<compile_context>
chip_gen: v7x
topology: tpu7x:2x2x1
jax: 0.10.0
libtpu: 0.0.40
codegen_flags: <defaults>
</compile_context>

<pallas_src>
import functools
import math

import jax
import jax.numpy as jnp
from jax.experimental import pallas as pl
from jax.experimental.pallas import tpu as pltpu

_EPS = 1e-5


def _vmem_limit_bytes():
  """Generation-aware VMEM budget: ~75% of physical, capped at 100 MiB."""
  cap = 64 * 1024 * 1024                 # conservative default (v7x physical)
  try:
    cap = int(getattr(pltpu.get_tpu_info(), "vmem_capacity_bytes", cap))
  except Exception:
    pass                                 # keep conservative default
  return max(32 * 1024 * 1024, min(cap * 3 // 4, 100 * 1024 * 1024))


def _layernorm(v, gamma, beta):
  """fp32 LayerNorm with biased variance (matches torch.nn.LayerNorm)."""
  mu = jnp.mean(v, axis=-1, keepdims=True)
  var = jnp.mean((v - mu) ** 2, axis=-1, keepdims=True)
  return (v - mu) * jax.lax.rsqrt(var + _EPS) * gamma + beta


# ---------------------------------------------------------------------------
# Kernel A: LN1 + fused QKV projection, tiled over (batch, sequence).
# 1/sqrt(head_dim) is pre-folded into the Q columns of wqkv at trace time.
# Emits q / k / v as three lane-dense (B, S, W) arrays so the attention kernel
# needs no wrapper-side head split / transpose.
# ---------------------------------------------------------------------------
def _ln_qkv_kernel(x_ref, g_ref, b_ref, wqkv_ref, bqkv_ref,
                   q_ref, k_ref, v_ref, *, width, compute_dtype):
  x = x_ref[0].astype(jnp.float32)                              # (ts, W)
  h = _layernorm(x, g_ref[...], b_ref[...])
  qkv = jnp.dot(h.astype(compute_dtype), wqkv_ref[...],
                preferred_element_type=jnp.float32) + bqkv_ref[...]
  q_ref[0] = qkv[:, :width].astype(q_ref.dtype)
  k_ref[0] = qkv[:, width:2 * width].astype(k_ref.dtype)
  v_ref[0] = qkv[:, 2 * width:].astype(v_ref.dtype)


# ---------------------------------------------------------------------------
# Kernel B: flash-style multi-head attention core.
# grid = (B, S//tq, S//tk); KV axis innermost ("arbitrary").  Running softmax
# state (m, l, acc) per head sits in VMEM scratch (pl.when init/finalize), so
# the full-S score tensor is never materialized.  Heads are peeled with static
# lane slices (unrolled); the context tile is written back lane-dense (tq, W).
# ---------------------------------------------------------------------------
def _flash_attn_kernel(q_ref, k_ref, v_ref, o_ref, m_s, l_s, acc_s, *,
                       heads, head_dim, compute_dtype, approx_recip):
  ki = pl.program_id(2)

  @pl.when(ki == 0)
  def _():
    m_s[...] = jnp.full(m_s.shape, -jnp.inf, m_s.dtype)
    l_s[...] = jnp.zeros(l_s.shape, l_s.dtype)
    acc_s[...] = jnp.zeros(acc_s.shape, acc_s.dtype)

  # fp32 (unpacked) lane slicing is the best-supported relayout path.
  q = q_ref[0].astype(jnp.float32)                              # (tq, W)
  k = k_ref[0].astype(jnp.float32)                              # (tk, W)
  v = v_ref[0].astype(jnp.float32)                              # (tk, W)

  for h in range(heads):                  # unrolled; each head is an MXU op
    sl = slice(h * head_dim, (h + 1) * head_dim)
    qh = q[:, sl].astype(compute_dtype)
    kh = k[:, sl].astype(compute_dtype)
    vh = v[:, sl].astype(compute_dtype)
    # Softmax scale already folded into wqkv's Q columns.
    s = jnp.einsum("qd,kd->qk", qh, kh,
                   preferred_element_type=jnp.float32)          # (tq, tk)
    m_prev = m_s[h]                                             # (tq, 1)
    m_new = jnp.maximum(m_prev, jnp.max(s, axis=-1, keepdims=True))
    alpha = jnp.exp(m_prev - m_new)
    p = jnp.exp(s - m_new)
    l_s[h] = alpha * l_s[h] + jnp.sum(p, axis=-1, keepdims=True)
    acc_s[h] = alpha * acc_s[h] + jnp.dot(p.astype(compute_dtype), vh,
                                          preferred_element_type=jnp.float32)
    m_s[h] = m_new

  @pl.when(ki == pl.num_programs(2) - 1)
  def _():
    inv = pl.reciprocal(l_s[...], approx=approx_recip)          # (H, tq, 1)
    ctx = acc_s[...] * inv                                      # (H, tq, hd)
    # Merge heads into a single lane-dense (tq, W) store.
    o_ref[0] = jnp.concatenate(
        [ctx[h] for h in range(heads)], axis=-1).astype(o_ref.dtype)


# ---------------------------------------------------------------------------
# Kernel C: attention out-projection + residual + LN2 + FFN + residual.
# ---------------------------------------------------------------------------
def _proj_ffn_kernel(x_ref, ctx_ref, wo_ref, bo_ref, g2_ref, b2_ref,
                     w1_ref, b1_ref, w2_ref, b2f_ref, o_ref, *,
                     compute_dtype, approx_gelu):
  x = x_ref[0].astype(jnp.float32)                              # (tc, W)

  attn = jnp.dot(ctx_ref[0], wo_ref[...],
                 preferred_element_type=jnp.float32) + bo_ref[...]
  x1 = x + attn

  h2 = _layernorm(x1, g2_ref[...], b2_ref[...])
  f = jnp.dot(h2.astype(compute_dtype), w1_ref[...],
              preferred_element_type=jnp.float32) + b1_ref[...]
  if approx_gelu:
    # tanh GELU runs on the EUP slot (useful when VALU-bound, e.g. v5e).
    f = 0.5 * f * (1.0 + jnp.tanh(0.7978845608028654
                                  * (f + 0.044715 * f * f * f)))
  else:
    # exact erf GELU -> matches torch.nn.GELU() default
    f = 0.5 * f * (1.0 + jax.lax.erf(f * (1.0 / math.sqrt(2.0))))
  f = jnp.dot(f.astype(compute_dtype), w2_ref[...],
              preferred_element_type=jnp.float32) + b2f_ref[...]
  o_ref[0] = (x1 + f).astype(o_ref.dtype)


# ---------------------------------------------------------------------------
# Wrapper
# ---------------------------------------------------------------------------
@functools.partial(
    jax.jit,
    static_argnames=("heads", "compute_dtype", "a_tile", "q_tile", "k_tile",
                     "c_tile", "approx_gelu"))
def self_attn_block(x, params, *, heads=8, compute_dtype=jnp.bfloat16,
                    a_tile=512, q_tile=256, k_tile=512, c_tile=256,
                    approx_gelu=False):
  B, S, W = x.shape
  assert W % heads == 0, "width must be divisible by heads"
  hd = W // heads

  def _tile(t):
    t = min(t, S)
    assert S % t == 0, "sequence length must be a multiple of every tile"
    return t

  ts, tq, tk, tc = _tile(a_tile), _tile(q_tile), _tile(k_tile), _tile(c_tile)

  f32 = jnp.float32
  # Fold the softmax scale into the Q columns/bias of the fused QKV projection
  # (trace-time; no per-token scaling inside the kernels).
  scale_row = jnp.concatenate(
      [jnp.full((1, W), 1.0 / math.sqrt(hd), f32), jnp.ones((1, 2 * W), f32)],
      axis=1)
  wqkv = (params["wqkv"].astype(f32) * scale_row).astype(compute_dtype)
  bqkv = params["bqkv"].astype(f32) * scale_row                  # bias stays f32
  wo = params["wo"].astype(compute_dtype)
  w1 = params["w1"].astype(compute_dtype)
  w2 = params["w2"].astype(compute_dtype)
  F = w1.shape[1]

  vmem = _vmem_limit_bytes()
  cp_2d = pltpu.CompilerParams(dimension_semantics=("parallel", "parallel"),
                               vmem_limit_bytes=vmem)
  cp_3d = pltpu.CompilerParams(
      dimension_semantics=("parallel", "parallel", "arbitrary"),
      vmem_limit_bytes=vmem)

  # ---- Kernel A: LN1 + QKV projection (tiled over batch & sequence) -------
  q, k, v = pl.pallas_call(
      functools.partial(_ln_qkv_kernel, width=W, compute_dtype=compute_dtype),
      out_shape=[jax.ShapeDtypeStruct((B, S, W), compute_dtype),
                 jax.ShapeDtypeStruct((B, S, W), compute_dtype),
                 jax.ShapeDtypeStruct((B, S, W), compute_dtype)],
      grid_spec=pltpu.PrefetchScalarGridSpec(
          num_scalar_prefetch=0,
          grid=(B, S // ts),
          in_specs=[
              pl.BlockSpec((1, ts, W), lambda b, s: (b, s, 0)),
              pl.BlockSpec((1, W), lambda b, s: (0, 0)),
              pl.BlockSpec((1, W), lambda b, s: (0, 0)),
              # (v7x option, not applied: pipeline_mode=pl.Buffered(1) on this
              #  resident weight would halve its VMEM footprint.)
              pl.BlockSpec((W, 3 * W), lambda b, s: (0, 0)),
              pl.BlockSpec((1, 3 * W), lambda b, s: (0, 0)),
          ],
          out_specs=[pl.BlockSpec((1, ts, W), lambda b, s: (b, s, 0)),
                     pl.BlockSpec((1, ts, W), lambda b, s: (b, s, 0)),
                     pl.BlockSpec((1, ts, W), lambda b, s: (b, s, 0))],
      ),
      compiler_params=cp_2d,
  )(x, params["ln1_g"], params["ln1_b"], wqkv, bqkv)

  # ---- Kernel B: flash attention core (online softmax over KV tiles) ------
  approx = compute_dtype == jnp.bfloat16
  ctx = pl.pallas_call(
      functools.partial(_flash_attn_kernel, heads=heads, head_dim=hd,
                        compute_dtype=compute_dtype, approx_recip=approx),
      out_shape=jax.ShapeDtypeStruct((B, S, W), compute_dtype),
      grid_spec=pltpu.PrefetchScalarGridSpec(
          num_scalar_prefetch=0,
          grid=(B, S // tq, S // tk),
          in_specs=[
              pl.BlockSpec((1, tq, W), lambda b, qi, ki: (b, qi, 0)),
              pl.BlockSpec((1, tk, W), lambda b, qi, ki: (b, ki, 0)),
              pl.BlockSpec((1, tk, W), lambda b, qi, ki: (b, ki, 0)),
          ],
          out_specs=pl.BlockSpec((1, tq, W), lambda b, qi, ki: (b, qi, 0)),
          scratch_shapes=[
              pltpu.VMEM((heads, tq, 1), jnp.float32),    # running max
              pltpu.VMEM((heads, tq, 1), jnp.float32),    # running denom
              pltpu.VMEM((heads, tq, hd), jnp.float32),   # running context
          ]),
      compiler_params=cp_3d,
  )(q, k, v)

  # ---- Kernel C: out-proj + residual + LN2 + FFN + residual ---------------
  out = pl.pallas_call(
      functools.partial(_proj_ffn_kernel, compute_dtype=compute_dtype,
                        approx_gelu=approx_gelu),
      out_shape=jax.ShapeDtypeStruct((B, S, W), x.dtype),
      grid_spec=pltpu.PrefetchScalarGridSpec(
          num_scalar_prefetch=0,
          grid=(B, S // tc),
          in_specs=[
              pl.BlockSpec((1, tc, W), lambda b, t: (b, t, 0)),   # x
              pl.BlockSpec((1, tc, W), lambda b, t: (b, t, 0)),   # ctx
              # (v7x option, not applied: Buffered(1) / F-tiling for wo/w1/w2.)
              pl.BlockSpec((W, W), lambda b, t: (0, 0)),          # wo
              pl.BlockSpec((1, W), lambda b, t: (0, 0)),          # bo
              pl.BlockSpec((1, W), lambda b, t: (0, 0)),          # ln2_g
              pl.BlockSpec((1, W), lambda b, t: (0, 0)),          # ln2_b
              pl.BlockSpec((W, F), lambda b, t: (0, 0)),          # w1
              pl.BlockSpec((1, F), lambda b, t: (0, 0)),          # b1
              pl.BlockSpec((F, W), lambda b, t: (0, 0)),          # w2
              pl.BlockSpec((1, W), lambda b, t: (0, 0)),          # b2
          ],
          out_specs=pl.BlockSpec((1, tc, W), lambda b, t: (b, t, 0)),
      ),
      compiler_params=cp_2d,
  )(x, ctx, wo, params["bo"], params["ln2_g"], params["ln2_b"],
    w1, params["b1"], w2, params["b2"])
  return out


# ---------------------------------------------------------------------------
# Parameters and pure-JAX reference (mirrors the PyTorch module in eval mode)
# ---------------------------------------------------------------------------
def init_params(key, width, ffn_mult=1):
  """Deterministic synthetic params (torch Linear layout transposed to (in, out))."""
  ks = jax.random.split(key, 8)

  def lin(k, fan_in, fan_out):
    bound = 1.0 / math.sqrt(fan_in)
    wk, bk = jax.random.split(k)
    w = jax.random.uniform(wk, (fan_in, fan_out), jnp.float32, -bound, bound)
    b = jax.random.uniform(bk, (1, fan_out), jnp.float32, -bound, bound)
    return w, b

  wqkv, bqkv = lin(ks[0], width, 3 * width)
  wo, bo = lin(ks[1], width, width)
  w1, b1 = lin(ks[2], width, width * ffn_mult)
  w2, b2 = lin(ks[3], width * ffn_mult, width)
  return dict(
      ln1_g=1.0 + 0.1 * jax.random.normal(ks[4], (1, width), jnp.float32),
      ln1_b=0.1 * jax.random.normal(ks[5], (1, width), jnp.float32),
      wqkv=wqkv, bqkv=bqkv, wo=wo, bo=bo,
      ln2_g=1.0 + 0.1 * jax.random.normal(ks[6], (1, width), jnp.float32),
      ln2_b=0.1 * jax.random.normal(ks[7], (1, width), jnp.float32),
      w1=w1, b1=b1, w2=w2, b2=b2,
  )


def reference(x, p, heads):
  def ln(v, g, b):
    mu = v.mean(-1, keepdims=True)
    var = ((v - mu) ** 2).mean(-1, keepdims=True)
    return (v - mu) / jnp.sqrt(var + _EPS) * g + b

  B, S, W = x.shape
  hd = W // heads
  h = ln(x, p["ln1_g"], p["ln1_b"])
  qkv = h @ p["wqkv"] + p["bqkv"]
  q, k, v = jnp.split(qkv, 3, axis=-1)
  q = q.reshape(B, S, heads, hd).transpose(0, 2, 1, 3)
  k = k.reshape(B, S, heads, hd).transpose(0, 2, 1, 3)
  v = v.reshape(B, S, heads, hd).transpose(0, 2, 1, 3)
  s = jnp.einsum("bhqd,bhkd->bhqk", q, k) / math.sqrt(hd)
  pa = jax.nn.softmax(s, axis=-1)
  o = jnp.einsum("bhqk,bhkd->bhqd", pa, v).transpose(0, 2, 1, 3).reshape(B, S, W)
  x1 = x + (o @ p["wo"] + p["bo"])
  h2 = ln(x1, p["ln2_g"], p["ln2_b"])
  f = h2 @ p["w1"] + p["b1"]
  f = jax.nn.gelu(f, approximate=False)
  return x1 + (f @ p["w2"] + p["b2"])


if __name__ == "__main__":
  # Small but lane-dense shapes; 64-row tiles force multi-step grids so the
  # online-softmax init/accumulate/finalize path is actually exercised.
  B, S, W, HEADS, FFN_MULT = 2, 128, 128, 8, 2
  key = jax.random.PRNGKey(0)
  kx, kp = jax.random.split(key)
  x = jax.random.normal(kx, (B, S, W), jnp.float32)
  params = init_params(kp, W, ffn_mult=FFN_MULT)
  ref = reference(x, params, HEADS)

  kw = dict(heads=HEADS, a_tile=64, q_tile=64, k_tile=64, c_tile=64)

  # fp32 compute path: tight numerical validation.
  out_f32 = jax.block_until_ready(
      self_attn_block(x, params, compute_dtype=jnp.float32, **kw))
  assert out_f32.shape == (B, S, W)
  assert jnp.allclose(out_f32, ref, atol=2e-3, rtol=2e-3), (
      float(jnp.max(jnp.abs(out_f32 - ref))))

  # bf16-operand / fp32-accumulate path: looser tolerance vs fp32 reference.
  out_bf16 = jax.block_until_ready(
      self_attn_block(x, params, compute_dtype=jnp.bfloat16, **kw))
  assert out_bf16.shape == (B, S, W)
  assert jnp.allclose(out_bf16, ref, atol=8e-2, rtol=8e-2), (
      float(jnp.max(jnp.abs(out_bf16 - ref))))

  print("KERNEL_OK")
</pallas_src>

<mosaic_0001>
module attributes {stable_mosaic.version = 11 : i64} {
  func.func @_ln_qkv_kernel(%arg0: i32, %arg1: i32, %arg2: memref<1x64x128xf32, #tpu.memory_space<vmem>>, %arg3: memref<1x128xf32, #tpu.memory_space<vmem>>, %arg4: memref<1x128xf32, #tpu.memory_space<vmem>>, %arg5: memref<128x384xf32, #tpu.memory_space<vmem>>, %arg6: memref<1x384xf32, #tpu.memory_space<vmem>>, %arg7: memref<1x64x128xf32, #tpu.memory_space<vmem>>, %arg8: memref<1x64x128xf32, #tpu.memory_space<vmem>>, %arg9: memref<1x64x128xf32, #tpu.memory_space<vmem>>) attributes {dimension_semantics = [#tpu.dimension_semantics<parallel>, #tpu.dimension_semantics<parallel>], iteration_bounds = array<i64: 2, 2>, scalar_prefetch = 0 : i64, scratch_operands = 0 : i64, tpu.core_type = #tpu.core_type<tc>, window_params = [{transform_indices = @transform_0, window_bounds = array<i64: 1, 64, 128>}, {pipeline_mode = #tpu.pipeline_mode<synchronous>, transform_indices = @transform_1, window_bounds = array<i64: 1, 128>}, {pipeline_mode = #tpu.pipeline_mode<synchronous>, transform_indices = @transform_2, window_bounds = array<i64: 1, 128>}, {pipeline_mode = #tpu.pipeline_mode<synchronous>, transform_indices = @transform_3, window_bounds = array<i64: 128, 384>}, {pipeline_mode = #tpu.pipeline_mode<synchronous>, transform_indices = @transform_4, window_bounds = array<i64: 1, 384>}, {transform_indices = @transform_5, window_bounds = array<i64: 1, 64, 128>}, {transform_indices = @transform_6, window_bounds = array<i64: 1, 64, 128>}, {transform_indices = @transform_7, window_bounds = array<i64: 1, 64, 128>}]} {
    %c0 = arith.constant 0 : index
    %c0_0 = arith.constant 0 : index
    %c0_1 = arith.constant 0 : index
    %0 = vector.load %arg2[%c0, %c0_0, %c0_1] : memref<1x64x128xf32, #tpu.memory_space<vmem>>, vector<1x64x128xf32>
    %1 = vector.shape_cast %0 : vector<1x64x128xf32> to vector<64x128xf32>
    %c0_2 = arith.constant 0 : index
    %c0_3 = arith.constant 0 : index
    %2 = vector.load %arg3[%c0_2, %c0_3] : memref<1x128xf32, #tpu.memory_space<vmem>>, vector<1x128xf32>
    %c0_4 = arith.constant 0 : index
    %c0_5 = arith.constant 0 : index
    %3 = vector.load %arg4[%c0_4, %c0_5] : memref<1x128xf32, #tpu.memory_space<vmem>>, vector<1x128xf32>
    %cst = arith.constant dense<0.000000e+00> : vector<64xf32>
    %4 = vector.multi_reduction <add>, %1, %cst [1] : vector<64x128xf32> to vector<64xf32>
    %5 = vector.shape_cast %4 : vector<64xf32> to vector<64x1xf32>
    %cst_6 = arith.constant 1.280000e+02 : f32
    %6 = vector.broadcast %cst_6 : f32 to vector<64x1xf32>
    %7 = arith.divf %5, %6 : vector<64x1xf32>
    %8 = vector.broadcast %7 : vector<64x1xf32> to vector<64x128xf32>
    %9 = arith.subf %1, %8 : vector<64x128xf32>
    %10 = arith.mulf %9, %9 : vector<64x128xf32>
    %cst_7 = arith.constant dense<0.000000e+00> : vector<64xf32>
    %11 = vector.multi_reduction <add>, %10, %cst_7 [1] : vector<64x128xf32> to vector<64xf32>
    %12 = vector.shape_cast %11 : vector<64xf32> to vector<64x1xf32>
    %cst_8 = arith.constant 1.280000e+02 : f32
    %13 = vector.broadcast %cst_8 : f32 to vector<64x1xf32>
    %14 = arith.divf %12, %13 : vector<64x1xf32>
    %15 = vector.broadcast %7 : vector<64x1xf32> to vector<64x128xf32>
    %16 = arith.subf %1, %15 : vector<64x128xf32>
    %cst_9 = arith.constant 9.99999974E-6 : f32
    %17 = vector.broadcast %cst_9 : f32 to vector<64x1xf32>
    %18 = arith.addf %14, %17 : vector<64x1xf32>
    %19 = math.rsqrt %18 : vector<64x1xf32>
    %20 = vector.broadcast %19 : vector<64x1xf32> to vector<64x128xf32>
    %21 = arith.mulf %16, %20 : vector<64x128xf32>
    %22 = vector.broadcast %2 : vector<1x128xf32> to vector<64x128xf32>
    %23 = arith.mulf %21, %22 : vector<64x128xf32>
    %24 = vector.broadcast %3 : vector<1x128xf32> to vector<64x128xf32>
    %25 = arith.addf %23, %24 : vector<64x128xf32>
    %c0_10 = arith.constant 0 : index
    %c0_11 = arith.constant 0 : index
    %26 = vector.load %arg5[%c0_10, %c0_11] : memref<128x384xf32, #tpu.memory_space<vmem>>, vector<128x384xf32>
    %cst_12 = arith.constant dense<0.000000e+00> : vector<64x384xf32>
    %27 = tpu.matmul %25, %26, %cst_12 {dimension_numbers = #tpu.dot_dimension_numbers<[1], [0], [0], [1], [0, 0, 1, 1], [], []>} : vector<64x128xf32>, vector<128x384xf32>, vector<64x384xf32> -> vector<64x384xf32>
    %c0_13 = arith.constant 0 : index
    %c0_14 = arith.constant 0 : index
    %28 = vector.load %arg6[%c0_13, %c0_14] : memref<1x384xf32, #tpu.memory_space<vmem>>, vector<1x384xf32>
    %29 = vector.broadcast %28 : vector<1x384xf32> to vector<64x384xf32>
    %30 = arith.addf %27, %29 : vector<64x384xf32>
    %31 = vector.extract_strided_slice %30 {offsets = [0, 0], sizes = [64, 128], strides = [1, 1]} : vector<64x384xf32> to vector<64x128xf32>
    %c0_15 = arith.constant 0 : index
    %c0_16 = arith.constant 0 : index
    %c0_17 = arith.constant 0 : index
    %32 = vector.load %arg7[%c0_15, %c0_16, %c0_17] : memref<1x64x128xf32, #tpu.memory_space<vmem>>, vector<1x64x128xf32>
    %33 = vector.shape_cast %32 : vector<1x64x128xf32> to vector<64x128xf32>
    %34 = vector.shape_cast %31 : vector<64x128xf32> to vector<1x64x128xf32>
    tpu.vector_store %arg7[%c0_15, %c0_16, %c0_17], %34 {strides = array<i32>} : memref<1x64x128xf32, #tpu.memory_space<vmem>>, vector<1x64x128xf32>,
    %35 = vector.extract_strided_slice %30 {offsets = [0, 128], sizes = [64, 128], strides = [1, 1]} : vector<64x384xf32> to vector<64x128xf32>
    %c0_18 = arith.constant 0 : index
    %c0_19 = arith.constant 0 : index
    %c0_20 = arith.constant 0 : index
    %36 = vector.load %arg8[%c0_18, %c0_19, %c0_20] : memref<1x64x128xf32, #tpu.memory_space<vmem>>, vector<1x64x128xf32>
    %37 = vector.shape_cast %36 : vector<1x64x128xf32> to vector<64x128xf32>
    %38 = vector.shape_cast %35 : vector<64x128xf32> to vector<1x64x128xf32>
    tpu.vector_store %arg8[%c0_18, %c0_19, %c0_20], %38 {strides = array<i32>} : memref<1x64x128xf32, #tpu.memory_space<vmem>>, vector<1x64x128xf32>,
    %39 = vector.extract_strided_slice %30 {offsets = [0, 256], sizes = [64, 128], strides = [1, 1]} : vector<64x384xf32> to vector<64x128xf32>
    %c0_21 = arith.constant 0 : index
    %c0_22 = arith.constant 0 : index
    %c0_23 = arith.constant 0 : index
    %40 = vector.load %arg9[%c0_21, %c0_22, %c0_23] : memref<1x64x128xf32, #tpu.memory_space<vmem>>, vector<1x64x128xf32>
    %41 = vector.shape_cast %40 : vector<1x64x128xf32> to vector<64x128xf32>
    %42 = vector.shape_cast %39 : vector<64x128xf32> to vector<1x64x128xf32>
    tpu.vector_store %arg9[%c0_21, %c0_22, %c0_23], %42 {strides = array<i32>} : memref<1x64x128xf32, #tpu.memory_space<vmem>>, vector<1x64x128xf32>,
    return
  }
  func.func @transform_0(%arg0: i32, %arg1: i32) -> (i32, i32, i32) {
    %c0_i32 = arith.constant 0 : i32
    %c0_i32_0 = arith.constant 0 : i32
    return %arg0, %arg1, %c0_i32 : i32, i32, i32
  }
  func.func @transform_1(%arg0: i32, %arg1: i32) -> (i32, i32) {
    %c0_i32 = arith.constant 0 : i32
    %c0_i32_0 = arith.constant 0 : i32
    %c0_i32_1 = arith.constant 0 : i32
    return %c0_i32, %c0_i32_0 : i32, i32
  }
  func.func @transform_2(%arg0: i32, %arg1: i32) -> (i32, i32) {
    %c0_i32 = arith.constant 0 : i32
    %c0_i32_0 = arith.constant 0 : i32
    %c0_i32_1 = arith.constant 0 : i32
    return %c0_i32, %c0_i32_0 : i32, i32
  }
  func.func @transform_3(%arg0: i32, %arg1: i32) -> (i32, i32) {
    %c0_i32 = arith.constant 0 : i32
    %c0_i32_0 = arith.constant 0 : i32
    %c0_i32_1 = arith.constant 0 : i32
    return %c0_i32, %c0_i32_0 : i32, i32
  }
  func.func @transform_4(%arg0: i32, %arg1: i32) -> (i32, i32) {
    %c0_i32 = arith.constant 0 : i32
    %c0_i32_0 = arith.constant 0 : i32
    %c0_i32_1 = arith.constant 0 : i32
    return %c0_i32, %c0_i32_0 : i32, i32
  }
  func.func @transform_5(%arg0: i32, %arg1: i32) -> (i32, i32, i32) {
    %c0_i32 = arith.constant 0 : i32
    %c0_i32_0 = arith.constant 0 : i32
    return %arg0, %arg1, %c0_i32 : i32, i32, i32
  }
  func.func @transform_6(%arg0: i32, %arg1: i32) -> (i32, i32, i32) {
    %c0_i32 = arith.constant 0 : i32
    %c0_i32_0 = arith.constant 0 : i32
    return %arg0, %arg1, %c0_i32 : i32, i32, i32
  }
  func.func @transform_7(%arg0: i32, %arg1: i32) -> (i32, i32, i32) {
    %c0_i32 = arith.constant 0 : i32
    %c0_i32_0 = arith.constant 0 : i32
    return %arg0, %arg1, %c0_i32 : i32, i32, i32
  }
}

module attributes {stable_mosaic.version = 11 : i64} {
  func.func @_proj_ffn_kernel(%arg0: i32, %arg1: i32, %arg2: memref<1x64x128xf32, #tpu.memory_space<vmem>>, %arg3: memref<1x64x128xf32, #tpu.memory_space<vmem>>, %arg4: memref<128x128xf32, #tpu.memory_space<vmem>>, %arg5: memref<1x128xf32, #tpu.memory_space<vmem>>, %arg6: memref<1x128xf32, #tpu.memory_space<vmem>>, %arg7: memref<1x128xf32, #tpu.memory_space<vmem>>, %arg8: memref<128x256xf32, #tpu.memory_space<vmem>>, %arg9: memref<1x256xf32, #tpu.memory_space<vmem>>, %arg10: memref<256x128xf32, #tpu.memory_space<vmem>>, %arg11: memref<1x128xf32, #tpu.memory_space<vmem>>, %arg12: memref<1x64x128xf32, #tpu.memory_space<vmem>>) attributes {dimension_semantics = [#tpu.dimension_semantics<parallel>, #tpu.dimension_semantics<parallel>], iteration_bounds = array<i64: 2, 2>, scalar_prefetch = 0 : i64, scratch_operands = 0 : i64, tpu.core_type = #tpu.core_type<tc>, window_params = [{transform_indices = @transform_0, window_bounds = array<i64: 1, 64, 128>}, {transform_indices = @transform_1, window_bounds = array<i64: 1, 64, 128>}, {pipeline_mode = #tpu.pipeline_mode<synchronous>, transform_indices = @transform_2, window_bounds = array<i64: 128, 128>}, {pipeline_mode = #tpu.pipeline_mode<synchronous>, transform_indices = @transform_3, window_bounds = array<i64: 1, 128>}, {pipeline_mode = #tpu.pipeline_mode<synchronous>, transform_indices = @transform_4, window_bounds = array<i64: 1, 128>}, {pipeline_mode = #tpu.pipeline_mode<synchronous>, transform_indices = @transform_5, window_bounds = array<i64: 1, 128>}, {pipeline_mode = #tpu.pipeline_mode<synchronous>, transform_indices = @transform_6, window_bounds = array<i64: 128, 256>}, {pipeline_mode = #tpu.pipeline_mode<synchronous>, transform_indices = @transform_7, window_bounds = array<i64: 1, 256>}, {pipeline_mode = #tpu.pipeline_mode<synchronous>, transform_indices = @transform_8, window_bounds = array<i64: 256, 128>}, {pipeline_mode = #tpu.pipeline_mode<synchronous>, transform_indices = @transform_9, window_bounds = array<i64: 1, 128>}, {transform_indices = @transform_10, window_bounds = array<i64: 1, 64, 128>}]} {
    %c0 = arith.constant 0 : index
    %c0_0 = arith.constant 0 : index
    %c0_1 = arith.constant 0 : index
    %0 = vector.load %arg2[%c0, %c0_0, %c0_1] : memref<1x64x128xf32, #tpu.memory_space<vmem>>, vector<1x64x128xf32>
    %1 = vector.shape_cast %0 : vector<1x64x128xf32> to vector<64x128xf32>
    %c0_2 = arith.constant 0 : index
    %c0_3 = arith.constant 0 : index
    %c0_4 = arith.constant 0 : index
    %2 = vector.load %arg3[%c0_2, %c0_3, %c0_4] : memref<1x64x128xf32, #tpu.memory_space<vmem>>, vector<1x64x128xf32>
    %3 = vector.shape_cast %2 : vector<1x64x128xf32> to vector<64x128xf32>
    %c0_5 = arith.constant 0 : index
    %c0_6 = arith.constant 0 : index
    %4 = vector.load %arg4[%c0_5, %c0_6] : memref<128x128xf32, #tpu.memory_space<vmem>>, vector<128x128xf32>
    %cst = arith.constant dense<0.000000e+00> : vector<64x128xf32>
    %5 = tpu.matmul %3, %4, %cst {dimension_numbers = #tpu.dot_dimension_numbers<[1], [0], [0], [1], [0, 0, 1, 1], [], []>} : vector<64x128xf32>, vector<128x128xf32>, vector<64x128xf32> -> vector<64x128xf32>
    %c0_7 = arith.constant 0 : index
    %c0_8 = arith.constant 0 : index
    %6 = vector.load %arg5[%c0_7, %c0_8] : memref<1x128xf32, #tpu.memory_space<vmem>>, vector<1x128xf32>
    %7 = vector.broadcast %6 : vector<1x128xf32> to vector<64x128xf32>
    %8 = arith.addf %5, %7 : vector<64x128xf32>
    %9 = arith.addf %1, %8 : vector<64x128xf32>
    %c0_9 = arith.constant 0 : index
    %c0_10 = arith.constant 0 : index
    %10 = vector.load %arg6[%c0_9, %c0_10] : memref<1x128xf32, #tpu.memory_space<vmem>>, vector<1x128xf32>
    %c0_11 = arith.constant 0 : index
    %c0_12 = arith.constant 0 : index
    %11 = vector.load %arg7[%c0_11, %c0_12] : memref<1x128xf32, #tpu.memory_space<vmem>>, vector<1x128xf32>
    %cst_13 = arith.constant dense<0.000000e+00> : vector<64xf32>
    %12 = vector.multi_reduction <add>, %9, %cst_13 [1] : vector<64x128xf32> to vector<64xf32>
    %13 = vector.shape_cast %12 : vector<64xf32> to vector<64x1xf32>
    %cst_14 = arith.constant 1.280000e+02 : f32
    %14 = vector.broadcast %cst_14 : f32 to vector<64x1xf32>
    %15 = arith.divf %13, %14 : vector<64x1xf32>
    %16 = vector.broadcast %15 : vector<64x1xf32> to vector<64x128xf32>
    %17 = arith.subf %9, %16 : vector<64x128xf32>
    %18 = arith.mulf %17, %17 : vector<64x128xf32>
    %cst_15 = arith.constant dense<0.000000e+00> : vector<64xf32>
    %19 = vector.multi_reduction <add>, %18, %cst_15 [1] : vector<64x128xf32> to vector<64xf32>
    %20 = vector.shape_cast %19 : vector<64xf32> to vector<64x1xf32>
    %cst_16 = arith.constant 1.280000e+02 : f32
    %21 = vector.broadcast %cst_16 : f32 to vector<64x1xf32>
    %22 = arith.divf %20, %21 : vector<64x1xf32>
    %23 = vector.broadcast %15 : vector<64x1xf32> to vector<64x128xf32>
    %24 = arith.subf %9, %23 : vector<64x128xf32>
    %cst_17 = arith.constant 9.99999974E-6 : f32
    %25 = vector.broadcast %cst_17 : f32 to vector<64x1xf32>
    %26 = arith.addf %22, %25 : vector<64x1xf32>
    %27 = math.rsqrt %26 : vector<64x1xf32>
    %28 = vector.broadcast %27 : vector<64x1xf32> to vector<64x128xf32>
    %29 = arith.mulf %24, %28 : vector<64x128xf32>
    %30 = vector.broadcast %10 : vector<1x128xf32> to vector<64x128xf32>
    %31 = arith.mulf %29, %30 : vector<64x128xf32>
    %32 = vector.broadcast %11 : vector<1x128xf32> to vector<64x128xf32>
    %33 = arith.addf %31, %32 : vector<64x128xf32>
    %c0_18 = arith.constant 0 : index
    %c0_19 = arith.constant 0 : index
    %34 = vector.load %arg8[%c0_18, %c0_19] : memref<128x256xf32, #tpu.memory_space<vmem>>, vector<128x256xf32>
    %cst_20 = arith.constant dense<0.000000e+00> : vector<64x256xf32>
    %35 = tpu.matmul %33, %34, %cst_20 {dimension_numbers = #tpu.dot_dimension_numbers<[1], [0], [0], [1], [0, 0, 1, 1], [], []>} : vector<64x128xf32>, vector<128x256xf32>, vector<64x256xf32> -> vector<64x256xf32>
    %c0_21 = arith.constant 0 : index
    %c0_22 = arith.constant 0 : index
    %36 = vector.load %arg9[%c0_21, %c0_22] : memref<1x256xf32, #tpu.memory_space<vmem>>, vector<1x256xf32>
    %37 = vector.broadcast %36 : vector<1x256xf32> to vector<64x256xf32>
    %38 = arith.addf %35, %37 : vector<64x256xf32>
    %cst_23 = arith.constant 5.000000e-01 : f32
    %39 = vector.broadcast %cst_23 : f32 to vector<64x256xf32>
    %40 = arith.mulf %39, %38 : vector<64x256xf32>
    %cst_24 = arith.constant 0.707106769 : f32
    %41 = vector.broadcast %cst_24 : f32 to vector<64x256xf32>
    %42 = arith.mulf %38, %41 : vector<64x256xf32>
    %43 = math.erf %42 : vector<64x256xf32>
    %cst_25 = arith.constant 1.000000e+00 : f32
    %44 = vector.broadcast %cst_25 : f32 to vector<64x256xf32>
    %45 = arith.addf %44, %43 : vector<64x256xf32>
    %46 = arith.mulf %40, %45 : vector<64x256xf32>
    %c0_26 = arith.constant 0 : index
    %c0_27 = arith.constant 0 : index
    %47 = vector.load %arg10[%c0_26, %c0_27] : memref<256x128xf32, #tpu.memory_space<vmem>>, vector<256x128xf32>
    %cst_28 = arith.constant dense<0.000000e+00> : vector<64x128xf32>
    %48 = tpu.matmul %46, %47, %cst_28 {dimension_numbers = #tpu.dot_dimension_numbers<[1], [0], [0], [1], [0, 0, 1, 1], [], []>} : vector<64x256xf32>, vector<256x128xf32>, vector<64x128xf32> -> vector<64x128xf32>
    %c0_29 = arith.constant 0 : index
    %c0_30 = arith.constant 0 : index
    %49 = vector.load %arg11[%c0_29, %c0_30] : memref<1x128xf32, #tpu.memory_space<vmem>>, vector<1x128xf32>
    %50 = vector.broadcast %49 : vector<1x128xf32> to vector<64x128xf32>
    %51 = arith.addf %48, %50 : vector<64x128xf32>
    %52 = arith.addf %9, %51 : vector<64x128xf32>
    %c0_31 = arith.constant 0 : index
    %c0_32 = arith.constant 0 : index
    %c0_33 = arith.constant 0 : index
    %53 = vector.load %arg12[%c0_31, %c0_32, %c0_33] : memref<1x64x128xf32, #tpu.memory_space<vmem>>, vector<1x64x128xf32>
    %54 = vector.shape_cast %53 : vector<1x64x128xf32> to vector<64x128xf32>
    %55 = vector.shape_cast %52 : vector<64x128xf32> to vector<1x64x128xf32>
    tpu.vector_store %arg12[%c0_31, %c0_32, %c0_33], %55 {strides = array<i32>} : memref<1x64x128xf32, #tpu.memory_space<vmem>>, vector<1x64x128xf32>,
    return
  }
  func.func @transform_0(%arg0: i32, %arg1: i32) -> (i32, i32, i32) {
    %c0_i32 = arith.constant 0 : i32
    %c0_i32_0 = arith.constant 0 : i32
    return %arg0, %arg1, %c0_i32 : i32, i32, i32
  }
  func.func @transform_1(%arg0: i32, %arg1: i32) -> (i32, i32, i32) {
    %c0_i32 = arith.constant 0 : i32
    %c0_i32_0 = arith.constant 0 : i32
    return %arg0, %arg1, %c0_i32 : i32, i32, i32
  }
  func.func @transform_2(%arg0: i32, %arg1: i32) -> (i32, i32) {
    %c0_i32 = arith.constant 0 : i32
    %c0_i32_0 = arith.constant 0 : i32
    %c0_i32_1 = arith.constant 0 : i32
    return %c0_i32, %c0_i32_0 : i32, i32
  }
  func.func @transform_3(%arg0: i32, %arg1: i32) -> (i32, i32) {
    %c0_i32 = arith.constant 0 : i32
    %c0_i32_0 = arith.constant 0 : i32
    %c0_i32_1 = arith.constant 0 : i32
    return %c0_i32, %c0_i32_0 : i32, i32
  }
  func.func @transform_4(%arg0: i32, %arg1: i32) -> (i32, i32) {
    %c0_i32 = arith.constant 0 : i32
    %c0_i32_0 = arith.constant 0 : i32
    %c0_i32_1 = arith.constant 0 : i32
    return %c0_i32, %c0_i32_0 : i32, i32
  }
  func.func @transform_5(%arg0: i32, %arg1: i32) -> (i32, i32) {
    %c0_i32 = arith.constant 0 : i32
    %c0_i32_0 = arith.constant 0 : i32
    %c0_i32_1 = arith.constant 0 : i32
    return %c0_i32, %c0_i32_0 : i32, i32
  }
  func.func @transform_6(%arg0: i32, %arg1: i32) -> (i32, i32) {
    %c0_i32 = arith.constant 0 : i32
    %c0_i32_0 = arith.constant 0 : i32
    %c0_i32_1 = arith.constant 0 : i32
    return %c0_i32, %c0_i32_0 : i32, i32
  }
  func.func @transform_7(%arg0: i32, %arg1: i32) -> (i32, i32) {
    %c0_i32 = arith.constant 0 : i32
    %c0_i32_0 = arith.constant 0 : i32
    %c0_i32_1 = arith.constant 0 : i32
    return %c0_i32, %c0_i32_0 : i32, i32
  }
  func.func @transform_8(%arg0: i32, %arg1: i32) -> (i32, i32) {
    %c0_i32 = arith.constant 0 : i32
    %c0_i32_0 = arith.constant 0 : i32
    %c0_i32_1 = arith.constant 0 : i32
    return %c0_i32, %c0_i32_0 : i32, i32
  }
  func.func @transform_9(%arg0: i32, %arg1: i32) -> (i32, i32) {
    %c0_i32 = arith.constant 0 : i32
    %c0_i32_0 = arith.constant 0 : i32
    %c0_i32_1 = arith.constant 0 : i32
    return %c0_i32, %c0_i32_0 : i32, i32
  }
  func.func @transform_10(%arg0: i32, %arg1: i32) -> (i32, i32, i32) {
    %c0_i32 = arith.constant 0 : i32
    %c0_i32_0 = arith.constant 0 : i32
    return %arg0, %arg1, %c0_i32 : i32, i32, i32
  }
}

module attributes {stable_mosaic.version = 11 : i64} {
  func.func @_flash_attn_kernel(%arg0: i32, %arg1: i32, %arg2: i32, %arg3: memref<1x64x128xf32, #tpu.memory_space<vmem>>, %arg4: memref<1x64x128xf32, #tpu.memory_space<vmem>>, %arg5: memref<1x64x128xf32, #tpu.memory_space<vmem>>, %arg6: memref<1x64x128xf32, #tpu.memory_space<vmem>>, %arg7: memref<8x64x1xf32, #tpu.memory_space<vmem>>, %arg8: memref<8x64x1xf32, #tpu.memory_space<vmem>>, %arg9: memref<8x64x16xf32, #tpu.memory_space<vmem>>) attributes {dimension_semantics = [#tpu.dimension_semantics<parallel>, #tpu.dimension_semantics<parallel>, #tpu.dimension_semantics<arbitrary>], iteration_bounds = array<i64: 2, 2, 2>, scalar_prefetch = 0 : i64, scratch_operands = 3 : i64, tpu.core_type = #tpu.core_type<tc>, window_params = [{transform_indices = @transform_0, window_bounds = array<i64: 1, 64, 128>}, {transform_indices = @transform_1, window_bounds = array<i64: 1, 64, 128>}, {transform_indices = @transform_2, window_bounds = array<i64: 1, 64, 128>}, {transform_indices = @transform_3, window_bounds = array<i64: 1, 64, 128>}]} {
    %c0_i32 = arith.constant 0 : i32
    %0 = arith.cmpi eq, %arg2, %c0_i32 : i32
    %1 = arith.extui %0 : i1 to i32
    %c0_i32_0 = arith.constant 0 : i32
    %2 = arith.cmpi ne, %1, %c0_i32_0 : i32
    scf.if %2 {
      %cst_178 = arith.constant 0xFF800000 : f32
      %292 = vector.broadcast %cst_178 : f32 to vector<8x64x1xf32>
      %c0_179 = arith.constant 0 : index
      %c0_180 = arith.constant 0 : index
      %c0_181 = arith.constant 0 : index
      %293 = vector.load %arg7[%c0_179, %c0_180, %c0_181] : memref<8x64x1xf32, #tpu.memory_space<vmem>>, vector<8x64x1xf32>
      tpu.vector_store %arg7[%c0_179, %c0_180, %c0_181], %292 {strides = array<i32>} : memref<8x64x1xf32, #tpu.memory_space<vmem>>, vector<8x64x1xf32>,
      %cst_182 = arith.constant 0.000000e+00 : f32
      %294 = vector.broadcast %cst_182 : f32 to vector<8x64x1xf32>
      %c0_183 = arith.constant 0 : index
      %c0_184 = arith.constant 0 : index
      %c0_185 = arith.constant 0 : index
      %295 = vector.load %arg8[%c0_183, %c0_184, %c0_185] : memref<8x64x1xf32, #tpu.memory_space<vmem>>, vector<8x64x1xf32>
      tpu.vector_store %arg8[%c0_183, %c0_184, %c0_185], %294 {strides = array<i32>} : memref<8x64x1xf32, #tpu.memory_space<vmem>>, vector<8x64x1xf32>,
      %cst_186 = arith.constant 0.000000e+00 : f32
      %296 = vector.broadcast %cst_186 : f32 to vector<8x64x16xf32>
      %c0_187 = arith.constant 0 : index
      %c0_188 = arith.constant 0 : index
      %c0_189 = arith.constant 0 : index
      %297 = vector.load %arg9[%c0_187, %c0_188, %c0_189] : memref<8x64x16xf32, #tpu.memory_space<vmem>>, vector<8x64x16xf32>
      tpu.vector_store %arg9[%c0_187, %c0_188, %c0_189], %296 {strides = array<i32>} : memref<8x64x16xf32, #tpu.memory_space<vmem>>, vector<8x64x16xf32>,
    } else {
    }
    %c0 = arith.constant 0 : index
    %c0_1 = arith.constant 0 : index
    %c0_2 = arith.constant 0 : index
    %3 = vector.load %arg3[%c0, %c0_1, %c0_2] : memref<1x64x128xf32, #tpu.memory_space<vmem>>, vector<1x64x128xf32>
    %4 = vector.shape_cast %3 : vector<1x64x128xf32> to vector<64x128xf32>
    %c0_3 = arith.constant 0 : index
    %c0_4 = arith.constant 0 : index
    %c0_5 = arith.constant 0 : index
    %5 = vector.load %arg4[%c0_3, %c0_4, %c0_5] : memref<1x64x128xf32, #tpu.memory_space<vmem>>, vector<1x64x128xf32>
    %6 = vector.shape_cast %5 : vector<1x64x128xf32> to vector<64x128xf32>
    %c0_6 = arith.constant 0 : index
    %c0_7 = arith.constant 0 : index
    %c0_8 = arith.constant 0 : index
    %7 = vector.load %arg5[%c0_6, %c0_7, %c0_8] : memref<1x64x128xf32, #tpu.memory_space<vmem>>, vector<1x64x128xf32>
    %8 = vector.shape_cast %7 : vector<1x64x128xf32> to vector<64x128xf32>
    %9 = vector.extract_strided_slice %4 {offsets = [0, 0], sizes = [64, 16], strides = [1, 1]} : vector<64x128xf32> to vector<64x16xf32>
    %10 = vector.extract_strided_slice %6 {offsets = [0, 0], sizes = [64, 16], strides = [1, 1]} : vector<64x128xf32> to vector<64x16xf32>
    %11 = vector.extract_strided_slice %8 {offsets = [0, 0], sizes = [64, 16], strides = [1, 1]} : vector<64x128xf32> to vector<64x16xf32>
    "tpu.trace_start"() <{level = 10 : i32, message = "qd,kd->qk"}> : () -> ()
    %cst = arith.constant dense<0.000000e+00> : vector<64x64xf32>
    %12 = tpu.matmul %9, %10, %cst {dimension_numbers = #tpu.dot_dimension_numbers<[1], [1], [0], [0], [0, 0, 1, 0], [], []>} : vector<64x16xf32>, vector<64x16xf32>, vector<64x64xf32> -> vector<64x64xf32>
    "tpu.trace_stop"() : () -> ()
    %c0_9 = arith.constant 0 : index
    %c0_10 = arith.constant 0 : index
    %c0_11 = arith.constant 0 : index
    %13 = vector.load %arg7[%c0_9, %c0_10, %c0_11] : memref<8x64x1xf32, #tpu.memory_space<vmem>>, vector<1x64x1xf32>
    %14 = vector.shape_cast %13 : vector<1x64x1xf32> to vector<64x1xf32>
    %cst_12 = arith.constant dense<0xFF800000> : vector<64xf32>
    %15 = vector.multi_reduction <maximumf>, %12, %cst_12 [1] : vector<64x64xf32> to vector<64xf32>
    %16 = vector.shape_cast %15 : vector<64xf32> to vector<64x1xf32>
    %17 = arith.maximumf %14, %16 : vector<64x1xf32>
    %18 = arith.subf %14, %17 : vector<64x1xf32>
    %19 = math.exp %18 : vector<64x1xf32>
    %20 = vector.broadcast %17 : vector<64x1xf32> to vector<64x64xf32>
    %21 = arith.subf %12, %20 : vector<64x64xf32>
    %22 = math.exp %21 : vector<64x64xf32>
    %c0_13 = arith.constant 0 : index
    %c0_14 = arith.constant 0 : index
    %c0_15 = arith.constant 0 : index
    %23 = vector.load %arg8[%c0_13, %c0_14, %c0_15] : memref<8x64x1xf32, #tpu.memory_space<vmem>>, vector<1x64x1xf32>
    %24 = vector.shape_cast %23 : vector<1x64x1xf32> to vector<64x1xf32>
    %25 = arith.mulf %19, %24 : vector<64x1xf32>
    %cst_16 = arith.constant dense<0.000000e+00> : vector<64xf32>
    %26 = vector.multi_reduction <add>, %22, %cst_16 [1] : vector<64x64xf32> to vector<64xf32>
    %27 = vector.shape_cast %26 : vector<64xf32> to vector<64x1xf32>
    %28 = arith.addf %25, %27 : vector<64x1xf32>
    %c0_17 = arith.constant 0 : index
    %c0_18 = arith.constant 0 : index
    %c0_19 = arith.constant 0 : index
    %29 = vector.load %arg8[%c0_17, %c0_18, %c0_19] : memref<8x64x1xf32, #tpu.memory_space<vmem>>, vector<1x64x1xf32>
    %30 = vector.shape_cast %29 : vector<1x64x1xf32> to vector<64x1xf32>
    %31 = vector.shape_cast %28 : vector<64x1xf32> to vector<1x64x1xf32>
    tpu.vector_store %arg8[%c0_17, %c0_18, %c0_19], %31 {strides = array<i32>} : memref<8x64x1xf32, #tpu.memory_space<vmem>>, vector<1x64x1xf32>,
    %c0_20 = arith.constant 0 : index
    %c0_21 = arith.constant 0 : index
    %c0_22 = arith.constant 0 : index
    %32 = vector.load %arg9[%c0_20, %c0_21, %c0_22] : memref<8x64x16xf32, #tpu.memory_space<vmem>>, vector<1x64x16xf32>
    %33 = vector.shape_cast %32 : vector<1x64x16xf32> to vector<64x16xf32>
    %34 = vector.broadcast %19 : vector<64x1xf32> to vector<64x16xf32>
    %35 = arith.mulf %34, %33 : vector<64x16xf32>
    %cst_23 = arith.constant dense<0.000000e+00> : vector<64x16xf32>
    %36 = tpu.matmul %22, %11, %cst_23 {dimension_numbers = #tpu.dot_dimension_numbers<[1], [0], [0], [1], [0, 0, 1, 1], [], []>} : vector<64x64xf32>, vector<64x16xf32>, vector<64x16xf32> -> vector<64x16xf32>
    %37 = arith.addf %35, %36 : vector<64x16xf32>
    %c0_24 = arith.constant 0 : index
    %c0_25 = arith.constant 0 : index
    %c0_26 = arith.constant 0 : index
    %38 = vector.load %arg9[%c0_24, %c0_25, %c0_26] : memref<8x64x16xf32, #tpu.memory_space<vmem>>, vector<1x64x16xf32>
    %39 = vector.shape_cast %38 : vector<1x64x16xf32> to vector<64x16xf32>
    %40 = vector.shape_cast %37 : vector<64x16xf32> to vector<1x64x16xf32>
    tpu.vector_store %arg9[%c0_24, %c0_25, %c0_26], %40 {strides = array<i32>} : memref<8x64x16xf32, #tpu.memory_space<vmem>>, vector<1x64x16xf32>,
    %c0_27 = arith.constant 0 : index
    %c0_28 = arith.constant 0 : index
    %c0_29 = arith.constant 0 : index
    %41 = vector.load %arg7[%c0_27, %c0_28, %c0_29] : memref<8x64x1xf32, #tpu.memory_space<vmem>>, vector<1x64x1xf32>
    %42 = vector.shape_cast %41 : vector<1x64x1xf32> to vector<64x1xf32>
    %43 = vector.shape_cast %17 : vector<64x1xf32> to vector<1x64x1xf32>
    tpu.vector_store %arg7[%c0_27, %c0_28, %c0_29], %43 {strides = array<i32>} : memref<8x64x1xf32, #tpu.memory_space<vmem>>, vector<1x64x1xf32>,
    %44 = vector.extract_strided_slice %4 {offsets = [0, 16], sizes = [64, 16], strides = [1, 1]} : vector<64x128xf32> to vector<64x16xf32>
    %45 = vector.extract_strided_slice %6 {offsets = [0, 16], sizes = [64, 16], strides = [1, 1]} : vector<64x128xf32> to vector<64x16xf32>
    %46 = vector.extract_strided_slice %8 {offsets = [0, 16], sizes = [64, 16], strides = [1, 1]} : vector<64x128xf32> to vector<64x16xf32>
    "tpu.trace_start"() <{level = 10 : i32, message = "qd,kd->qk"}> : () -> ()
    %cst_30 = arith.constant dense<0.000000e+00> : vector<64x64xf32>
    %47 = tpu.matmul %44, %45, %cst_30 {dimension_numbers = #tpu.dot_dimension_numbers<[1], [1], [0], [0], [0, 0, 1, 0], [], []>} : vector<64x16xf32>, vector<64x16xf32>, vector<64x64xf32> -> vector<64x64xf32>
    "tpu.trace_stop"() : () -> ()
    %c1 = arith.constant 1 : index
    %c0_31 = arith.constant 0 : index
    %c0_32 = arith.constant 0 : index
    %48 = vector.load %arg7[%c1, %c0_31, %c0_32] : memref<8x64x1xf32, #tpu.memory_space<vmem>>, vector<1x64x1xf32>
    %49 = vector.shape_cast %48 : vector<1x64x1xf32> to vector<64x1xf32>
    %cst_33 = arith.constant dense<0xFF800000> : vector<64xf32>
    %50 = vector.multi_reduction <maximumf>, %47, %cst_33 [1] : vector<64x64xf32> to vector<64xf32>
    %51 = vector.shape_cast %50 : vector<64xf32> to vector<64x1xf32>
    %52 = arith.maximumf %49, %51 : vector<64x1xf32>
    %53 = arith.subf %49, %52 : vector<64x1xf32>
    %54 = math.exp %53 : vector<64x1xf32>
    %55 = vector.broadcast %52 : vector<64x1xf32> to vector<64x64xf32>
    %56 = arith.subf %47, %55 : vector<64x64xf32>
    %57 = math.exp %56 : vector<64x64xf32>
    %c1_34 = arith.constant 1 : index
    %c0_35 = arith.constant 0 : index
    %c0_36 = arith.constant 0 : index
    %58 = vector.load %arg8[%c1_34, %c0_35, %c0_36] : memref<8x64x1xf32, #tpu.memory_space<vmem>>, vector<1x64x1xf32>
    %59 = vector.shape_cast %58 : vector<1x64x1xf32> to vector<64x1xf32>
    %60 = arith.mulf %54, %59 : vector<64x1xf32>
    %cst_37 = arith.constant dense<0.000000e+00> : vector<64xf32>
    %61 = vector.multi_reduction <add>, %57, %cst_37 [1] : vector<64x64xf32> to vector<64xf32>
    %62 = vector.shape_cast %61 : vector<64xf32> to vector<64x1xf32>
    %63 = arith.addf %60, %62 : vector<64x1xf32>
    %c1_38 = arith.constant 1 : index
    %c0_39 = arith.constant 0 : index
    %c0_40 = arith.constant 0 : index
    %64 = vector.load %arg8[%c1_38, %c0_39, %c0_40] : memref<8x64x1xf32, #tpu.memory_space<vmem>>, vector<1x64x1xf32>
    %65 = vector.shape_cast %64 : vector<1x64x1xf32> to vector<64x1xf32>
    %66 = vector.shape_cast %63 : vector<64x1xf32> to vector<1x64x1xf32>
    tpu.vector_store %arg8[%c1_38, %c0_39, %c0_40], %66 {strides = array<i32>} : memref<8x64x1xf32, #tpu.memory_space<vmem>>, vector<1x64x1xf32>,
    %c1_41 = arith.constant 1 : index
    %c0_42 = arith.constant 0 : index
    %c0_43 = arith.constant 0 : index
    %67 = vector.load %arg9[%c1_41, %c0_42, %c0_43] : memref<8x64x16xf32, #tpu.memory_space<vmem>>, vector<1x64x16xf32>
    %68 = vector.shape_cast %67 : vector<1x64x16xf32> to vector<64x16xf32>
    %69 = vector.broadcast %54 : vector<64x1xf32> to vector<64x16xf32>
    %70 = arith.mulf %69, %68 : vector<64x16xf32>
    %cst_44 = arith.constant dense<0.000000e+00> : vector<64x16xf32>
    %71 = tpu.matmul %57, %46, %cst_44 {dimension_numbers = #tpu.dot_dimension_numbers<[1], [0], [0], [1], [0, 0, 1, 1], [], []>} : vector<64x64xf32>, vector<64x16xf32>, vector<64x16xf32> -> vector<64x16xf32>
    %72 = arith.addf %70, %71 : vector<64x16xf32>
    %c1_45 = arith.constant 1 : index
    %c0_46 = arith.constant 0 : index
    %c0_47 = arith.constant 0 : index
    %73 = vector.load %arg9[%c1_45, %c0_46, %c0_47] : memref<8x64x16xf32, #tpu.memory_space<vmem>>, vector<1x64x16xf32>
    %74 = vector.shape_cast %73 : vector<1x64x16xf32> to vector<64x16xf32>
    %75 = vector.shape_cast %72 : vector<64x16xf32> to vector<1x64x16xf32>
    tpu.vector_store %arg9[%c1_45, %c0_46, %c0_47], %75 {strides = array<i32>} : memref<8x64x16xf32, #tpu.memory_space<vmem>>, vector<1x64x16xf32>,
    %c1_48 = arith.constant 1 : index
    %c0_49 = arith.constant 0 : index
    %c0_50 = arith.constant 0 : index
    %76 = vector.load %arg7[%c1_48, %c0_49, %c0_50] : memref<8x64x1xf32, #tpu.memory_space<vmem>>, vector<1x64x1xf32>
    %77 = vector.shape_cast %76 : vector<1x64x1xf32> to vector<64x1xf32>
    %78 = vector.shape_cast %52 : vector<64x1xf32> to vector<1x64x1xf32>
    tpu.vector_store %arg7[%c1_48, %c0_49, %c0_50], %78 {strides = array<i32>} : memref<8x64x1xf32, #tpu.memory_space<vmem>>, vector<1x64x1xf32>,
    %79 = vector.extract_strided_slice %4 {offsets = [0, 32], sizes = [64, 16], strides = [1, 1]} : vector<64x128xf32> to vector<64x16xf32>
    %80 = vector.extract_strided_slice %6 {offsets = [0, 32], sizes = [64, 16], strides = [1, 1]} : vector<64x128xf32> to vector<64x16xf32>
    %81 = vector.extract_strided_slice %8 {offsets = [0, 32], sizes = [64, 16], strides = [1, 1]} : vector<64x128xf32> to vector<64x16xf32>
    "tpu.trace_start"() <{level = 10 : i32, message = "qd,kd->qk"}> : () -> ()
    %cst_51 = arith.constant dense<0.000000e+00> : vector<64x64xf32>
    %82 = tpu.matmul %79, %80, %cst_51 {dimension_numbers = #tpu.dot_dimension_numbers<[1], [1], [0], [0], [0, 0, 1, 0], [], []>} : vector<64x16xf32>, vector<64x16xf32>, vector<64x64xf32> -> vector<64x64xf32>
    "tpu.trace_stop"() : () -> ()
    %c2 = arith.constant 2 : index
    %c0_52 = arith.constant 0 : index
    %c0_53 = arith.constant 0 : index
    %83 = vector.load %arg7[%c2, %c0_52, %c0_53] : memref<8x64x1xf32, #tpu.memory_space<vmem>>, vector<1x64x1xf32>
    %84 = vector.shape_cast %83 : vector<1x64x1xf32> to vector<64x1xf32>
    %cst_54 = arith.constant dense<0xFF800000> : vector<64xf32>
    %85 = vector.multi_reduction <maximumf>, %82, %cst_54 [1] : vector<64x64xf32> to vector<64xf32>
    %86 = vector.shape_cast %85 : vector<64xf32> to vector<64x1xf32>
    %87 = arith.maximumf %84, %86 : vector<64x1xf32>
    %88 = arith.subf %84, %87 : vector<64x1xf32>
    %89 = math.exp %88 : vector<64x1xf32>
    %90 = vector.broadcast %87 : vector<64x1xf32> to vector<64x64xf32>
    %91 = arith.subf %82, %90 : vector<64x64xf32>
    %92 = math.exp %91 : vector<64x64xf32>
    %c2_55 = arith.constant 2 : index
    %c0_56 = arith.constant 0 : index
    %c0_57 = arith.constant 0 : index
    %93 = vector.load %arg8[%c2_55, %c0_56, %c0_57] : memref<8x64x1xf32, #tpu.memory_space<vmem>>, vector<1x64x1xf32>
    %94 = vector.shape_cast %93 : vector<1x64x1xf32> to vector<64x1xf32>
    %95 = arith.mulf %89, %94 : vector<64x1xf32>
    %cst_58 = arith.constant dense<0.000000e+00> : vector<64xf32>
    %96 = vector.multi_reduction <add>, %92, %cst_58 [1] : vector<64x64xf32> to vector<64xf32>
    %97 = vector.shape_cast %96 : vector<64xf32> to vector<64x1xf32>
    %98 = arith.addf %95, %97 : vector<64x1xf32>
    %c2_59 = arith.constant 2 : index
    %c0_60 = arith.constant 0 : index
    %c0_61 = arith.constant 0 : index
    %99 = vector.load %arg8[%c2_59, %c0_60, %c0_61] : memref<8x64x1xf32, #tpu.memory_space<vmem>>, vector<1x64x1xf32>
    %100 = vector.shape_cast %99 : vector<1x64x1xf32> to vector<64x1xf32>
    %101 = vector.shape_cast %98 : vector<64x1xf32> to vector<1x64x1xf32>
    tpu.vector_store %arg8[%c2_59, %c0_60, %c0_61], %101 {strides = array<i32>} : memref<8x64x1xf32, #tpu.memory_space<vmem>>, vector<1x64x1xf32>,
    %c2_62 = arith.constant 2 : index
    %c0_63 = arith.constant 0 : index
    %c0_64 = arith.constant 0 : index
    %102 = vector.load %arg9[%c2_62, %c0_63, %c0_64] : memref<8x64x16xf32, #tpu.memory_space<vmem>>, vector<1x64x16xf32>
    %103 = vector.shape_cast %102 : vector<1x64x16xf32> to vector<64x16xf32>
    %104 = vector.broadcast %89 : vector<64x1xf32> to vector<64x16xf32>
    %105 = arith.mulf %104, %103 : vector<64x16xf32>
    %cst_65 = arith.constant dense<0.000000e+00> : vector<64x16xf32>
    %106 = tpu.matmul %92, %81, %cst_65 {dimension_numbers = #tpu.dot_dimension_numbers<[1], [0], [0], [1], [0, 0, 1, 1], [], []>} : vector<64x64xf32>, vector<64x16xf32>, vector<64x16xf32> -> vector<64x16xf32>
    %107 = arith.addf %105, %106 : vector<64x16xf32>
    %c2_66 = arith.constant 2 : index
    %c0_67 = arith.constant 0 : index
    %c0_68 = arith.constant 0 : index
    %108 = vector.load %arg9[%c2_66, %c0_67, %c0_68] : memref<8x64x16xf32, #tpu.memory_space<vmem>>, vector<1x64x16xf32>
    %109 = vector.shape_cast %108 : vector<1x64x16xf32> to vector<64x16xf32>
    %110 = vector.shape_cast %107 : vector<64x16xf32> to vector<1x64x16xf32>
    tpu.vector_store %arg9[%c2_66, %c0_67, %c0_68], %110 {strides = array<i32>} : memref<8x64x16xf32, #tpu.memory_space<vmem>>, vector<1x64x16xf32>,
    %c2_69 = arith.constant 2 : index
    %c0_70 = arith.constant 0 : index
    %c0_71 = arith.constant 0 : index
    %111 = vector.load %arg7[%c2_69, %c0_70, %c0_71] : memref<8x64x1xf32, #tpu.memory_space<vmem>>, vector<1x64x1xf32>
    %112 = vector.shape_cast %111 : vector<1x64x1xf32> to vector<64x1xf32>
    %113 = vector.shape_cast %87 : vector<64x1xf32> to vector<1x64x1xf32>
    tpu.vector_store %arg7[%c2_69, %c0_70, %c0_71], %113 {strides = array<i32>} : memref<8x64x1xf32, #tpu.memory_space<vmem>>, vector<1x64x1xf32>,
    %114 = vector.extract_strided_slice %4 {offsets = [0, 48], sizes = [64, 16], strides = [1, 1]} : vector<64x128xf32> to vector<64x16xf32>
    %115 = vector.extract_strided_slice %6 {offsets = [0, 48], sizes = [64, 16], strides = [1, 1]} : vector<64x128xf32> to vector<64x16xf32>
    %116 = vector.extract_strided_slice %8 {offsets = [0, 48], sizes = [64, 16], strides = [1, 1]} : vector<64x128xf32> to vector<64x16xf32>
    "tpu.trace_start"() <{level = 10 : i32, message = "qd,kd->qk"}> : () -> ()
    %cst_72 = arith.constant dense<0.000000e+00> : vector<64x64xf32>
    %117 = tpu.matmul %114, %115, %cst_72 {dimension_numbers = #tpu.dot_dimension_numbers<[1], [1], [0], [0], [0, 0, 1, 0], [], []>} : vector<64x16xf32>, vector<64x16xf32>, vector<64x64xf32> -> vector<64x64xf32>
    "tpu.trace_stop"() : () -> ()
    %c3 = arith.constant 3 : index
    %c0_73 = arith.constant 0 : index
    %c0_74 = arith.constant 0 : index
    %118 = vector.load %arg7[%c3, %c0_73, %c0_74] : memref<8x64x1xf32, #tpu.memory_space<vmem>>, vector<1x64x1xf32>
    %119 = vector.shape_cast %118 : vector<1x64x1xf32> to vector<64x1xf32>
    %cst_75 = arith.constant dense<0xFF800000> : vector<64xf32>
    %120 = vector.multi_reduction <maximumf>, %117, %cst_75 [1] : vector<64x64xf32> to vector<64xf32>
    %121 = vector.shape_cast %120 : vector<64xf32> to vector<64x1xf32>
    %122 = arith.maximumf %119, %121 : vector<64x1xf32>
    %123 = arith.subf %119, %122 : vector<64x1xf32>
    %124 = math.exp %123 : vector<64x1xf32>
    %125 = vector.broadcast %122 : vector<64x1xf32> to vector<64x64xf32>
    %126 = arith.subf %117, %125 : vector<64x64xf32>
    %127 = math.exp %126 : vector<64x64xf32>
    %c3_76 = arith.constant 3 : index
    %c0_77 = arith.constant 0 : index
    %c0_78 = arith.constant 0 : index
    %128 = vector.load %arg8[%c3_76, %c0_77, %c0_78] : memref<8x64x1xf32, #tpu.memory_space<vmem>>, vector<1x64x1xf32>
    %129 = vector.shape_cast %128 : vector<1x64x1xf32> to vector<64x1xf32>
    %130 = arith.mulf %124, %129 : vector<64x1xf32>
    %cst_79 = arith.constant dense<0.000000e+00> : vector<64xf32>
    %131 = vector.multi_reduction <add>, %127, %cst_79 [1] : vector<64x64xf32> to vector<64xf32>
    %132 = vector.shape_cast %131 : vector<64xf32> to vector<64x1xf32>
    %133 = arith.addf %130, %132 : vector<64x1xf32>
    %c3_80 = arith.constant 3 : index
    %c0_81 = arith.constant 0 : index
    %c0_82 = arith.constant 0 : index
    %134 = vector.load %arg8[%c3_80, %c0_81, %c0_82] : memref<8x64x1xf32, #tpu.memory_space<vmem>>, vector<1x64x1xf32>
    %135 = vector.shape_cast %134 : vector<1x64x1xf32> to vector<64x1xf32>
    %136 = vector.shape_cast %133 : vector<64x1xf32> to vector<1x64x1xf32>
    tpu.vector_store %arg8[%c3_80, %c0_81, %c0_82], %136 {strides = array<i32>} : memref<8x64x1xf32, #tpu.memory_space<vmem>>, vector<1x64x1xf32>,
    %c3_83 = arith.constant 3 : index
    %c0_84 = arith.constant 0 : index
    %c0_85 = arith.constant 0 : index
    %137 = vector.load %arg9[%c3_83, %c0_84, %c0_85] : memref<8x64x16xf32, #tpu.memory_space<vmem>>, vector<1x64x16xf32>
    %138 = vector.shape_cast %137 : vector<1x64x16xf32> to vector<64x16xf32>
    %139 = vector.broadcast %124 : vector<64x1xf32> to vector<64x16xf32>
    %140 = arith.mulf %139, %138 : vector<64x16xf32>
    %cst_86 = arith.constant dense<0.000000e+00> : vector<64x16xf32>
    %141 = tpu.matmul %127, %116, %cst_86 {dimension_numbers = #tpu.dot_dimension_numbers<[1], [0], [0], [1], [0, 0, 1, 1], [], []>} : vector<64x64xf32>, vector<64x16xf32>, vector<64x16xf32> -> vector<64x16xf32>
    %142 = arith.addf %140, %141 : vector<64x16xf32>
    %c3_87 = arith.constant 3 : index
    %c0_88 = arith.constant 0 : index
    %c0_89 = arith.constant 0 : index
    %143 = vector.load %arg9[%c3_87, %c0_88, %c0_89] : memref<8x64x16xf32, #tpu.memory_space<vmem>>, vector<1x64x16xf32>
    %144 = vector.shape_cast %143 : vector<1x64x16xf32> to vector<64x16xf32>
    %145 = vector.shape_cast %142 : vector<64x16xf32> to vector<1x64x16xf32>
    tpu.vector_store %arg9[%c3_87, %c0_88, %c0_89], %145 {strides = array<i32>} : memref<8x64x16xf32, #tpu.memory_space<vmem>>, vector<1x64x16xf32>,
    %c3_90 = arith.constant 3 : index
    %c0_91 = arith.constant 0 : index
    %c0_92 = arith.constant 0 : index
    %146 = vector.load %arg7[%c3_90, %c0_91, %c0_92] : memref<8x64x1xf32, #tpu.memory_space<vmem>>, vector<1x64x1xf32>
    %147 = vector.shape_cast %146 : vector<1x64x1xf32> to vector<64x1xf32>
    %148 = vector.shape_cast %122 : vector<64x1xf32> to vector<1x64x1xf32>
    tpu.vector_store %arg7[%c3_90, %c0_91, %c0_92], %148 {strides = array<i32>} : memref<8x64x1xf32, #tpu.memory_space<vmem>>, vector<1x64x1xf32>,
    %149 = vector.extract_strided_slice %4 {offsets = [0, 64], sizes = [64, 16], strides = [1, 1]} : vector<64x128xf32> to vector<64x16xf32>
    %150 = vector.extract_strided_slice %6 {offsets = [0, 64], sizes = [64, 16], strides = [1, 1]} : vector<64x128xf32> to vector<64x16xf32>
    %151 = vector.extract_strided_slice %8 {offsets = [0, 64], sizes = [64, 16], strides = [1, 1]} : vector<64x128xf32> to vector<64x16xf32>
    "tpu.trace_start"() <{level = 10 : i32, message = "qd,kd->qk"}> : () -> ()
    %cst_93 = arith.constant dense<0.000000e+00> : vector<64x64xf32>
    %152 = tpu.matmul %149, %150, %cst_93 {dimension_numbers = #tpu.dot_dimension_numbers<[1], [1], [0], [0], [0, 0, 1, 0], [], []>} : vector<64x16xf32>, vector<64x16xf32>, vector<64x64xf32> -> vector<64x64xf32>
    "tpu.trace_stop"() : () -> ()
    %c4 = arith.constant 4 : index
    %c0_94 = arith.constant 0 : index
    %c0_95 = arith.constant 0 : index
    %153 = vector.load %arg7[%c4, %c0_94, %c0_95] : memref<8x64x1xf32, #tpu.memory_space<vmem>>, vector<1x64x1xf32>
    %154 = vector.shape_cast %153 : vector<1x64x1xf32> to vector<64x1xf32>
    %cst_96 = arith.constant dense<0xFF800000> : vector<64xf32>
    %155 = vector.multi_reduction <maximumf>, %152, %cst_96 [1] : vector<64x64xf32> to vector<64xf32>
    %156 = vector.shape_cast %155 : vector<64xf32> to vector<64x1xf32>
    %157 = arith.maximumf %154, %156 : vector<64x1xf32>
    %158 = arith.subf %154, %157 : vector<64x1xf32>
    %159 = math.exp %158 : vector<64x1xf32>
    %160 = vector.broadcast %157 : vector<64x1xf32> to vector<64x64xf32>
    %161 = arith.subf %152, %160 : vector<64x64xf32>
    %162 = math.exp %161 : vector<64x64xf32>
    %c4_97 = arith.constant 4 : index
    %c0_98 = arith.constant 0 : index
    %c0_99 = arith.constant 0 : index
    %163 = vector.load %arg8[%c4_97, %c0_98, %c0_99] : memref<8x64x1xf32, #tpu.memory_space<vmem>>, vector<1x64x1xf32>
    %164 = vector.shape_cast %163 : vector<1x64x1xf32> to vector<64x1xf32>
    %165 = arith.mulf %159, %164 : vector<64x1xf32>
    %cst_100 = arith.constant dense<0.000000e+00> : vector<64xf32>
    %166 = vector.multi_reduction <add>, %162, %cst_100 [1] : vector<64x64xf32> to vector<64xf32>
    %167 = vector.shape_cast %166 : vector<64xf32> to vector<64x1xf32>
    %168 = arith.addf %165, %167 : vector<64x1xf32>
    %c4_101 = arith.constant 4 : index
    %c0_102 = arith.constant 0 : index
    %c0_103 = arith.constant 0 : index
    %169 = vector.load %arg8[%c4_101, %c0_102, %c0_103] : memref<8x64x1xf32, #tpu.memory_space<vmem>>, vector<1x64x1xf32>
    %170 = vector.shape_cast %169 : vector<1x64x1xf32> to vector<64x1xf32>
    %171 = vector.shape_cast %168 : vector<64x1xf32> to vector<1x64x1xf32>
    tpu.vector_store %arg8[%c4_101, %c0_102, %c0_103], %171 {strides = array<i32>} : memref<8x64x1xf32, #tpu.memory_space<vmem>>, vector<1x64x1xf32>,
    %c4_104 = arith.constant 4 : index
    %c0_105 = arith.constant 0 : index
    %c0_106 = arith.constant 0 : index
    %172 = vector.load %arg9[%c4_104, %c0_105, %c0_106] : memref<8x64x16xf32, #tpu.memory_space<vmem>>, vector<1x64x16xf32>
    %173 = vector.shape_cast %172 : vector<1x64x16xf32> to vector<64x16xf32>
    %174 = vector.broadcast %159 : vector<64x1xf32> to vector<64x16xf32>
    %175 = arith.mulf %174, %173 : vector<64x16xf32>
    %cst_107 = arith.constant dense<0.000000e+00> : vector<64x16xf32>
    %176 = tpu.matmul %162, %151, %cst_107 {dimension_numbers = #tpu.dot_dimension_numbers<[1], [0], [0], [1], [0, 0, 1, 1], [], []>} : vector<64x64xf32>, vector<64x16xf32>, vector<64x16xf32> -> vector<64x16xf32>
    %177 = arith.addf %175, %176 : vector<64x16xf32>
    %c4_108 = arith.constant 4 : index
    %c0_109 = arith.constant 0 : index
    %c0_110 = arith.constant 0 : index
    %178 = vector.load %arg9[%c4_108, %c0_109, %c0_110] : memref<8x64x16xf32, #tpu.memory_space<vmem>>, vector<1x64x16xf32>
    %179 = vector.shape_cast %178 : vector<1x64x16xf32> to vector<64x16xf32>
    %180 = vector.shape_cast %177 : vector<64x16xf32> to vector<1x64x16xf32>
    tpu.vector_store %arg9[%c4_108, %c0_109, %c0_110], %180 {strides = array<i32>} : memref<8x64x16xf32, #tpu.memory_space<vmem>>, vector<1x64x16xf32>,
    %c4_111 = arith.constant 4 : index
    %c0_112 = arith.constant 0 : index
    %c0_113 = arith.constant 0 : index
    %181 = vector.load %arg7[%c4_111, %c0_112, %c0_113] : memref<8x64x1xf32, #tpu.memory_space<vmem>>, vector<1x64x1xf32>
    %182 = vector.shape_cast %181 : vector<1x64x1xf32> to vector<64x1xf32>
    %183 = vector.shape_cast %157 : vector<64x1xf32> to vector<1x64x1xf32>
    tpu.vector_store %arg7[%c4_111, %c0_112, %c0_113], %183 {strides = array<i32>} : memref<8x64x1xf32, #tpu.memory_space<vmem>>, vector<1x64x1xf32>,
    %184 = vector.extract_strided_slice %4 {offsets = [0, 80], sizes = [64, 16], strides = [1, 1]} : vector<64x128xf32> to vector<64x16xf32>
    %185 = vector.extract_strided_slice %6 {offsets = [0, 80], sizes = [64, 16], strides = [1, 1]} : vector<64x128xf32> to vector<64x16xf32>
    %186 = vector.extract_strided_slice %8 {offsets = [0, 80], sizes = [64, 16], strides = [1, 1]} : vector<64x128xf32> to vector<64x16xf32>
    "tpu.trace_start"() <{level = 10 : i32, message = "qd,kd->qk"}> : () -> ()
    %cst_114 = arith.constant dense<0.000000e+00> : vector<64x64xf32>
    %187 = tpu.matmul %184, %185, %cst_114 {dimension_numbers = #tpu.dot_dimension_numbers<[1], [1], [0], [0], [0, 0, 1, 0], [], []>} : vector<64x16xf32>, vector<64x16xf32>, vector<64x64xf32> -> vector<64x64xf32>
    "tpu.trace_stop"() : () -> ()
    %c5 = arith.constant 5 : index
    %c0_115 = arith.constant 0 : index
    %c0_116 = arith.constant 0 : index
    %188 = vector.load %arg7[%c5, %c0_115, %c0_116] : memref<8x64x1xf32, #tpu.memory_space<vmem>>, vector<1x64x1xf32>
    %189 = vector.shape_cast %188 : vector<1x64x1xf32> to vector<64x1xf32>
    %cst_117 = arith.constant dense<0xFF800000> : vector<64xf32>
    %190 = vector.multi_reduction <maximumf>, %187, %cst_117 [1] : vector<64x64xf32> to vector<64xf32>
    %191 = vector.shape_cast %190 : vector<64xf32> to vector<64x1xf32>
    %192 = arith.maximumf %189, %191 : vector<64x1xf32>
    %193 = arith.subf %189, %192 : vector<64x1xf32>
    %194 = math.exp %193 : vector<64x1xf32>
    %195 = vector.broadcast %192 : vector<64x1xf32> to vector<64x64xf32>
    %196 = arith.subf %187, %195 : vector<64x64xf32>
    %197 = math.exp %196 : vector<64x64xf32>
    %c5_118 = arith.constant 5 : index
    %c0_119 = arith.constant 0 : index
    %c0_120 = arith.constant 0 : index
    %198 = vector.load %arg8[%c5_118, %c0_119, %c0_120] : memref<8x64x1xf32, #tpu.memory_space<vmem>>, vector<1x64x1xf32>
    %199 = vector.shape_cast %198 : vector<1x64x1xf32> to vector<64x1xf32>
    %200 = arith.mulf %194, %199 : vector<64x1xf32>
    %cst_121 = arith.constant dense<0.000000e+00> : vector<64xf32>
    %201 = vector.multi_reduction <add>, %197, %cst_121 [1] : vector<64x64xf32> to vector<64xf32>
    %202 = vector.shape_cast %201 : vector<64xf32> to vector<64x1xf32>
    %203 = arith.addf %200, %202 : vector<64x1xf32>
    %c5_122 = arith.constant 5 : index
    %c0_123 = arith.constant 0 : index
    %c0_124 = arith.constant 0 : index
    %204 = vector.load %arg8[%c5_122, %c0_123, %c0_124] : memref<8x64x1xf32, #tpu.memory_space<vmem>>, vector<1x64x1xf32>
    %205 = vector.shape_cast %204 : vector<1x64x1xf32> to vector<64x1xf32>
    %206 = vector.shape_cast %203 : vector<64x1xf32> to vector<1x64x1xf32>
    tpu.vector_store %arg8[%c5_122, %c0_123, %c0_124], %206 {strides = array<i32>} : memref<8x64x1xf32, #tpu.memory_space<vmem>>, vector<1x64x1xf32>,
    %c5_125 = arith.constant 5 : index
    %c0_126 = arith.constant 0 : index
    %c0_127 = arith.constant 0 : index
    %207 = vector.load %arg9[%c5_125, %c0_126, %c0_127] : memref<8x64x16xf32, #tpu.memory_space<vmem>>, vector<1x64x16xf32>
    %208 = vector.shape_cast %207 : vector<1x64x16xf32> to vector<64x16xf32>
    %209 = vector.broadcast %194 : vector<64x1xf32> to vector<64x16xf32>
    %210 = arith.mulf %209, %208 : vector<64x16xf32>
    %cst_128 = arith.constant dense<0.000000e+00> : vector<64x16xf32>
    %211 = tpu.matmul %197, %186, %cst_128 {dimension_numbers = #tpu.dot_dimension_numbers<[1], [0], [0], [1], [0, 0, 1, 1], [], []>} : vector<64x64xf32>, vector<64x16xf32>, vector<64x16xf32> -> vector<64x16xf32>
    %212 = arith.addf %210, %211 : vector<64x16xf32>
    %c5_129 = arith.constant 5 : index
    %c0_130 = arith.constant 0 : index
    %c0_131 = arith.constant 0 : index
    %213 = vector.load %arg9[%c5_129, %c0_130, %c0_131] : memref<8x64x16xf32, #tpu.memory_space<vmem>>, vector<1x64x16xf32>
    %214 = vector.shape_cast %213 : vector<1x64x16xf32> to vector<64x16xf32>
    %215 = vector.shape_cast %212 : vector<64x16xf32> to vector<1x64x16xf32>
    tpu.vector_store %arg9[%c5_129, %c0_130, %c0_131], %215 {strides = array<i32>} : memref<8x64x16xf32, #tpu.memory_space<vmem>>, vector<1x64x16xf32>,
    %c5_132 = arith.constant 5 : index
    %c0_133 = arith.constant 0 : index
    %c0_134 = arith.constant 0 : index
    %216 = vector.load %arg7[%c5_132, %c0_133, %c0_134] : memref<8x64x1xf32, #tpu.memory_space<vmem>>, vector<1x64x1xf32>
    %217 = vector.shape_cast %216 : vector<1x64x1xf32> to vector<64x1xf32>
    %218 = vector.shape_cast %192 : vector<64x1xf32> to vector<1x64x1xf32>
    tpu.vector_store %arg7[%c5_132, %c0_133, %c0_134], %218 {strides = array<i32>} : memref<8x64x1xf32, #tpu.memory_space<vmem>>, vector<1x64x1xf32>,
    %219 = vector.extract_strided_slice %4 {offsets = [0, 96], sizes = [64, 16], strides = [1, 1]} : vector<64x128xf32> to vector<64x16xf32>
    %220 = vector.extract_strided_slice %6 {offsets = [0, 96], sizes = [64, 16], strides = [1, 1]} : vector<64x128xf32> to vector<64x16xf32>
    %221 = vector.extract_strided_slice %8 {offsets = [0, 96], sizes = [64, 16], strides = [1, 1]} : vector<64x128xf32> to vector<64x16xf32>
    "tpu.trace_start"() <{level = 10 : i32, message = "qd,kd->qk"}> : () -> ()
    %cst_135 = arith.constant dense<0.000000e+00> : vector<64x64xf32>
    %222 = tpu.matmul %219, %220, %cst_135 {dimension_numbers = #tpu.dot_dimension_numbers<[1], [1], [0], [0], [0, 0, 1, 0], [], []>} : vector<64x16xf32>, vector<64x16xf32>, vector<64x64xf32> -> vector<64x64xf32>
    "tpu.trace_stop"() : () -> ()
    %c6 = arith.constant 6 : index
    %c0_136 = arith.constant 0 : index
    %c0_137 = arith.constant 0 : index
    %223 = vector.load %arg7[%c6, %c0_136, %c0_137] : memref<8x64x1xf32, #tpu.memory_space<vmem>>, vector<1x64x1xf32>
    %224 = vector.shape_cast %223 : vector<1x64x1xf32> to vector<64x1xf32>
    %cst_138 = arith.constant dense<0xFF800000> : vector<64xf32>
    %225 = vector.multi_reduction <maximumf>, %222, %cst_138 [1] : vector<64x64xf32> to vector<64xf32>
    %226 = vector.shape_cast %225 : vector<64xf32> to vector<64x1xf32>
    %227 = arith.maximumf %224, %226 : vector<64x1xf32>
    %228 = arith.subf %224, %227 : vector<64x1xf32>
    %229 = math.exp %228 : vector<64x1xf32>
    %230 = vector.broadcast %227 : vector<64x1xf32> to vector<64x64xf32>
    %231 = arith.subf %222, %230 : vector<64x64xf32>
    %232 = math.exp %231 : vector<64x64xf32>
    %c6_139 = arith.constant 6 : index
    %c0_140 = arith.constant 0 : index
    %c0_141 = arith.constant 0 : index
    %233 = vector.load %arg8[%c6_139, %c0_140, %c0_141] : memref<8x64x1xf32, #tpu.memory_space<vmem>>, vector<1x64x1xf32>
    %234 = vector.shape_cast %233 : vector<1x64x1xf32> to vector<64x1xf32>
    %235 = arith.mulf %229, %234 : vector<64x1xf32>
    %cst_142 = arith.constant dense<0.000000e+00> : vector<64xf32>
    %236 = vector.multi_reduction <add>, %232, %cst_142 [1] : vector<64x64xf32> to vector<64xf32>
    %237 = vector.shape_cast %236 : vector<64xf32> to vector<64x1xf32>
    %238 = arith.addf %235, %237 : vector<64x1xf32>
    %c6_143 = arith.constant 6 : index
    %c0_144 = arith.constant 0 : index
    %c0_145 = arith.constant 0 : index
    %239 = vector.load %arg8[%c6_143, %c0_144, %c0_145] : memref<8x64x1xf32, #tpu.memory_space<vmem>>, vector<1x64x1xf32>
    %240 = vector.shape_cast %239 : vector<1x64x1xf32> to vector<64x1xf32>
    %241 = vector.shape_cast %238 : vector<64x1xf32> to vector<1x64x1xf32>
    tpu.vector_store %arg8[%c6_143, %c0_144, %c0_145], %241 {strides = array<i32>} : memref<8x64x1xf32, #tpu.memory_space<vmem>>, vector<1x64x1xf32>,
    %c6_146 = arith.constant 6 : index
    %c0_147 = arith.constant 0 : index
    %c0_148 = arith.constant 0 : index
    %242 = vector.load %arg9[%c6_146, %c0_147, %c0_148] : memref<8x64x16xf32, #tpu.memory_space<vmem>>, vector<1x64x16xf32>
    %243 = vector.shape_cast %242 : vector<1x64x16xf32> to vector<64x16xf32>
    %244 = vector.broadcast %229 : vector<64x1xf32> to vector<64x16xf32>
    %245 = arith.mulf %244, %243 : vector<64x16xf32>
    %cst_149 = arith.constant dense<0.000000e+00> : vector<64x16xf32>
    %246 = tpu.matmul %232, %221, %cst_149 {dimension_numbers = #tpu.dot_dimension_numbers<[1], [0], [0], [1], [0, 0, 1, 1], [], []>} : vector<64x64xf32>, vector<64x16xf32>, vector<64x16xf32> -> vector<64x16xf32>
    %247 = arith.addf %245, %246 : vector<64x16xf32>
    %c6_150 = arith.constant 6 : index
    %c0_151 = arith.constant 0 : index
    %c0_152 = arith.constant 0 : index
    %248 = vector.load %arg9[%c6_150, %c0_151, %c0_152] : memref<8x64x16xf32, #tpu.memory_space<vmem>>, vector<1x64x16xf32>
    %249 = vector.shape_cast %248 : vector<1x64x16xf32> to vector<64x16xf32>
    %250 = vector.shape_cast %247 : vector<64x16xf32> to vector<1x64x16xf32>
    tpu.vector_store %arg9[%c6_150, %c0_151, %c0_152], %250 {strides = array<i32>} : memref<8x64x16xf32, #tpu.memory_space<vmem>>, vector<1x64x16xf32>,
    %c6_153 = arith.constant 6 : index
    %c0_154 = arith.constant 0 : index
    %c0_155 = arith.constant 0 : index
    %251 = vector.load %arg7[%c6_153, %c0_154, %c0_155] : memref<8x64x1xf32, #tpu.memory_space<vmem>>, vector<1x64x1xf32>
    %252 = vector.shape_cast %251 : vector<1x64x1xf32> to vector<64x1xf32>
    %253 = vector.shape_cast %227 : vector<64x1xf32> to vector<1x64x1xf32>
    tpu.vector_store %arg7[%c6_153, %c0_154, %c0_155], %253 {strides = array<i32>} : memref<8x64x1xf32, #tpu.memory_space<vmem>>, vector<1x64x1xf32>,
    %254 = vector.extract_strided_slice %4 {offsets = [0, 112], sizes = [64, 16], strides = [1, 1]} : vector<64x128xf32> to vector<64x16xf32>
    %255 = vector.extract_strided_slice %6 {offsets = [0, 112], sizes = [64, 16], strides = [1, 1]} : vector<64x128xf32> to vector<64x16xf32>
    %256 = vector.extract_strided_slice %8 {offsets = [0, 112], sizes = [64, 16], strides = [1, 1]} : vector<64x128xf32> to vector<64x16xf32>
    "tpu.trace_start"() <{level = 10 : i32, message = "qd,kd->qk"}> : () -> ()
    %cst_156 = arith.constant dense<0.000000e+00> : vector<64x64xf32>
    %257 = tpu.matmul %254, %255, %cst_156 {dimension_numbers = #tpu.dot_dimension_numbers<[1], [1], [0], [0], [0, 0, 1, 0], [], []>} : vector<64x16xf32>, vector<64x16xf32>, vector<64x64xf32> -> vector<64x64xf32>
    "tpu.trace_stop"() : () -> ()
    %c7 = arith.constant 7 : index
    %c0_157 = arith.constant 0 : index
    %c0_158 = arith.constant 0 : index
    %258 = vector.load %arg7[%c7, %c0_157, %c0_158] : memref<8x64x1xf32, #tpu.memory_space<vmem>>, vector<1x64x1xf32>
    %259 = vector.shape_cast %258 : vector<1x64x1xf32> to vector<64x1xf32>
    %cst_159 = arith.constant dense<0xFF800000> : vector<64xf32>
    %260 = vector.multi_reduction <maximumf>, %257, %cst_159 [1] : vector<64x64xf32> to vector<64xf32>
    %261 = vector.shape_cast %260 : vector<64xf32> to vector<64x1xf32>
    %262 = arith.maximumf %259, %261 : vector<64x1xf32>
    %263 = arith.subf %259, %262 : vector<64x1xf32>
    %264 = math.exp %263 : vector<64x1xf32>
    %265 = vector.broadcast %262 : vector<64x1xf32> to vector<64x64xf32>
    %266 = arith.subf %257, %265 : vector<64x64xf32>
    %267 = math.exp %266 : vector<64x64xf32>
    %c7_160 = arith.constant 7 : index
    %c0_161 = arith.constant 0 : index
    %c0_162 = arith.constant 0 : index
    %268 = vector.load %arg8[%c7_160, %c0_161, %c0_162] : memref<8x64x1xf32, #tpu.memory_space<vmem>>, vector<1x64x1xf32>
    %269 = vector.shape_cast %268 : vector<1x64x1xf32> to vector<64x1xf32>
    %270 = arith.mulf %264, %269 : vector<64x1xf32>
    %cst_163 = arith.constant dense<0.000000e+00> : vector<64xf32>
    %271 = vector.multi_reduction <add>, %267, %cst_163 [1] : vector<64x64xf32> to vector<64xf32>
    %272 = vector.shape_cast %271 : vector<64xf32> to vector<64x1xf32>
    %273 = arith.addf %270, %272 : vector<64x1xf32>
    %c7_164 = arith.constant 7 : index
    %c0_165 = arith.constant 0 : index
    %c0_166 = arith.constant 0 : index
    %274 = vector.load %arg8[%c7_164, %c0_165, %c0_166] : memref<8x64x1xf32, #tpu.memory_space<vmem>>, vector<1x64x1xf32>
    %275 = vector.shape_cast %274 : vector<1x64x1xf32> to vector<64x1xf32>
    %276 = vector.shape_cast %273 : vector<64x1xf32> to vector<1x64x1xf32>
    tpu.vector_store %arg8[%c7_164, %c0_165, %c0_166], %276 {strides = array<i32>} : memref<8x64x1xf32, #tpu.memory_space<vmem>>, vector<1x64x1xf32>,
    %c7_167 = arith.constant 7 : index
    %c0_168 = arith.constant 0 : index
    %c0_169 = arith.constant 0 : index
    %277 = vector.load %arg9[%c7_167, %c0_168, %c0_169] : memref<8x64x16xf32, #tpu.memory_space<vmem>>, vector<1x64x16xf32>
    %278 = vector.shape_cast %277 : vector<1x64x16xf32> to vector<64x16xf32>
    %279 = vector.broadcast %264 : vector<64x1xf32> to vector<64x16xf32>
    %280 = arith.mulf %279, %278 : vector<64x16xf32>
    %cst_170 = arith.constant dense<0.000000e+00> : vector<64x16xf32>
    %281 = tpu.matmul %267, %256, %cst_170 {dimension_numbers = #tpu.dot_dimension_numbers<[1], [0], [0], [1], [0, 0, 1, 1], [], []>} : vector<64x64xf32>, vector<64x16xf32>, vector<64x16xf32> -> vector<64x16xf32>
    %282 = arith.addf %280, %281 : vector<64x16xf32>
    %c7_171 = arith.constant 7 : index
    %c0_172 = arith.constant 0 : index
    %c0_173 = arith.constant 0 : index
    %283 = vector.load %arg9[%c7_171, %c0_172, %c0_173] : memref<8x64x16xf32, #tpu.memory_space<vmem>>, vector<1x64x16xf32>
    %284 = vector.shape_cast %283 : vector<1x64x16xf32> to vector<64x16xf32>
    %285 = vector.shape_cast %282 : vector<64x16xf32> to vector<1x64x16xf32>
    tpu.vector_store %arg9[%c7_171, %c0_172, %c0_173], %285 {strides = array<i32>} : memref<8x64x16xf32, #tpu.memory_space<vmem>>, vector<1x64x16xf32>,
    %c7_174 = arith.constant 7 : index
    %c0_175 = arith.constant 0 : index
    %c0_176 = arith.constant 0 : index
    %286 = vector.load %arg7[%c7_174, %c0_175, %c0_176] : memref<8x64x1xf32, #tpu.memory_space<vmem>>, vector<1x64x1xf32>
    %287 = vector.shape_cast %286 : vector<1x64x1xf32> to vector<64x1xf32>
    %288 = vector.shape_cast %262 : vector<64x1xf32> to vector<1x64x1xf32>
    tpu.vector_store %arg7[%c7_174, %c0_175, %c0_176], %288 {strides = array<i32>} : memref<8x64x1xf32, #tpu.memory_space<vmem>>, vector<1x64x1xf32>,
    %c1_i32 = arith.constant 1 : i32
    %289 = arith.cmpi eq, %arg2, %c1_i32 : i32
    %290 = arith.extui %289 : i1 to i32
    %c0_i32_177 = arith.constant 0 : i32
    %291 = arith.cmpi ne, %290, %c0_i32_177 : i32
    scf.if %291 {
      %c0_178 = arith.constant 0 : index
      %c0_179 = arith.constant 0 : index
      %c0_180 = arith.constant 0 : index
      %292 = vector.load %arg8[%c0_178, %c0_179, %c0_180] : memref<8x64x1xf32, #tpu.memory_space<vmem>>, vector<8x64x1xf32>
      %293 = tpu.reciprocal %292 : vector<8x64x1xf32> -> vector<8x64x1xf32>
      %c0_181 = arith.constant 0 : index
      %c0_182 = arith.constant 0 : index
      %c0_183 = arith.constant 0 : index
      %294 = vector.load %arg9[%c0_181, %c0_182, %c0_183] : memref<8x64x16xf32, #tpu.memory_space<vmem>>, vector<8x64x16xf32>
      %295 = vector.broadcast %293 : vector<8x64x1xf32> to vector<8x64x16xf32>
      %296 = arith.mulf %294, %295 : vector<8x64x16xf32>
      %297 = vector.extract_strided_slice %296 {offsets = [0, 0, 0], sizes = [1, 64, 16], strides = [1, 1, 1]} : vector<8x64x16xf32> to vector<1x64x16xf32>
      %298 = vector.shape_cast %297 : vector<1x64x16xf32> to vector<64x16xf32>
      %299 = vector.extract_strided_slice %296 {offsets = [1, 0, 0], sizes = [1, 64, 16], strides = [1, 1, 1]} : vector<8x64x16xf32> to vector<1x64x16xf32>
      %300 = vector.shape_cast %299 : vector<1x64x16xf32> to vector<64x16xf32>
      %301 = vector.extract_strided_slice %296 {offsets = [2, 0, 0], sizes = [1, 64, 16], strides = [1, 1, 1]} : vector<8x64x16xf32> to vector<1x64x16xf32>
      %302 = vector.shape_cast %301 : vector<1x64x16xf32> to vector<64x16xf32>
      %303 = vector.extract_strided_slice %296 {offsets = [3, 0, 0], sizes = [1, 64, 16], strides = [1, 1, 1]} : vector<8x64x16xf32> to vector<1x64x16xf32>
      %304 = vector.shape_cast %303 : vector<1x64x16xf32> to vector<64x16xf32>
      %305 = vector.extract_strided_slice %296 {offsets = [4, 0, 0], sizes = [1, 64, 16], strides = [1, 1, 1]} : vector<8x64x16xf32> to vector<1x64x16xf32>
      %306 = vector.shape_cast %305 : vector<1x64x16xf32> to vector<64x16xf32>
      %307 = vector.extract_strided_slice %296 {offsets = [5, 0, 0], sizes = [1, 64, 16], strides = [1, 1, 1]} : vector<8x64x16xf32> to vector<1x64x16xf32>
      %308 = vector.shape_cast %307 : vector<1x64x16xf32> to vector<64x16xf32>
      %309 = vector.extract_strided_slice %296 {offsets = [6, 0, 0], sizes = [1, 64, 16], strides = [1, 1, 1]} : vector<8x64x16xf32> to vector<1x64x16xf32>
      %310 = vector.shape_cast %309 : vector<1x64x16xf32> to vector<64x16xf32>
      %311 = vector.extract_strided_slice %296 {offsets = [7, 0, 0], sizes = [1, 64, 16], strides = [1, 1, 1]} : vector<8x64x16xf32> to vector<1x64x16xf32>
      %312 = vector.shape_cast %311 : vector<1x64x16xf32> to vector<64x16xf32>
      %313 = tpu.concatenate %298, %300, %302, %304, %306, %308, %310, %312 in 1 : vector<64x16xf32>, vector<64x16xf32>, vector<64x16xf32>, vector<64x16xf32>, vector<64x16xf32>, vector<64x16xf32>, vector<64x16xf32>, vector<64x16xf32> -> vector<64x128xf32>
      %c0_184 = arith.constant 0 : index
      %c0_185 = arith.constant 0 : index
      %c0_186 = arith.constant 0 : index
      %314 = vector.load %arg6[%c0_184, %c0_185, %c0_186] : memref<1x64x128xf32, #tpu.memory_space<vmem>>, vector<1x64x128xf32>
      %315 = vector.shape_cast %314 : vector<1x64x128xf32> to vector<64x128xf32>
      %316 = vector.shape_cast %313 : vector<64x128xf32> to vector<1x64x128xf32>
      tpu.vector_store %arg6[%c0_184, %c0_185, %c0_186], %316 {strides = array<i32>} : memref<1x64x128xf32, #tpu.memory_space<vmem>>, vector<1x64x128xf32>,
    } else {
    }
    return
  }
  func.func @transform_0(%arg0: i32, %arg1: i32, %arg2: i32) -> (i32, i32, i32) {
    %c0_i32 = arith.constant 0 : i32
    %c0_i32_0 = arith.constant 0 : i32
    return %arg0, %arg1, %c0_i32 : i32, i32, i32
  }
  func.func @transform_1(%arg0: i32, %arg1: i32, %arg2: i32) -> (i32, i32, i32) {
    %c0_i32 = arith.constant 0 : i32
    %c0_i32_0 = arith.constant 0 : i32
    return %arg0, %arg2, %c0_i32 : i32, i32, i32
  }
  func.func @transform_2(%arg0: i32, %arg1: i32, %arg2: i32) -> (i32, i32, i32) {
    %c0_i32 = arith.constant 0 : i32
    %c0_i32_0 = arith.constant 0 : i32
    return %arg0, %arg2, %c0_i32 : i32, i32, i32
  }
  func.func @transform_3(%arg0: i32, %arg1: i32, %arg2: i32) -> (i32, i32, i32) {
    %c0_i32 = arith.constant 0 : i32
    %c0_i32_0 = arith.constant 0 : i32
    return %arg0, %arg1, %c0_i32 : i32, i32, i32
  }
}

</mosaic_0001>

<llo_original>
// kernel: mul.9
$region0: #{mul.9}
  #allocation0 [shape = 's32[1]{0}', space=sflag, size = 0x4, scoped, tag = 'scoped memory for mul.9']
  %s0 = inlined_call_operand.vmem [shape: f32[1,384], index: 0, kind: input, shape index: {}]
  %s1 = inlined_call_operand.vmem [shape: f32[1,384], index: 1, kind: input, shape index: {}]
  %s2 = inlined_call_operand.vmem [shape: f32[1,384], index: 2, kind: output, shape index: {}]
  %v3 = vld [vmem:[%s0] sm:$0x1]
  %v4 = vld [vmem:[%s1] sm:$0x1]
  %5 = xla_tuple %v3, %v4
  %6 = xla_tuple %5
  %v7 = vmul.f32 %v3, %v4
  %8 = xla_tuple %v7
  %9 = vst [vmem:[%s2] sm:$0x1] %v7
  %s10 = scalar_lea.vmem %s0, 1
  %v11 = vld [vmem:[%s10] sm:$0x1]
  %s12 = scalar_lea.vmem %s1, 1
  %v13 = vld [vmem:[%s12] sm:$0x1]
  %14 = xla_tuple %v11, %v13
  %15 = xla_tuple %14
  %v16 = vmul.f32 %v11, %v13
  %17 = xla_tuple %v16
  %s18 = scalar_lea.vmem %s2, 1
  %19 = vst [vmem:[%s18] sm:$0x1] %v16
  %s20 = scalar_lea.vmem %s0, 2
  %v21 = vld [vmem:[%s20] sm:$0x1]
  %s22 = scalar_lea.vmem %s1, 2
  %v23 = vld [vmem:[%s22] sm:$0x1]
  %24 = xla_tuple %v21, %v23
  %25 = xla_tuple %24
  %v26 = vmul.f32 %v21, %v23
  %27 = xla_tuple %v26
  %s28 = scalar_lea.vmem %s2, 2
  %29 = vst [vmem:[%s28] sm:$0x1] %v26

// kernel: self_attn_block.3
$region0: #{self_attn_block.3}
  #allocation0 [shape = 'u32[]', space=smem, size = 0x4, offset = 0x4, fixed_abs, tag = 'smem constant byte address 0x4 - core index']
  #allocation1 [shape = 'u32[144,128]{1,0:T(1,128)}', space=vmem, size = 0x12000, scoped, tag = 'internal scratch']
  %s0 = inlined_call_operand.vmem [shape: f32[2,128,128], index: 0, kind: input, shape index: {}]
  %s1 = inlined_call_operand.vmem [shape: f32[1,128], index: 1, kind: input, shape index: {}]
  %s2 = inlined_call_operand.vmem [shape: f32[1,128], index: 2, kind: input, shape index: {}]
  %s3 = inlined_call_operand.vmem [shape: f32[128,384], index: 3, kind: input, shape index: {}]
  %s4 = inlined_call_operand.vmem [shape: f32[1,384], index: 4, kind: input, shape index: {}]
  %s5 = inlined_call_operand.vmem [shape: f32[2,128,128], index: 5, kind: output, shape index: {0}]
  %s6 = inlined_call_operand.vmem [shape: f32[2,128,128], index: 6, kind: output, shape index: {1}]
  %s7 = inlined_call_operand.vmem [shape: f32[2,128,128], index: 7, kind: output, shape index: {2}]
  %8 = xla_tuple %s5, %s6, %s7
  %s9 = sld [smem:[#allocation0]]
  $region69: #{self_attn_block.3} parent=0
    _
  %s11 = ssub.s32 1, %s9
  %s12 = scalar_select 0, %s11, %s9
  loop: start=0, step=1, limit=6
  $region2: #{self_attn_block.3} parent=0 // loop_pre_header
    _
  $region3: #{self_attn_block.3} parent=0 // loop_header
    %s14 = sphi 0, %s18
    %p15 = scmp.ge.s32.totalorder %s14, 6
    %s21 = sphi 0, %s33
    %s22 = sphi 0, %s29
    %s23 = sphi 0, %s21
    %s24 = sphi 0, %s22
    %s25 = sphi 0, %s23
    %s26 = sphi 0, %s24
    %s38 = sphi 0, %s40
    %s41 = sphi 0, %s38
    %s42 = sphi 0, %s41
    %s58 = sphi 0, %s42
    %s62 = sphi 0, %s62
    %s64 = sphi 0, %s62
    %s65 = sphi 0, %s64
    %s79 = sphi 0, %s65
    %s83 = sphi 0, %s83
    %s85 = sphi 0, %s83
    %s86 = sphi 0, %s85
    %s100 = sphi 0, %s86
    %s104 = sphi 0, %s104
    %s106 = sphi 0, %s104
    %s107 = sphi 0, %s106
    %s121 = sphi 0, %s107
    %s125 = sphi 0, %s125
    %s127 = sphi 0, %s125
    %s128 = sphi 0, %s127
    %s142 = sphi 0, %s128
    %s150 = sphi 0, %s152
    %s153 = sphi 0, %s150
    %s154 = sphi 0, %s153
    %s170 = sphi 0, %s154
    %s178 = sphi 0, %s180
    %s181 = sphi 0, %s178
    %s182 = sphi 0, %s181
    %s198 = sphi 0, %s182
    %s206 = sphi 0, %s208
    %s209 = sphi 0, %s206
    %s210 = sphi 0, %s209
    %s226 = sphi 0, %s210
  $region4: #{self_attn_block.3} parent=0 // loop_header_branch
    %17 = sbr.rel (%p15) target = $region8
  $region5: #{self_attn_block.3} parent=0 // loop_body
    %s19 = ssub.s32 %s14, 1
    %s20 = ssub.s32 %s14, 2
    %s27 = sadd.s32 1, %s22
    %p28 = scmp.ge.s32.totalorder %s27, 2
    %s29 = scalar_select %p28, 0, %s27
    %s30 = sadd.s32 1, %s21
    %s31 = scalar_select %p28, %s30, %s21
    %p32 = scmp.ge.s32.totalorder %s31, 2
    %s33 = scalar_select %p32, 0, %s31
    %s34 = ssub.s32 %s21, %s33
    %s35 = ssub.s32 %s22, %s29
    %s36 = sor.u32 %s34, %s35
    %p37 = scmp.eq.s32.totalorder %s36, 0
    %s39 = sadd.s32 %s38, 1
    %s40 = scalar_select %p37, %s38, %s39
    %p43 = pneg %p37
    %p44 = scmp.eq.s32.totalorder %s14, 3
    %p45 = por %p43, %p44
    %p46 = scmp.ne.s32.totalorder %s38, %s41
    %p47 = scmp.eq.s32.totalorder %s14, 0
    %p48 = por %p46, %p47
    %p49 = scmp.ne.s32.totalorder %s38, %s41
    %p50 = scmp.eq.s32.totalorder %s19, 3
    %p51 = por %p49, %p50
    %p52 = scmp.ne.s32.totalorder %s41, %s42
    %p53 = scmp.eq.s32.totalorder %s19, 0
    %p54 = por %p52, %p53
    %p55 = scmp.ne.s32.totalorder %s41, %s42
    %p56 = scmp.eq.s32.totalorder %s20, 3
    %p57 = por %p55, %p56
    %p59 = scmp.ne.s32.totalorder %s42, %s58
    %p60 = scmp.eq.s32.totalorder %s20, 0
    %p61 = por %p59, %p60
    %s63 = sadd.s32 %s62, 1
    %p66 = scmp.eq.s32.totalorder %s14, 3
    %p67 = scmp.ne.s32.totalorder %s62, %s64
    %p68 = scmp.eq.s32.totalorder %s14, 0
    %p69 = por %p67, %p68
    %p70 = scmp.ne.s32.totalorder %s62, %s64
    %p71 = scmp.eq.s32.totalorder %s19, 3
    %p72 = por %p70, %p71
    %p73 = scmp.ne.s32.totalorder %s64, %s65
    %p74 = scmp.eq.s32.totalorder %s19, 0
    %p75 = por %p73, %p74
    %p76 = scmp.ne.s32.totalorder %s64, %s65
    %p77 = scmp.eq.s32.totalorder %s20, 3
    %p78 = por %p76, %p77
    %p80 = scmp.ne.s32.totalorder %s65, %s79
    %p81 = scmp.eq.s32.totalorder %s20, 0
    %p82 = por %p80, %p81
    %s84 = sadd.s32 %s83, 1
    %p87 = scmp.eq.s32.totalorder %s14, 3
    %p88 = scmp.ne.s32.totalorder %s83, %s85
    %p89 = scmp.eq.s32.totalorder %s14, 0
    %p90 = por %p88, %p89
    %p91 = scmp.ne.s32.totalorder %s83, %s85
    %p92 = scmp.eq.s32.totalorder %s19, 3
    %p93 = por %p91, %p92
    %p94 = scmp.ne.s32.totalorder %s85, %s86
    %p95 = scmp.eq.s32.totalorder %s19, 0
    %p96 = por %p94, %p95
    %p97 = scmp.ne.s32.totalorder %s85, %s86
    %p98 = scmp.eq.s32.totalorder %s20, 3
    %p99 = por %p97, %p98
    %p101 = scmp.ne.s32.totalorder %s86, %s100
    %p102 = scmp.eq.s32.totalorder %s20, 0
    %p103 = por %p101, %p102
    %s105 = sadd.s32 %s104, 1
    %p108 = scmp.eq.s32.totalorder %s14, 3
    %p109 = scmp.ne.s32.totalorder %s104, %s106
    %p110 = scmp.eq.s32.totalorder %s14, 0
    %p111 = por %p109, %p110
    %p112 = scmp.ne.s32.totalorder %s104, %s106
    %p113 = scmp.eq.s32.totalorder %s19, 3
    %p114 = por %p112, %p113
    %p115 = scmp.ne.s32.totalorder %s106, %s107
    %p116 = scmp.eq.s32.totalorder %s19, 0
    %p117 = por %p115, %p116
    %p118 = scmp.ne.s32.totalorder %s106, %s107
    %p119 = scmp.eq.s32.totalorder %s20, 3
    %p120 = por %p118, %p119
    %p122 = scmp.ne.s32.totalorder %s107, %s121
    %p123 = scmp.eq.s32.totalorder %s20, 0
    %p124 = por %p122, %p123
    %s126 = sadd.s32 %s125, 1
    %p129 = scmp.eq.s32.totalorder %s14, 3
    %p130 = scmp.ne.s32.totalorder %s125, %s127
    %p131 = scmp.eq.s32.totalorder %s14, 0
    %p132 = por %p130, %p131
    %p133 = scmp.ne.s32.totalorder %s125, %s127
    %p134 = scmp.eq.s32.totalorder %s19, 3
    %p135 = por %p133, %p134
    %p136 = scmp.ne.s32.totalorder %s127, %s128
    %p137 = scmp.eq.s32.totalorder %s19, 0
    %p138 = por %p136, %p137
    %p139 = scmp.ne.s32.totalorder %s127, %s128
    %p140 = scmp.eq.s32.totalorder %s20, 3
    %p141 = por %p139, %p140
    %p143 = scmp.ne.s32.totalorder %s128, %s142
    %p144 = scmp.eq.s32.totalorder %s20, 0
    %p145 = por %p143, %p144
    %s146 = ssub.s32 %s21, %s33
    %s147 = ssub.s32 %s22, %s29
    %s148 = sor.u32 %s146, %s147
    %p149 = scmp.eq.s32.totalorder %s148, 0
    %s151 = sadd.s32 %s150, 1
    %s152 = scalar_select %p149, %s150, %s151
    %p155 = pneg %p149
    %p156 = scmp.eq.s32.totalorder %s14, 3
    %p157 = por %p155, %p156
    %p158 = scmp.ne.s32.totalorder %s150, %s153
    %p159 = scmp.eq.s32.totalorder %s14, 0
    %p160 = por %p158, %p159
    %p161 = scmp.ne.s32.totalorder %s150, %s153
    %p162 = scmp.eq.s32.totalorder %s19, 3
    %p163 = por %p161, %p162
    %p164 = scmp.ne.s32.totalorder %s153, %s154
    %p165 = scmp.eq.s32.totalorder %s19, 0
    %p166 = por %p164, %p165
    %p167 = scmp.ne.s32.totalorder %s153, %s154
    %p168 = scmp.eq.s32.totalorder %s20, 3
    %p169 = por %p167, %p168
    %p171 = scmp.ne.s32.totalorder %s154, %s170
    %p172 = scmp.eq.s32.totalorder %s20, 0
    %p173 = por %p171, %p172
    %s174 = ssub.s32 %s21, %s33
    %s175 = ssub.s32 %s22, %s29
    %s176 = sor.u32 %s174, %s175
    %p177 = scmp.eq.s32.totalorder %s176, 0
    %s179 = sadd.s32 %s178, 1
    %s180 = scalar_select %p177, %s178, %s179
    %p183 = pneg %p177
    %p184 = scmp.eq.s32.totalorder %s14, 3
    %p185 = por %p183, %p184
    %p186 = scmp.ne.s32.totalorder %s178, %s181
    %p187 = scmp.eq.s32.totalorder %s14, 0
    %p188 = por %p186, %p187
    %p189 = scmp.ne.s32.totalorder %s178, %s181
    %p190 = scmp.eq.s32.totalorder %s19, 3
    %p191 = por %p189, %p190
    %p192 = scmp.ne.s32.totalorder %s181, %s182
    %p193 = scmp.eq.s32.totalorder %s19, 0
    %p194 = por %p192, %p193
    %p195 = scmp.ne.s32.totalorder %s181, %s182
    %p196 = scmp.eq.s32.totalorder %s20, 3
    %p197 = por %p195, %p196
    %p199 = scmp.ne.s32.totalorder %s182, %s198
    %p200 = scmp.eq.s32.totalorder %s20, 0
    %p201 = por %p199, %p200
    %s202 = ssub.s32 %s21, %s33
    %s203 = ssub.s32 %s22, %s29
    %s204 = sor.u32 %s202, %s203
    %p205 = scmp.eq.s32.totalorder %s204, 0
    %s207 = sadd.s32 %s206, 1
    %s208 = scalar_select %p205, %s206, %s207
    %p211 = pneg %p205
    %p212 = scmp.eq.s32.totalorder %s14, 3
    %p213 = por %p211, %p212
    %p214 = scmp.ne.s32.totalorder %s206, %s209
    %p215 = scmp.eq.s32.totalorder %s14, 0
    %p216 = por %p214, %p215
    %p217 = scmp.ne.s32.totalorder %s206, %s209
    %p218 = scmp.eq.s32.totalorder %s19, 3
    %p219 = por %p217, %p218
    %p220 = scmp.ne.s32.totalorder %s209, %s210
    %p221 = scmp.eq.s32.totalorder %s19, 0
    %p222 = por %p220, %p221
    %p223 = scmp.ne.s32.totalorder %s209, %s210
    %p224 = scmp.eq.s32.totalorder %s20, 3
    %p225 = por %p223, %p224
    %p227 = scmp.ne.s32.totalorder %s210, %s226
    %p228 = scmp.eq.s32.totalorder %s20, 0
    %p229 = por %p227, %p228
    %p230 = scmp.le.s32.totalorder 1, %s14
    %p231 = scmp.lt.s32.totalorder %s14, 5
    %p232 = pnand %p230, %p231
    %p233 = pneg %p232
    // Predicated region
    $region9: #{self_attn_block.3} parent=5 // pred_check
      _
    $region10: #{self_attn_block.3} parent=5 // pred_check_branch
      %235 = sbr.rel (%p232) target = $region12
    $region11: #{self_attn_block.3} parent=5 // pred_region
      %s236 = ssub.s32 %s14, 1
      // Predicated region
      $region13: #{self_attn_block.3} parent=11 // pred_check
        %p237 = pneg %p75
      $region14: #{self_attn_block.3} parent=11 // pred_check_branch
        %239 = sbr.rel (%p237) target = $region16
      $region15: #{self_attn_block.3} parent=11 // pred_region
        _
      $region16: #{self_attn_block.3} parent=11 // pred_fallthru
        _
      // Predicated region
      $region17: #{self_attn_block.3} parent=11 // pred_check
        %p240 = pneg %p96
      $region18: #{self_attn_block.3} parent=11 // pred_check_branch
        %242 = sbr.rel (%p240) target = $region20
      $region19: #{self_attn_block.3} parent=11 // pred_region
        _
      $region20: #{self_attn_block.3} parent=11 // pred_fallthru
        _
      // Predicated region
      $region21: #{self_attn_block.3} parent=11 // pred_check
        %p243 = pneg %p117
      $region22: #{self_attn_block.3} parent=11 // pred_check_branch
        %245 = sbr.rel (%p243) target = $region24
      $region23: #{self_attn_block.3} parent=11 // pred_region
        _
      $region24: #{self_attn_block.3} parent=11 // pred_fallthru
        _
      // Predicated region
      $region25: #{self_attn_block.3} parent=11 // pred_check
        %p246 = pneg %p138
      $region26: #{self_attn_block.3} parent=11 // pred_check_branch
        %248 = sbr.rel (%p246) target = $region28
      $region27: #{self_attn_block.3} parent=11 // pred_region
        _
      $region28: #{self_attn_block.3} parent=11 // pred_fallthru
        _
    $region12: #{self_attn_block.3} parent=5 // pred_fallthru
      _
    %p249 = scmp.lt.s32.totalorder %s14, 4
    // Predicated region
    $region29: #{self_attn_block.3} parent=5 // pred_check
      %p250 = pneg %p249
    $region30: #{self_attn_block.3} parent=5 // pred_check_branch
      %252 = sbr.rel (%p250) target = $region32
    $region31: #{self_attn_block.3} parent=5 // pred_region
      // Predicated region
      $region33: #{self_attn_block.3} parent=31 // pred_check
        %p253 = pneg %p48
      $region34: #{self_attn_block.3} parent=31 // pred_check_branch
        %255 = sbr.rel (%p253) target = $region36
      $region35: #{self_attn_block.3} parent=31 // pred_region
        %s256 = smul.u32 8, %s22
        %p257 = scmp.lt.s32.totalorder %s21, 1
        %s258 = scalar_select %p257, %s21, 1
        %p259 = scmp.lt.s32.totalorder %s256, 15
        %s260 = scalar_select %p259, %s256, 15
        %s261 = smul.addr %s258, 16
        %s262 = sadd.s32 %s260, %s261
        %s263 = smul.addr %s262, 8
        %s264 = scalar_lea.vmem %s0, %s263
        %s265 = smul.u32 8, %s22
      $region36: #{self_attn_block.3} parent=31 // pred_fallthru
        _
    $region32: #{self_attn_block.3} parent=5 // pred_fallthru
      _
    %p266 = scmp.le.s32.totalorder 1, %s14
    %p267 = scmp.lt.s32.totalorder %s14, 5
    %p268 = pnand %p266, %p267
    %p269 = pneg %p268
    // Predicated region
    $region37: #{self_attn_block.3} parent=5 // pred_check
      _
    $region38: #{self_attn_block.3} parent=5 // pred_check_branch
      %271 = sbr.rel (%p268) target = $region40
    $region39: #{self_attn_block.3} parent=5 // pred_region
      %s272 = ssub.s32 %s14, 1
      %s273 = smul.u32 8, %s24
      %p274 = scmp.lt.s32.totalorder %s23, 1
      %s275 = scalar_select %p274, %s23, 1
      %p276 = scmp.lt.s32.totalorder %s273, 15
      %s277 = scalar_select %p276, %s273, 15
      %s278 = smul.addr %s275, 16
      %s279 = sadd.s32 %s277, %s278
      %s280 = smul.addr %s279, 8
      %s281 = scalar_lea.vmem %s0, %s280
      %p282 = pneg %p54
      %p283 = pneg %p51
      %p284 = pneg %p75
      %p285 = pneg %p72
      %p286 = pneg %p96
      %p287 = pneg %p93
      %p288 = pneg %p117
      %p289 = pneg %p114
      %p290 = pneg %p138
      %p291 = pneg %p135
      %p292 = pneg %p166
      %p293 = pneg %p163
      %s294 = smul.u32 8, %s24
      %p295 = scmp.lt.s32.totalorder %s23, 1
      %s296 = scalar_select %p295, %s23, 1
      %p297 = scmp.lt.s32.totalorder %s294, 15
      %s298 = scalar_select %p297, %s294, 15
      %s299 = smul.addr %s296, 16
      %s300 = sadd.s32 %s298, %s299
      %s301 = smul.addr %s300, 8
      %s302 = scalar_lea.vmem %s5, %s301
      %p303 = pneg %p194
      %p304 = pneg %p191
      %s305 = smul.u32 8, %s24
      %p306 = scmp.lt.s32.totalorder %s23, 1
      %s307 = scalar_select %p306, %s23, 1
      %p308 = scmp.lt.s32.totalorder %s305, 15
      %s309 = scalar_select %p308, %s305, 15
      %s310 = smul.addr %s307, 16
      %s311 = sadd.s32 %s309, %s310
      %s312 = smul.addr %s311, 8
      %s313 = scalar_lea.vmem %s6, %s312
      %p314 = pneg %p222
      %p315 = pneg %p219
      %s316 = smul.u32 8, %s24
      %p317 = scmp.lt.s32.totalorder %s23, 1
      %s318 = scalar_select %p317, %s23, 1
      %p319 = scmp.lt.s32.totalorder %s316, 15
      %s320 = scalar_select %p319, %s316, 15
      %s321 = smul.addr %s318, 16
      %s322 = sadd.s32 %s320, %s321
      %s323 = smul.addr %s322, 8
      %s324 = scalar_lea.vmem %s7, %s323
      %s325 = smul.u32 8, %s24
      %p326 = scmp.lt.s32.totalorder %s23, 1
      %s327 = scalar_select %p326, %s23, 1
      %p328 = scmp.lt.s32.totalorder %s325, 15
      %s329 = scalar_select %p328, %s325, 15
      %s330 = smul.addr %s327, 16
      %s331 = sadd.s32 %s329, %s330
      %s332 = smul.addr %s331, 8
      %s333 = scalar_lea.vmem %s0, %s332
      %s334 = smul.u32 8, %s24
      %s335 = smul.u32 8, %s24
      %p336 = scmp.lt.s32.totalorder %s23, 1
      %s337 = scalar_select %p336, %s23, 1
      %p338 = scmp.lt.s32.totalorder %s335, 15
      %s339 = scalar_select %p338, %s335, 15
      %s340 = smul.addr %s337, 16
      %s341 = sadd.s32 %s339, %s340
      %s342 = smul.addr %s341, 8
      %s343 = scalar_lea.vmem %s5, %s342
      %s344 = smul.u32 8, %s24
      %s345 = smul.u32 8, %s24
      %p346 = scmp.lt.s32.totalorder %s23, 1
      %s347 = scalar_select %p346, %s23, 1
      %p348 = scmp.lt.s32.totalorder %s345, 15
      %s349 = scalar_select %p348, %s345, 15
      %s350 = smul.addr %s347, 16
      %s351 = sadd.s32 %s349, %s350
      %s352 = smul.addr %s351, 8
      %s353 = scalar_lea.vmem %s6, %s352
      %s354 = smul.u32 8, %s24
      %s355 = smul.u32 8, %s24
      %p356 = scmp.lt.s32.totalorder %s23, 1
      %s357 = scalar_select %p356, %s23, 1
      %p358 = scmp.lt.s32.totalorder %s355, 15
      %s359 = scalar_select %p358, %s355, 15
      %s360 = smul.addr %s357, 16
      %s361 = sadd.s32 %s359, %s360
      %s362 = smul.addr %s361, 8
      %s363 = scalar_lea.vmem %s7, %s362
      %s364 = smul.u32 8, %s24
      %v365 = vld [vmem:[%s333] sm:$0xff]
      %v366 = vld [vmem:[%s333 + $0x8] sm:$0xff]
      %v367 = vld [vmem:[%s333 + $0x10] sm:$0xff]
      %v368 = vld [vmem:[%s333 + $0x18] sm:$0xff]
      %v369 = vld [vmem:[%s333 + $0x20] sm:$0xff]
      %v370 = vld [vmem:[%s333 + $0x28] sm:$0xff]
      %v371 = vld [vmem:[%s333 + $0x30] sm:$0xff]
      %v372 = vld [vmem:[%s333 + $0x38] sm:$0xff]
      %v373 = vld [vmem:[%s1] sm:$0x1]
      %v374 = vld [vmem:[%s2] sm:$0x1]
      %375 = vadd.xlane.f32.xlu0 %v365
      %v376 = vpop.xlane.xlu0 %375
      %377 = vadd.xlane.f32.xlu0 %v366
      %v378 = vpop.xlane.xlu0 %377
      %379 = vadd.xlane.f32.xlu0 %v367
      %v380 = vpop.xlane.xlu0 %379
      %381 = vadd.xlane.f32.xlu0 %v368
      %v382 = vpop.xlane.xlu0 %381
      %383 = vadd.xlane.f32.xlu0 %v369
      %v384 = vpop.xlane.xlu0 %383
      %385 = vadd.xlane.f32.xlu0 %v370
      %v386 = vpop.xlane.xlu0 %385
      %387 = vadd.xlane.f32.xlu0 %v371
      %v388 = vpop.xlane.xlu0 %387
      %389 = vadd.xlane.f32.xlu0 %v372
      %v390 = vpop.xlane.xlu0 %389
      %v391 = vrcp.pop 128.0
      %v392 = vmul.f32 %v376, %v391
      %v393 = vmul.f32 %v378, %v391
      %v394 = vmul.f32 %v380, %v391
      %v395 = vmul.f32 %v382, %v391
      %v396 = vmul.f32 %v384, %v391
      %v397 = vmul.f32 %v386, %v391
      %v398 = vmul.f32 %v388, %v391
      %v399 = vmul.f32 %v390, %v391
      %v400 = vsub.f32 %v365, %v392
      %v401 = vsub.f32 %v366, %v393
      %v402 = vsub.f32 %v367, %v394
      %v403 = vsub.f32 %v368, %v395
      %v404 = vsub.f32 %v369, %v396
      %v405 = vsub.f32 %v370, %v397
      %v406 = vsub.f32 %v371, %v398
      %v407 = vsub.f32 %v372, %v399
      %v408 = vmul.f32 %v400, %v400
      %v409 = vmul.f32 %v401, %v401
      %v410 = vmul.f32 %v402, %v402
      %v411 = vmul.f32 %v403, %v403
      %v412 = vmul.f32 %v404, %v404
      %v413 = vmul.f32 %v405, %v405
      %v414 = vmul.f32 %v406, %v406
      %v415 = vmul.f32 %v407, %v407
      %416 = vadd.xlane.f32.xlu0 %v408
      %v417 = vpop.xlane.xlu0 %416
      %418 = vadd.xlane.f32.xlu0 %v409
      %v419 = vpop.xlane.xlu0 %418
      %420 = vadd.xlane.f32.xlu0 %v410
      %v421 = vpop.xlane.xlu0 %420
      %422 = vadd.xlane.f32.xlu0 %v411
      %v423 = vpop.xlane.xlu0 %422
      %424 = vadd.xlane.f32.xlu0 %v412
      %v425 = vpop.xlane.xlu0 %424
      %426 = vadd.xlane.f32.xlu0 %v413
      %v427 = vpop.xlane.xlu0 %426
      %428 = vadd.xlane.f32.xlu0 %v414
      %v429 = vpop.xlane.xlu0 %428
      %430 = vadd.xlane.f32.xlu0 %v415
      %v431 = vpop.xlane.xlu0 %430
      %v432 = vmul.f32 %v417, %v391
      %v433 = vmul.f32 %v419, %v391
      %v434 = vmul.f32 %v421, %v391
      %v435 = vmul.f32 %v423, %v391
      %v436 = vmul.f32 %v425, %v391
      %v437 = vmul.f32 %v427, %v391
      %v438 = vmul.f32 %v429, %v391
      %v439 = vmul.f32 %v431, %v391
      %v440 = vadd.f32 %v432, 1e-05
      %v441 = vadd.f32 %v433, 1e-05
      %v442 = vadd.f32 %v434, 1e-05
      %v443 = vadd.f32 %v435, 1e-05
      %v444 = vadd.f32 %v436, 1e-05
      %v445 = vadd.f32 %v437, 1e-05
      %v446 = vadd.f32 %v438, 1e-05
      %v447 = vadd.f32 %v439, 1e-05
      %v448 = vrsqrt.pop %v440
      %v449 = vrsqrt.pop %v441
      %v450 = vrsqrt.pop %v442
      %v451 = vrsqrt.pop %v443
      %v452 = vrsqrt.pop %v444
      %v453 = vrsqrt.pop %v445
      %v454 = vrsqrt.pop %v446
      %v455 = vrsqrt.pop %v447
      %v456 = vmul.f32 %v400, %v448
      %v457 = vmul.f32 %v401, %v449
      %v458 = vmul.f32 %v402, %v450
      %v459 = vmul.f32 %v403, %v451
      %v460 = vmul.f32 %v404, %v452
      %v461 = vmul.f32 %v405, %v453
      %v462 = vmul.f32 %v406, %v454
      %v463 = vmul.f32 %v407, %v455
      %v465 = vlaneseq
      %v466 = vshrl.u32 %v465, 7
      %v467 = vsub.s32 0, %v466
      %v468 = vrot.slane %v373, %v467
      %v470 = vmul.f32 %v456, %v468
      %v471 = vmul.f32 %v457, %v468
      %v472 = vmul.f32 %v458, %v468
      %v473 = vmul.f32 %v459, %v468
      %v474 = vmul.f32 %v460, %v468
      %v475 = vmul.f32 %v461, %v468
      %v476 = vmul.f32 %v462, %v468
      %v477 = vmul.f32 %v463, %v468
      %v479 = vlaneseq
      %v480 = vshrl.u32 %v479, 7
      %v481 = vsub.s32 0, %v480
      %v482 = vrot.slane %v374, %v481
      %v484 = vadd.f32 %v470, %v482
      %v485 = vadd.f32 %v471, %v482
      %v486 = vadd.f32 %v472, %v482
      %v487 = vadd.f32 %v473, %v482
      %v488 = vadd.f32 %v474, %v482
      %v489 = vadd.f32 %v475, %v482
      %v490 = vadd.f32 %v476, %v482
      %v491 = vadd.f32 %v477, %v482
      %v492 = vld [vmem:[%s3] sm:$0xff]
      %v493 = vld [vmem:[%s3 + $0x8] sm:$0xff]
      %v494 = vld [vmem:[%s3 + $0x10] sm:$0xff]
      %v495 = vld [vmem:[%s3 + $0x18] sm:$0xff]
      %v496 = vld [vmem:[%s3 + $0x20] sm:$0xff]
      %v497 = vld [vmem:[%s3 + $0x28] sm:$0xff]
      %v498 = vld [vmem:[%s3 + $0x30] sm:$0xff]
      %v499 = vld [vmem:[%s3 + $0x38] sm:$0xff]
      %v500 = vld [vmem:[%s3 + $0x40] sm:$0xff]
      %v501 = vld [vmem:[%s3 + $0x48] sm:$0xff]
      %v502 = vld [vmem:[%s3 + $0x50] sm:$0xff]
      %v503 = vld [vmem:[%s3 + $0x58] sm:$0xff]
      %v504 = vld [vmem:[%s3 + $0x60] sm:$0xff]
      %v505 = vld [vmem:[%s3 + $0x68] sm:$0xff]
      %v506 = vld [vmem:[%s3 + $0x70] sm:$0xff]
      %v507 = vld [vmem:[%s3 + $0x78] sm:$0xff]
      %v508 = vld [vmem:[%s3 + $0x80] sm:$0xff]
      %v509 = vld [vmem:[%s3 + $0x88] sm:$0xff]
      %v510 = vld [vmem:[%s3 + $0x90] sm:$0xff]
      %v511 = vld [vmem:[%s3 + $0x98] sm:$0xff]
      %v512 = vld [vmem:[%s3 + $0xa0] sm:$0xff]
      %v513 = vld [vmem:[%s3 + $0xa8] sm:$0xff]
      %v514 = vld [vmem:[%s3 + $0xb0] sm:$0xff]
      %v515 = vld [vmem:[%s3 + $0xb8] sm:$0xff]
      %v516 = vld [vmem:[%s3 + $0xc0] sm:$0xff]
      %v517 = vld [vmem:[%s3 + $0xc8] sm:$0xff]
      %v518 = vld [vmem:[%s3 + $0xd0] sm:$0xff]
      %v519 = vld [vmem:[%s3 + $0xd8] sm:$0xff]
      %v520 = vld [vmem:[%s3 + $0xe0] sm:$0xff]
      %v521 = vld [vmem:[%s3 + $0xe8] sm:$0xff]
      %v522 = vld [vmem:[%s3 + $0xf0] sm:$0xff]
      %v523 = vld [vmem:[%s3 + $0xf8] sm:$0xff]
      %v524 = vld [vmem:[%s3 + $0x100] sm:$0xff]
      %v525 = vld [vmem:[%s3 + $0x108] sm:$0xff]
      %v526 = vld [vmem:[%s3 + $0x110] sm:$0xff]
      %v527 = vld [vmem:[%s3 + $0x118] sm:$0xff]
      %v528 = vld [vmem:[%s3 + $0x120] sm:$0xff]
      %v529 = vld [vmem:[%s3 + $0x128] sm:$0xff]
      %v530 = vld [vmem:[%s3 + $0x130] sm:$0xff]
      %v531 = vld [vmem:[%s3 + $0x138] sm:$0xff]
      %v532 = vld [vmem:[%s3 + $0x140] sm:$0xff]
      %v533 = vld [vmem:[%s3 + $0x148] sm:$0xff]
      %v534 = vld [vmem:[%s3 + $0x150] sm:$0xff]
      %v535 = vld [vmem:[%s3 + $0x158] sm:$0xff]
      %v536 = vld [vmem:[%s3 + $0x160] sm:$0xff]
      %v537 = vld [vmem:[%s3 + $0x168] sm:$0xff]
      %v538 = vld [vmem:[%s3 + $0x170] sm:$0xff]
      %v539 = vld [vmem:[%s3 + $0x178] sm:$0xff]
      %v540 = vld [vmem:[%s4] sm:$0x7]
      %v542 = vlaneseq
      %v543 = vshrl.u32 %v542, 7
      %v544 = vsub.s32 0, %v543
      %v545 = vrot.slane %v540, %v544
      %v546 = vlaneseq
      %v547 = vshrl.u32 %v546, 7
      %v548 = vsub.s32 1, %v547
      %v549 = vrot.slane %v540, %v548
      %v550 = vlaneseq
      %v551 = vshrl.u32 %v550, 7
      %v552 = vsub.s32 2, %v551
      %v553 = vrot.slane %v540, %v552
      %557 = vmatprep.subr.mxu0 %v493
      %558 = vmatpush1.msra.mxu0 %v492
      %559 = vmatprep.subr.mxu0 %v496
      %560 = vmatpush1.msra.mxu0 %v495
      %561 = vmatprep.subr.mxu0 %v499
      %562 = vmatpush1.msra.mxu0 %v498
      %563 = vmatprep.subr.mxu0 %v502
      %564 = vmatpush1.msra.mxu0 %v501
      %565 = vmatprep.subr.mxu0 %v505
      %566 = vmatpush1.msra.mxu0 %v504
      %567 = vmatprep.subr.mxu0 %v508
      %568 = vmatpush1.msra.mxu0 %v507
      %569 = vmatprep.subr.mxu0 %v511
      %570 = vmatpush1.msra.mxu0 %v510
      %571 = vmatprep.subr.mxu0 %v514
      %572 = vmatpush1.msra.mxu0 %v513
      %573 = vmatprep.subr.mxu0 %v517
      %574 = vmatpush1.msra.mxu0 %v516
      %575 = vmatprep.subr.mxu0 %v520
      %576 = vmatpush1.msra.mxu0 %v519
      %577 = vmatprep.subr.mxu0 %v523
      %578 = vmatpush1.msra.mxu0 %v522
      %579 = vmatprep.subr.mxu0 %v526
      %580 = vmatpush1.msra.mxu0 %v525
      %581 = vmatprep.subr.mxu0 %v529
      %582 = vmatpush1.msra.mxu0 %v528
      %583 = vmatprep.subr.mxu0 %v532
      %584 = vmatpush1.msra.mxu0 %v531
      %585 = vmatprep.subr.mxu0 %v535
      %586 = vmatpush1.msra.mxu0 %v534
      %587 = vmatprep.subr.mxu0 %v538
      %588 = vmatpush1.msra.mxu0 %v537
      %589 = vmatprep.subr.mxu0 0.0
      %590 = vmatpush1.msra.mxu0 0.0
      %591 = vmatprep.subr.mxu0 0.0
      %592 = vmatpush1.msra.mxu0 0.0
      %593 = vmatprep.subr.mxu0 0.0
      %594 = vmatpush1.msra.mxu0 0.0
      %595 = vmatprep.subr.mxu0 0.0
      %596 = vmatpush1.msra.mxu0 0.0
      %597 = vmatprep.subr.mxu0 0.0
      %598 = vmatpush1.msra.mxu0 0.0
      %599 = vmatprep.subr.mxu0 0.0
      %600 = vmatpush1.msra.mxu0 0.0
      %601 = vmatprep.subr.mxu0 0.0
      %602 = vmatpush1.msra.mxu0 0.0
      %603 = vmatprep.subr.mxu0 0.0
      %604 = vmatpush1.msra.mxu0 0.0
      %605 = vmatprep.subr.mxu0 0.0
      %606 = vmatpush1.msra.mxu0 0.0
      %607 = vmatprep.subr.mxu0 0.0
      %608 = vmatpush1.msra.mxu0 0.0
      %609 = vmatprep.subr.mxu0 0.0
      %610 = vmatpush1.msra.mxu0 0.0
      %611 = vmatprep.subr.mxu0 0.0
      %612 = vmatpush1.msra.mxu0 0.0
      %613 = vmatprep.subr.mxu0 0.0
      %614 = vmatpush1.msra.mxu0 0.0
      %615 = vmatprep.subr.mxu0 0.0
      %616 = vmatpush1.msra.mxu0 0.0
      %617 = vmatprep.subr.mxu0 0.0
      %618 = vmatpush1.msra.mxu0 0.0
      %619 = vmatprep.subr.mxu0 0.0
      %620 = vmatpush1.msra.mxu0 0.0
      %621 = vmatprep.mubr.f32.mxu0 0.0
      %622 = vmatmul.mubr.f32.gmra.mrb[0].mxu0 %v484
      %v623 = vpop.f32.mrb[0].mxu0
      %v624 = vadd.f32 %v545, %v623
      %v625 = vpop.f32.mrb[0].mxu0
      %v626 = vadd.f32 %v549, %v625
      %627 = vmatprep.mubr.f32.mxu0 0.0
      %628 = vmatmul.mubr.f32.gmra.mrb[0].mxu0 %v485
      %v629 = vpop.f32.mrb[0].mxu0
      %v630 = vadd.f32 %v545, %v629
      %v631 = vpop.f32.mrb[0].mxu0
      %v632 = vadd.f32 %v549, %v631
      %633 = vmatprep.mubr.f32.mxu0 0.0
      %634 = vmatmul.mubr.f32.gmra.mrb[0].mxu0 %v486
      %v635 = vpop.f32.mrb[0].mxu0
      %v636 = vadd.f32 %v545, %v635
      %v637 = vpop.f32.mrb[0].mxu0
      %v638 = vadd.f32 %v549, %v637
      %639 = vmatprep.mubr.f32.mxu0 0.0
      %640 = vmatmul.mubr.f32.gmra.mrb[0].mxu0 %v487
      %v641 = vpop.f32.mrb[0].mxu0
      %v642 = vadd.f32 %v545, %v641
      %v643 = vpop.f32.mrb[0].mxu0
      %v644 = vadd.f32 %v549, %v643
      %645 = vmatprep.mubr.f32.mxu0 0.0
      %646 = vmatmul.mubr.f32.gmra.mrb[0].mxu0 %v488
      %v647 = vpop.f32.mrb[0].mxu0
      %v648 = vadd.f32 %v545, %v647
      %v649 = vpop.f32.mrb[0].mxu0
      %v650 = vadd.f32 %v549, %v649
      %651 = vmatprep.mubr.f32.mxu0 0.0
      %652 = vmatmul.mubr.f32.gmra.mrb[0].mxu0 %v489
      %v653 = vpop.f32.mrb[0].mxu0
      %v654 = vadd.f32 %v545, %v653
      %v655 = vpop.f32.mrb[0].mxu0
      %v656 = vadd.f32 %v549, %v655
      %657 = vmatprep.mubr.f32.mxu0 0.0
      %658 = vmatmul.mubr.f32.gmra.mrb[0].mxu0 %v490
      %v659 = vpop.f32.mrb[0].mxu0
      %v660 = vadd.f32 %v545, %v659
      %v661 = vpop.f32.mrb[0].mxu0
      %v662 = vadd.f32 %v549, %v661
      %663 = vmatprep.mubr.f32.mxu0 0.0
      %664 = vmatmul.mubr.f32.gmra.mrb[0].mxu0 %v491
      %v665 = vpop.f32.mrb[0].mxu0
      %v666 = vadd.f32 %v545, %v665
      %v667 = vpop.f32.mrb[0].mxu0
      %v668 = vadd.f32 %v549, %v667
      %669 = vdwg.mxu0
      %670 = vmatprep.subr.mxu0 0.0
      %671 = vmatpush1.msra.mxu0 %v494
      %672 = vmatprep.subr.mxu0 0.0
      %673 = vmatpush1.msra.mxu0 %v497
      %674 = vmatprep.subr.mxu0 0.0
      %675 = vmatpush1.msra.mxu0 %v500
      %676 = vmatprep.subr.mxu0 0.0
      %677 = vmatpush1.msra.mxu0 %v503
      %678 = vmatprep.subr.mxu0 0.0
      %679 = vmatpush1.msra.mxu0 %v506
      %680 = vmatprep.subr.mxu0 0.0
      %681 = vmatpush1.msra.mxu0 %v509
      %682 = vmatprep.subr.mxu0 0.0
      %683 = vmatpush1.msra.mxu0 %v512
      %684 = vmatprep.subr.mxu0 0.0
      %685 = vmatpush1.msra.mxu0 %v515
      %686 = vmatprep.subr.mxu0 0.0
      %687 = vmatpush1.msra.mxu0 %v518
      %688 = vmatprep.subr.mxu0 0.0
      %689 = vmatpush1.msra.mxu0 %v521
      %690 = vmatprep.subr.mxu0 0.0
      %691 = vmatpush1.msra.mxu0 %v524
      %692 = vmatprep.subr.mxu0 0.0
      %693 = vmatpush1.msra.mxu0 %v527
      %694 = vmatprep.subr.mxu0 0.0
      %695 = vmatpush1.msra.mxu0 %v530
      %696 = vmatprep.subr.mxu0 0.0
      %697 = vmatpush1.msra.mxu0 %v533
      %698 = vmatprep.subr.mxu0 0.0
      %699 = vmatpush1.msra.mxu0 %v536
      %700 = vmatprep.subr.mxu0 0.0
      %701 = vmatpush1.msra.mxu0 %v539
      %702 = vmatprep.subr.mxu0 0.0
      %703 = vmatpush1.msra.mxu0 0.0
      %704 = vmatprep.subr.mxu0 0.0
      %705 = vmatpush1.msra.mxu0 0.0
      %706 = vmatprep.subr.mxu0 0.0
      %707 = vmatpush1.msra.mxu0 0.0
      %708 = vmatprep.subr.mxu0 0.0
      %709 = vmatpush1.msra.mxu0 0.0
      %710 = vmatprep.subr.mxu0 0.0
      %711 = vmatpush1.msra.mxu0 0.0
      %712 = vmatprep.subr.mxu0 0.0
      %713 = vmatpush1.msra.mxu0 0.0
      %714 = vmatprep.subr.mxu0 0.0
      %715 = vmatpush1.msra.mxu0 0.0
      %716 = vmatprep.subr.mxu0 0.0
      %717 = vmatpush1.msra.mxu0 0.0
      %718 = vmatprep.subr.mxu0 0.0
      %719 = vmatpush1.msra.mxu0 0.0
      %720 = vmatprep.subr.mxu0 0.0
      %721 = vmatpush1.msra.mxu0 0.0
      %722 = vmatprep.subr.mxu0 0.0
      %723 = vmatpush1.msra.mxu0 0.0
      %724 = vmatprep.subr.mxu0 0.0
      %725 = vmatpush1.msra.mxu0 0.0
      %726 = vmatprep.subr.mxu0 0.0
      %727 = vmatpush1.msra.mxu0 0.0
      %728 = vmatprep.subr.mxu0 0.0
      %729 = vmatpush1.msra.mxu0 0.0
      %730 = vmatprep.subr.mxu0 0.0
      %731 = vmatpush1.msra.mxu0 0.0
      %732 = vmatprep.subr.mxu0 0.0
      %733 = vmatpush1.msra.mxu0 0.0
      %734 = vmatprep.mubr.f32.mxu0 0.0
      %735 = vmatmul.mubr.f32.gmra.mrb[0].mxu0 %v484
      %v736 = vpop.f32.mrb[0].mxu0
      %v737 = vadd.f32 %v553, %v736
      %v738 = vpop.f32.mrb[0].mxu0
      %739 = vmatprep.mubr.f32.mxu0 0.0
      %740 = vmatmul.mubr.f32.gmra.mrb[0].mxu0 %v485
      %v741 = vpop.f32.mrb[0].mxu0
      %v742 = vadd.f32 %v553, %v741
      %v743 = vpop.f32.mrb[0].mxu0
      %744 = vmatprep.mubr.f32.mxu0 0.0
      %745 = vmatmul.mubr.f32.gmra.mrb[0].mxu0 %v486
      %v746 = vpop.f32.mrb[0].mxu0
      %v747 = vadd.f32 %v553, %v746
      %v748 = vpop.f32.mrb[0].mxu0
      %749 = vmatprep.mubr.f32.mxu0 0.0
      %750 = vmatmul.mubr.f32.gmra.mrb[0].mxu0 %v487
      %v751 = vpop.f32.mrb[0].mxu0
      %v752 = vadd.f32 %v553, %v751
      %v753 = vpop.f32.mrb[0].mxu0
      %754 = vmatprep.mubr.f32.mxu0 0.0
      %755 = vmatmul.mubr.f32.gmra.mrb[0].mxu0 %v488
      %v756 = vpop.f32.mrb[0].mxu0
      %v757 = vadd.f32 %v553, %v756
      %v758 = vpop.f32.mrb[0].mxu0
      %759 = vmatprep.mubr.f32.mxu0 0.0
      %760 = vmatmul.mubr.f32.gmra.mrb[0].mxu0 %v489
      %v761 = vpop.f32.mrb[0].mxu0
      %v762 = vadd.f32 %v553, %v761
      %v763 = vpop.f32.mrb[0].mxu0
      %764 = vmatprep.mubr.f32.mxu0 0.0
      %765 = vmatmul.mubr.f32.gmra.mrb[0].mxu0 %v490
      %v766 = vpop.f32.mrb[0].mxu0
      %v767 = vadd.f32 %v553, %v766
      %v768 = vpop.f32.mrb[0].mxu0
      %769 = vmatprep.mubr.f32.mxu0 0.0
      %770 = vmatmul.mubr.f32.gmra.mrb[0].mxu0 %v491
      %v771 = vpop.f32.mrb[0].mxu0
      %v772 = vadd.f32 %v553, %v771
      %v773 = vpop.f32.mrb[0].mxu0
      %774 = vdwg.mxu0
      %775 = vst [vmem:[%s343] sm:$0xff] %v624
      %776 = vst [vmem:[%s343 + $0x8] sm:$0xff] %v630
      %777 = vst [vmem:[%s343 + $0x10] sm:$0xff] %v636
      %778 = vst [vmem:[%s343 + $0x18] sm:$0xff] %v642
      %779 = vst [vmem:[%s343 + $0x20] sm:$0xff] %v648
      %780 = vst [vmem:[%s343 + $0x28] sm:$0xff] %v654
      %781 = vst [vmem:[%s343 + $0x30] sm:$0xff] %v660
      %782 = vst [vmem:[%s343 + $0x38] sm:$0xff] %v666
      %783 = vst [vmem:[%s353] sm:$0xff] %v626
      %784 = vst [vmem:[%s353 + $0x8] sm:$0xff] %v632
      %785 = vst [vmem:[%s353 + $0x10] sm:$0xff] %v638
      %786 = vst [vmem:[%s353 + $0x18] sm:$0xff] %v644
      %787 = vst [vmem:[%s353 + $0x20] sm:$0xff] %v650
      %788 = vst [vmem:[%s353 + $0x28] sm:$0xff] %v656
      %789 = vst [vmem:[%s353 + $0x30] sm:$0xff] %v662
      %790 = vst [vmem:[%s353 + $0x38] sm:$0xff] %v668
      %791 = vst [vmem:[%s363] sm:$0xff] %v737
      %792 = vst [vmem:[%s363 + $0x8] sm:$0xff] %v742
      %793 = vst [vmem:[%s363 + $0x10] sm:$0xff] %v747
      %794 = vst [vmem:[%s363 + $0x18] sm:$0xff] %v752
      %795 = vst [vmem:[%s363 + $0x20] sm:$0xff] %v757
      %796 = vst [vmem:[%s363 + $0x28] sm:$0xff] %v762
      %797 = vst [vmem:[%s363 + $0x30] sm:$0xff] %v767
      %798 = vst [vmem:[%s363 + $0x38] sm:$0xff] %v772
      %s799 = smul.u32 8, %s24
      %p800 = scmp.lt.s32.totalorder %s23, 1
      %s801 = scalar_select %p800, %s23, 1
      %p802 = scmp.lt.s32.totalorder %s799, 15
      %s803 = scalar_select %p802, %s799, 15
      %s804 = smul.addr %s801, 16
      %s805 = sadd.s32 %s803, %s804
      %s806 = smul.addr %s805, 8
      %s807 = scalar_lea.vmem %s5, %s806
      %s808 = smul.u32 8, %s24
      %p809 = scmp.lt.s32.totalorder %s23, 1
      %s810 = scalar_select %p809, %s23, 1
      %p811 = scmp.lt.s32.totalorder %s808, 15
      %s812 = scalar_select %p811, %s808, 15
      %s813 = smul.addr %s810, 16
      %s814 = sadd.s32 %s812, %s813
      %s815 = smul.addr %s814, 8
      %s816 = scalar_lea.vmem %s6, %s815
      %s817 = smul.u32 8, %s24
      %p818 = scmp.lt.s32.totalorder %s23, 1
      %s819 = scalar_select %p818, %s23, 1
      %p820 = scmp.lt.s32.totalorder %s817, 15
      %s821 = scalar_select %p820, %s817, 15
      %s822 = smul.addr %s819, 16
      %s823 = sadd.s32 %s821, %s822
      %s824 = smul.addr %s823, 8
      %s825 = scalar_lea.vmem %s7, %s824
      // Predicated region
      $region41: #{self_attn_block.3} parent=39 // pred_check
        %p826 = pneg %p163
      $region42: #{self_attn_block.3} parent=39 // pred_check_branch
        %828 = sbr.rel (%p826) target = $region44
      $region43: #{self_attn_block.3} parent=39 // pred_region
        %s829 = smul.u32 8, %s24
      $region44: #{self_attn_block.3} parent=39 // pred_fallthru
        _
      // Predicated region
      $region45: #{self_attn_block.3} parent=39 // pred_check
        %p830 = pneg %p191
      $region46: #{self_attn_block.3} parent=39 // pred_check_branch
        %832 = sbr.rel (%p830) target = $region48
      $region47: #{self_attn_block.3} parent=39 // pred_region
        %s833 = smul.u32 8, %s24
      $region48: #{self_attn_block.3} parent=39 // pred_fallthru
        _
      // Predicated region
      $region49: #{self_attn_block.3} parent=39 // pred_check
        %p834 = pneg %p219
      $region50: #{self_attn_block.3} parent=39 // pred_check_branch
        %836 = sbr.rel (%p834) target = $region52
      $region51: #{self_attn_block.3} parent=39 // pred_region
        %s837 = smul.u32 8, %s24
      $region52: #{self_attn_block.3} parent=39 // pred_fallthru
        _
    $region40: #{self_attn_block.3} parent=5 // pred_fallthru
      _
    %p838 = scmp.le.s32.totalorder 2, %s14
    // Predicated region
    $region53: #{self_attn_block.3} parent=5 // pred_check
      %p839 = pneg %p838
    $region54: #{self_attn_block.3} parent=5 // pred_check_branch
      %841 = sbr.rel (%p839) target = $region56
    $region55: #{self_attn_block.3} parent=5 // pred_region
      %s842 = ssub.s32 %s14, 2
      // Predicated region
      $region57: #{self_attn_block.3} parent=55 // pred_check
        %p843 = pneg %p169
      $region58: #{self_attn_block.3} parent=55 // pred_check_branch
        %845 = sbr.rel (%p843) target = $region60
      $region59: #{self_attn_block.3} parent=55 // pred_region
        %s846 = smul.u32 8, %s26
        %p847 = scmp.lt.s32.totalorder %s25, 1
        %s848 = scalar_select %p847, %s25, 1
        %p849 = scmp.lt.s32.totalorder %s846, 15
        %s850 = scalar_select %p849, %s846, 15
        %s851 = smul.addr %s848, 16
        %s852 = sadd.s32 %s850, %s851
        %s853 = smul.addr %s852, 8
        %s854 = scalar_lea.vmem %s5, %s853
      $region60: #{self_attn_block.3} parent=55 // pred_fallthru
        _
      // Predicated region
      $region61: #{self_attn_block.3} parent=55 // pred_check
        %p855 = pneg %p197
      $region62: #{self_attn_block.3} parent=55 // pred_check_branch
        %857 = sbr.rel (%p855) target = $region64
      $region63: #{self_attn_block.3} parent=55 // pred_region
        %s858 = smul.u32 8, %s26
        %p859 = scmp.lt.s32.totalorder %s25, 1
        %s860 = scalar_select %p859, %s25, 1
        %p861 = scmp.lt.s32.totalorder %s858, 15
        %s862 = scalar_select %p861, %s858, 15
        %s863 = smul.addr %s860, 16
        %s864 = sadd.s32 %s862, %s863
        %s865 = smul.addr %s864, 8
        %s866 = scalar_lea.vmem %s6, %s865
      $region64: #{self_attn_block.3} parent=55 // pred_fallthru
        _
      // Predicated region
      $region65: #{self_attn_block.3} parent=55 // pred_check
        %p867 = pneg %p225
      $region66: #{self_attn_block.3} parent=55 // pred_check_branch
        %869 = sbr.rel (%p867) target = $region68
      $region67: #{self_attn_block.3} parent=55 // pred_region
        %s870 = smul.u32 8, %s26
        %p871 = scmp.lt.s32.totalorder %s25, 1
        %s872 = scalar_select %p871, %s25, 1
        %p873 = scmp.lt.s32.totalorder %s870, 15
        %s874 = scalar_select %p873, %s870, 15
        %s875 = smul.addr %s872, 16
        %s876 = sadd.s32 %s874, %s875
        %s877 = smul.addr %s876, 8
        %s878 = scalar_lea.vmem %s7, %s877
      $region68: #{self_attn_block.3} parent=55 // pred_fallthru
        _
    $region56: #{self_attn_block.3} parent=5 // pred_fallthru
      _
  $region6: #{self_attn_block.3} parent=0 // loop_footer
    %s18 = sadd.s32 1, %s14
  $region7: #{self_attn_block.3} parent=0 // loop_footer_branch
    %13 = sbr.rel target = $region3
  $region8: #{self_attn_block.3} parent=0 // loop_exit
    _

// kernel: self_attn_block.5
$region0: #{self_attn_block.5}
  #allocation0 [shape = 'u32[]', space=smem, size = 0x4, offset = 0x4, fixed_abs, tag = 'smem constant byte address 0x4 - core index']
  #allocation1 [shape = 'u32[144,128]{1,0:T(1,128)}', space=vmem, size = 0x12000, scoped, tag = 'internal scratch']
  %s0 = inlined_call_operand.vmem [shape: f32[2,128,128], index: 0, kind: input, shape index: {}]
  %s1 = inlined_call_operand.vmem [shape: f32[2,128,128], index: 1, kind: input, shape index: {}]
  %s2 = inlined_call_operand.vmem [shape: f32[128,128], index: 2, kind: input, shape index: {}]
  %s3 = inlined_call_operand.vmem [shape: f32[1,128], index: 3, kind: input, shape index: {}]
  %s4 = inlined_call_operand.vmem [shape: f32[1,128], index: 4, kind: input, shape index: {}]
  %s5 = inlined_call_operand.vmem [shape: f32[1,128], index: 5, kind: input, shape index: {}]
  %s6 = inlined_call_operand.vmem [shape: f32[128,256], index: 6, kind: input, shape index: {}]
  %s7 = inlined_call_operand.vmem [shape: f32[1,256], index: 7, kind: input, shape index: {}]
  %s8 = inlined_call_operand.vmem [shape: f32[256,128], index: 8, kind: input, shape index: {}]
  %s9 = inlined_call_operand.vmem [shape: f32[1,128], index: 9, kind: input, shape index: {}]
  %s10 = inlined_call_operand.hbm [shape: f32[2,128,128], index: 10, kind: output, shape index: {}]
  %s11 = sld [smem:[#allocation0]]
  $region73: #{self_attn_block.5} parent=0
    _
  %s13 = ssub.s32 1, %s11
  %s14 = scalar_select 0, %s13, %s11
  $region1: #{self_attn_block.5} parent=0
    #allocation2 [shape = 'u8[65536]{0}', space=vmem, size = 0x10000, scoped, tag = 'output window, operand 0']
    #allocation3 [shape = 's32[2]{0}', space=sflag, size = 0x8, scoped, tag = 'scoped memory for self_attn_block.5']
    %15 = vsyncpa [#allocation3], 0
    %s16 = scalar_lea.sflag [#allocation3], 1
    %17 = vsyncpa %s16, 0
    loop: start=0, step=1, limit=6
    $region2: #{self_attn_block.5} parent=1 // loop_pre_header
      _
    $region3: #{self_attn_block.5} parent=1 // loop_header
      %s19 = sphi 0, %s23
      %p20 = scmp.ge.s32.totalorder %s19, 6
      %s26 = sphi 0, %s38
      %s27 = sphi 0, %s34
      %s28 = sphi 0, %s26
      %s29 = sphi 0, %s27
      %s30 = sphi 0, %s28
      %s31 = sphi 0, %s29
      %s43 = sphi 0, %s45
      %s46 = sphi 0, %s43
      %s47 = sphi 0, %s46
      %s63 = sphi 0, %s47
      %s71 = sphi 0, %s73
      %s74 = sphi 0, %s71
      %s75 = sphi 0, %s74
      %s91 = sphi 0, %s75
      %s95 = sphi 0, %s95
      %s97 = sphi 0, %s95
      %s98 = sphi 0, %s97
      %s112 = sphi 0, %s98
      %s116 = sphi 0, %s116
      %s118 = sphi 0, %s116
      %s119 = sphi 0, %s118
      %s133 = sphi 0, %s119
      %s137 = sphi 0, %s137
      %s139 = sphi 0, %s137
      %s140 = sphi 0, %s139
      %s154 = sphi 0, %s140
      %s158 = sphi 0, %s158
      %s160 = sphi 0, %s158
      %s161 = sphi 0, %s160
      %s175 = sphi 0, %s161
      %s179 = sphi 0, %s179
      %s181 = sphi 0, %s179
      %s182 = sphi 0, %s181
      %s196 = sphi 0, %s182
      %s200 = sphi 0, %s200
      %s202 = sphi 0, %s200
      %s203 = sphi 0, %s202
      %s217 = sphi 0, %s203
      %s221 = sphi 0, %s221
      %s223 = sphi 0, %s221
      %s224 = sphi 0, %s223
      %s238 = sphi 0, %s224
      %s242 = sphi 0, %s242
      %s244 = sphi 0, %s242
      %s245 = sphi 0, %s244
      %s259 = sphi 0, %s245
      %s267 = sphi 0, %s269
      %s270 = sphi 0, %s267
      %s271 = sphi 0, %s270
      %s287 = sphi 0, %s271
    $region4: #{self_attn_block.5} parent=1 // loop_header_branch
      %22 = sbr.rel (%p20) target = $region8
    $region5: #{self_attn_block.5} parent=1 // loop_body
      %s24 = ssub.s32 %s19, 1
      %s25 = ssub.s32 %s19, 2
      %s32 = sadd.s32 1, %s27
      %p33 = scmp.ge.s32.totalorder %s32, 2
      %s34 = scalar_select %p33, 0, %s32
      %s35 = sadd.s32 1, %s26
      %s36 = scalar_select %p33, %s35, %s26
      %p37 = scmp.ge.s32.totalorder %s36, 2
      %s38 = scalar_select %p37, 0, %s36
      %s39 = ssub.s32 %s26, %s38
      %s40 = ssub.s32 %s27, %s34
      %s41 = sor.u32 %s39, %s40
      %p42 = scmp.eq.s32.totalorder %s41, 0
      %s44 = sadd.s32 %s43, 1
      %s45 = scalar_select %p42, %s43, %s44
      %p48 = pneg %p42
      %p49 = scmp.eq.s32.totalorder %s19, 3
      %p50 = por %p48, %p49
      %p51 = scmp.ne.s32.totalorder %s43, %s46
      %p52 = scmp.eq.s32.totalorder %s19, 0
      %p53 = por %p51, %p52
      %p54 = scmp.ne.s32.totalorder %s43, %s46
      %p55 = scmp.eq.s32.totalorder %s24, 3
      %p56 = por %p54, %p55
      %p57 = scmp.ne.s32.totalorder %s46, %s47
      %p58 = scmp.eq.s32.totalorder %s24, 0
      %p59 = por %p57, %p58
      %p60 = scmp.ne.s32.totalorder %s46, %s47
      %p61 = scmp.eq.s32.totalorder %s25, 3
      %p62 = por %p60, %p61
      %p64 = scmp.ne.s32.totalorder %s47, %s63
      %p65 = scmp.eq.s32.totalorder %s25, 0
      %p66 = por %p64, %p65
      %s67 = ssub.s32 %s26, %s38
      %s68 = ssub.s32 %s27, %s34
      %s69 = sor.u32 %s67, %s68
      %p70 = scmp.eq.s32.totalorder %s69, 0
      %s72 = sadd.s32 %s71, 1
      %s73 = scalar_select %p70, %s71, %s72
      %p76 = pneg %p70
      %p77 = scmp.eq.s32.totalorder %s19, 3
      %p78 = por %p76, %p77
      %p79 = scmp.ne.s32.totalorder %s71, %s74
      %p80 = scmp.eq.s32.totalorder %s19, 0
      %p81 = por %p79, %p80
      %p82 = scmp.ne.s32.totalorder %s71, %s74
      %p83 = scmp.eq.s32.totalorder %s24, 3
      %p84 = por %p82, %p83
      %p85 = scmp.ne.s32.totalorder %s74, %s75
      %p86 = scmp.eq.s32.totalorder %s24, 0
      %p87 = por %p85, %p86
      %p88 = scmp.ne.s32.totalorder %s74, %s75
      %p89 = scmp.eq.s32.totalorder %s25, 3
      %p90 = por %p88, %p89
      %p92 = scmp.ne.s32.totalorder %s75, %s91
      %p93 = scmp.eq.s32.totalorder %s25, 0
      %p94 = por %p92, %p93
      %s96 = sadd.s32 %s95, 1
      %p99 = scmp.eq.s32.totalorder %s19, 3
      %p100 = scmp.ne.s32.totalorder %s95, %s97
      %p101 = scmp.eq.s32.totalorder %s19, 0
      %p102 = por %p100, %p101
      %p103 = scmp.ne.s32.totalorder %s95, %s97
      %p104 = scmp.eq.s32.totalorder %s24, 3
      %p105 = por %p103, %p104
      %p106 = scmp.ne.s32.totalorder %s97, %s98
      %p107 = scmp.eq.s32.totalorder %s24, 0
      %p108 = por %p106, %p107
      %p109 = scmp.ne.s32.totalorder %s97, %s98
      %p110 = scmp.eq.s32.totalorder %s25, 3
      %p111 = por %p109, %p110
      %p113 = scmp.ne.s32.totalorder %s98, %s112
      %p114 = scmp.eq.s32.totalorder %s25, 0
      %p115 = por %p113, %p114
      %s117 = sadd.s32 %s116, 1
      %p120 = scmp.eq.s32.totalorder %s19, 3
      %p121 = scmp.ne.s32.totalorder %s116, %s118
      %p122 = scmp.eq.s32.totalorder %s19, 0
      %p123 = por %p121, %p122
      %p124 = scmp.ne.s32.totalorder %s116, %s118
      %p125 = scmp.eq.s32.totalorder %s24, 3
      %p126 = por %p124, %p125
      %p127 = scmp.ne.s32.totalorder %s118, %s119
      %p128 = scmp.eq.s32.totalorder %s24, 0
      %p129 = por %p127, %p128
      %p130 = scmp.ne.s32.totalorder %s118, %s119
      %p131 = scmp.eq.s32.totalorder %s25, 3
      %p132 = por %p130, %p131
      %p134 = scmp.ne.s32.totalorder %s119, %s133
      %p135 = scmp.eq.s32.totalorder %s25, 0
      %p136 = por %p134, %p135
      %s138 = sadd.s32 %s137, 1
      %p141 = scmp.eq.s32.totalorder %s19, 3
      %p142 = scmp.ne.s32.totalorder %s137, %s139
      %p143 = scmp.eq.s32.totalorder %s19, 0
      %p144 = por %p142, %p143
      %p145 = scmp.ne.s32.totalorder %s137, %s139
      %p146 = scmp.eq.s32.totalorder %s24, 3
      %p147 = por %p145, %p146
      %p148 = scmp.ne.s32.totalorder %s139, %s140
      %p149 = scmp.eq.s32.totalorder %s24, 0
      %p150 = por %p148, %p149
      %p151 = scmp.ne.s32.totalorder %s139, %s140
      %p152 = scmp.eq.s32.totalorder %s25, 3
      %p153 = por %p151, %p152
      %p155 = scmp.ne.s32.totalorder %s140, %s154
      %p156 = scmp.eq.s32.totalorder %s25, 0
      %p157 = por %p155, %p156
      %s159 = sadd.s32 %s158, 1
      %p162 = scmp.eq.s32.totalorder %s19, 3
      %p163 = scmp.ne.s32.totalorder %s158, %s160
      %p164 = scmp.eq.s32.totalorder %s19, 0
      %p165 = por %p163, %p164
      %p166 = scmp.ne.s32.totalorder %s158, %s160
      %p167 = scmp.eq.s32.totalorder %s24, 3
      %p168 = por %p166, %p167
      %p169 = scmp.ne.s32.totalorder %s160, %s161
      %p170 = scmp.eq.s32.totalorder %s24, 0
      %p171 = por %p169, %p170
      %p172 = scmp.ne.s32.totalorder %s160, %s161
      %p173 = scmp.eq.s32.totalorder %s25, 3
      %p174 = por %p172, %p173
      %p176 = scmp.ne.s32.totalorder %s161, %s175
      %p177 = scmp.eq.s32.totalorder %s25, 0
      %p178 = por %p176, %p177
      %s180 = sadd.s32 %s179, 1
      %p183 = scmp.eq.s32.totalorder %s19, 3
      %p184 = scmp.ne.s32.totalorder %s179, %s181
      %p185 = scmp.eq.s32.totalorder %s19, 0
      %p186 = por %p184, %p185
      %p187 = scmp.ne.s32.totalorder %s179, %s181
      %p188 = scmp.eq.s32.totalorder %s24, 3
      %p189 = por %p187, %p188
      %p190 = scmp.ne.s32.totalorder %s181, %s182
      %p191 = scmp.eq.s32.totalorder %s24, 0
      %p192 = por %p190, %p191
      %p193 = scmp.ne.s32.totalorder %s181, %s182
      %p194 = scmp.eq.s32.totalorder %s25, 3
      %p195 = por %p193, %p194
      %p197 = scmp.ne.s32.totalorder %s182, %s196
      %p198 = scmp.eq.s32.totalorder %s25, 0
      %p199 = por %p197, %p198
      %s201 = sadd.s32 %s200, 1
      %p204 = scmp.eq.s32.totalorder %s19, 3
      %p205 = scmp.ne.s32.totalorder %s200, %s202
      %p206 = scmp.eq.s32.totalorder %s19, 0
      %p207 = por %p205, %p206
      %p208 = scmp.ne.s32.totalorder %s200, %s202
      %p209 = scmp.eq.s32.totalorder %s24, 3
      %p210 = por %p208, %p209
      %p211 = scmp.ne.s32.totalorder %s202, %s203
      %p212 = scmp.eq.s32.totalorder %s24, 0
      %p213 = por %p211, %p212
      %p214 = scmp.ne.s32.totalorder %s202, %s203
      %p215 = scmp.eq.s32.totalorder %s25, 3
      %p216 = por %p214, %p215
      %p218 = scmp.ne.s32.totalorder %s203, %s217
      %p219 = scmp.eq.s32.totalorder %s25, 0
      %p220 = por %p218, %p219
      %s222 = sadd.s32 %s221, 1
      %p225 = scmp.eq.s32.totalorder %s19, 3
      %p226 = scmp.ne.s32.totalorder %s221, %s223
      %p227 = scmp.eq.s32.totalorder %s19, 0
      %p228 = por %p226, %p227
      %p229 = scmp.ne.s32.totalorder %s221, %s223
      %p230 = scmp.eq.s32.totalorder %s24, 3
      %p231 = por %p229, %p230
      %p232 = scmp.ne.s32.totalorder %s223, %s224
      %p233 = scmp.eq.s32.totalorder %s24, 0
      %p234 = por %p232, %p233
      %p235 = scmp.ne.s32.totalorder %s223, %s224
      %p236 = scmp.eq.s32.totalorder %s25, 3
      %p237 = por %p235, %p236
      %p239 = scmp.ne.s32.totalorder %s224, %s238
      %p240 = scmp.eq.s32.totalorder %s25, 0
      %p241 = por %p239, %p240
      %s243 = sadd.s32 %s242, 1
      %p246 = scmp.eq.s32.totalorder %s19, 3
      %p247 = scmp.ne.s32.totalorder %s242, %s244
      %p248 = scmp.eq.s32.totalorder %s19, 0
      %p249 = por %p247, %p248
      %p250 = scmp.ne.s32.totalorder %s242, %s244
      %p251 = scmp.eq.s32.totalorder %s24, 3
      %p252 = por %p250, %p251
      %p253 = scmp.ne.s32.totalorder %s244, %s245
      %p254 = scmp.eq.s32.totalorder %s24, 0
      %p255 = por %p253, %p254
      %p256 = scmp.ne.s32.totalorder %s244, %s245
      %p257 = scmp.eq.s32.totalorder %s25, 3
      %p258 = por %p256, %p257
      %p260 = scmp.ne.s32.totalorder %s245, %s259
      %p261 = scmp.eq.s32.totalorder %s25, 0
      %p262 = por %p260, %p261
      %s263 = ssub.s32 %s26, %s38
      %s264 = ssub.s32 %s27, %s34
      %s265 = sor.u32 %s263, %s264
      %p266 = scmp.eq.s32.totalorder %s265, 0
      %s268 = sadd.s32 %s267, 1
      %s269 = scalar_select %p266, %s267, %s268
      %p272 = pneg %p266
      %p273 = scmp.eq.s32.totalorder %s19, 3
      %p274 = por %p272, %p273
      %p275 = scmp.ne.s32.totalorder %s267, %s270
      %p276 = scmp.eq.s32.totalorder %s19, 0
      %p277 = por %p275, %p276
      %p278 = scmp.ne.s32.totalorder %s267, %s270
      %p279 = scmp.eq.s32.totalorder %s24, 3
      %p280 = por %p278, %p279
      %p281 = scmp.ne.s32.totalorder %s270, %s271
      %p282 = scmp.eq.s32.totalorder %s24, 0
      %p283 = por %p281, %p282
      %p284 = scmp.ne.s32.totalorder %s270, %s271
      %p285 = scmp.eq.s32.totalorder %s25, 3
      %p286 = por %p284, %p285
      %p288 = scmp.ne.s32.totalorder %s271, %s287
      %p289 = scmp.eq.s32.totalorder %s25, 0
      %p290 = por %p288, %p289
      %p291 = scmp.le.s32.totalorder 1, %s19
      %p292 = scmp.lt.s32.totalorder %s19, 5
      %p293 = pnand %p291, %p292
      %p294 = pneg %p293
      // Predicated region
      $region9: #{self_attn_block.5} parent=5 // pred_check
        _
      $region10: #{self_attn_block.5} parent=5 // pred_check_branch
        %296 = sbr.rel (%p293) target = $region12
      $region11: #{self_attn_block.5} parent=5 // pred_region
        %s297 = ssub.s32 %s19, 1
        // Predicated region
        $region13: #{self_attn_block.5} parent=11 // pred_check
          %p298 = pneg %p108
        $region14: #{self_attn_block.5} parent=11 // pred_check_branch
          %300 = sbr.rel (%p298) target = $region16
        $region15: #{self_attn_block.5} parent=11 // pred_region
          _
        $region16: #{self_attn_block.5} parent=11 // pred_fallthru
          _
        // Predicated region
        $region17: #{self_attn_block.5} parent=11 // pred_check
          %p301 = pneg %p129
        $region18: #{self_attn_block.5} parent=11 // pred_check_branch
          %303 = sbr.rel (%p301) target = $region20
        $region19: #{self_attn_block.5} parent=11 // pred_region
          _
        $region20: #{self_attn_block.5} parent=11 // pred_fallthru
          _
        // Predicated region
        $region21: #{self_attn_block.5} parent=11 // pred_check
          %p304 = pneg %p150
        $region22: #{self_attn_block.5} parent=11 // pred_check_branch
          %306 = sbr.rel (%p304) target = $region24
        $region23: #{self_attn_block.5} parent=11 // pred_region
          _
        $region24: #{self_attn_block.5} parent=11 // pred_fallthru
          _
        // Predicated region
        $region25: #{self_attn_block.5} parent=11 // pred_check
          %p307 = pneg %p171
        $region26: #{self_attn_block.5} parent=11 // pred_check_branch
          %309 = sbr.rel (%p307) target = $region28
        $region27: #{self_attn_block.5} parent=11 // pred_region
          _
        $region28: #{self_attn_block.5} parent=11 // pred_fallthru
          _
        // Predicated region
        $region29: #{self_attn_block.5} parent=11 // pred_check
          %p310 = pneg %p192
        $region30: #{self_attn_block.5} parent=11 // pred_check_branch
          %312 = sbr.rel (%p310) target = $region32
        $region31: #{self_attn_block.5} parent=11 // pred_region
          _
        $region32: #{self_attn_block.5} parent=11 // pred_fallthru
          _
        // Predicated region
        $region33: #{self_attn_block.5} parent=11 // pred_check
          %p313 = pneg %p213
        $region34: #{self_attn_block.5} parent=11 // pred_check_branch
          %315 = sbr.rel (%p313) target = $region36
        $region35: #{self_attn_block.5} parent=11 // pred_region
          _
        $region36: #{self_attn_block.5} parent=11 // pred_fallthru
          _
        // Predicated region
        $region37: #{self_attn_block.5} parent=11 // pred_check
          %p316 = pneg %p234
        $region38: #{self_attn_block.5} parent=11 // pred_check_branch
          %318 = sbr.rel (%p316) target = $region40
        $region39: #{self_attn_block.5} parent=11 // pred_region
          _
        $region40: #{self_attn_block.5} parent=11 // pred_fallthru
          _
        // Predicated region
        $region41: #{self_attn_block.5} parent=11 // pred_check
          %p319 = pneg %p255
        $region42: #{self_attn_block.5} parent=11 // pred_check_branch
          %321 = sbr.rel (%p319) target = $region44
        $region43: #{self_attn_block.5} parent=11 // pred_region
          _
        $region44: #{self_attn_block.5} parent=11 // pred_fallthru
          _
      $region12: #{self_attn_block.5} parent=5 // pred_fallthru
        _
      %p322 = scmp.lt.s32.totalorder %s19, 4
      // Predicated region
      $region45: #{self_attn_block.5} parent=5 // pred_check
        %p323 = pneg %p322
      $region46: #{self_attn_block.5} parent=5 // pred_check_branch
        %325 = sbr.rel (%p323) target = $region48
      $region47: #{self_attn_block.5} parent=5 // pred_region
        // Predicated region
        $region49: #{self_attn_block.5} parent=47 // pred_check
          %p326 = pneg %p53
        $region50: #{self_attn_block.5} parent=47 // pred_check_branch
          %328 = sbr.rel (%p326) target = $region52
        $region51: #{self_attn_block.5} parent=47 // pred_region
          %s329 = smul.u32 8, %s27
          %p330 = scmp.lt.s32.totalorder %s26, 1
          %s331 = scalar_select %p330, %s26, 1
          %p332 = scmp.lt.s32.totalorder %s329, 15
          %s333 = scalar_select %p332, %s329, 15
          %s334 = smul.addr %s331, 16
          %s335 = sadd.s32 %s333, %s334
          %s336 = smul.addr %s335, 8
          %s337 = scalar_lea.vmem %s0, %s336
          %s338 = smul.u32 8, %s27
        $region52: #{self_attn_block.5} parent=47 // pred_fallthru
          _
        // Predicated region
        $region53: #{self_attn_block.5} parent=47 // pred_check
          %p339 = pneg %p81
        $region54: #{self_attn_block.5} parent=47 // pred_check_branch
          %341 = sbr.rel (%p339) target = $region56
        $region55: #{self_attn_block.5} parent=47 // pred_region
          %s342 = smul.u32 8, %s27
          %p343 = scmp.lt.s32.totalorder %s26, 1
          %s344 = scalar_select %p343, %s26, 1
          %p345 = scmp.lt.s32.totalorder %s342, 15
          %s346 = scalar_select %p345, %s342, 15
          %s347 = smul.addr %s344, 16
          %s348 = sadd.s32 %s346, %s347
          %s349 = smul.addr %s348, 8
          %s350 = scalar_lea.vmem %s1, %s349
          %s351 = smul.u32 8, %s27
        $region56: #{self_attn_block.5} parent=47 // pred_fallthru
          _
      $region48: #{self_attn_block.5} parent=5 // pred_fallthru
        _
      %p352 = scmp.le.s32.totalorder 1, %s19
      %p353 = scmp.lt.s32.totalorder %s19, 5
      %p354 = pnand %p352, %p353
      %p355 = pneg %p354
      // Predicated region
      $region57: #{self_attn_block.5} parent=5 // pred_check
        _
      $region58: #{self_attn_block.5} parent=5 // pred_check_branch
        %357 = sbr.rel (%p354) target = $region60
      $region59: #{self_attn_block.5} parent=5 // pred_region
        %s358 = ssub.s32 %s19, 1
        %s359 = smul.u32 8, %s29
        %p360 = scmp.lt.s32.totalorder %s28, 1
        %s361 = scalar_select %p360, %s28, 1
        %p362 = scmp.lt.s32.totalorder %s359, 15
        %s363 = scalar_select %p362, %s359, 15
        %s364 = smul.addr %s361, 16
        %s365 = sadd.s32 %s363, %s364
        %s366 = smul.addr %s365, 8
        %s367 = scalar_lea.vmem %s0, %s366
        %p368 = pneg %p59
        %p369 = pneg %p56
        %s370 = smul.u32 8, %s29
        %p371 = scmp.lt.s32.totalorder %s28, 1
        %s372 = scalar_select %p371, %s28, 1
        %p373 = scmp.lt.s32.totalorder %s370, 15
        %s374 = scalar_select %p373, %s370, 15
        %s375 = smul.addr %s372, 16
        %s376 = sadd.s32 %s374, %s375
        %s377 = smul.addr %s376, 8
        %s378 = scalar_lea.vmem %s1, %s377
        %p379 = pneg %p87
        %p380 = pneg %p84
        %p381 = pneg %p108
        %p382 = pneg %p105
        %p383 = pneg %p129
        %p384 = pneg %p126
        %p385 = pneg %p150
        %p386 = pneg %p147
        %p387 = pneg %p171
        %p388 = pneg %p168
        %p389 = pneg %p192
        %p390 = pneg %p189
        %p391 = pneg %p213
        %p392 = pneg %p210
        %p393 = pneg %p234
        %p394 = pneg %p231
        %p395 = pneg %p255
        %p396 = pneg %p252
        %p397 = pneg %p283
        %p398 = pneg %p280
        %s399 = sand.u32 %s270, 1
        %s400 = scalar_lea.sflag [#allocation3], %s399
        %s401 = sand.u32 %s270, 1
        %s402 = smul.addr %s401, 64
        %s403 = scalar_lea.vmem [#allocation2], %s402
        %s404 = smul.u32 8, %s29
        %p405 = scmp.lt.s32.totalorder %s28, 1
        %s406 = scalar_select %p405, %s28, 1
        %p407 = scmp.lt.s32.totalorder %s404, 15
        %s408 = scalar_select %p407, %s404, 15
        %s409 = smul.addr %s406, 16
        %s410 = sadd.s32 %s408, %s409
        %s411 = smul.addr %s410, 8
        %s412 = scalar_lea.vmem %s0, %s411
        %s413 = smul.u32 8, %s29
        %s414 = smul.u32 8, %s29
        %p415 = scmp.lt.s32.totalorder %s28, 1
        %s416 = scalar_select %p415, %s28, 1
        %p417 = scmp.lt.s32.totalorder %s414, 15
        %s418 = scalar_select %p417, %s414, 15
        %s419 = smul.addr %s416, 16
        %s420 = sadd.s32 %s418, %s419
        %s421 = smul.addr %s420, 8
        %s422 = scalar_lea.vmem %s1, %s421
        %s423 = smul.u32 8, %s29
        %s424 = smul.u32 8, %s29
        %v425 = vld [vmem:[%s412] sm:$0xff]
        %v426 = vld [vmem:[%s412 + $0x8] sm:$0xff]
        %v427 = vld [vmem:[%s412 + $0x10] sm:$0xff]
        %v428 = vld [vmem:[%s412 + $0x18] sm:$0xff]
        %v429 = vld [vmem:[%s412 + $0x20] sm:$0xff]
        %v430 = vld [vmem:[%s412 + $0x28] sm:$0xff]
        %v431 = vld [vmem:[%s412 + $0x30] sm:$0xff]
        %v432 = vld [vmem:[%s412 + $0x38] sm:$0xff]
        %v433 = vld [vmem:[%s422] sm:$0xff]
        %v434 = vld [vmem:[%s422 + $0x8] sm:$0xff]
        %v435 = vld [vmem:[%s422 + $0x10] sm:$0xff]
        %v436 = vld [vmem:[%s422 + $0x18] sm:$0xff]
        %v437 = vld [vmem:[%s422 + $0x20] sm:$0xff]
        %v438 = vld [vmem:[%s422 + $0x28] sm:$0xff]
        %v439 = vld [vmem:[%s422 + $0x30] sm:$0xff]
        %v440 = vld [vmem:[%s422 + $0x38] sm:$0xff]
        %v441 = vld [vmem:[%s2] sm:$0xff]
        %v442 = vld [vmem:[%s2 + $0x8] sm:$0xff]
        %v443 = vld [vmem:[%s2 + $0x10] sm:$0xff]
        %v444 = vld [vmem:[%s2 + $0x18] sm:$0xff]
        %v445 = vld [vmem:[%s2 + $0x20] sm:$0xff]
        %v446 = vld [vmem:[%s2 + $0x28] sm:$0xff]
        %v447 = vld [vmem:[%s2 + $0x30] sm:$0xff]
        %v448 = vld [vmem:[%s2 + $0x38] sm:$0xff]
        %v449 = vld [vmem:[%s2 + $0x40] sm:$0xff]
        %v450 = vld [vmem:[%s2 + $0x48] sm:$0xff]
        %v451 = vld [vmem:[%s2 + $0x50] sm:$0xff]
        %v452 = vld [vmem:[%s2 + $0x58] sm:$0xff]
        %v453 = vld [vmem:[%s2 + $0x60] sm:$0xff]
        %v454 = vld [vmem:[%s2 + $0x68] sm:$0xff]
        %v455 = vld [vmem:[%s2 + $0x70] sm:$0xff]
        %v456 = vld [vmem:[%s2 + $0x78] sm:$0xff]
        %v457 = vld [vmem:[%s3] sm:$0x1]
        %v459 = vlaneseq
        %v460 = vshrl.u32 %v459, 7
        %v461 = vsub.s32 0, %v460
        %v462 = vrot.slane %v457, %v461
        %464 = vmatprep.subr.mxu0 0.0
        %465 = vmatpush1.msra.mxu0 %v441
        %466 = vmatprep.subr.mxu0 0.0
        %467 = vmatpush1.msra.mxu0 %v442
        %468 = vmatprep.subr.mxu0 0.0
        %469 = vmatpush1.msra.mxu0 %v443
        %470 = vmatprep.subr.mxu0 0.0
        %471 = vmatpush1.msra.mxu0 %v444
        %472 = vmatprep.subr.mxu0 0.0
        %473 = vmatpush1.msra.mxu0 %v445
        %474 = vmatprep.subr.mxu0 0.0
        %475 = vmatpush1.msra.mxu0 %v446
        %476 = vmatprep.subr.mxu0 0.0
        %477 = vmatpush1.msra.mxu0 %v447
        %478 = vmatprep.subr.mxu0 0.0
        %479 = vmatpush1.msra.mxu0 %v448
        %480 = vmatprep.subr.mxu0 0.0
        %481 = vmatpush1.msra.mxu0 %v449
        %482 = vmatprep.subr.mxu0 0.0
        %483 = vmatpush1.msra.mxu0 %v450
        %484 = vmatprep.subr.mxu0 0.0
        %485 = vmatpush1.msra.mxu0 %v451
        %486 = vmatprep.subr.mxu0 0.0
        %487 = vmatpush1.msra.mxu0 %v452
        %488 = vmatprep.subr.mxu0 0.0
        %489 = vmatpush1.msra.mxu0 %v453
        %490 = vmatprep.subr.mxu0 0.0
        %491 = vmatpush1.msra.mxu0 %v454
        %492 = vmatprep.subr.mxu0 0.0
        %493 = vmatpush1.msra.mxu0 %v455
        %494 = vmatprep.subr.mxu0 0.0
        %495 = vmatpush1.msra.mxu0 %v456
        %496 = vmatprep.subr.mxu0 0.0
        %497 = vmatpush1.msra.mxu0 0.0
        %498 = vmatprep.subr.mxu0 0.0
        %499 = vmatpush1.msra.mxu0 0.0
        %500 = vmatprep.subr.mxu0 0.0
        %501 = vmatpush1.msra.mxu0 0.0
        %502 = vmatprep.subr.mxu0 0.0
        %503 = vmatpush1.msra.mxu0 0.0
        %504 = vmatprep.subr.mxu0 0.0
        %505 = vmatpush1.msra.mxu0 0.0
        %506 = vmatprep.subr.mxu0 0.0
        %507 = vmatpush1.msra.mxu0 0.0
        %508 = vmatprep.subr.mxu0 0.0
        %509 = vmatpush1.msra.mxu0 0.0
        %510 = vmatprep.subr.mxu0 0.0
        %511 = vmatpush1.msra.mxu0 0.0
        %512 = vmatprep.subr.mxu0 0.0
        %513 = vmatpush1.msra.mxu0 0.0
        %514 = vmatprep.subr.mxu0 0.0
        %515 = vmatpush1.msra.mxu0 0.0
        %516 = vmatprep.subr.mxu0 0.0
        %517 = vmatpush1.msra.mxu0 0.0
        %518 = vmatprep.subr.mxu0 0.0
        %519 = vmatpush1.msra.mxu0 0.0
        %520 = vmatprep.subr.mxu0 0.0
        %521 = vmatpush1.msra.mxu0 0.0
        %522 = vmatprep.subr.mxu0 0.0
        %523 = vmatpush1.msra.mxu0 0.0
        %524 = vmatprep.subr.mxu0 0.0
        %525 = vmatpush1.msra.mxu0 0.0
        %526 = vmatprep.subr.mxu0 0.0
        %527 = vmatpush1.msra.mxu0 0.0
        %528 = vmatprep.mubr.f32.mxu0 0.0
        %529 = vmatmul.mubr.f32.gmra.mrb[0].mxu0 %v433
        %v530 = vpop.f32.mrb[0].mxu0
        %v531 = vadd.f32 %v462, %v530
        %v532 = vpop.f32.mrb[0].mxu0
        %533 = vmatprep.mubr.f32.mxu0 0.0
        %534 = vmatmul.mubr.f32.gmra.mrb[0].mxu0 %v434
        %v535 = vpop.f32.mrb[0].mxu0
        %v536 = vadd.f32 %v462, %v535
        %v537 = vpop.f32.mrb[0].mxu0
        %538 = vmatprep.mubr.f32.mxu0 0.0
        %539 = vmatmul.mubr.f32.gmra.mrb[0].mxu0 %v435
        %v540 = vpop.f32.mrb[0].mxu0
        %v541 = vadd.f32 %v462, %v540
        %v542 = vpop.f32.mrb[0].mxu0
        %543 = vmatprep.mubr.f32.mxu0 0.0
        %544 = vmatmul.mubr.f32.gmra.mrb[0].mxu0 %v436
        %v545 = vpop.f32.mrb[0].mxu0
        %v546 = vadd.f32 %v462, %v545
        %v547 = vpop.f32.mrb[0].mxu0
        %548 = vmatprep.mubr.f32.mxu0 0.0
        %549 = vmatmul.mubr.f32.gmra.mrb[0].mxu0 %v437
        %v550 = vpop.f32.mrb[0].mxu0
        %v551 = vadd.f32 %v462, %v550
        %v552 = vpop.f32.mrb[0].mxu0
        %553 = vmatprep.mubr.f32.mxu0 0.0
        %554 = vmatmul.mubr.f32.gmra.mrb[0].mxu0 %v438
        %v555 = vpop.f32.mrb[0].mxu0
        %v556 = vadd.f32 %v462, %v555
        %v557 = vpop.f32.mrb[0].mxu0
        %558 = vmatprep.mubr.f32.mxu0 0.0
        %559 = vmatmul.mubr.f32.gmra.mrb[0].mxu0 %v439
        %v560 = vpop.f32.mrb[0].mxu0
        %v561 = vadd.f32 %v462, %v560
        %v562 = vpop.f32.mrb[0].mxu0
        %563 = vmatprep.mubr.f32.mxu0 0.0
        %564 = vmatmul.mubr.f32.gmra.mrb[0].mxu0 %v440
        %v565 = vpop.f32.mrb[0].mxu0
        %v566 = vadd.f32 %v462, %v565
        %v567 = vpop.f32.mrb[0].mxu0
        %568 = vdwg.mxu0
        %v569 = vadd.f32 %v425, %v531
        %v570 = vadd.f32 %v426, %v536
        %v571 = vadd.f32 %v427, %v541
        %v572 = vadd.f32 %v428, %v546
        %v573 = vadd.f32 %v429, %v551
        %v574 = vadd.f32 %v430, %v556
        %v575 = vadd.f32 %v431, %v561
        %v576 = vadd.f32 %v432, %v566
        %v577 = vld [vmem:[%s4] sm:$0x1]
        %v578 = vld [vmem:[%s5] sm:$0x1]
        %579 = vadd.xlane.f32.xlu0 %v569
        %v580 = vpop.xlane.xlu0 %579
        %581 = vadd.xlane.f32.xlu0 %v570
        %v582 = vpop.xlane.xlu0 %581
        %583 = vadd.xlane.f32.xlu0 %v571
        %v584 = vpop.xlane.xlu0 %583
        %585 = vadd.xlane.f32.xlu0 %v572
        %v586 = vpop.xlane.xlu0 %585
        %587 = vadd.xlane.f32.xlu0 %v573
        %v588 = vpop.xlane.xlu0 %587
        %589 = vadd.xlane.f32.xlu0 %v574
        %v590 = vpop.xlane.xlu0 %589
        %591 = vadd.xlane.f32.xlu0 %v575
        %v592 = vpop.xlane.xlu0 %591
        %593 = vadd.xlane.f32.xlu0 %v576
        %v594 = vpop.xlane.xlu0 %593
        %v595 = vrcp.pop 128.0
        %v596 = vmul.f32 %v580, %v595
        %v597 = vmul.f32 %v582, %v595
        %v598 = vmul.f32 %v584, %v595
        %v599 = vmul.f32 %v586, %v595
        %v600 = vmul.f32 %v588, %v595
        %v601 = vmul.f32 %v590, %v595
        %v602 = vmul.f32 %v592, %v595
        %v603 = vmul.f32 %v594, %v595
        %v604 = vsub.f32 %v569, %v596
        %v605 = vsub.f32 %v570, %v597
        %v606 = vsub.f32 %v571, %v598
        %v607 = vsub.f32 %v572, %v599
        %v608 = vsub.f32 %v573, %v600
        %v609 = vsub.f32 %v574, %v601
        %v610 = vsub.f32 %v575, %v602
        %v611 = vsub.f32 %v576, %v603
        %v612 = vmul.f32 %v604, %v604
        %v613 = vmul.f32 %v605, %v605
        %v614 = vmul.f32 %v606, %v606
        %v615 = vmul.f32 %v607, %v607
        %v616 = vmul.f32 %v608, %v608
        %v617 = vmul.f32 %v609, %v609
        %v618 = vmul.f32 %v610, %v610
        %v619 = vmul.f32 %v611, %v611
        %620 = vadd.xlane.f32.xlu0 %v612
        %v621 = vpop.xlane.xlu0 %620
        %622 = vadd.xlane.f32.xlu0 %v613
        %v623 = vpop.xlane.xlu0 %622
        %624 = vadd.xlane.f32.xlu0 %v614
        %v625 = vpop.xlane.xlu0 %624
        %626 = vadd.xlane.f32.xlu0 %v615
        %v627 = vpop.xlane.xlu0 %626
        %628 = vadd.xlane.f32.xlu0 %v616
        %v629 = vpop.xlane.xlu0 %628
        %630 = vadd.xlane.f32.xlu0 %v617
        %v631 = vpop.xlane.xlu0 %630
        %632 = vadd.xlane.f32.xlu0 %v618
        %v633 = vpop.xlane.xlu0 %632
        %634 = vadd.xlane.f32.xlu0 %v619
        %v635 = vpop.xlane.xlu0 %634
        %v636 = vmul.f32 %v621, %v595
        %v637 = vmul.f32 %v623, %v595
        %v638 = vmul.f32 %v625, %v595
        %v639 = vmul.f32 %v627, %v595
        %v640 = vmul.f32 %v629, %v595
        %v641 = vmul.f32 %v631, %v595
        %v642 = vmul.f32 %v633, %v595
        %v643 = vmul.f32 %v635, %v595
        %v644 = vadd.f32 %v636, 1e-05
        %v645 = vadd.f32 %v637, 1e-05
        %v646 = vadd.f32 %v638, 1e-05
        %v647 = vadd.f32 %v639, 1e-05
        %v648 = vadd.f32 %v640, 1e-05
        %v649 = vadd.f32 %v641, 1e-05
        %v650 = vadd.f32 %v642, 1e-05
        %v651 = vadd.f32 %v643, 1e-05
        %v652 = vrsqrt.pop %v644
        %v653 = vrsqrt.pop %v645
        %v654 = vrsqrt.pop %v646
        %v655 = vrsqrt.pop %v647
        %v656 = vrsqrt.pop %v648
        %v657 = vrsqrt.pop %v649
        %v658 = vrsqrt.pop %v650
        %v659 = vrsqrt.pop %v651
        %v660 = vmul.f32 %v604, %v652
        %v661 = vmul.f32 %v605, %v653
        %v662 = vmul.f32 %v606, %v654
        %v663 = vmul.f32 %v607, %v655
        %v664 = vmul.f32 %v608, %v656
        %v665 = vmul.f32 %v609, %v657
        %v666 = vmul.f32 %v610, %v658
        %v667 = vmul.f32 %v611, %v659
        %v669 = vlaneseq
        %v670 = vshrl.u32 %v669, 7
        %v671 = vsub.s32 0, %v670
        %v672 = vrot.slane %v577, %v671
        %v674 = vmul.f32 %v660, %v672
        %v675 = vmul.f32 %v661, %v672
        %v676 = vmul.f32 %v662, %v672
        %v677 = vmul.f32 %v663, %v672
        %v678 = vmul.f32 %v664, %v672
        %v679 = vmul.f32 %v665, %v672
        %v680 = vmul.f32 %v666, %v672
        %v681 = vmul.f32 %v667, %v672
        %v683 = vlaneseq
        %v684 = vshrl.u32 %v683, 7
        %v685 = vsub.s32 0, %v684
        %v686 = vrot.slane %v578, %v685
        %v688 = vadd.f32 %v674, %v686
        %v689 = vadd.f32 %v675, %v686
        %v690 = vadd.f32 %v676, %v686
        %v691 = vadd.f32 %v677, %v686
        %v692 = vadd.f32 %v678, %v686
        %v693 = vadd.f32 %v679, %v686
        %v694 = vadd.f32 %v680, %v686
        %v695 = vadd.f32 %v681, %v686
        %v696 = vld [vmem:[%s6] sm:$0xff]
        %v697 = vld [vmem:[%s6 + $0x8] sm:$0xff]
        %v698 = vld [vmem:[%s6 + $0x10] sm:$0xff]
        %v699 = vld [vmem:[%s6 + $0x18] sm:$0xff]
        %v700 = vld [vmem:[%s6 + $0x20] sm:$0xff]
        %v701 = vld [vmem:[%s6 + $0x28] sm:$0xff]
        %v702 = vld [vmem:[%s6 + $0x30] sm:$0xff]
        %v703 = vld [vmem:[%s6 + $0x38] sm:$0xff]
        %v704 = vld [vmem:[%s6 + $0x40] sm:$0xff]
        %v705 = vld [vmem:[%s6 + $0x48] sm:$0xff]
        %v706 = vld [vmem:[%s6 + $0x50] sm:$0xff]
        %v707 = vld [vmem:[%s6 + $0x58] sm:$0xff]
        %v708 = vld [vmem:[%s6 + $0x60] sm:$0xff]
        %v709 = vld [vmem:[%s6 + $0x68] sm:$0xff]
        %v710 = vld [vmem:[%s6 + $0x70] sm:$0xff]
        %v711 = vld [vmem:[%s6 + $0x78] sm:$0xff]
        %v712 = vld [vmem:[%s6 + $0x80] sm:$0xff]
        %v713 = vld [vmem:[%s6 + $0x88] sm:$0xff]
        %v714 = vld [vmem:[%s6 + $0x90] sm:$0xff]
        %v715 = vld [vmem:[%s6 + $0x98] sm:$0xff]
        %v716 = vld [vmem:[%s6 + $0xa0] sm:$0xff]
        %v717 = vld [vmem:[%s6 + $0xa8] sm:$0xff]
        %v718 = vld [vmem:[%s6 + $0xb0] sm:$0xff]
        %v719 = vld [vmem:[%s6 + $0xb8] sm:$0xff]
        %v720 = vld [vmem:[%s6 + $0xc0] sm:$0xff]
        %v721 = vld [vmem:[%s6 + $0xc8] sm:$0xff]
        %v722 = vld [vmem:[%s6 + $0xd0] sm:$0xff]
        %v723 = vld [vmem:[%s6 + $0xd8] sm:$0xff]
        %v724 = vld [vmem:[%s6 + $0xe0] sm:$0xff]
        %v725 = vld [vmem:[%s6 + $0xe8] sm:$0xff]
        %v726 = vld [vmem:[%s6 + $0xf0] sm:$0xff]
        %v727 = vld [vmem:[%s6 + $0xf8] sm:$0xff]
        %v728 = vld [vmem:[%s7] sm:$0x3]
        %v730 = vlaneseq
        %v731 = vshrl.u32 %v730, 7
        %v732 = vsub.s32 0, %v731
        %v733 = vrot.slane %v728, %v732
        %v734 = vlaneseq
        %v735 = vshrl.u32 %v734, 7
        %v736 = vsub.s32 1, %v735
        %v737 = vrot.slane %v728, %v736
        %740 = vmatprep.subr.mxu0 %v697
        %741 = vmatpush1.msra.mxu0 %v696
        %742 = vmatprep.subr.mxu0 %v699
        %743 = vmatpush1.msra.mxu0 %v698
        %744 = vmatprep.subr.mxu0 %v701
        %745 = vmatpush1.msra.mxu0 %v700
        %746 = vmatprep.subr.mxu0 %v703
        %747 = vmatpush1.msra.mxu0 %v702
        %748 = vmatprep.subr.mxu0 %v705
        %749 = vmatpush1.msra.mxu0 %v704
        %750 = vmatprep.subr.mxu0 %v707
        %751 = vmatpush1.msra.mxu0 %v706
        %752 = vmatprep.subr.mxu0 %v709
        %753 = vmatpush1.msra.mxu0 %v708
        %754 = vmatprep.subr.mxu0 %v711
        %755 = vmatpush1.msra.mxu0 %v710
        %756 = vmatprep.subr.mxu0 %v713
        %757 = vmatpush1.msra.mxu0 %v712
        %758 = vmatprep.subr.mxu0 %v715
        %759 = vmatpush1.msra.mxu0 %v714
        %760 = vmatprep.subr.mxu0 %v717
        %761 = vmatpush1.msra.mxu0 %v716
        %762 = vmatprep.subr.mxu0 %v719
        %763 = vmatpush1.msra.mxu0 %v718
        %764 = vmatprep.subr.mxu0 %v721
        %765 = vmatpush1.msra.mxu0 %v720
        %766 = vmatprep.subr.mxu0 %v723
        %767 = vmatpush1.msra.mxu0 %v722
        %768 = vmatprep.subr.mxu0 %v725
        %769 = vmatpush1.msra.mxu0 %v724
        %770 = vmatprep.subr.mxu0 %v727
        %771 = vmatpush1.msra.mxu0 %v726
        %772 = vmatprep.subr.mxu0 0.0
        %773 = vmatpush1.msra.mxu0 0.0
        %774 = vmatprep.subr.mxu0 0.0
        %775 = vmatpush1.msra.mxu0 0.0
        %776 = vmatprep.subr.mxu0 0.0
        %777 = vmatpush1.msra.mxu0 0.0
        %778 = vmatprep.subr.mxu0 0.0
        %779 = vmatpush1.msra.mxu0 0.0
        %780 = vmatprep.subr.mxu0 0.0
        %781 = vmatpush1.msra.mxu0 0.0
        %782 = vmatprep.subr.mxu0 0.0
        %783 = vmatpush1.msra.mxu0 0.0
        %784 = vmatprep.subr.mxu0 0.0
        %785 = vmatpush1.msra.mxu0 0.0
        %786 = vmatprep.subr.mxu0 0.0
        %787 = vmatpush1.msra.mxu0 0.0
        %788 = vmatprep.subr.mxu0 0.0
        %789 = vmatpush1.msra.mxu0 0.0
        %790 = vmatprep.subr.mxu0 0.0
        %791 = vmatpush1.msra.mxu0 0.0
        %792 = vmatprep.subr.mxu0 0.0
        %793 = vmatpush1.msra.mxu0 0.0
        %794 = vmatprep.subr.mxu0 0.0
        %795 = vmatpush1.msra.mxu0 0.0
        %796 = vmatprep.subr.mxu0 0.0
        %797 = vmatpush1.msra.mxu0 0.0
        %798 = vmatprep.subr.mxu0 0.0
        %799 = vmatpush1.msra.mxu0 0.0
        %800 = vmatprep.subr.mxu0 0.0
        %801 = vmatpush1.msra.mxu0 0.0
        %802 = vmatprep.subr.mxu0 0.0
        %803 = vmatpush1.msra.mxu0 0.0
        %804 = vmatprep.mubr.f32.mxu0 0.0
        %805 = vmatmul.mubr.f32.gmra.mrb[0].mxu0 %v688
        %v806 = vpop.f32.mrb[0].mxu0
        %v807 = vadd.f32 %v733, %v806
        %v808 = vpop.f32.mrb[0].mxu0
        %v809 = vadd.f32 %v737, %v808
        %810 = vmatprep.mubr.f32.mxu0 0.0
        %811 = vmatmul.mubr.f32.gmra.mrb[0].mxu0 %v689
        %v812 = vpop.f32.mrb[0].mxu0
        %v813 = vadd.f32 %v733, %v812
        %v814 = vpop.f32.mrb[0].mxu0
        %v815 = vadd.f32 %v737, %v814
        %816 = vmatprep.mubr.f32.mxu0 0.0
        %817 = vmatmul.mubr.f32.gmra.mrb[0].mxu0 %v690
        %v818 = vpop.f32.mrb[0].mxu0
        %v819 = vadd.f32 %v733, %v818
        %v820 = vpop.f32.mrb[0].mxu0
        %v821 = vadd.f32 %v737, %v820
        %822 = vmatprep.mubr.f32.mxu0 0.0
        %823 = vmatmul.mubr.f32.gmra.mrb[0].mxu0 %v691
        %v824 = vpop.f32.mrb[0].mxu0
        %v825 = vadd.f32 %v733, %v824
        %v826 = vpop.f32.mrb[0].mxu0
        %v827 = vadd.f32 %v737, %v826
        %828 = vmatprep.mubr.f32.mxu0 0.0
        %829 = vmatmul.mubr.f32.gmra.mrb[0].mxu0 %v692
        %v830 = vpop.f32.mrb[0].mxu0
        %v831 = vadd.f32 %v733, %v830
        %v832 = vpop.f32.mrb[0].mxu0
        %v833 = vadd.f32 %v737, %v832
        %834 = vmatprep.mubr.f32.mxu0 0.0
        %835 = vmatmul.mubr.f32.gmra.mrb[0].mxu0 %v693
        %v836 = vpop.f32.mrb[0].mxu0
        %v837 = vadd.f32 %v733, %v836
        %v838 = vpop.f32.mrb[0].mxu0
        %v839 = vadd.f32 %v737, %v838
        %840 = vmatprep.mubr.f32.mxu0 0.0
        %841 = vmatmul.mubr.f32.gmra.mrb[0].mxu0 %v694
        %v842 = vpop.f32.mrb[0].mxu0
        %v843 = vadd.f32 %v733, %v842
        %v844 = vpop.f32.mrb[0].mxu0
        %v845 = vadd.f32 %v737, %v844
        %846 = vmatprep.mubr.f32.mxu0 0.0
        %847 = vmatmul.mubr.f32.gmra.mrb[0].mxu0 %v695
        %v848 = vpop.f32.mrb[0].mxu0
        %v849 = vadd.f32 %v733, %v848
        %v850 = vpop.f32.mrb[0].mxu0
        %v851 = vadd.f32 %v737, %v850
        %852 = vdwg.mxu0
        %v853 = vmul.f32 %v807, 0.5
        %v854 = vmul.f32 %v809, 0.5
        %v855 = vmul.f32 %v813, 0.5
        %v856 = vmul.f32 %v815, 0.5
        %v857 = vmul.f32 %v819, 0.5
        %v858 = vmul.f32 %v821, 0.5
        %v859 = vmul.f32 %v825, 0.5
        %v860 = vmul.f32 %v827, 0.5
        %v861 = vmul.f32 %v831, 0.5
        %v862 = vmul.f32 %v833, 0.5
        %v863 = vmul.f32 %v837, 0.5
        %v864 = vmul.f32 %v839, 0.5
        %v865 = vmul.f32 %v843, 0.5
        %v866 = vmul.f32 %v845, 0.5
        %v867 = vmul.f32 %v849, 0.5
        %v868 = vmul.f32 %v851, 0.5
        %v869 = vmul.f32 %v807, 0.70710677
        %v870 = vmul.f32 %v809, 0.70710677
        %v871 = vmul.f32 %v813, 0.70710677
        %v872 = vmul.f32 %v815, 0.70710677
        %v873 = vmul.f32 %v819, 0.70710677
        %v874 = vmul.f32 %v821, 0.70710677
        %v875 = vmul.f32 %v825, 0.70710677
        %v876 = vmul.f32 %v827, 0.70710677
        %v877 = vmul.f32 %v831, 0.70710677
        %v878 = vmul.f32 %v833, 0.70710677
        %v879 = vmul.f32 %v837, 0.70710677
        %v880 = vmul.f32 %v839, 0.70710677
        %v881 = vmul.f32 %v843, 0.70710677
        %v882 = vmul.f32 %v845, 0.70710677
        %v883 = vmul.f32 %v849, 0.70710677
        %v884 = vmul.f32 %v851, 0.70710677
        %v885 = verf.f32.pop %v869
        %v886 = verf.f32.pop %v870
        %v887 = verf.f32.pop %v871
        %v888 = verf.f32.pop %v872
        %v889 = verf.f32.pop %v873
        %v890 = verf.f32.pop %v874
        %v891 = verf.f32.pop %v875
        %v892 = verf.f32.pop %v876
        %v893 = verf.f32.pop %v877
        %v894 = verf.f32.pop %v878
        %v895 = verf.f32.pop %v879
        %v896 = verf.f32.pop %v880
        %v897 = verf.f32.pop %v881
        %v898 = verf.f32.pop %v882
        %v899 = verf.f32.pop %v883
        %v900 = verf.f32.pop %v884
        %v901 = vadd.f32 %v885, 1.0
        %v902 = vadd.f32 %v886, 1.0
        %v903 = vadd.f32 %v887, 1.0
        %v904 = vadd.f32 %v888, 1.0
        %v905 = vadd.f32 %v889, 1.0
        %v906 = vadd.f32 %v890, 1.0
        %v907 = vadd.f32 %v891, 1.0
        %v908 = vadd.f32 %v892, 1.0
        %v909 = vadd.f32 %v893, 1.0
        %v910 = vadd.f32 %v894, 1.0
        %v911 = vadd.f32 %v895, 1.0
        %v912 = vadd.f32 %v896, 1.0
        %v913 = vadd.f32 %v897, 1.0
        %v914 = vadd.f32 %v898, 1.0
        %v915 = vadd.f32 %v899, 1.0
        %v916 = vadd.f32 %v900, 1.0
        %v917 = vmul.f32 %v853, %v901
        %v918 = vmul.f32 %v854, %v902
        %v919 = vmul.f32 %v855, %v903
        %v920 = vmul.f32 %v856, %v904
        %v921 = vmul.f32 %v857, %v905
        %v922 = vmul.f32 %v858, %v906
        %v923 = vmul.f32 %v859, %v907
        %v924 = vmul.f32 %v860, %v908
        %v925 = vmul.f32 %v861, %v909
        %v926 = vmul.f32 %v862, %v910
        %v927 = vmul.f32 %v863, %v911
        %v928 = vmul.f32 %v864, %v912
        %v929 = vmul.f32 %v865, %v913
        %v930 = vmul.f32 %v866, %v914
        %v931 = vmul.f32 %v867, %v915
        %v932 = vmul.f32 %v868, %v916
        %v933 = vld [vmem:[%s8] sm:$0xff]
        %v934 = vld [vmem:[%s8 + $0x8] sm:$0xff]
        %v935 = vld [vmem:[%s8 + $0x10] sm:$0xff]
        %v936 = vld [vmem:[%s8 + $0x18] sm:$0xff]
        %v937 = vld [vmem:[%s8 + $0x20] sm:$0xff]
        %v938 = vld [vmem:[%s8 + $0x28] sm:$0xff]
        %v939 = vld [vmem:[%s8 + $0x30] sm:$0xff]
        %v940 = vld [vmem:[%s8 + $0x38] sm:$0xff]
        %v941 = vld [vmem:[%s8 + $0x40] sm:$0xff]
        %v942 = vld [vmem:[%s8 + $0x48] sm:$0xff]
        %v943 = vld [vmem:[%s8 + $0x50] sm:$0xff]
        %v944 = vld [vmem:[%s8 + $0x58] sm:$0xff]
        %v945 = vld [vmem:[%s8 + $0x60] sm:$0xff]
        %v946 = vld [vmem:[%s8 + $0x68] sm:$0xff]
        %v947 = vld [vmem:[%s8 + $0x70] sm:$0xff]
        %v948 = vld [vmem:[%s8 + $0x78] sm:$0xff]
        %v949 = vld [vmem:[%s8 + $0x80] sm:$0xff]
        %v950 = vld [vmem:[%s8 + $0x88] sm:$0xff]
        %v951 = vld [vmem:[%s8 + $0x90] sm:$0xff]
        %v952 = vld [vmem:[%s8 + $0x98] sm:$0xff]
        %v953 = vld [vmem:[%s8 + $0xa0] sm:$0xff]
        %v954 = vld [vmem:[%s8 + $0xa8] sm:$0xff]
        %v955 = vld [vmem:[%s8 + $0xb0] sm:$0xff]
        %v956 = vld [vmem:[%s8 + $0xb8] sm:$0xff]
        %v957 = vld [vmem:[%s8 + $0xc0] sm:$0xff]
        %v958 = vld [vmem:[%s8 + $0xc8] sm:$0xff]
        %v959 = vld [vmem:[%s8 + $0xd0] sm:$0xff]
        %v960 = vld [vmem:[%s8 + $0xd8] sm:$0xff]
        %v961 = vld [vmem:[%s8 + $0xe0] sm:$0xff]
        %v962 = vld [vmem:[%s8 + $0xe8] sm:$0xff]
        %v963 = vld [vmem:[%s8 + $0xf0] sm:$0xff]
        %v964 = vld [vmem:[%s8 + $0xf8] sm:$0xff]
        %v965 = vld [vmem:[%s9] sm:$0x1]
        %v967 = vlaneseq
        %v968 = vshrl.u32 %v967, 7
        %v969 = vsub.s32 0, %v968
        %v970 = vrot.slane %v965, %v969
        %972 = vmatprep.subr.mxu0 0.0
        %973 = vmatpush1.msra.mxu0 %v933
        %974 = vmatprep.subr.mxu0 0.0
        %975 = vmatpush1.msra.mxu0 %v934
        %976 = vmatprep.subr.mxu0 0.0
        %977 = vmatpush1.msra.mxu0 %v935
        %978 = vmatprep.subr.mxu0 0.0
        %979 = vmatpush1.msra.mxu0 %v936
        %980 = vmatprep.subr.mxu0 0.0
        %981 = vmatpush1.msra.mxu0 %v937
        %982 = vmatprep.subr.mxu0 0.0
        %983 = vmatpush1.msra.mxu0 %v938
        %984 = vmatprep.subr.mxu0 0.0
        %985 = vmatpush1.msra.mxu0 %v939
        %986 = vmatprep.subr.mxu0 0.0
        %987 = vmatpush1.msra.mxu0 %v940
        %988 = vmatprep.subr.mxu0 0.0
        %989 = vmatpush1.msra.mxu0 %v941
        %990 = vmatprep.subr.mxu0 0.0
        %991 = vmatpush1.msra.mxu0 %v942
        %992 = vmatprep.subr.mxu0 0.0
        %993 = vmatpush1.msra.mxu0 %v943
        %994 = vmatprep.subr.mxu0 0.0
        %995 = vmatpush1.msra.mxu0 %v944
        %996 = vmatprep.subr.mxu0 0.0
        %997 = vmatpush1.msra.mxu0 %v945
        %998 = vmatprep.subr.mxu0 0.0
        %999 = vmatpush1.msra.mxu0 %v946
        %1000 = vmatprep.subr.mxu0 0.0
        %1001 = vmatpush1.msra.mxu0 %v947
        %1002 = vmatprep.subr.mxu0 0.0
        %1003 = vmatpush1.msra.mxu0 %v948
        %1004 = vmatprep.subr.mxu0 0.0
        %1005 = vmatpush1.msra.mxu0 %v949
        %1006 = vmatprep.subr.mxu0 0.0
        %1007 = vmatpush1.msra.mxu0 %v950
        %1008 = vmatprep.subr.mxu0 0.0
        %1009 = vmatpush1.msra.mxu0 %v951
        %1010 = vmatprep.subr.mxu0 0.0
        %1011 = vmatpush1.msra.mxu0 %v952
        %1012 = vmatprep.subr.mxu0 0.0
        %1013 = vmatpush1.msra.mxu0 %v953
        %1014 = vmatprep.subr.mxu0 0.0
        %1015 = vmatpush1.msra.mxu0 %v954
        %1016 = vmatprep.subr.mxu0 0.0
        %1017 = vmatpush1.msra.mxu0 %v955
        %1018 = vmatprep.subr.mxu0 0.0
        %1019 = vmatpush1.msra.mxu0 %v956
        %1020 = vmatprep.subr.mxu0 0.0
        %1021 = vmatpush1.msra.mxu0 %v957
        %1022 = vmatprep.subr.mxu0 0.0
        %1023 = vmatpush1.msra.mxu0 %v958
        %1024 = vmatprep.subr.mxu0 0.0
        %1025 = vmatpush1.msra.mxu0 %v959
        %1026 = vmatprep.subr.mxu0 0.0
        %1027 = vmatpush1.msra.mxu0 %v960
        %1028 = vmatprep.subr.mxu0 0.0
        %1029 = vmatpush1.msra.mxu0 %v961
        %1030 = vmatprep.subr.mxu0 0.0
        %1031 = vmatpush1.msra.mxu0 %v962
        %1032 = vmatprep.subr.mxu0 0.0
        %1033 = vmatpush1.msra.mxu0 %v963
        %1034 = vmatprep.subr.mxu0 0.0
        %1035 = vmatpush1.msra.mxu0 %v964
        %1036 = vmatprep.mubr.f32.mxu0 %v918
        %1037 = vmatmul.mubr.f32.gmra.mrb[0].mxu0 %v917
        %v1038 = vpop.f32.mrb[0].mxu0
        %v1039 = vadd.f32 %v970, %v1038
        %v1040 = vpop.f32.mrb[0].mxu0
        %1041 = vmatprep.mubr.f32.mxu0 %v920
        %1042 = vmatmul.mubr.f32.gmra.mrb[0].mxu0 %v919
        %v1043 = vpop.f32.mrb[0].mxu0
        %v1044 = vadd.f32 %v970, %v1043
        %v1045 = vpop.f32.mrb[0].mxu0
        %1046 = vmatprep.mubr.f32.mxu0 %v922
        %1047 = vmatmul.mubr.f32.gmra.mrb[0].mxu0 %v921
        %v1048 = vpop.f32.mrb[0].mxu0
        %v1049 = vadd.f32 %v970, %v1048
        %v1050 = vpop.f32.mrb[0].mxu0
        %1051 = vmatprep.mubr.f32.mxu0 %v924
        %1052 = vmatmul.mubr.f32.gmra.mrb[0].mxu0 %v923
        %v1053 = vpop.f32.mrb[0].mxu0
        %v1054 = vadd.f32 %v970, %v1053
        %v1055 = vpop.f32.mrb[0].mxu0
        %1056 = vmatprep.mubr.f32.mxu0 %v926
        %1057 = vmatmul.mubr.f32.gmra.mrb[0].mxu0 %v925
        %v1058 = vpop.f32.mrb[0].mxu0
        %v1059 = vadd.f32 %v970, %v1058
        %v1060 = vpop.f32.mrb[0].mxu0
        %1061 = vmatprep.mubr.f32.mxu0 %v928
        %1062 = vmatmul.mubr.f32.gmra.mrb[0].mxu0 %v927
        %v1063 = vpop.f32.mrb[0].mxu0
        %v1064 = vadd.f32 %v970, %v1063
        %v1065 = vpop.f32.mrb[0].mxu0
        %1066 = vmatprep.mubr.f32.mxu0 %v930
        %1067 = vmatmul.mubr.f32.gmra.mrb[0].mxu0 %v929
        %v1068 = vpop.f32.mrb[0].mxu0
        %v1069 = vadd.f32 %v970, %v1068
        %v1070 = vpop.f32.mrb[0].mxu0
        %1071 = vmatprep.mubr.f32.mxu0 %v932
        %1072 = vmatmul.mubr.f32.gmra.mrb[0].mxu0 %v931
        %v1073 = vpop.f32.mrb[0].mxu0
        %v1074 = vadd.f32 %v970, %v1073
        %v1075 = vpop.f32.mrb[0].mxu0
        %1076 = vdwg.mxu0
        %v1077 = vadd.f32 %v569, %v1039
        %v1078 = vadd.f32 %v570, %v1044
        %v1079 = vadd.f32 %v571, %v1049
        %v1080 = vadd.f32 %v572, %v1054
        %v1081 = vadd.f32 %v573, %v1059
        %v1082 = vadd.f32 %v574, %v1064
        %v1083 = vadd.f32 %v575, %v1069
        %v1084 = vadd.f32 %v576, %v1074
        %1085 = vst [vmem:[%s403] sm:$0xff] %v1077
        %1086 = vst [vmem:[%s403 + $0x8] sm:$0xff] %v1078
        %1087 = vst [vmem:[%s403 + $0x10] sm:$0xff] %v1079
        %1088 = vst [vmem:[%s403 + $0x18] sm:$0xff] %v1080
        %1089 = vst [vmem:[%s403 + $0x20] sm:$0xff] %v1081
        %1090 = vst [vmem:[%s403 + $0x28] sm:$0xff] %v1082
        %1091 = vst [vmem:[%s403 + $0x30] sm:$0xff] %v1083
        %1092 = vst [vmem:[%s403 + $0x38] sm:$0xff] %v1084
        %s1093 = sand.u32 %s270, 1
        %s1094 = scalar_lea.sflag [#allocation3], %s1093
        %s1095 = sand.u32 %s270, 1
        %s1096 = smul.addr %s1095, 64
        %s1097 = scalar_lea.vmem [#allocation2], %s1096
        // Predicated region
        $region61: #{self_attn_block.5} parent=59 // pred_check
          %p1098 = pneg %p280
        $region62: #{self_attn_block.5} parent=59 // pred_check_branch
          %1100 = sbr.rel (%p1098) target = $region64
        $region63: #{self_attn_block.5} parent=59 // pred_region
          %s1101 = smul.u32 8, %s29
          %s1103 = ssub.s32 1024, 1024
          %1104 = vsyncadd %s1094, %s1103
          %s1105 = smul.addr %s28, 16
          %s1106 = sadd.s32 %s1101, %s1105
          %s1107 = smul.addr %s1106, 128
          %s1108 = scalar_lea.hbm %s10, %s1107
          %s1109 = sshll.u32 %s1097, 4
          %s1110 = int_to_ptr.vmem [resolvable:$true] %s1109
          %1115 = dma.vmem_to_hbm [thread:$0]  %s1110, 1024, %s1108, %s1094, 128, 128, 8
        $region64: #{self_attn_block.5} parent=59 // pred_fallthru
          _
      $region60: #{self_attn_block.5} parent=5 // pred_fallthru
        _
      %p1116 = scmp.le.s32.totalorder 2, %s19
      // Predicated region
      $region65: #{self_attn_block.5} parent=5 // pred_check
        %p1117 = pneg %p1116
      $region66: #{self_attn_block.5} parent=5 // pred_check_branch
        %1119 = sbr.rel (%p1117) target = $region68
      $region67: #{self_attn_block.5} parent=5 // pred_region
        %s1120 = ssub.s32 %s19, 2
        // Predicated region
        $region69: #{self_attn_block.5} parent=67 // pred_check
          %p1121 = pneg %p286
        $region70: #{self_attn_block.5} parent=67 // pred_check_branch
          %1123 = sbr.rel (%p1121) target = $region72
        $region71: #{self_attn_block.5} parent=67 // pred_region
          %s1124 = sand.u32 %s271, 1
          %s1125 = scalar_lea.sflag [#allocation3], %s1124
          %s1126 = sand.u32 %s271, 1
          %s1127 = smul.addr %s1126, 64
          %s1128 = scalar_lea.vmem [#allocation2], %s1127
          %1129 = dma.done %s1125, 1024
        $region72: #{self_attn_block.5} parent=67 // pred_fallthru
          _
      $region68: #{self_attn_block.5} parent=5 // pred_fallthru
        _
    $region6: #{self_attn_block.5} parent=1 // loop_footer
      %s23 = sadd.s32 1, %s19
    $region7: #{self_attn_block.5} parent=1 // loop_footer_branch
      %18 = sbr.rel target = $region3
    $region8: #{self_attn_block.5} parent=1 // loop_exit
      _
    %1130 = vsyncpa [#allocation3], 1
    %s1131 = scalar_lea.sflag [#allocation3], 1
    %1132 = vsyncpa %s1131, 1

// kernel: self_attn_block.4
$region0: #{self_attn_block.4}
  #allocation0 [shape = 'u32[]', space=smem, size = 0x4, offset = 0x4, fixed_abs, tag = 'smem constant byte address 0x4 - core index']
  #allocation1 [shape = 'u32[144,128]{1,0:T(1,128)}', space=vmem, size = 0x12000, scoped, tag = 'internal scratch']
  #allocation2 [shape = 'f32[8,64,1]{2,1,0:T(8,128)}', space=vmem, size = 0x40000, scoped, tag = 'scratch operand']
  #allocation3 [shape = 'f32[8,64,1]{2,1,0:T(8,128)}', space=vmem, size = 0x40000, scoped, tag = 'scratch operand']
  #allocation4 [shape = 'f32[8,64,16]{2,1,0:T(8,128)}', space=vmem, size = 0x40000, scoped, tag = 'scratch operand']
  %s0 = inlined_call_operand.vmem [shape: f32[2,128,128], index: 0, kind: input, shape index: {}]
  %s1 = inlined_call_operand.vmem [shape: f32[2,128,128], index: 1, kind: input, shape index: {}]
  %s2 = inlined_call_operand.vmem [shape: f32[2,128,128], index: 2, kind: input, shape index: {}]
  %s3 = inlined_call_operand.vmem [shape: f32[2,128,128], index: 3, kind: output, shape index: {}]
  %s4 = sld [smem:[#allocation0]]
  $region53: #{self_attn_block.4} parent=0
    _
  %s6 = ssub.s32 1, %s4
  %s7 = scalar_select 0, %s6, %s4
  loop: start=0, step=1, limit=10
  $region2: #{self_attn_block.4} parent=0 // loop_pre_header
    _
  $region3: #{self_attn_block.4} parent=0 // loop_header
    %s9 = sphi 0, %s13
    %p10 = scmp.ge.s32.totalorder %s9, 10
    %s16 = sphi 0, %s35
    %s17 = sphi 0, %s31
    %s18 = sphi 0, %s27
    %s19 = sphi 0, %s16
    %s20 = sphi 0, %s17
    %s21 = sphi 0, %s18
    %s22 = sphi 0, %s19
    %s23 = sphi 0, %s20
    %s24 = sphi 0, %s21
    %s40 = sphi 0, %s42
    %s43 = sphi 0, %s40
    %s44 = sphi 0, %s43
    %s60 = sphi 0, %s44
    %s68 = sphi 0, %s70
    %s71 = sphi 0, %s68
    %s72 = sphi 0, %s71
    %s88 = sphi 0, %s72
    %s96 = sphi 0, %s98
    %s99 = sphi 0, %s96
    %s100 = sphi 0, %s99
    %s116 = sphi 0, %s100
    %s124 = sphi 0, %s126
    %s127 = sphi 0, %s124
    %s128 = sphi 0, %s127
    %s144 = sphi 0, %s128
  $region4: #{self_attn_block.4} parent=0 // loop_header_branch
    %12 = sbr.rel (%p10) target = $region8
  $region5: #{self_attn_block.4} parent=0 // loop_body
    %s14 = ssub.s32 %s9, 1
    %s15 = ssub.s32 %s9, 2
    %s25 = sadd.s32 1, %s18
    %p26 = scmp.ge.s32.totalorder %s25, 2
    %s27 = scalar_select %p26, 0, %s25
    %s28 = sadd.s32 1, %s17
    %s29 = scalar_select %p26, %s28, %s17
    %p30 = scmp.ge.s32.totalorder %s29, 2
    %s31 = scalar_select %p30, 0, %s29
    %s32 = sadd.s32 1, %s16
    %s33 = scalar_select %p30, %s32, %s16
    %p34 = scmp.ge.s32.totalorder %s33, 2
    %s35 = scalar_select %p34, 0, %s33
    %s36 = ssub.s32 %s16, %s35
    %s37 = ssub.s32 %s17, %s31
    %s38 = sor.u32 %s36, %s37
    %p39 = scmp.eq.s32.totalorder %s38, 0
    %s41 = sadd.s32 %s40, 1
    %s42 = scalar_select %p39, %s40, %s41
    %p45 = pneg %p39
    %p46 = scmp.eq.s32.totalorder %s9, 7
    %p47 = por %p45, %p46
    %p48 = scmp.ne.s32.totalorder %s40, %s43
    %p49 = scmp.eq.s32.totalorder %s9, 0
    %p50 = por %p48, %p49
    %p51 = scmp.ne.s32.totalorder %s40, %s43
    %p52 = scmp.eq.s32.totalorder %s14, 7
    %p53 = por %p51, %p52
    %p54 = scmp.ne.s32.totalorder %s43, %s44
    %p55 = scmp.eq.s32.totalorder %s14, 0
    %p56 = por %p54, %p55
    %p57 = scmp.ne.s32.totalorder %s43, %s44
    %p58 = scmp.eq.s32.totalorder %s15, 7
    %p59 = por %p57, %p58
    %p61 = scmp.ne.s32.totalorder %s44, %s60
    %p62 = scmp.eq.s32.totalorder %s15, 0
    %p63 = por %p61, %p62
    %s64 = ssub.s32 %s16, %s35
    %s65 = ssub.s32 %s18, %s27
    %s66 = sor.u32 %s64, %s65
    %p67 = scmp.eq.s32.totalorder %s66, 0
    %s69 = sadd.s32 %s68, 1
    %s70 = scalar_select %p67, %s68, %s69
    %p73 = pneg %p67
    %p74 = scmp.eq.s32.totalorder %s9, 7
    %p75 = por %p73, %p74
    %p76 = scmp.ne.s32.totalorder %s68, %s71
    %p77 = scmp.eq.s32.totalorder %s9, 0
    %p78 = por %p76, %p77
    %p79 = scmp.ne.s32.totalorder %s68, %s71
    %p80 = scmp.eq.s32.totalorder %s14, 7
    %p81 = por %p79, %p80
    %p82 = scmp.ne.s32.totalorder %s71, %s72
    %p83 = scmp.eq.s32.totalorder %s14, 0
    %p84 = por %p82, %p83
    %p85 = scmp.ne.s32.totalorder %s71, %s72
    %p86 = scmp.eq.s32.totalorder %s15, 7
    %p87 = por %p85, %p86
    %p89 = scmp.ne.s32.totalorder %s72, %s88
    %p90 = scmp.eq.s32.totalorder %s15, 0
    %p91 = por %p89, %p90
    %s92 = ssub.s32 %s16, %s35
    %s93 = ssub.s32 %s18, %s27
    %s94 = sor.u32 %s92, %s93
    %p95 = scmp.eq.s32.totalorder %s94, 0
    %s97 = sadd.s32 %s96, 1
    %s98 = scalar_select %p95, %s96, %s97
    %p101 = pneg %p95
    %p102 = scmp.eq.s32.totalorder %s9, 7
    %p103 = por %p101, %p102
    %p104 = scmp.ne.s32.totalorder %s96, %s99
    %p105 = scmp.eq.s32.totalorder %s9, 0
    %p106 = por %p104, %p105
    %p107 = scmp.ne.s32.totalorder %s96, %s99
    %p108 = scmp.eq.s32.totalorder %s14, 7
    %p109 = por %p107, %p108
    %p110 = scmp.ne.s32.totalorder %s99, %s100
    %p111 = scmp.eq.s32.totalorder %s14, 0
    %p112 = por %p110, %p111
    %p113 = scmp.ne.s32.totalorder %s99, %s100
    %p114 = scmp.eq.s32.totalorder %s15, 7
    %p115 = por %p113, %p114
    %p117 = scmp.ne.s32.totalorder %s100, %s116
    %p118 = scmp.eq.s32.totalorder %s15, 0
    %p119 = por %p117, %p118
    %s120 = ssub.s32 %s16, %s35
    %s121 = ssub.s32 %s17, %s31
    %s122 = sor.u32 %s120, %s121
    %p123 = scmp.eq.s32.totalorder %s122, 0
    %s125 = sadd.s32 %s124, 1
    %s126 = scalar_select %p123, %s124, %s125
    %p129 = pneg %p123
    %p130 = scmp.eq.s32.totalorder %s9, 7
    %p131 = por %p129, %p130
    %p132 = scmp.ne.s32.totalorder %s124, %s127
    %p133 = scmp.eq.s32.totalorder %s9, 0
    %p134 = por %p132, %p133
    %p135 = scmp.ne.s32.totalorder %s124, %s127
    %p136 = scmp.eq.s32.totalorder %s14, 7
    %p137 = por %p135, %p136
    %p138 = scmp.ne.s32.totalorder %s127, %s128
    %p139 = scmp.eq.s32.totalorder %s14, 0
    %p140 = por %p138, %p139
    %p141 = scmp.ne.s32.totalorder %s127, %s128
    %p142 = scmp.eq.s32.totalorder %s15, 7
    %p143 = por %p141, %p142
    %p145 = scmp.ne.s32.totalorder %s128, %s144
    %p146 = scmp.eq.s32.totalorder %s15, 0
    %p147 = por %p145, %p146
    %p148 = scmp.le.s32.totalorder 1, %s9
    %p149 = scmp.lt.s32.totalorder %s9, 9
    %p150 = pnand %p148, %p149
    %p151 = pneg %p150
    // Predicated region
    $region9: #{self_attn_block.4} parent=5 // pred_check
      _
    $region10: #{self_attn_block.4} parent=5 // pred_check_branch
      %153 = sbr.rel (%p150) target = $region12
    $region11: #{self_attn_block.4} parent=5 // pred_region
      %s154 = ssub.s32 %s9, 1
    $region12: #{self_attn_block.4} parent=5 // pred_fallthru
      _
    %p155 = scmp.lt.s32.totalorder %s9, 8
    // Predicated region
    $region13: #{self_attn_block.4} parent=5 // pred_check
      %p156 = pneg %p155
    $region14: #{self_attn_block.4} parent=5 // pred_check_branch
      %158 = sbr.rel (%p156) target = $region16
    $region15: #{self_attn_block.4} parent=5 // pred_region
      // Predicated region
      $region17: #{self_attn_block.4} parent=15 // pred_check
        %p159 = pneg %p50
      $region18: #{self_attn_block.4} parent=15 // pred_check_branch
        %161 = sbr.rel (%p159) target = $region20
      $region19: #{self_attn_block.4} parent=15 // pred_region
        %s162 = smul.u32 8, %s17
        %p163 = scmp.lt.s32.totalorder %s16, 1
        %s164 = scalar_select %p163, %s16, 1
        %p165 = scmp.lt.s32.totalorder %s162, 15
        %s166 = scalar_select %p165, %s162, 15
        %s167 = smul.addr %s164, 16
        %s168 = sadd.s32 %s166, %s167
        %s169 = smul.addr %s168, 8
        %s170 = scalar_lea.vmem %s0, %s169
        %s171 = smul.u32 8, %s17
      $region20: #{self_attn_block.4} parent=15 // pred_fallthru
        _
      // Predicated region
      $region21: #{self_attn_block.4} parent=15 // pred_check
        %p172 = pneg %p78
      $region22: #{self_attn_block.4} parent=15 // pred_check_branch
        %174 = sbr.rel (%p172) target = $region24
      $region23: #{self_attn_block.4} parent=15 // pred_region
        %s175 = smul.u32 8, %s18
        %p176 = scmp.lt.s32.totalorder %s16, 1
        %s177 = scalar_select %p176, %s16, 1
        %p178 = scmp.lt.s32.totalorder %s175, 15
        %s179 = scalar_select %p178, %s175, 15
        %s180 = smul.addr %s177, 16
        %s181 = sadd.s32 %s179, %s180
        %s182 = smul.addr %s181, 8
        %s183 = scalar_lea.vmem %s1, %s182
        %s184 = smul.u32 8, %s18
      $region24: #{self_attn_block.4} parent=15 // pred_fallthru
        _
      // Predicated region
      $region25: #{self_attn_block.4} parent=15 // pred_check
        %p185 = pneg %p106
      $region26: #{self_attn_block.4} parent=15 // pred_check_branch
        %187 = sbr.rel (%p185) target = $region28
      $region27: #{self_attn_block.4} parent=15 // pred_region
        %s188 = smul.u32 8, %s18
        %p189 = scmp.lt.s32.totalorder %s16, 1
        %s190 = scalar_select %p189, %s16, 1
        %p191 = scmp.lt.s32.totalorder %s188, 15
        %s192 = scalar_select %p191, %s188, 15
        %s193 = smul.addr %s190, 16
        %s194 = sadd.s32 %s192, %s193
        %s195 = smul.addr %s194, 8
        %s196 = scalar_lea.vmem %s2, %s195
        %s197 = smul.u32 8, %s18
      $region28: #{self_attn_block.4} parent=15 // pred_fallthru
        _
    $region16: #{self_attn_block.4} parent=5 // pred_fallthru
      _
    %p198 = scmp.le.s32.totalorder 1, %s9
    %p199 = scmp.lt.s32.totalorder %s9, 9
    %p200 = pnand %p198, %p199
    %p201 = pneg %p200
    // Predicated region
    $region29: #{self_attn_block.4} parent=5 // pred_check
      _
    $region30: #{self_attn_block.4} parent=5 // pred_check_branch
      %203 = sbr.rel (%p200) target = $region32
    $region31: #{self_attn_block.4} parent=5 // pred_region
      %s204 = ssub.s32 %s9, 1
      %s205 = smul.u32 8, %s20
      %p206 = scmp.lt.s32.totalorder %s19, 1
      %s207 = scalar_select %p206, %s19, 1
      %p208 = scmp.lt.s32.totalorder %s205, 15
      %s209 = scalar_select %p208, %s205, 15
      %s210 = smul.addr %s207, 16
      %s211 = sadd.s32 %s209, %s210
      %s212 = smul.addr %s211, 8
      %s213 = scalar_lea.vmem %s0, %s212
      %p214 = pneg %p56
      %p215 = pneg %p53
      %s216 = smul.u32 8, %s21
      %p217 = scmp.lt.s32.totalorder %s19, 1
      %s218 = scalar_select %p217, %s19, 1
      %p219 = scmp.lt.s32.totalorder %s216, 15
      %s220 = scalar_select %p219, %s216, 15
      %s221 = smul.addr %s218, 16
      %s222 = sadd.s32 %s220, %s221
      %s223 = smul.addr %s222, 8
      %s224 = scalar_lea.vmem %s1, %s223
      %p225 = pneg %p84
      %p226 = pneg %p81
      %s227 = smul.u32 8, %s21
      %p228 = scmp.lt.s32.totalorder %s19, 1
      %s229 = scalar_select %p228, %s19, 1
      %p230 = scmp.lt.s32.totalorder %s227, 15
      %s231 = scalar_select %p230, %s227, 15
      %s232 = smul.addr %s229, 16
      %s233 = sadd.s32 %s231, %s232
      %s234 = smul.addr %s233, 8
      %s235 = scalar_lea.vmem %s2, %s234
      %p236 = pneg %p112
      %p237 = pneg %p109
      %p238 = pneg %p140
      %p239 = pneg %p137
      %s240 = smul.u32 8, %s20
      %p241 = scmp.lt.s32.totalorder %s19, 1
      %s242 = scalar_select %p241, %s19, 1
      %p243 = scmp.lt.s32.totalorder %s240, 15
      %s244 = scalar_select %p243, %s240, 15
      %s245 = smul.addr %s242, 16
      %s246 = sadd.s32 %s244, %s245
      %s247 = smul.addr %s246, 8
      %s248 = scalar_lea.vmem %s3, %s247
      %s249 = smul.u32 8, %s20
      %p250 = scmp.lt.s32.totalorder %s19, 1
      %s251 = scalar_select %p250, %s19, 1
      %p252 = scmp.lt.s32.totalorder %s249, 15
      %s253 = scalar_select %p252, %s249, 15
      %s254 = smul.addr %s251, 16
      %s255 = sadd.s32 %s253, %s254
      %s256 = smul.addr %s255, 8
      %s257 = scalar_lea.vmem %s0, %s256
      %s258 = smul.u32 8, %s20
      %s259 = smul.u32 8, %s21
      %p260 = scmp.lt.s32.totalorder %s19, 1
      %s261 = scalar_select %p260, %s19, 1
      %p262 = scmp.lt.s32.totalorder %s259, 15
      %s263 = scalar_select %p262, %s259, 15
      %s264 = smul.addr %s261, 16
      %s265 = sadd.s32 %s263, %s264
      %s266 = smul.addr %s265, 8
      %s267 = scalar_lea.vmem %s1, %s266
      %s268 = smul.u32 8, %s21
      %s269 = smul.u32 8, %s21
      %p270 = scmp.lt.s32.totalorder %s19, 1
      %s271 = scalar_select %p270, %s19, 1
      %p272 = scmp.lt.s32.totalorder %s269, 15
      %s273 = scalar_select %p272, %s269, 15
      %s274 = smul.addr %s271, 16
      %s275 = sadd.s32 %s273, %s274
      %s276 = smul.addr %s275, 8
      %s277 = scalar_lea.vmem %s2, %s276
      %s278 = smul.u32 8, %s21
      %s279 = smul.u32 8, %s20
      %p280 = scmp.lt.s32.totalorder %s19, 1
      %s281 = scalar_select %p280, %s19, 1
      %p282 = scmp.lt.s32.totalorder %s279, 15
      %s283 = scalar_select %p282, %s279, 15
      %s284 = smul.addr %s281, 16
      %s285 = sadd.s32 %s283, %s284
      %s286 = smul.addr %s285, 8
      %s287 = scalar_lea.vmem %s3, %s286
      %s288 = smul.u32 8, %s20
      %p289 = scmp.eq.s32.totalorder %s21, 0
      // Predicated region
      $region33: #{self_attn_block.4} parent=31 // pred_check
        %p290 = pneg %p289
      $region34: #{self_attn_block.4} parent=31 // pred_check_branch
        %292 = sbr.rel (%p290) target = $region36
      $region35: #{self_attn_block.4} parent=31 // pred_region
        %vm293 = vcmask 7168
        %294 = vst.msk [vmem:[#allocation2] sm:$0xff] %vm293, -inf
        %295 = vst.msk [vmem:[#allocation2 + $0x8] sm:$0xff] %vm293, -inf
        %296 = vst.msk [vmem:[#allocation2 + $0x10] sm:$0xff] %vm293, -inf
        %297 = vst.msk [vmem:[#allocation2 + $0x18] sm:$0xff] %vm293, -inf
        %298 = vst.msk [vmem:[#allocation2 + $0x20] sm:$0xff] %vm293, -inf
        %299 = vst.msk [vmem:[#allocation2 + $0x28] sm:$0xff] %vm293, -inf
        %300 = vst.msk [vmem:[#allocation2 + $0x30] sm:$0xff] %vm293, -inf
        %301 = vst.msk [vmem:[#allocation2 + $0x38] sm:$0xff] %vm293, -inf
        %302 = vst.msk [vmem:[#allocation2 + $0x40] sm:$0xff] %vm293, -inf
        %303 = vst.msk [vmem:[#allocation2 + $0x48] sm:$0xff] %vm293, -inf
        %304 = vst.msk [vmem:[#allocation2 + $0x50] sm:$0xff] %vm293, -inf
        %305 = vst.msk [vmem:[#allocation2 + $0x58] sm:$0xff] %vm293, -inf
        %306 = vst.msk [vmem:[#allocation2 + $0x60] sm:$0xff] %vm293, -inf
        %307 = vst.msk [vmem:[#allocation2 + $0x68] sm:$0xff] %vm293, -inf
        %308 = vst.msk [vmem:[#allocation2 + $0x70] sm:$0xff] %vm293, -inf
        %309 = vst.msk [vmem:[#allocation2 + $0x78] sm:$0xff] %vm293, -inf
        %310 = vst.msk [vmem:[#allocation2 + $0x80] sm:$0xff] %vm293, -inf
        %311 = vst.msk [vmem:[#allocation2 + $0x88] sm:$0xff] %vm293, -inf
        %312 = vst.msk [vmem:[#allocation2 + $0x90] sm:$0xff] %vm293, -inf
        %313 = vst.msk [vmem:[#allocation2 + $0x98] sm:$0xff] %vm293, -inf
        %314 = vst.msk [vmem:[#allocation2 + $0xa0] sm:$0xff] %vm293, -inf
        %315 = vst.msk [vmem:[#allocation2 + $0xa8] sm:$0xff] %vm293, -inf
        %316 = vst.msk [vmem:[#allocation2 + $0xb0] sm:$0xff] %vm293, -inf
        %317 = vst.msk [vmem:[#allocation2 + $0xb8] sm:$0xff] %vm293, -inf
        %318 = vst.msk [vmem:[#allocation2 + $0xc0] sm:$0xff] %vm293, -inf
        %319 = vst.msk [vmem:[#allocation2 + $0xc8] sm:$0xff] %vm293, -inf
        %320 = vst.msk [vmem:[#allocation2 + $0xd0] sm:$0xff] %vm293, -inf
        %321 = vst.msk [vmem:[#allocation2 + $0xd8] sm:$0xff] %vm293, -inf
        %322 = vst.msk [vmem:[#allocation2 + $0xe0] sm:$0xff] %vm293, -inf
        %323 = vst.msk [vmem:[#allocation2 + $0xe8] sm:$0xff] %vm293, -inf
        %324 = vst.msk [vmem:[#allocation2 + $0xf0] sm:$0xff] %vm293, -inf
        %325 = vst.msk [vmem:[#allocation2 + $0xf8] sm:$0xff] %vm293, -inf
        %326 = vst.msk [vmem:[#allocation2 + $0x100] sm:$0xff] %vm293, -inf
        %327 = vst.msk [vmem:[#allocation2 + $0x108] sm:$0xff] %vm293, -inf
        %328 = vst.msk [vmem:[#allocation2 + $0x110] sm:$0xff] %vm293, -inf
        %329 = vst.msk [vmem:[#allocation2 + $0x118] sm:$0xff] %vm293, -inf
        %330 = vst.msk [vmem:[#allocation2 + $0x120] sm:$0xff] %vm293, -inf
        %331 = vst.msk [vmem:[#allocation2 + $0x128] sm:$0xff] %vm293, -inf
        %332 = vst.msk [vmem:[#allocation2 + $0x130] sm:$0xff] %vm293, -inf
        %333 = vst.msk [vmem:[#allocation2 + $0x138] sm:$0xff] %vm293, -inf
        %334 = vst.msk [vmem:[#allocation2 + $0x140] sm:$0xff] %vm293, -inf
        %335 = vst.msk [vmem:[#allocation2 + $0x148] sm:$0xff] %vm293, -inf
        %336 = vst.msk [vmem:[#allocation2 + $0x150] sm:$0xff] %vm293, -inf
        %337 = vst.msk [vmem:[#allocation2 + $0x158] sm:$0xff] %vm293, -inf
        %338 = vst.msk [vmem:[#allocation2 + $0x160] sm:$0xff] %vm293, -inf
        %339 = vst.msk [vmem:[#allocation2 + $0x168] sm:$0xff] %vm293, -inf
        %340 = vst.msk [vmem:[#allocation2 + $0x170] sm:$0xff] %vm293, -inf
        %341 = vst.msk [vmem:[#allocation2 + $0x178] sm:$0xff] %vm293, -inf
        %342 = vst.msk [vmem:[#allocation2 + $0x180] sm:$0xff] %vm293, -inf
        %343 = vst.msk [vmem:[#allocation2 + $0x188] sm:$0xff] %vm293, -inf
        %344 = vst.msk [vmem:[#allocation2 + $0x190] sm:$0xff] %vm293, -inf
        %345 = vst.msk [vmem:[#allocation2 + $0x198] sm:$0xff] %vm293, -inf
        %346 = vst.msk [vmem:[#allocation2 + $0x1a0] sm:$0xff] %vm293, -inf
        %347 = vst.msk [vmem:[#allocation2 + $0x1a8] sm:$0xff] %vm293, -inf
        %348 = vst.msk [vmem:[#allocation2 + $0x1b0] sm:$0xff] %vm293, -inf
        %349 = vst.msk [vmem:[#allocation2 + $0x1b8] sm:$0xff] %vm293, -inf
        %350 = vst.msk [vmem:[#allocation2 + $0x1c0] sm:$0xff] %vm293, -inf
        %351 = vst.msk [vmem:[#allocation2 + $0x1c8] sm:$0xff] %vm293, -inf
        %352 = vst.msk [vmem:[#allocation2 + $0x1d0] sm:$0xff] %vm293, -inf
        %353 = vst.msk [vmem:[#allocation2 + $0x1d8] sm:$0xff] %vm293, -inf
        %354 = vst.msk [vmem:[#allocation2 + $0x1e0] sm:$0xff] %vm293, -inf
        %355 = vst.msk [vmem:[#allocation2 + $0x1e8] sm:$0xff] %vm293, -inf
        %356 = vst.msk [vmem:[#allocation2 + $0x1f0] sm:$0xff] %vm293, -inf
        %357 = vst.msk [vmem:[#allocation2 + $0x1f8] sm:$0xff] %vm293, -inf
        %358 = vst.msk [vmem:[#allocation3] sm:$0xff] %vm293, 0.0
        %359 = vst.msk [vmem:[#allocation3 + $0x8] sm:$0xff] %vm293, 0.0
        %360 = vst.msk [vmem:[#allocation3 + $0x10] sm:$0xff] %vm293, 0.0
        %361 = vst.msk [vmem:[#allocation3 + $0x18] sm:$0xff] %vm293, 0.0
        %362 = vst.msk [vmem:[#allocation3 + $0x20] sm:$0xff] %vm293, 0.0
        %363 = vst.msk [vmem:[#allocation3 + $0x28] sm:$0xff] %vm293, 0.0
        %364 = vst.msk [vmem:[#allocation3 + $0x30] sm:$0xff] %vm293, 0.0
        %365 = vst.msk [vmem:[#allocation3 + $0x38] sm:$0xff] %vm293, 0.0
        %366 = vst.msk [vmem:[#allocation3 + $0x40] sm:$0xff] %vm293, 0.0
        %367 = vst.msk [vmem:[#allocation3 + $0x48] sm:$0xff] %vm293, 0.0
        %368 = vst.msk [vmem:[#allocation3 + $0x50] sm:$0xff] %vm293, 0.0
        %369 = vst.msk [vmem:[#allocation3 + $0x58] sm:$0xff] %vm293, 0.0
        %370 = vst.msk [vmem:[#allocation3 + $0x60] sm:$0xff] %vm293, 0.0
        %371 = vst.msk [vmem:[#allocation3 + $0x68] sm:$0xff] %vm293, 0.0
        %372 = vst.msk [vmem:[#allocation3 + $0x70] sm:$0xff] %vm293, 0.0
        %373 = vst.msk [vmem:[#allocation3 + $0x78] sm:$0xff] %vm293, 0.0
        %374 = vst.msk [vmem:[#allocation3 + $0x80] sm:$0xff] %vm293, 0.0
        %375 = vst.msk [vmem:[#allocation3 + $0x88] sm:$0xff] %vm293, 0.0
        %376 = vst.msk [vmem:[#allocation3 + $0x90] sm:$0xff] %vm293, 0.0
        %377 = vst.msk [vmem:[#allocation3 + $0x98] sm:$0xff] %vm293, 0.0
        %378 = vst.msk [vmem:[#allocation3 + $0xa0] sm:$0xff] %vm293, 0.0
        %379 = vst.msk [vmem:[#allocation3 + $0xa8] sm:$0xff] %vm293, 0.0
        %380 = vst.msk [vmem:[#allocation3 + $0xb0] sm:$0xff] %vm293, 0.0
        %381 = vst.msk [vmem:[#allocation3 + $0xb8] sm:$0xff] %vm293, 0.0
        %382 = vst.msk [vmem:[#allocation3 + $0xc0] sm:$0xff] %vm293, 0.0
        %383 = vst.msk [vmem:[#allocation3 + $0xc8] sm:$0xff] %vm293, 0.0
        %384 = vst.msk [vmem:[#allocation3 + $0xd0] sm:$0xff] %vm293, 0.0
        %385 = vst.msk [vmem:[#allocation3 + $0xd8] sm:$0xff] %vm293, 0.0
        %386 = vst.msk [vmem:[#allocation3 + $0xe0] sm:$0xff] %vm293, 0.0
        %387 = vst.msk [vmem:[#allocation3 + $0xe8] sm:$0xff] %vm293, 0.0
        %388 = vst.msk [vmem:[#allocation3 + $0xf0] sm:$0xff] %vm293, 0.0
        %389 = vst.msk [vmem:[#allocation3 + $0xf8] sm:$0xff] %vm293, 0.0
        %390 = vst.msk [vmem:[#allocation3 + $0x100] sm:$0xff] %vm293, 0.0
        %391 = vst.msk [vmem:[#allocation3 + $0x108] sm:$0xff] %vm293, 0.0
        %392 = vst.msk [vmem:[#allocation3 + $0x110] sm:$0xff] %vm293, 0.0
        %393 = vst.msk [vmem:[#allocation3 + $0x118] sm:$0xff] %vm293, 0.0
        %394 = vst.msk [vmem:[#allocation3 + $0x120] sm:$0xff] %vm293, 0.0
        %395 = vst.msk [vmem:[#allocation3 + $0x128] sm:$0xff] %vm293, 0.0
        %396 = vst.msk [vmem:[#allocation3 + $0x130] sm:$0xff] %vm293, 0.0
        %397 = vst.msk [vmem:[#allocation3 + $0x138] sm:$0xff] %vm293, 0.0
        %398 = vst.msk [vmem:[#allocation3 + $0x140] sm:$0xff] %vm293, 0.0
        %399 = vst.msk [vmem:[#allocation3 + $0x148] sm:$0xff] %vm293, 0.0
        %400 = vst.msk [vmem:[#allocation3 + $0x150] sm:$0xff] %vm293, 0.0
        %401 = vst.msk [vmem:[#allocation3 + $0x158] sm:$0xff] %vm293, 0.0
        %402 = vst.msk [vmem:[#allocation3 + $0x160] sm:$0xff] %vm293, 0.0
        %403 = vst.msk [vmem:[#allocation3 + $0x168] sm:$0xff] %vm293, 0.0
        %404 = vst.msk [vmem:[#allocation3 + $0x170] sm:$0xff] %vm293, 0.0
        %405 = vst.msk [vmem:[#allocation3 + $0x178] sm:$0xff] %vm293, 0.0
        %406 = vst.msk [vmem:[#allocation3 + $0x180] sm:$0xff] %vm293, 0.0
        %407 = vst.msk [vmem:[#allocation3 + $0x188] sm:$0xff] %vm293, 0.0
        %408 = vst.msk [vmem:[#allocation3 + $0x190] sm:$0xff] %vm293, 0.0
        %409 = vst.msk [vmem:[#allocation3 + $0x198] sm:$0xff] %vm293, 0.0
        %410 = vst.msk [vmem:[#allocation3 + $0x1a0] sm:$0xff] %vm293, 0.0
        %411 = vst.msk [vmem:[#allocation3 + $0x1a8] sm:$0xff] %vm293, 0.0
        %412 = vst.msk [vmem:[#allocation3 + $0x1b0] sm:$0xff] %vm293, 0.0
        %413 = vst.msk [vmem:[#allocation3 + $0x1b8] sm:$0xff] %vm293, 0.0
        %414 = vst.msk [vmem:[#allocation3 + $0x1c0] sm:$0xff] %vm293, 0.0
        %415 = vst.msk [vmem:[#allocation3 + $0x1c8] sm:$0xff] %vm293, 0.0
        %416 = vst.msk [vmem:[#allocation3 + $0x1d0] sm:$0xff] %vm293, 0.0
        %417 = vst.msk [vmem:[#allocation3 + $0x1d8] sm:$0xff] %vm293, 0.0
        %418 = vst.msk [vmem:[#allocation3 + $0x1e0] sm:$0xff] %vm293, 0.0
        %419 = vst.msk [vmem:[#allocation3 + $0x1e8] sm:$0xff] %vm293, 0.0
        %420 = vst.msk [vmem:[#allocation3 + $0x1f0] sm:$0xff] %vm293, 0.0
        %421 = vst.msk [vmem:[#allocation3 + $0x1f8] sm:$0xff] %vm293, 0.0
        %vm422 = vcmask 130048
        %423 = vst.msk [vmem:[#allocation4] sm:$0xff] %vm422, 0.0
        %424 = vst.msk [vmem:[#allocation4 + $0x8] sm:$0xff] %vm422, 0.0
        %425 = vst.msk [vmem:[#allocation4 + $0x10] sm:$0xff] %vm422, 0.0
        %426 = vst.msk [vmem:[#allocation4 + $0x18] sm:$0xff] %vm422, 0.0
        %427 = vst.msk [vmem:[#allocation4 + $0x20] sm:$0xff] %vm422, 0.0
        %428 = vst.msk [vmem:[#allocation4 + $0x28] sm:$0xff] %vm422, 0.0
        %429 = vst.msk [vmem:[#allocation4 + $0x30] sm:$0xff] %vm422, 0.0
        %430 = vst.msk [vmem:[#allocation4 + $0x38] sm:$0xff] %vm422, 0.0
        %431 = vst.msk [vmem:[#allocation4 + $0x40] sm:$0xff] %vm422, 0.0
        %432 = vst.msk [vmem:[#allocation4 + $0x48] sm:$0xff] %vm422, 0.0
        %433 = vst.msk [vmem:[#allocation4 + $0x50] sm:$0xff] %vm422, 0.0
        %434 = vst.msk [vmem:[#allocation4 + $0x58] sm:$0xff] %vm422, 0.0
        %435 = vst.msk [vmem:[#allocation4 + $0x60] sm:$0xff] %vm422, 0.0
        %436 = vst.msk [vmem:[#allocation4 + $0x68] sm:$0xff] %vm422, 0.0
        %437 = vst.msk [vmem:[#allocation4 + $0x70] sm:$0xff] %vm422, 0.0
        %438 = vst.msk [vmem:[#allocation4 + $0x78] sm:$0xff] %vm422, 0.0
        %439 = vst.msk [vmem:[#allocation4 + $0x80] sm:$0xff] %vm422, 0.0
        %440 = vst.msk [vmem:[#allocation4 + $0x88] sm:$0xff] %vm422, 0.0
        %441 = vst.msk [vmem:[#allocation4 + $0x90] sm:$0xff] %vm422, 0.0
        %442 = vst.msk [vmem:[#allocation4 + $0x98] sm:$0xff] %vm422, 0.0
        %443 = vst.msk [vmem:[#allocation4 + $0xa0] sm:$0xff] %vm422, 0.0
        %444 = vst.msk [vmem:[#allocation4 + $0xa8] sm:$0xff] %vm422, 0.0
        %445 = vst.msk [vmem:[#allocation4 + $0xb0] sm:$0xff] %vm422, 0.0
        %446 = vst.msk [vmem:[#allocation4 + $0xb8] sm:$0xff] %vm422, 0.0
        %447 = vst.msk [vmem:[#allocation4 + $0xc0] sm:$0xff] %vm422, 0.0
        %448 = vst.msk [vmem:[#allocation4 + $0xc8] sm:$0xff] %vm422, 0.0
        %449 = vst.msk [vmem:[#allocation4 + $0xd0] sm:$0xff] %vm422, 0.0
        %450 = vst.msk [vmem:[#allocation4 + $0xd8] sm:$0xff] %vm422, 0.0
        %451 = vst.msk [vmem:[#allocation4 + $0xe0] sm:$0xff] %vm422, 0.0
        %452 = vst.msk [vmem:[#allocation4 + $0xe8] sm:$0xff] %vm422, 0.0
        %453 = vst.msk [vmem:[#allocation4 + $0xf0] sm:$0xff] %vm422, 0.0
        %454 = vst.msk [vmem:[#allocation4 + $0xf8] sm:$0xff] %vm422, 0.0
        %455 = vst.msk [vmem:[#allocation4 + $0x100] sm:$0xff] %vm422, 0.0
        %456 = vst.msk [vmem:[#allocation4 + $0x108] sm:$0xff] %vm422, 0.0
        %457 = vst.msk [vmem:[#allocation4 + $0x110] sm:$0xff] %vm422, 0.0
        %458 = vst.msk [vmem:[#allocation4 + $0x118] sm:$0xff] %vm422, 0.0
        %459 = vst.msk [vmem:[#allocation4 + $0x120] sm:$0xff] %vm422, 0.0
        %460 = vst.msk [vmem:[#allocation4 + $0x128] sm:$0xff] %vm422, 0.0
        %461 = vst.msk [vmem:[#allocation4 + $0x130] sm:$0xff] %vm422, 0.0
        %462 = vst.msk [vmem:[#allocation4 + $0x138] sm:$0xff] %vm422, 0.0
        %463 = vst.msk [vmem:[#allocation4 + $0x140] sm:$0xff] %vm422, 0.0
        %464 = vst.msk [vmem:[#allocation4 + $0x148] sm:$0xff] %vm422, 0.0
        %465 = vst.msk [vmem:[#allocation4 + $0x150] sm:$0xff] %vm422, 0.0
        %466 = vst.msk [vmem:[#allocation4 + $0x158] sm:$0xff] %vm422, 0.0
        %467 = vst.msk [vmem:[#allocation4 + $0x160] sm:$0xff] %vm422, 0.0
        %468 = vst.msk [vmem:[#allocation4 + $0x168] sm:$0xff] %vm422, 0.0
        %469 = vst.msk [vmem:[#allocation4 + $0x170] sm:$0xff] %vm422, 0.0
        %470 = vst.msk [vmem:[#allocation4 + $0x178] sm:$0xff] %vm422, 0.0
        %471 = vst.msk [vmem:[#allocation4 + $0x180] sm:$0xff] %vm422, 0.0
        %472 = vst.msk [vmem:[#allocation4 + $0x188] sm:$0xff] %vm422, 0.0
        %473 = vst.msk [vmem:[#allocation4 + $0x190] sm:$0xff] %vm422, 0.0
        %474 = vst.msk [vmem:[#allocation4 + $0x198] sm:$0xff] %vm422, 0.0
        %475 = vst.msk [vmem:[#allocation4 + $0x1a0] sm:$0xff] %vm422, 0.0
        %476 = vst.msk [vmem:[#allocation4 + $0x1a8] sm:$0xff] %vm422, 0.0
        %477 = vst.msk [vmem:[#allocation4 + $0x1b0] sm:$0xff] %vm422, 0.0
        %478 = vst.msk [vmem:[#allocation4 + $0x1b8] sm:$0xff] %vm422, 0.0
        %479 = vst.msk [vmem:[#allocation4 + $0x1c0] sm:$0xff] %vm422, 0.0
        %480 = vst.msk [vmem:[#allocation4 + $0x1c8] sm:$0xff] %vm422, 0.0
        %481 = vst.msk [vmem:[#allocation4 + $0x1d0] sm:$0xff] %vm422, 0.0
        %482 = vst.msk [vmem:[#allocation4 + $0x1d8] sm:$0xff] %vm422, 0.0
        %483 = vst.msk [vmem:[#allocation4 + $0x1e0] sm:$0xff] %vm422, 0.0
        %484 = vst.msk [vmem:[#allocation4 + $0x1e8] sm:$0xff] %vm422, 0.0
        %485 = vst.msk [vmem:[#allocation4 + $0x1f0] sm:$0xff] %vm422, 0.0
        %486 = vst.msk [vmem:[#allocation4 + $0x1f8] sm:$0xff] %vm422, 0.0
      $region36: #{self_attn_block.4} parent=31 // pred_fallthru
        _
      %v487 = vld [vmem:[%s257] sm:$0xff]
      %v488 = vld [vmem:[%s257 + $0x8] sm:$0xff]
      %v489 = vld [vmem:[%s257 + $0x10] sm:$0xff]
      %v490 = vld [vmem:[%s257 + $0x18] sm:$0xff]
      %v491 = vld [vmem:[%s257 + $0x20] sm:$0xff]
      %v492 = vld [vmem:[%s257 + $0x28] sm:$0xff]
      %v493 = vld [vmem:[%s257 + $0x30] sm:$0xff]
      %v494 = vld [vmem:[%s257 + $0x38] sm:$0xff]
      %v495 = vld [vmem:[%s267] sm:$0xff]
      %v496 = vld [vmem:[%s267 + $0x8] sm:$0xff]
      %v497 = vld [vmem:[%s267 + $0x10] sm:$0xff]
      %v498 = vld [vmem:[%s267 + $0x18] sm:$0xff]
      %v499 = vld [vmem:[%s267 + $0x20] sm:$0xff]
      %v500 = vld [vmem:[%s267 + $0x28] sm:$0xff]
      %v501 = vld [vmem:[%s267 + $0x30] sm:$0xff]
      %v502 = vld [vmem:[%s267 + $0x38] sm:$0xff]
      %v503 = vld [vmem:[%s277] sm:$0xff]
      %v504 = vld [vmem:[%s277 + $0x8] sm:$0xff]
      %v505 = vld [vmem:[%s277 + $0x10] sm:$0xff]
      %v506 = vld [vmem:[%s277 + $0x18] sm:$0xff]
      %v507 = vld [vmem:[%s277 + $0x20] sm:$0xff]
      %v508 = vld [vmem:[%s277 + $0x28] sm:$0xff]
      %v509 = vld [vmem:[%s277 + $0x30] sm:$0xff]
      %v510 = vld [vmem:[%s277 + $0x38] sm:$0xff]
      %vm511 = vcmask 130048
      %v513 = vsel %vm511, %v487, 0
      %v516 = vsel %vm511, %v488, 0
      %v519 = vsel %vm511, %v489, 0
      %v522 = vsel %vm511, %v490, 0
      %v525 = vsel %vm511, %v491, 0
      %v528 = vsel %vm511, %v492, 0
      %v531 = vsel %vm511, %v493, 0
      %v534 = vsel %vm511, %v494, 0
      %v537 = vsel %vm511, %v495, 0
      %v540 = vsel %vm511, %v496, 0
      %v543 = vsel %vm511, %v497, 0
      %v546 = vsel %vm511, %v498, 0
      %v549 = vsel %vm511, %v499, 0
      %v552 = vsel %vm511, %v500, 0
      %v555 = vsel %vm511, %v501, 0
      %v558 = vsel %vm511, %v502, 0
      %560 = vmatprep.subr.mxu0 0.0
      %561 = vmatpush1.xpose.msra.mxu0 %v537
      %562 = vmatprep.subr.mxu0 0.0
      %563 = vmatpush1.xpose.msra.mxu0 %v540
      %564 = vmatprep.subr.mxu0 0.0
      %565 = vmatpush1.xpose.msra.mxu0 %v543
      %566 = vmatprep.subr.mxu0 0.0
      %567 = vmatpush1.xpose.msra.mxu0 %v546
      %568 = vmatprep.subr.mxu0 0.0
      %569 = vmatpush1.xpose.msra.mxu0 %v549
      %570 = vmatprep.subr.mxu0 0.0
      %571 = vmatpush1.xpose.msra.mxu0 %v552
      %572 = vmatprep.subr.mxu0 0.0
      %573 = vmatpush1.xpose.msra.mxu0 %v555
      %574 = vmatprep.subr.mxu0 0.0
      %575 = vmatpush1.xpose.msra.mxu0 %v558
      %576 = vmatprep.subr.mxu0 0.0
      %577 = vmatpush1.xpose.msra.mxu0 0.0
      %578 = vmatprep.subr.mxu0 0.0
      %579 = vmatpush1.xpose.msra.mxu0 0.0
      %580 = vmatprep.subr.mxu0 0.0
      %581 = vmatpush1.xpose.msra.mxu0 0.0
      %582 = vmatprep.subr.mxu0 0.0
      %583 = vmatpush1.xpose.msra.mxu0 0.0
      %584 = vmatprep.subr.mxu0 0.0
      %585 = vmatpush1.xpose.msra.mxu0 0.0
      %586 = vmatprep.subr.mxu0 0.0
      %587 = vmatpush1.xpose.msra.mxu0 0.0
      %588 = vmatprep.subr.mxu0 0.0
      %589 = vmatpush1.xpose.msra.mxu0 0.0
      %590 = vmatprep.subr.mxu0 0.0
      %591 = vmatpush1.xpose.msra.mxu0 0.0
      %592 = vmatprep.subr.mxu0 0.0
      %593 = vmatpush1.xpose.msra.mxu0 0.0
      %594 = vmatprep.subr.mxu0 0.0
      %595 = vmatpush1.xpose.msra.mxu0 0.0
      %596 = vmatprep.subr.mxu0 0.0
      %597 = vmatpush1.xpose.msra.mxu0 0.0
      %598 = vmatprep.subr.mxu0 0.0
      %599 = vmatpush1.xpose.msra.mxu0 0.0
      %600 = vmatprep.subr.mxu0 0.0
      %601 = vmatpush1.xpose.msra.mxu0 0.0
      %602 = vmatprep.subr.mxu0 0.0
      %603 = vmatpush1.xpose.msra.mxu0 0.0
      %604 = vmatprep.subr.mxu0 0.0
      %605 = vmatpush1.xpose.msra.mxu0 0.0
      %606 = vmatprep.subr.mxu0 0.0
      %607 = vmatpush1.xpose.msra.mxu0 0.0
      %608 = vmatprep.subr.mxu0 0.0
      %609 = vmatpush1.xpose.msra.mxu0 0.0
      %610 = vmatprep.subr.mxu0 0.0
      %611 = vmatpush1.xpose.msra.mxu0 0.0
      %612 = vmatprep.subr.mxu0 0.0
      %613 = vmatpush1.xpose.msra.mxu0 0.0
      %614 = vmatprep.subr.mxu0 0.0
      %615 = vmatpush1.xpose.msra.mxu0 0.0
      %616 = vmatprep.subr.mxu0 0.0
      %617 = vmatpush1.xpose.msra.mxu0 0.0
      %618 = vmatprep.subr.mxu0 0.0
      %619 = vmatpush1.xpose.msra.mxu0 0.0
      %620 = vmatprep.subr.mxu0 0.0
      %621 = vmatpush1.xpose.msra.mxu0 0.0
      %622 = vmatprep.subr.mxu0 0.0
      %623 = vmatpush1.xpose.msra.mxu0 0.0
      %624 = vmatprep.mubr.f32.mxu0 0.0
      %625 = vmatmul.mubr.f32.gmra.mrb[0].mxu0 %v513
      %v626 = vpop.f32.mrb[0].mxu0
      %v627 = vadd.f32 0.0, %v626
      %v628 = vpop.f32.mrb[0].mxu0
      %629 = vmatprep.mubr.f32.mxu0 0.0
      %630 = vmatmul.mubr.f32.gmra.mrb[0].mxu0 %v516
      %v631 = vpop.f32.mrb[0].mxu0
      %v632 = vadd.f32 0.0, %v631
      %v633 = vpop.f32.mrb[0].mxu0
      %634 = vmatprep.mubr.f32.mxu0 0.0
      %635 = vmatmul.mubr.f32.gmra.mrb[0].mxu0 %v519
      %v636 = vpop.f32.mrb[0].mxu0
      %v637 = vadd.f32 0.0, %v636
      %v638 = vpop.f32.mrb[0].mxu0
      %639 = vmatprep.mubr.f32.mxu0 0.0
      %640 = vmatmul.mubr.f32.gmra.mrb[0].mxu0 %v522
      %v641 = vpop.f32.mrb[0].mxu0
      %v642 = vadd.f32 0.0, %v641
      %v643 = vpop.f32.mrb[0].mxu0
      %644 = vmatprep.mubr.f32.mxu0 0.0
      %645 = vmatmul.mubr.f32.gmra.mrb[0].mxu0 %v525
      %v646 = vpop.f32.mrb[0].mxu0
      %v647 = vadd.f32 0.0, %v646
      %v648 = vpop.f32.mrb[0].mxu0
      %649 = vmatprep.mubr.f32.mxu0 0.0
      %650 = vmatmul.mubr.f32.gmra.mrb[0].mxu0 %v528
      %v651 = vpop.f32.mrb[0].mxu0
      %v652 = vadd.f32 0.0, %v651
      %v653 = vpop.f32.mrb[0].mxu0
      %654 = vmatprep.mubr.f32.mxu0 0.0
      %655 = vmatmul.mubr.f32.gmra.mrb[0].mxu0 %v531
      %v656 = vpop.f32.mrb[0].mxu0
      %v657 = vadd.f32 0.0, %v656
      %v658 = vpop.f32.mrb[0].mxu0
      %659 = vmatprep.mubr.f32.mxu0 0.0
      %660 = vmatmul.mubr.f32.gmra.mrb[0].mxu0 %v534
      %v661 = vpop.f32.mrb[0].mxu0
      %v662 = vadd.f32 0.0, %v661
      %v663 = vpop.f32.mrb[0].mxu0
      %664 = vdwg.mxu0
      %v665 = vld [vmem:[#allocation2] sm:$0xff]
      %v666 = vld [vmem:[#allocation2 + $0x8] sm:$0xff]
      %v667 = vld [vmem:[#allocation2 + $0x10] sm:$0xff]
      %v668 = vld [vmem:[#allocation2 + $0x18] sm:$0xff]
      %v669 = vld [vmem:[#allocation2 + $0x20] sm:$0xff]
      %v670 = vld [vmem:[#allocation2 + $0x28] sm:$0xff]
      %v671 = vld [vmem:[#allocation2 + $0x30] sm:$0xff]
      %v672 = vld [vmem:[#allocation2 + $0x38] sm:$0xff]
      %vm673 = vcmask 523264
      %v674 = vsel %vm673, %v627, -inf
      %675 = vmax.xlane.f32.xlu0 %v674
      %v676 = vpop.xlane.xlu0 %675
      %v677 = vsel %vm673, %v632, -inf
      %678 = vmax.xlane.f32.xlu0 %v677
      %v679 = vpop.xlane.xlu0 %678
      %v680 = vsel %vm673, %v637, -inf
      %681 = vmax.xlane.f32.xlu0 %v680
      %v682 = vpop.xlane.xlu0 %681
      %v683 = vsel %vm673, %v642, -inf
      %684 = vmax.xlane.f32.xlu0 %v683
      %v685 = vpop.xlane.xlu0 %684
      %v686 = vsel %vm673, %v647, -inf
      %687 = vmax.xlane.f32.xlu0 %v686
      %v688 = vpop.xlane.xlu0 %687
      %v689 = vsel %vm673, %v652, -inf
      %690 = vmax.xlane.f32.xlu0 %v689
      %v691 = vpop.xlane.xlu0 %690
      %v692 = vsel %vm673, %v657, -inf
      %693 = vmax.xlane.f32.xlu0 %v692
      %v694 = vpop.xlane.xlu0 %693
      %v695 = vsel %vm673, %v662, -inf
      %696 = vmax.xlane.f32.xlu0 %v695
      %v697 = vpop.xlane.xlu0 %696
      %v698 = vmax.f32 %v665, %v676
      %v699 = vmax.f32 %v666, %v679
      %v700 = vmax.f32 %v667, %v682
      %v701 = vmax.f32 %v668, %v685
      %v702 = vmax.f32 %v669, %v688
      %v703 = vmax.f32 %v670, %v691
      %v704 = vmax.f32 %v671, %v694
      %v705 = vmax.f32 %v672, %v697
      %v706 = vsub.f32 %v665, %v698
      %v707 = vsub.f32 %v666, %v699
      %v708 = vsub.f32 %v667, %v700
      %v709 = vsub.f32 %v668, %v701
      %v710 = vsub.f32 %v669, %v702
      %v711 = vsub.f32 %v670, %v703
      %v712 = vsub.f32 %v671, %v704
      %v713 = vsub.f32 %v672, %v705
      %v714 = vmul.f32 %v706, 1.442695
      %v715 = vpow.pop %v714
      %v716 = vmul.f32 %v707, 1.442695
      %v717 = vpow.pop %v716
      %v718 = vmul.f32 %v708, 1.442695
      %v719 = vpow.pop %v718
      %v720 = vmul.f32 %v709, 1.442695
      %v721 = vpow.pop %v720
      %v722 = vmul.f32 %v710, 1.442695
      %v723 = vpow.pop %v722
      %v724 = vmul.f32 %v711, 1.442695
      %v725 = vpow.pop %v724
      %v726 = vmul.f32 %v712, 1.442695
      %v727 = vpow.pop %v726
      %v728 = vmul.f32 %v713, 1.442695
      %v729 = vpow.pop %v728
      %731 = vset.pattern.permute.xlu0 0
      %732 = vperm.xlu0 %731, %v698
      %v733 = vpop.permute.xlu0 %732
      %736 = vset.pattern.permute.xlu0 0
      %737 = vperm.xlu0 %736, %v699
      %v738 = vpop.permute.xlu0 %737
      %741 = vset.pattern.permute.xlu0 0
      %742 = vperm.xlu0 %741, %v700
      %v743 = vpop.permute.xlu0 %742
      %746 = vset.pattern.permute.xlu0 0
      %747 = vperm.xlu0 %746, %v701
      %v748 = vpop.permute.xlu0 %747
      %751 = vset.pattern.permute.xlu0 0
      %752 = vperm.xlu0 %751, %v702
      %v753 = vpop.permute.xlu0 %752
      %756 = vset.pattern.permute.xlu0 0
      %757 = vperm.xlu0 %756, %v703
      %v758 = vpop.permute.xlu0 %757
      %761 = vset.pattern.permute.xlu0 0
      %762 = vperm.xlu0 %761, %v704
      %v763 = vpop.permute.xlu0 %762
      %766 = vset.pattern.permute.xlu0 0
      %767 = vperm.xlu0 %766, %v705
      %v768 = vpop.permute.xlu0 %767
      %v770 = vsub.f32 %v627, %v733
      %v771 = vsub.f32 %v632, %v738
      %v772 = vsub.f32 %v637, %v743
      %v773 = vsub.f32 %v642, %v748
      %v774 = vsub.f32 %v647, %v753
      %v775 = vsub.f32 %v652, %v758
      %v776 = vsub.f32 %v657, %v763
      %v777 = vsub.f32 %v662, %v768
      %v778 = vmul.f32 %v770, 1.442695
      %v779 = vpow.pop %v778
      %v780 = vmul.f32 %v771, 1.442695
      %v781 = vpow.pop %v780
      %v782 = vmul.f32 %v772, 1.442695
      %v783 = vpow.pop %v782
      %v784 = vmul.f32 %v773, 1.442695
      %v785 = vpow.pop %v784
      %v786 = vmul.f32 %v774, 1.442695
      %v787 = vpow.pop %v786
      %v788 = vmul.f32 %v775, 1.442695
      %v789 = vpow.pop %v788
      %v790 = vmul.f32 %v776, 1.442695
      %v791 = vpow.pop %v790
      %v792 = vmul.f32 %v777, 1.442695
      %v793 = vpow.pop %v792
      %v794 = vld [vmem:[#allocation3] sm:$0xff]
      %v795 = vld [vmem:[#allocation3 + $0x8] sm:$0xff]
      %v796 = vld [vmem:[#allocation3 + $0x10] sm:$0xff]
      %v797 = vld [vmem:[#allocation3 + $0x18] sm:$0xff]
      %v798 = vld [vmem:[#allocation3 + $0x20] sm:$0xff]
      %v799 = vld [vmem:[#allocation3 + $0x28] sm:$0xff]
      %v800 = vld [vmem:[#allocation3 + $0x30] sm:$0xff]
      %v801 = vld [vmem:[#allocation3 + $0x38] sm:$0xff]
      %v802 = vmul.f32 %v715, %v794
      %v803 = vmul.f32 %v717, %v795
      %v804 = vmul.f32 %v719, %v796
      %v805 = vmul.f32 %v721, %v797
      %v806 = vmul.f32 %v723, %v798
      %v807 = vmul.f32 %v725, %v799
      %v808 = vmul.f32 %v727, %v800
      %v809 = vmul.f32 %v729, %v801
      %v810 = vsel %vm673, %v779, 0.0
      %811 = vadd.xlane.f32.xlu0 %v810
      %v812 = vpop.xlane.xlu0 %811
      %v813 = vsel %vm673, %v781, 0.0
      %814 = vadd.xlane.f32.xlu0 %v813
      %v815 = vpop.xlane.xlu0 %814
      %v816 = vsel %vm673, %v783, 0.0
      %817 = vadd.xlane.f32.xlu0 %v816
      %v818 = vpop.xlane.xlu0 %817
      %v819 = vsel %vm673, %v785, 0.0
      %820 = vadd.xlane.f32.xlu0 %v819
      %v821 = vpop.xlane.xlu0 %820
      %v822 = vsel %vm673, %v787, 0.0
      %823 = vadd.xlane.f32.xlu0 %v822
      %v824 = vpop.xlane.xlu0 %823
      %v825 = vsel %vm673, %v789, 0.0
      %826 = vadd.xlane.f32.xlu0 %v825
      %v827 = vpop.xlane.xlu0 %826
      %v828 = vsel %vm673, %v791, 0.0
      %829 = vadd.xlane.f32.xlu0 %v828
      %v830 = vpop.xlane.xlu0 %829
      %v831 = vsel %vm673, %v793, 0.0
      %832 = vadd.xlane.f32.xlu0 %v831
      %v833 = vpop.xlane.xlu0 %832
      %v834 = vadd.f32 %v802, %v812
      %v835 = vadd.f32 %v803, %v815
      %v836 = vadd.f32 %v804, %v818
      %v837 = vadd.f32 %v805, %v821
      %v838 = vadd.f32 %v806, %v824
      %v839 = vadd.f32 %v807, %v827
      %v840 = vadd.f32 %v808, %v830
      %v841 = vadd.f32 %v809, %v833
      %vm842 = vcmask 7168
      %843 = vst.msk [vmem:[#allocation3] sm:$0xff] %vm842, %v834
      %844 = vst.msk [vmem:[#allocation3 + $0x8] sm:$0xff] %vm842, %v835
      %845 = vst.msk [vmem:[#allocation3 + $0x10] sm:$0xff] %vm842, %v836
      %846 = vst.msk [vmem:[#allocation3 + $0x18] sm:$0xff] %vm842, %v837
      %847 = vst.msk [vmem:[#allocation3 + $0x20] sm:$0xff] %vm842, %v838
      %848 = vst.msk [vmem:[#allocation3 + $0x28] sm:$0xff] %vm842, %v839
      %849 = vst.msk [vmem:[#allocation3 + $0x30] sm:$0xff] %vm842, %v840
      %850 = vst.msk [vmem:[#allocation3 + $0x38] sm:$0xff] %vm842, %v841
      %v851 = vld [vmem:[#allocation4] sm:$0xff]
      %v852 = vld [vmem:[#allocation4 + $0x8] sm:$0xff]
      %v853 = vld [vmem:[#allocation4 + $0x10] sm:$0xff]
      %v854 = vld [vmem:[#allocation4 + $0x18] sm:$0xff]
      %v855 = vld [vmem:[#allocation4 + $0x20] sm:$0xff]
      %v856 = vld [vmem:[#allocation4 + $0x28] sm:$0xff]
      %v857 = vld [vmem:[#allocation4 + $0x30] sm:$0xff]
      %v858 = vld [vmem:[#allocation4 + $0x38] sm:$0xff]
      %860 = vset.pattern.permute.xlu0 0
      %861 = vperm.xlu0 %860, %v715
      %v862 = vpop.permute.xlu0 %861
      %865 = vset.pattern.permute.xlu0 0
      %866 = vperm.xlu0 %865, %v717
      %v867 = vpop.permute.xlu0 %866
      %870 = vset.pattern.permute.xlu0 0
      %871 = vperm.xlu0 %870, %v719
      %v872 = vpop.permute.xlu0 %871
      %875 = vset.pattern.permute.xlu0 0
      %876 = vperm.xlu0 %875, %v721
      %v877 = vpop.permute.xlu0 %876
      %880 = vset.pattern.permute.xlu0 0
      %881 = vperm.xlu0 %880, %v723
      %v882 = vpop.permute.xlu0 %881
      %885 = vset.pattern.permute.xlu0 0
      %886 = vperm.xlu0 %885, %v725
      %v887 = vpop.permute.xlu0 %886
      %890 = vset.pattern.permute.xlu0 0
      %891 = vperm.xlu0 %890, %v727
      %v892 = vpop.permute.xlu0 %891
      %895 = vset.pattern.permute.xlu0 0
      %896 = vperm.xlu0 %895, %v729
      %v897 = vpop.permute.xlu0 %896
      %v899 = vmul.f32 %v862, %v851
      %v900 = vmul.f32 %v867, %v852
      %v901 = vmul.f32 %v872, %v853
      %v902 = vmul.f32 %v877, %v854
      %v903 = vmul.f32 %v882, %v855
      %v904 = vmul.f32 %v887, %v856
      %v905 = vmul.f32 %v892, %v857
      %v906 = vmul.f32 %v897, %v858
      %v908 = vsel %vm673, %v779, 0
      %v911 = vsel %vm673, %v781, 0
      %v914 = vsel %vm673, %v783, 0
      %v917 = vsel %vm673, %v785, 0
      %v920 = vsel %vm673, %v787, 0
      %v923 = vsel %vm673, %v789, 0
      %v926 = vsel %vm673, %v791, 0
      %v929 = vsel %vm673, %v793, 0
      %931 = vmatprep.subr.mxu0 0.0
      %932 = vmatpush1.msra.mxu0 %v503
      %933 = vmatprep.subr.mxu0 0.0
      %934 = vmatpush1.msra.mxu0 %v504
      %935 = vmatprep.subr.mxu0 0.0
      %936 = vmatpush1.msra.mxu0 %v505
      %937 = vmatprep.subr.mxu0 0.0
      %938 = vmatpush1.msra.mxu0 %v506
      %939 = vmatprep.subr.mxu0 0.0
      %940 = vmatpush1.msra.mxu0 %v507
      %941 = vmatprep.subr.mxu0 0.0
      %942 = vmatpush1.msra.mxu0 %v508
      %943 = vmatprep.subr.mxu0 0.0
      %944 = vmatpush1.msra.mxu0 %v509
      %945 = vmatprep.subr.mxu0 0.0
      %946 = vmatpush1.msra.mxu0 %v510
      %947 = vmatprep.subr.mxu0 0.0
      %948 = vmatpush1.msra.mxu0 0.0
      %949 = vmatprep.subr.mxu0 0.0
      %950 = vmatpush1.msra.mxu0 0.0
      %951 = vmatprep.subr.mxu0 0.0
      %952 = vmatpush1.msra.mxu0 0.0
      %953 = vmatprep.subr.mxu0 0.0
      %954 = vmatpush1.msra.mxu0 0.0
      %955 = vmatprep.subr.mxu0 0.0
      %956 = vmatpush1.msra.mxu0 0.0
      %957 = vmatprep.subr.mxu0 0.0
      %958 = vmatpush1.msra.mxu0 0.0
      %959 = vmatprep.subr.mxu0 0.0
      %960 = vmatpush1.msra.mxu0 0.0
      %961 = vmatprep.subr.mxu0 0.0
      %962 = vmatpush1.msra.mxu0 0.0
      %963 = vmatprep.subr.mxu0 0.0
      %964 = vmatpush1.msra.mxu0 0.0
      %965 = vmatprep.subr.mxu0 0.0
      %966 = vmatpush1.msra.mxu0 0.0
      %967 = vmatprep.subr.mxu0 0.0
      %968 = vmatpush1.msra.mxu0 0.0
      %969 = vmatprep.subr.mxu0 0.0
      %970 = vmatpush1.msra.mxu0 0.0
      %971 = vmatprep.subr.mxu0 0.0
      %972 = vmatpush1.msra.mxu0 0.0
      %973 = vmatprep.subr.mxu0 0.0
      %974 = vmatpush1.msra.mxu0 0.0
      %975 = vmatprep.subr.mxu0 0.0
      %976 = vmatpush1.msra.mxu0 0.0
      %977 = vmatprep.subr.mxu0 0.0
      %978 = vmatpush1.msra.mxu0 0.0
      %979 = vmatprep.subr.mxu0 0.0
      %980 = vmatpush1.msra.mxu0 0.0
      %981 = vmatprep.subr.mxu0 0.0
      %982 = vmatpush1.msra.mxu0 0.0
      %983 = vmatprep.subr.mxu0 0.0
      %984 = vmatpush1.msra.mxu0 0.0
      %985 = vmatprep.subr.mxu0 0.0
      %986 = vmatpush1.msra.mxu0 0.0
      %987 = vmatprep.subr.mxu0 0.0
      %988 = vmatpush1.msra.mxu0 0.0
      %989 = vmatprep.subr.mxu0 0.0
      %990 = vmatpush1.msra.mxu0 0.0
      %991 = vmatprep.subr.mxu0 0.0
      %992 = vmatpush1.msra.mxu0 0.0
      %993 = vmatprep.subr.mxu0 0.0
      %994 = vmatpush1.msra.mxu0 0.0
      %995 = vmatprep.mubr.f32.mxu0 0.0
      %996 = vmatmul.mubr.f32.gmra.mrb[0].mxu0 %v908
      %v997 = vpop.f32.mrb[0].mxu0
      %v998 = vadd.f32 0.0, %v997
      %v999 = vpop.f32.mrb[0].mxu0
      %1000 = vmatprep.mubr.f32.mxu0 0.0
      %1001 = vmatmul.mubr.f32.gmra.mrb[0].mxu0 %v911
      %v1002 = vpop.f32.mrb[0].mxu0
      %v1003 = vadd.f32 0.0, %v1002
      %v1004 = vpop.f32.mrb[0].mxu0
      %1005 = vmatprep.mubr.f32.mxu0 0.0
      %1006 = vmatmul.mubr.f32.gmra.mrb[0].mxu0 %v914
      %v1007 = vpop.f32.mrb[0].mxu0
      %v1008 = vadd.f32 0.0, %v1007
      %v1009 = vpop.f32.mrb[0].mxu0
      %1010 = vmatprep.mubr.f32.mxu0 0.0
      %1011 = vmatmul.mubr.f32.gmra.mrb[0].mxu0 %v917
      %v1012 = vpop.f32.mrb[0].mxu0
      %v1013 = vadd.f32 0.0, %v1012
      %v1014 = vpop.f32.mrb[0].mxu0
      %1015 = vmatprep.mubr.f32.mxu0 0.0
      %1016 = vmatmul.mubr.f32.gmra.mrb[0].mxu0 %v920
      %v1017 = vpop.f32.mrb[0].mxu0
      %v1018 = vadd.f32 0.0, %v1017
      %v1019 = vpop.f32.mrb[0].mxu0
      %1020 = vmatprep.mubr.f32.mxu0 0.0
      %1021 = vmatmul.mubr.f32.gmra.mrb[0].mxu0 %v923
      %v1022 = vpop.f32.mrb[0].mxu0
      %v1023 = vadd.f32 0.0, %v1022
      %v1024 = vpop.f32.mrb[0].mxu0
      %1025 = vmatprep.mubr.f32.mxu0 0.0
      %1026 = vmatmul.mubr.f32.gmra.mrb[0].mxu0 %v926
      %v1027 = vpop.f32.mrb[0].mxu0
      %v1028 = vadd.f32 0.0, %v1027
      %v1029 = vpop.f32.mrb[0].mxu0
      %1030 = vmatprep.mubr.f32.mxu0 0.0
      %1031 = vmatmul.mubr.f32.gmra.mrb[0].mxu0 %v929
      %v1032 = vpop.f32.mrb[0].mxu0
      %v1033 = vadd.f32 0.0, %v1032
      %v1034 = vpop.f32.mrb[0].mxu0
      %1035 = vdwg.mxu0
      %v1036 = vadd.f32 %v899, %v998
      %v1037 = vadd.f32 %v900, %v1003
      %v1038 = vadd.f32 %v901, %v1008
      %v1039 = vadd.f32 %v902, %v1013
      %v1040 = vadd.f32 %v903, %v1018
      %v1041 = vadd.f32 %v904, %v1023
      %v1042 = vadd.f32 %v905, %v1028
      %v1043 = vadd.f32 %v906, %v1033
      %1044 = vst.msk [vmem:[#allocation4] sm:$0xff] %vm511, %v1036
      %1045 = vst.msk [vmem:[#allocation4 + $0x8] sm:$0xff] %vm511, %v1037
      %1046 = vst.msk [vmem:[#allocation4 + $0x10] sm:$0xff] %vm511, %v1038
      %1047 = vst.msk [vmem:[#allocation4 + $0x18] sm:$0xff] %vm511, %v1039
      %1048 = vst.msk [vmem:[#allocation4 + $0x20] sm:$0xff] %vm511, %v1040
      %1049 = vst.msk [vmem:[#allocation4 + $0x28] sm:$0xff] %vm511, %v1041
      %1050 = vst.msk [vmem:[#allocation4 + $0x30] sm:$0xff] %vm511, %v1042
      %1051 = vst.msk [vmem:[#allocation4 + $0x38] sm:$0xff] %vm511, %v1043
      %1052 = vst.msk [vmem:[#allocation2] sm:$0xff] %vm842, %v698
      %1053 = vst.msk [vmem:[#allocation2 + $0x8] sm:$0xff] %vm842, %v699
      %1054 = vst.msk [vmem:[#allocation2 + $0x10] sm:$0xff] %vm842, %v700
      %1055 = vst.msk [vmem:[#allocation2 + $0x18] sm:$0xff] %vm842, %v701
      %1056 = vst.msk [vmem:[#allocation2 + $0x20] sm:$0xff] %vm842, %v702
      %1057 = vst.msk [vmem:[#allocation2 + $0x28] sm:$0xff] %vm842, %v703
      %1058 = vst.msk [vmem:[#allocation2 + $0x30] sm:$0xff] %vm842, %v704
      %1059 = vst.msk [vmem:[#allocation2 + $0x38] sm:$0xff] %vm842, %v705
      %1060 = vrot.lane.b32.xlu0 %v487, 112
      %v1061 = vpop.permute.xlu0 %1060
      %1062 = vrot.lane.b32.xlu0 %v488, 112
      %v1063 = vpop.permute.xlu0 %1062
      %1064 = vrot.lane.b32.xlu0 %v489, 112
      %v1065 = vpop.permute.xlu0 %1064
      %1066 = vrot.lane.b32.xlu0 %v490, 112
      %v1067 = vpop.permute.xlu0 %1066
      %1068 = vrot.lane.b32.xlu0 %v491, 112
      %v1069 = vpop.permute.xlu0 %1068
      %1070 = vrot.lane.b32.xlu0 %v492, 112
      %v1071 = vpop.permute.xlu0 %1070
      %1072 = vrot.lane.b32.xlu0 %v493, 112
      %v1073 = vpop.permute.xlu0 %1072
      %1074 = vrot.lane.b32.xlu0 %v494, 112
      %v1075 = vpop.permute.xlu0 %1074
      %1076 = vrot.lane.b32.xlu0 %v495, 112
      %v1077 = vpop.permute.xlu0 %1076
      %1078 = vrot.lane.b32.xlu0 %v496, 112
      %v1079 = vpop.permute.xlu0 %1078
      %1080 = vrot.lane.b32.xlu0 %v497, 112
      %v1081 = vpop.permute.xlu0 %1080
      %1082 = vrot.lane.b32.xlu0 %v498, 112
      %v1083 = vpop.permute.xlu0 %1082
      %1084 = vrot.lane.b32.xlu0 %v499, 112
      %v1085 = vpop.permute.xlu0 %1084
      %1086 = vrot.lane.b32.xlu0 %v500, 112
      %v1087 = vpop.permute.xlu0 %1086
      %1088 = vrot.lane.b32.xlu0 %v501, 112
      %v1089 = vpop.permute.xlu0 %1088
      %1090 = vrot.lane.b32.xlu0 %v502, 112
      %v1091 = vpop.permute.xlu0 %1090
      %v1092 = vsel %vm511, %v1061, 0
      %v1094 = vsel %vm511, %v1063, 0
      %v1096 = vsel %vm511, %v1065, 0
      %v1098 = vsel %vm511, %v1067, 0
      %v1100 = vsel %vm511, %v1069, 0
      %v1102 = vsel %vm511, %v1071, 0
      %v1104 = vsel %vm511, %v1073, 0
      %v1106 = vsel %vm511, %v1075, 0
      %v1108 = vsel %vm511, %v1077, 0
      %v1110 = vsel %vm511, %v1079, 0
      %v1112 = vsel %vm511, %v1081, 0
      %v1114 = vsel %vm511, %v1083, 0
      %v1116 = vsel %vm511, %v1085, 0
      %v1118 = vsel %vm511, %v1087, 0
      %v1120 = vsel %vm511, %v1089, 0
      %v1122 = vsel %vm511, %v1091, 0
      %1124 = vmatprep.subr.mxu0 0.0
      %1125 = vmatpush1.xpose.msra.mxu0 %v1108
      %1126 = vmatprep.subr.mxu0 0.0
      %1127 = vmatpush1.xpose.msra.mxu0 %v1110
      %1128 = vmatprep.subr.mxu0 0.0
      %1129 = vmatpush1.xpose.msra.mxu0 %v1112
      %1130 = vmatprep.subr.mxu0 0.0
      %1131 = vmatpush1.xpose.msra.mxu0 %v1114
      %1132 = vmatprep.subr.mxu0 0.0
      %1133 = vmatpush1.xpose.msra.mxu0 %v1116
      %1134 = vmatprep.subr.mxu0 0.0
      %1135 = vmatpush1.xpose.msra.mxu0 %v1118
      %1136 = vmatprep.subr.mxu0 0.0
      %1137 = vmatpush1.xpose.msra.mxu0 %v1120
      %1138 = vmatprep.subr.mxu0 0.0
      %1139 = vmatpush1.xpose.msra.mxu0 %v1122
      %1140 = vmatprep.subr.mxu0 0.0
      %1141 = vmatpush1.xpose.msra.mxu0 0.0
      %1142 = vmatprep.subr.mxu0 0.0
      %1143 = vmatpush1.xpose.msra.mxu0 0.0
      %1144 = vmatprep.subr.mxu0 0.0
      %1145 = vmatpush1.xpose.msra.mxu0 0.0
      %1146 = vmatprep.subr.mxu0 0.0
      %1147 = vmatpush1.xpose.msra.mxu0 0.0
      %1148 = vmatprep.subr.mxu0 0.0
      %1149 = vmatpush1.xpose.msra.mxu0 0.0
      %1150 = vmatprep.subr.mxu0 0.0
      %1151 = vmatpush1.xpose.msra.mxu0 0.0
      %1152 = vmatprep.subr.mxu0 0.0
      %1153 = vmatpush1.xpose.msra.mxu0 0.0
      %1154 = vmatprep.subr.mxu0 0.0
      %1155 = vmatpush1.xpose.msra.mxu0 0.0
      %1156 = vmatprep.subr.mxu0 0.0
      %1157 = vmatpush1.xpose.msra.mxu0 0.0
      %1158 = vmatprep.subr.mxu0 0.0
      %1159 = vmatpush1.xpose.msra.mxu0 0.0
      %1160 = vmatprep.subr.mxu0 0.0
      %1161 = vmatpush1.xpose.msra.mxu0 0.0
      %1162 = vmatprep.subr.mxu0 0.0
      %1163 = vmatpush1.xpose.msra.mxu0 0.0
      %1164 = vmatprep.subr.mxu0 0.0
      %1165 = vmatpush1.xpose.msra.mxu0 0.0
      %1166 = vmatprep.subr.mxu0 0.0
      %1167 = vmatpush1.xpose.msra.mxu0 0.0
      %1168 = vmatprep.subr.mxu0 0.0
      %1169 = vmatpush1.xpose.msra.mxu0 0.0
      %1170 = vmatprep.subr.mxu0 0.0
      %1171 = vmatpush1.xpose.msra.mxu0 0.0
      %1172 = vmatprep.subr.mxu0 0.0
      %1173 = vmatpush1.xpose.msra.mxu0 0.0
      %1174 = vmatprep.subr.mxu0 0.0
      %1175 = vmatpush1.xpose.msra.mxu0 0.0
      %1176 = vmatprep.subr.mxu0 0.0
      %1177 = vmatpush1.xpose.msra.mxu0 0.0
      %1178 = vmatprep.subr.mxu0 0.0
      %1179 = vmatpush1.xpose.msra.mxu0 0.0
      %1180 = vmatprep.subr.mxu0 0.0
      %1181 = vmatpush1.xpose.msra.mxu0 0.0
      %1182 = vmatprep.subr.mxu0 0.0
      %1183 = vmatpush1.xpose.msra.mxu0 0.0
      %1184 = vmatprep.subr.mxu0 0.0
      %1185 = vmatpush1.xpose.msra.mxu0 0.0
      %1186 = vmatprep.subr.mxu0 0.0
      %1187 = vmatpush1.xpose.msra.mxu0 0.0
      %1188 = vmatprep.mubr.f32.mxu0 0.0
      %1189 = vmatmul.mubr.f32.gmra.mrb[0].mxu0 %v1092
      %v1190 = vpop.f32.mrb[0].mxu0
      %v1191 = vadd.f32 0.0, %v1190
      %v1192 = vpop.f32.mrb[0].mxu0
      %1193 = vmatprep.mubr.f32.mxu0 0.0
      %1194 = vmatmul.mubr.f32.gmra.mrb[0].mxu0 %v1094
      %v1195 = vpop.f32.mrb[0].mxu0
      %v1196 = vadd.f32 0.0, %v1195
      %v1197 = vpop.f32.mrb[0].mxu0
      %1198 = vmatprep.mubr.f32.mxu0 0.0
      %1199 = vmatmul.mubr.f32.gmra.mrb[0].mxu0 %v1096
      %v1200 = vpop.f32.mrb[0].mxu0
      %v1201 = vadd.f32 0.0, %v1200
      %v1202 = vpop.f32.mrb[0].mxu0
      %1203 = vmatprep.mubr.f32.mxu0 0.0
      %1204 = vmatmul.mubr.f32.gmra.mrb[0].mxu0 %v1098
      %v1205 = vpop.f32.mrb[0].mxu0
      %v1206 = vadd.f32 0.0, %v1205
      %v1207 = vpop.f32.mrb[0].mxu0
      %1208 = vmatprep.mubr.f32.mxu0 0.0
      %1209 = vmatmul.mubr.f32.gmra.mrb[0].mxu0 %v1100
      %v1210 = vpop.f32.mrb[0].mxu0
      %v1211 = vadd.f32 0.0, %v1210
      %v1212 = vpop.f32.mrb[0].mxu0
      %1213 = vmatprep.mubr.f32.mxu0 0.0
      %1214 = vmatmul.mubr.f32.gmra.mrb[0].mxu0 %v1102
      %v1215 = vpop.f32.mrb[0].mxu0
      %v1216 = vadd.f32 0.0, %v1215
      %v1217 = vpop.f32.mrb[0].mxu0
      %1218 = vmatprep.mubr.f32.mxu0 0.0
      %1219 = vmatmul.mubr.f32.gmra.mrb[0].mxu0 %v1104
      %v1220 = vpop.f32.mrb[0].mxu0
      %v1221 = vadd.f32 0.0, %v1220
      %v1222 = vpop.f32.mrb[0].mxu0
      %1223 = vmatprep.mubr.f32.mxu0 0.0
      %1224 = vmatmul.mubr.f32.gmra.mrb[0].mxu0 %v1106
      %v1225 = vpop.f32.mrb[0].mxu0
      %v1226 = vadd.f32 0.0, %v1225
      %v1227 = vpop.f32.mrb[0].mxu0
      %1228 = vdwg.mxu0
      %s1229 = scalar_lea.vmem [#allocation2], 64
      %v1230 = vld [vmem:[%s1229] sm:$0xff]
      %v1231 = vld [vmem:[%s1229 + $0x8] sm:$0xff]
      %v1232 = vld [vmem:[%s1229 + $0x10] sm:$0xff]
      %v1233 = vld [vmem:[%s1229 + $0x18] sm:$0xff]
      %v1234 = vld [vmem:[%s1229 + $0x20] sm:$0xff]
      %v1235 = vld [vmem:[%s1229 + $0x28] sm:$0xff]
      %v1236 = vld [vmem:[%s1229 + $0x30] sm:$0xff]
      %v1237 = vld [vmem:[%s1229 + $0x38] sm:$0xff]
      %v1238 = vsel %vm673, %v1191, -inf
      %1239 = vmax.xlane.f32.xlu0 %v1238
      %v1240 = vpop.xlane.xlu0 %1239
      %v1241 = vsel %vm673, %v1196, -inf
      %1242 = vmax.xlane.f32.xlu0 %v1241
      %v1243 = vpop.xlane.xlu0 %1242
      %v1244 = vsel %vm673, %v1201, -inf
      %1245 = vmax.xlane.f32.xlu0 %v1244
      %v1246 = vpop.xlane.xlu0 %1245
      %v1247 = vsel %vm673, %v1206, -inf
      %1248 = vmax.xlane.f32.xlu0 %v1247
      %v1249 = vpop.xlane.xlu0 %1248
      %v1250 = vsel %vm673, %v1211, -inf
      %1251 = vmax.xlane.f32.xlu0 %v1250
      %v1252 = vpop.xlane.xlu0 %1251
      %v1253 = vsel %vm673, %v1216, -inf
      %1254 = vmax.xlane.f32.xlu0 %v1253
      %v1255 = vpop.xlane.xlu0 %1254
      %v1256 = vsel %vm673, %v1221, -inf
      %1257 = vmax.xlane.f32.xlu0 %v1256
      %v1258 = vpop.xlane.xlu0 %1257
      %v1259 = vsel %vm673, %v1226, -inf
      %1260 = vmax.xlane.f32.xlu0 %v1259
      %v1261 = vpop.xlane.xlu0 %1260
      %v1262 = vmax.f32 %v1230, %v1240
      %v1263 = vmax.f32 %v1231, %v1243
      %v1264 = vmax.f32 %v1232, %v1246
      %v1265 = vmax.f32 %v1233, %v1249
      %v1266 = vmax.f32 %v1234, %v1252
      %v1267 = vmax.f32 %v1235, %v1255
      %v1268 = vmax.f32 %v1236, %v1258
      %v1269 = vmax.f32 %v1237, %v1261
      %v1270 = vsub.f32 %v1230, %v1262
      %v1271 = vsub.f32 %v1231, %v1263
      %v1272 = vsub.f32 %v1232, %v1264
      %v1273 = vsub.f32 %v1233, %v1265
      %v1274 = vsub.f32 %v1234, %v1266
      %v1275 = vsub.f32 %v1235, %v1267
      %v1276 = vsub.f32 %v1236, %v1268
      %v1277 = vsub.f32 %v1237, %v1269
      %v1278 = vmul.f32 %v1270, 1.442695
      %v1279 = vpow.pop %v1278
      %v1280 = vmul.f32 %v1271, 1.442695
      %v1281 = vpow.pop %v1280
      %v1282 = vmul.f32 %v1272, 1.442695
      %v1283 = vpow.pop %v1282
      %v1284 = vmul.f32 %v1273, 1.442695
      %v1285 = vpow.pop %v1284
      %v1286 = vmul.f32 %v1274, 1.442695
      %v1287 = vpow.pop %v1286
      %v1288 = vmul.f32 %v1275, 1.442695
      %v1289 = vpow.pop %v1288
      %v1290 = vmul.f32 %v1276, 1.442695
      %v1291 = vpow.pop %v1290
      %v1292 = vmul.f32 %v1277, 1.442695
      %v1293 = vpow.pop %v1292
      %1295 = vset.pattern.permute.xlu0 0
      %1296 = vperm.xlu0 %1295, %v1262
      %v1297 = vpop.permute.xlu0 %1296
      %1300 = vset.pattern.permute.xlu0 0
      %1301 = vperm.xlu0 %1300, %v1263
      %v1302 = vpop.permute.xlu0 %1301
      %1305 = vset.pattern.permute.xlu0 0
      %1306 = vperm.xlu0 %1305, %v1264
      %v1307 = vpop.permute.xlu0 %1306
      %1310 = vset.pattern.permute.xlu0 0
      %1311 = vperm.xlu0 %1310, %v1265
      %v1312 = vpop.permute.xlu0 %1311
      %1315 = vset.pattern.permute.xlu0 0
      %1316 = vperm.xlu0 %1315, %v1266
      %v1317 = vpop.permute.xlu0 %1316
      %1320 = vset.pattern.permute.xlu0 0
      %1321 = vperm.xlu0 %1320, %v1267
      %v1322 = vpop.permute.xlu0 %1321
      %1325 = vset.pattern.permute.xlu0 0
      %1326 = vperm.xlu0 %1325, %v1268
      %v1327 = vpop.permute.xlu0 %1326
      %1330 = vset.pattern.permute.xlu0 0
      %1331 = vperm.xlu0 %1330, %v1269
      %v1332 = vpop.permute.xlu0 %1331
      %v1334 = vsub.f32 %v1191, %v1297
      %v1335 = vsub.f32 %v1196, %v1302
      %v1336 = vsub.f32 %v1201, %v1307
      %v1337 = vsub.f32 %v1206, %v1312
      %v1338 = vsub.f32 %v1211, %v1317
      %v1339 = vsub.f32 %v1216, %v1322
      %v1340 = vsub.f32 %v1221, %v1327
      %v1341 = vsub.f32 %v1226, %v1332
      %v1342 = vmul.f32 %v1334, 1.442695
      %v1343 = vpow.pop %v1342
      %v1344 = vmul.f32 %v1335, 1.442695
      %v1345 = vpow.pop %v1344
      %v1346 = vmul.f32 %v1336, 1.442695
      %v1347 = vpow.pop %v1346
      %v1348 = vmul.f32 %v1337, 1.442695
      %v1349 = vpow.pop %v1348
      %v1350 = vmul.f32 %v1338, 1.442695
      %v1351 = vpow.pop %v1350
      %v1352 = vmul.f32 %v1339, 1.442695
      %v1353 = vpow.pop %v1352
      %v1354 = vmul.f32 %v1340, 1.442695
      %v1355 = vpow.pop %v1354
      %v1356 = vmul.f32 %v1341, 1.442695
      %v1357 = vpow.pop %v1356
      %s1358 = scalar_lea.vmem [#allocation3], 64
      %v1359 = vld [vmem:[%s1358] sm:$0xff]
      %v1360 = vld [vmem:[%s1358 + $0x8] sm:$0xff]
      %v1361 = vld [vmem:[%s1358 + $0x10] sm:$0xff]
      %v1362 = vld [vmem:[%s1358 + $0x18] sm:$0xff]
      %v1363 = vld [vmem:[%s1358 + $0x20] sm:$0xff]
      %v1364 = vld [vmem:[%s1358 + $0x28] sm:$0xff]
      %v1365 = vld [vmem:[%s1358 + $0x30] sm:$0xff]
      %v1366 = vld [vmem:[%s1358 + $0x38] sm:$0xff]
      %v1367 = vmul.f32 %v1279, %v1359
      %v1368 = vmul.f32 %v1281, %v1360
      %v1369 = vmul.f32 %v1283, %v1361
      %v1370 = vmul.f32 %v1285, %v1362
      %v1371 = vmul.f32 %v1287, %v1363
      %v1372 = vmul.f32 %v1289, %v1364
      %v1373 = vmul.f32 %v1291, %v1365
      %v1374 = vmul.f32 %v1293, %v1366
      %v1375 = vsel %vm673, %v1343, 0.0
      %1376 = vadd.xlane.f32.xlu0 %v1375
      %v1377 = vpop.xlane.xlu0 %1376
      %v1378 = vsel %vm673, %v1345, 0.0
      %1379 = vadd.xlane.f32.xlu0 %v1378
      %v1380 = vpop.xlane.xlu0 %1379
      %v1381 = vsel %vm673, %v1347, 0.0
      %1382 = vadd.xlane.f32.xlu0 %v1381
      %v1383 = vpop.xlane.xlu0 %1382
      %v1384 = vsel %vm673, %v1349, 0.0
      %1385 = vadd.xlane.f32.xlu0 %v1384
      %v1386 = vpop.xlane.xlu0 %1385
      %v1387 = vsel %vm673, %v1351, 0.0
      %1388 = vadd.xlane.f32.xlu0 %v1387
      %v1389 = vpop.xlane.xlu0 %1388
      %v1390 = vsel %vm673, %v1353, 0.0
      %1391 = vadd.xlane.f32.xlu0 %v1390
      %v1392 = vpop.xlane.xlu0 %1391
      %v1393 = vsel %vm673, %v1355, 0.0
      %1394 = vadd.xlane.f32.xlu0 %v1393
      %v1395 = vpop.xlane.xlu0 %1394
      %v1396 = vsel %vm673, %v1357, 0.0
      %1397 = vadd.xlane.f32.xlu0 %v1396
      %v1398 = vpop.xlane.xlu0 %1397
      %v1399 = vadd.f32 %v1367, %v1377
      %v1400 = vadd.f32 %v1368, %v1380
      %v1401 = vadd.f32 %v1369, %v1383
      %v1402 = vadd.f32 %v1370, %v1386
      %v1403 = vadd.f32 %v1371, %v1389
      %v1404 = vadd.f32 %v1372, %v1392
      %v1405 = vadd.f32 %v1373, %v1395
      %v1406 = vadd.f32 %v1374, %v1398
      %1407 = vst.msk [vmem:[%s1358] sm:$0xff] %vm842, %v1399
      %1408 = vst.msk [vmem:[%s1358 + $0x8] sm:$0xff] %vm842, %v1400
      %1409 = vst.msk [vmem:[%s1358 + $0x10] sm:$0xff] %vm842, %v1401
      %1410 = vst.msk [vmem:[%s1358 + $0x18] sm:$0xff] %vm842, %v1402
      %1411 = vst.msk [vmem:[%s1358 + $0x20] sm:$0xff] %vm842, %v1403
      %1412 = vst.msk [vmem:[%s1358 + $0x28] sm:$0xff] %vm842, %v1404
      %1413 = vst.msk [vmem:[%s1358 + $0x30] sm:$0xff] %vm842, %v1405
      %1414 = vst.msk [vmem:[%s1358 + $0x38] sm:$0xff] %vm842, %v1406
      %s1415 = scalar_lea.vmem [#allocation4], 64
      %v1416 = vld [vmem:[%s1415] sm:$0xff]
      %v1417 = vld [vmem:[%s1415 + $0x8] sm:$0xff]
      %v1418 = vld [vmem:[%s1415 + $0x10] sm:$0xff]
      %v1419 = vld [vmem:[%s1415 + $0x18] sm:$0xff]
      %v1420 = vld [vmem:[%s1415 + $0x20] sm:$0xff]
      %v1421 = vld [vmem:[%s1415 + $0x28] sm:$0xff]
      %v1422 = vld [vmem:[%s1415 + $0x30] sm:$0xff]
      %v1423 = vld [vmem:[%s1415 + $0x38] sm:$0xff]
      %1425 = vset.pattern.permute.xlu0 0
      %1426 = vperm.xlu0 %1425, %v1279
      %v1427 = vpop.permute.xlu0 %1426
      %1430 = vset.pattern.permute.xlu0 0
      %1431 = vperm.xlu0 %1430, %v1281
      %v1432 = vpop.permute.xlu0 %1431
      %1435 = vset.pattern.permute.xlu0 0
      %1436 = vperm.xlu0 %1435, %v1283
      %v1437 = vpop.permute.xlu0 %1436
      %1440 = vset.pattern.permute.xlu0 0
      %1441 = vperm.xlu0 %1440, %v1285
      %v1442 = vpop.permute.xlu0 %1441
      %1445 = vset.pattern.permute.xlu0 0
      %1446 = vperm.xlu0 %1445, %v1287
      %v1447 = vpop.permute.xlu0 %1446
      %1450 = vset.pattern.permute.xlu0 0
      %1451 = vperm.xlu0 %1450, %v1289
      %v1452 = vpop.permute.xlu0 %1451
      %1455 = vset.pattern.permute.xlu0 0
      %1456 = vperm.xlu0 %1455, %v1291
      %v1457 = vpop.permute.xlu0 %1456
      %1460 = vset.pattern.permute.xlu0 0
      %1461 = vperm.xlu0 %1460, %v1293
      %v1462 = vpop.permute.xlu0 %1461
      %v1464 = vmul.f32 %v1427, %v1416
      %v1465 = vmul.f32 %v1432, %v1417
      %v1466 = vmul.f32 %v1437, %v1418
      %v1467 = vmul.f32 %v1442, %v1419
      %v1468 = vmul.f32 %v1447, %v1420
      %v1469 = vmul.f32 %v1452, %v1421
      %v1470 = vmul.f32 %v1457, %v1422
      %v1471 = vmul.f32 %v1462, %v1423
      %1480 = vrot.lane.b32.xlu0 %v503, 112
      %v1481 = vpop.permute.xlu0 %1480
      %1482 = vrot.lane.b32.xlu0 %v504, 112
      %v1483 = vpop.permute.xlu0 %1482
      %1484 = vrot.lane.b32.xlu0 %v505, 112
      %v1485 = vpop.permute.xlu0 %1484
      %1486 = vrot.lane.b32.xlu0 %v506, 112
      %v1487 = vpop.permute.xlu0 %1486
      %1488 = vrot.lane.b32.xlu0 %v507, 112
      %v1489 = vpop.permute.xlu0 %1488
      %1490 = vrot.lane.b32.xlu0 %v508, 112
      %v1491 = vpop.permute.xlu0 %1490
      %1492 = vrot.lane.b32.xlu0 %v509, 112
      %v1493 = vpop.permute.xlu0 %1492
      %1494 = vrot.lane.b32.xlu0 %v510, 112
      %v1495 = vpop.permute.xlu0 %1494
      %v1505 = vsel %vm673, %v1343, 0
      %v1508 = vsel %vm673, %v1345, 0
      %v1511 = vsel %vm673, %v1347, 0
      %v1514 = vsel %vm673, %v1349, 0
      %v1517 = vsel %vm673, %v1351, 0
      %v1520 = vsel %vm673, %v1353, 0
      %v1523 = vsel %vm673, %v1355, 0
      %v1526 = vsel %vm673, %v1357, 0
      %1528 = vmatprep.subr.mxu0 0.0
      %1529 = vmatpush1.msra.mxu0 %v1481
      %1530 = vmatprep.subr.mxu0 0.0
      %1531 = vmatpush1.msra.mxu0 %v1483
      %1532 = vmatprep.subr.mxu0 0.0
      %1533 = vmatpush1.msra.mxu0 %v1485
      %1534 = vmatprep.subr.mxu0 0.0
      %1535 = vmatpush1.msra.mxu0 %v1487
      %1536 = vmatprep.subr.mxu0 0.0
      %1537 = vmatpush1.msra.mxu0 %v1489
      %1538 = vmatprep.subr.mxu0 0.0
      %1539 = vmatpush1.msra.mxu0 %v1491
      %1540 = vmatprep.subr.mxu0 0.0
      %1541 = vmatpush1.msra.mxu0 %v1493
      %1542 = vmatprep.subr.mxu0 0.0
      %1543 = vmatpush1.msra.mxu0 %v1495
      %1544 = vmatprep.subr.mxu0 0.0
      %1545 = vmatpush1.msra.mxu0 0.0
      %1546 = vmatprep.subr.mxu0 0.0
      %1547 = vmatpush1.msra.mxu0 0.0
      %1548 = vmatprep.subr.mxu0 0.0
      %1549 = vmatpush1.msra.mxu0 0.0
      %1550 = vmatprep.subr.mxu0 0.0
      %1551 = vmatpush1.msra.mxu0 0.0
      %1552 = vmatprep.subr.mxu0 0.0
      %1553 = vmatpush1.msra.mxu0 0.0
      %1554 = vmatprep.subr.mxu0 0.0
      %1555 = vmatpush1.msra.mxu0 0.0
      %1556 = vmatprep.subr.mxu0 0.0
      %1557 = vmatpush1.msra.mxu0 0.0
      %1558 = vmatprep.subr.mxu0 0.0
      %1559 = vmatpush1.msra.mxu0 0.0
      %1560 = vmatprep.subr.mxu0 0.0
      %1561 = vmatpush1.msra.mxu0 0.0
      %1562 = vmatprep.subr.mxu0 0.0
      %1563 = vmatpush1.msra.mxu0 0.0
      %1564 = vmatprep.subr.mxu0 0.0
      %1565 = vmatpush1.msra.mxu0 0.0
      %1566 = vmatprep.subr.mxu0 0.0
      %1567 = vmatpush1.msra.mxu0 0.0
      %1568 = vmatprep.subr.mxu0 0.0
      %1569 = vmatpush1.msra.mxu0 0.0
      %1570 = vmatprep.subr.mxu0 0.0
      %1571 = vmatpush1.msra.mxu0 0.0
      %1572 = vmatprep.subr.mxu0 0.0
      %1573 = vmatpush1.msra.mxu0 0.0
      %1574 = vmatprep.subr.mxu0 0.0
      %1575 = vmatpush1.msra.mxu0 0.0
      %1576 = vmatprep.subr.mxu0 0.0
      %1577 = vmatpush1.msra.mxu0 0.0
      %1578 = vmatprep.subr.mxu0 0.0
      %1579 = vmatpush1.msra.mxu0 0.0
      %1580 = vmatprep.subr.mxu0 0.0
      %1581 = vmatpush1.msra.mxu0 0.0
      %1582 = vmatprep.subr.mxu0 0.0
      %1583 = vmatpush1.msra.mxu0 0.0
      %1584 = vmatprep.subr.mxu0 0.0
      %1585 = vmatpush1.msra.mxu0 0.0
      %1586 = vmatprep.subr.mxu0 0.0
      %1587 = vmatpush1.msra.mxu0 0.0
      %1588 = vmatprep.subr.mxu0 0.0
      %1589 = vmatpush1.msra.mxu0 0.0
      %1590 = vmatprep.subr.mxu0 0.0
      %1591 = vmatpush1.msra.mxu0 0.0
      %1592 = vmatprep.mubr.f32.mxu0 0.0
      %1593 = vmatmul.mubr.f32.gmra.mrb[0].mxu0 %v1505
      %v1594 = vpop.f32.mrb[0].mxu0
      %v1595 = vadd.f32 0.0, %v1594
      %v1596 = vpop.f32.mrb[0].mxu0
      %1597 = vmatprep.mubr.f32.mxu0 0.0
      %1598 = vmatmul.mubr.f32.gmra.mrb[0].mxu0 %v1508
      %v1599 = vpop.f32.mrb[0].mxu0
      %v1600 = vadd.f32 0.0, %v1599
      %v1601 = vpop.f32.mrb[0].mxu0
      %1602 = vmatprep.mubr.f32.mxu0 0.0
      %1603 = vmatmul.mubr.f32.gmra.mrb[0].mxu0 %v1511
      %v1604 = vpop.f32.mrb[0].mxu0
      %v1605 = vadd.f32 0.0, %v1604
      %v1606 = vpop.f32.mrb[0].mxu0
      %1607 = vmatprep.mubr.f32.mxu0 0.0
      %1608 = vmatmul.mubr.f32.gmra.mrb[0].mxu0 %v1514
      %v1609 = vpop.f32.mrb[0].mxu0
      %v1610 = vadd.f32 0.0, %v1609
      %v1611 = vpop.f32.mrb[0].mxu0
      %1612 = vmatprep.mubr.f32.mxu0 0.0
      %1613 = vmatmul.mubr.f32.gmra.mrb[0].mxu0 %v1517
      %v1614 = vpop.f32.mrb[0].mxu0
      %v1615 = vadd.f32 0.0, %v1614
      %v1616 = vpop.f32.mrb[0].mxu0
      %1617 = vmatprep.mubr.f32.mxu0 0.0
      %1618 = vmatmul.mubr.f32.gmra.mrb[0].mxu0 %v1520
      %v1619 = vpop.f32.mrb[0].mxu0
      %v1620 = vadd.f32 0.0, %v1619
      %v1621 = vpop.f32.mrb[0].mxu0
      %1622 = vmatprep.mubr.f32.mxu0 0.0
      %1623 = vmatmul.mubr.f32.gmra.mrb[0].mxu0 %v1523
      %v1624 = vpop.f32.mrb[0].mxu0
      %v1625 = vadd.f32 0.0, %v1624
      %v1626 = vpop.f32.mrb[0].mxu0
      %1627 = vmatprep.mubr.f32.mxu0 0.0
      %1628 = vmatmul.mubr.f32.gmra.mrb[0].mxu0 %v1526
      %v1629 = vpop.f32.mrb[0].mxu0
      %v1630 = vadd.f32 0.0, %v1629
      %v1631 = vpop.f32.mrb[0].mxu0
      %1632 = vdwg.mxu0
      %v1633 = vadd.f32 %v1464, %v1595
      %v1634 = vadd.f32 %v1465, %v1600
      %v1635 = vadd.f32 %v1466, %v1605
      %v1636 = vadd.f32 %v1467, %v1610
      %v1637 = vadd.f32 %v1468, %v1615
      %v1638 = vadd.f32 %v1469, %v1620
      %v1639 = vadd.f32 %v1470, %v1625
      %v1640 = vadd.f32 %v1471, %v1630
      %1641 = vst.msk [vmem:[%s1415] sm:$0xff] %vm511, %v1633
      %1642 = vst.msk [vmem:[%s1415 + $0x8] sm:$0xff] %vm511, %v1634
      %1643 = vst.msk [vmem:[%s1415 + $0x10] sm:$0xff] %vm511, %v1635
      %1644 = vst.msk [vmem:[%s1415 + $0x18] sm:$0xff] %vm511, %v1636
      %1645 = vst.msk [vmem:[%s1415 + $0x20] sm:$0xff] %vm511, %v1637
      %1646 = vst.msk [vmem:[%s1415 + $0x28] sm:$0xff] %vm511, %v1638
      %1647 = vst.msk [vmem:[%s1415 + $0x30] sm:$0xff] %vm511, %v1639
      %1648 = vst.msk [vmem:[%s1415 + $0x38] sm:$0xff] %vm511, %v1640
      %1649 = vst.msk [vmem:[%s1229] sm:$0xff] %vm842, %v1262
      %1650 = vst.msk [vmem:[%s1229 + $0x8] sm:$0xff] %vm842, %v1263
      %1651 = vst.msk [vmem:[%s1229 + $0x10] sm:$0xff] %vm842, %v1264
      %1652 = vst.msk [vmem:[%s1229 + $0x18] sm:$0xff] %vm842, %v1265
      %1653 = vst.msk [vmem:[%s1229 + $0x20] sm:$0xff] %vm842, %v1266
      %1654 = vst.msk [vmem:[%s1229 + $0x28] sm:$0xff] %vm842, %v1267
      %1655 = vst.msk [vmem:[%s1229 + $0x30] sm:$0xff] %vm842, %v1268
      %1656 = vst.msk [vmem:[%s1229 + $0x38] sm:$0xff] %vm842, %v1269
      %1657 = vrot.lane.b32.xlu0 %v487, 96
      %v1658 = vpop.permute.xlu0 %1657
      %1659 = vrot.lane.b32.xlu0 %v488, 96
      %v1660 = vpop.permute.xlu0 %1659
      %1661 = vrot.lane.b32.xlu0 %v489, 96
      %v1662 = vpop.permute.xlu0 %1661
      %1663 = vrot.lane.b32.xlu0 %v490, 96
      %v1664 = vpop.permute.xlu0 %1663
      %1665 = vrot.lane.b32.xlu0 %v491, 96
      %v1666 = vpop.permute.xlu0 %1665
      %1667 = vrot.lane.b32.xlu0 %v492, 96
      %v1668 = vpop.permute.xlu0 %1667
      %1669 = vrot.lane.b32.xlu0 %v493, 96
      %v1670 = vpop.permute.xlu0 %1669
      %1671 = vrot.lane.b32.xlu0 %v494, 96
      %v1672 = vpop.permute.xlu0 %1671
      %1673 = vrot.lane.b32.xlu0 %v495, 96
      %v1674 = vpop.permute.xlu0 %1673
      %1675 = vrot.lane.b32.xlu0 %v496, 96
      %v1676 = vpop.permute.xlu0 %1675
      %1677 = vrot.lane.b32.xlu0 %v497, 96
      %v1678 = vpop.permute.xlu0 %1677
      %1679 = vrot.lane.b32.xlu0 %v498, 96
      %v1680 = vpop.permute.xlu0 %1679
      %1681 = vrot.lane.b32.xlu0 %v499, 96
      %v1682 = vpop.permute.xlu0 %1681
      %1683 = vrot.lane.b32.xlu0 %v500, 96
      %v1684 = vpop.permute.xlu0 %1683
      %1685 = vrot.lane.b32.xlu0 %v501, 96
      %v1686 = vpop.permute.xlu0 %1685
      %1687 = vrot.lane.b32.xlu0 %v502, 96
      %v1688 = vpop.permute.xlu0 %1687
      %v1689 = vsel %vm511, %v1658, 0
      %v1691 = vsel %vm511, %v1660, 0
      %v1693 = vsel %vm511, %v1662, 0
      %v1695 = vsel %vm511, %v1664, 0
      %v1697 = vsel %vm511, %v1666, 0
      %v1699 = vsel %vm511, %v1668, 0
      %v1701 = vsel %vm511, %v1670, 0
      %v1703 = vsel %vm511, %v1672, 0
      %v1705 = vsel %vm511, %v1674, 0
      %v1707 = vsel %vm511, %v1676, 0
      %v1709 = vsel %vm511, %v1678, 0
      %v1711 = vsel %vm511, %v1680, 0
      %v1713 = vsel %vm511, %v1682, 0
      %v1715 = vsel %vm511, %v1684, 0
      %v1717 = vsel %vm511, %v1686, 0
      %v1719 = vsel %vm511, %v1688, 0
      %1721 = vmatprep.subr.mxu0 0.0
      %1722 = vmatpush1.xpose.msra.mxu0 %v1705
      %1723 = vmatprep.subr.mxu0 0.0
      %1724 = vmatpush1.xpose.msra.mxu0 %v1707
      %1725 = vmatprep.subr.mxu0 0.0
      %1726 = vmatpush1.xpose.msra.mxu0 %v1709
      %1727 = vmatprep.subr.mxu0 0.0
      %1728 = vmatpush1.xpose.msra.mxu0 %v1711
      %1729 = vmatprep.subr.mxu0 0.0
      %1730 = vmatpush1.xpose.msra.mxu0 %v1713
      %1731 = vmatprep.subr.mxu0 0.0
      %1732 = vmatpush1.xpose.msra.mxu0 %v1715
      %1733 = vmatprep.subr.mxu0 0.0
      %1734 = vmatpush1.xpose.msra.mxu0 %v1717
      %1735 = vmatprep.subr.mxu0 0.0
      %1736 = vmatpush1.xpose.msra.mxu0 %v1719
      %1737 = vmatprep.subr.mxu0 0.0
      %1738 = vmatpush1.xpose.msra.mxu0 0.0
      %1739 = vmatprep.subr.mxu0 0.0
      %1740 = vmatpush1.xpose.msra.mxu0 0.0
      %1741 = vmatprep.subr.mxu0 0.0
      %1742 = vmatpush1.xpose.msra.mxu0 0.0
      %1743 = vmatprep.subr.mxu0 0.0
      %1744 = vmatpush1.xpose.msra.mxu0 0.0
      %1745 = vmatprep.subr.mxu0 0.0
      %1746 = vmatpush1.xpose.msra.mxu0 0.0
      %1747 = vmatprep.subr.mxu0 0.0
      %1748 = vmatpush1.xpose.msra.mxu0 0.0
      %1749 = vmatprep.subr.mxu0 0.0
      %1750 = vmatpush1.xpose.msra.mxu0 0.0
      %1751 = vmatprep.subr.mxu0 0.0
      %1752 = vmatpush1.xpose.msra.mxu0 0.0
      %1753 = vmatprep.subr.mxu0 0.0
      %1754 = vmatpush1.xpose.msra.mxu0 0.0
      %1755 = vmatprep.subr.mxu0 0.0
      %1756 = vmatpush1.xpose.msra.mxu0 0.0
      %1757 = vmatprep.subr.mxu0 0.0
      %1758 = vmatpush1.xpose.msra.mxu0 0.0
      %1759 = vmatprep.subr.mxu0 0.0
      %1760 = vmatpush1.xpose.msra.mxu0 0.0
      %1761 = vmatprep.subr.mxu0 0.0
      %1762 = vmatpush1.xpose.msra.mxu0 0.0
      %1763 = vmatprep.subr.mxu0 0.0
      %1764 = vmatpush1.xpose.msra.mxu0 0.0
      %1765 = vmatprep.subr.mxu0 0.0
      %1766 = vmatpush1.xpose.msra.mxu0 0.0
      %1767 = vmatprep.subr.mxu0 0.0
      %1768 = vmatpush1.xpose.msra.mxu0 0.0
      %1769 = vmatprep.subr.mxu0 0.0
      %1770 = vmatpush1.xpose.msra.mxu0 0.0
      %1771 = vmatprep.subr.mxu0 0.0
      %1772 = vmatpush1.xpose.msra.mxu0 0.0
      %1773 = vmatprep.subr.mxu0 0.0
      %1774 = vmatpush1.xpose.msra.mxu0 0.0
      %1775 = vmatprep.subr.mxu0 0.0
      %1776 = vmatpush1.xpose.msra.mxu0 0.0
      %1777 = vmatprep.subr.mxu0 0.0
      %1778 = vmatpush1.xpose.msra.mxu0 0.0
      %1779 = vmatprep.subr.mxu0 0.0
      %1780 = vmatpush1.xpose.msra.mxu0 0.0
      %1781 = vmatprep.subr.mxu0 0.0
      %1782 = vmatpush1.xpose.msra.mxu0 0.0
      %1783 = vmatprep.subr.mxu0 0.0
      %1784 = vmatpush1.xpose.msra.mxu0 0.0
      %1785 = vmatprep.mubr.f32.mxu0 0.0
      %1786 = vmatmul.mubr.f32.gmra.mrb[0].mxu0 %v1689
      %v1787 = vpop.f32.mrb[0].mxu0
      %v1788 = vadd.f32 0.0, %v1787
      %v1789 = vpop.f32.mrb[0].mxu0
      %1790 = vmatprep.mubr.f32.mxu0 0.0
      %1791 = vmatmul.mubr.f32.gmra.mrb[0].mxu0 %v1691
      %v1792 = vpop.f32.mrb[0].mxu0
      %v1793 = vadd.f32 0.0, %v1792
      %v1794 = vpop.f32.mrb[0].mxu0
      %1795 = vmatprep.mubr.f32.mxu0 0.0
      %1796 = vmatmul.mubr.f32.gmra.mrb[0].mxu0 %v1693
      %v1797 = vpop.f32.mrb[0].mxu0
      %v1798 = vadd.f32 0.0, %v1797
      %v1799 = vpop.f32.mrb[0].mxu0
      %1800 = vmatprep.mubr.f32.mxu0 0.0
      %1801 = vmatmul.mubr.f32.gmra.mrb[0].mxu0 %v1695
      %v1802 = vpop.f32.mrb[0].mxu0
      %v1803 = vadd.f32 0.0, %v1802
      %v1804 = vpop.f32.mrb[0].mxu0
      %1805 = vmatprep.mubr.f32.mxu0 0.0
      %1806 = vmatmul.mubr.f32.gmra.mrb[0].mxu0 %v1697
      %v1807 = vpop.f32.mrb[0].mxu0
      %v1808 = vadd.f32 0.0, %v1807
      %v1809 = vpop.f32.mrb[0].mxu0
      %1810 = vmatprep.mubr.f32.mxu0 0.0
      %1811 = vmatmul.mubr.f32.gmra.mrb[0].mxu0 %v1699
      %v1812 = vpop.f32.mrb[0].mxu0
      %v1813 = vadd.f32 0.0, %v1812
      %v1814 = vpop.f32.mrb[0].mxu0
      %1815 = vmatprep.mubr.f32.mxu0 0.0
      %1816 = vmatmul.mubr.f32.gmra.mrb[0].mxu0 %v1701
      %v1817 = vpop.f32.mrb[0].mxu0
      %v1818 = vadd.f32 0.0, %v1817
      %v1819 = vpop.f32.mrb[0].mxu0
      %1820 = vmatprep.mubr.f32.mxu0 0.0
      %1821 = vmatmul.mubr.f32.gmra.mrb[0].mxu0 %v1703
      %v1822 = vpop.f32.mrb[0].mxu0
      %v1823 = vadd.f32 0.0, %v1822
      %v1824 = vpop.f32.mrb[0].mxu0
      %1825 = vdwg.mxu0
      %s1826 = scalar_lea.vmem [#allocation2], 128
      %v1827 = vld [vmem:[%s1826] sm:$0xff]
      %v1828 = vld [vmem:[%s1826 + $0x8] sm:$0xff]
      %v1829 = vld [vmem:[%s1826 + $0x10] sm:$0xff]
      %v1830 = vld [vmem:[%s1826 + $0x18] sm:$0xff]
      %v1831 = vld [vmem:[%s1826 + $0x20] sm:$0xff]
      %v1832 = vld [vmem:[%s1826 + $0x28] sm:$0xff]
      %v1833 = vld [vmem:[%s1826 + $0x30] sm:$0xff]
      %v1834 = vld [vmem:[%s1826 + $0x38] sm:$0xff]
      %v1835 = vsel %vm673, %v1788, -inf
      %1836 = vmax.xlane.f32.xlu0 %v1835
      %v1837 = vpop.xlane.xlu0 %1836
      %v1838 = vsel %vm673, %v1793, -inf
      %1839 = vmax.xlane.f32.xlu0 %v1838
      %v1840 = vpop.xlane.xlu0 %1839
      %v1841 = vsel %vm673, %v1798, -inf
      %1842 = vmax.xlane.f32.xlu0 %v1841
      %v1843 = vpop.xlane.xlu0 %1842
      %v1844 = vsel %vm673, %v1803, -inf
      %1845 = vmax.xlane.f32.xlu0 %v1844
      %v1846 = vpop.xlane.xlu0 %1845
      %v1847 = vsel %vm673, %v1808, -inf
      %1848 = vmax.xlane.f32.xlu0 %v1847
      %v1849 = vpop.xlane.xlu0 %1848
      %v1850 = vsel %vm673, %v1813, -inf
      %1851 = vmax.xlane.f32.xlu0 %v1850
      %v1852 = vpop.xlane.xlu0 %1851
      %v1853 = vsel %vm673, %v1818, -inf
      %1854 = vmax.xlane.f32.xlu0 %v1853
      %v1855 = vpop.xlane.xlu0 %1854
      %v1856 = vsel %vm673, %v1823, -inf
      %1857 = vmax.xlane.f32.xlu0 %v1856
      %v1858 = vpop.xlane.xlu0 %1857
      %v1859 = vmax.f32 %v1827, %v1837
      %v1860 = vmax.f32 %v1828, %v1840
      %v1861 = vmax.f32 %v1829, %v1843
      %v1862 = vmax.f32 %v1830, %v1846
      %v1863 = vmax.f32 %v1831, %v1849
      %v1864 = vmax.f32 %v1832, %v1852
      %v1865 = vmax.f32 %v1833, %v1855
      %v1866 = vmax.f32 %v1834, %v1858
      %v1867 = vsub.f32 %v1827, %v1859
      %v1868 = vsub.f32 %v1828, %v1860
      %v1869 = vsub.f32 %v1829, %v1861
      %v1870 = vsub.f32 %v1830, %v1862
      %v1871 = vsub.f32 %v1831, %v1863
      %v1872 = vsub.f32 %v1832, %v1864
      %v1873 = vsub.f32 %v1833, %v1865
      %v1874 = vsub.f32 %v1834, %v1866
      %v1875 = vmul.f32 %v1867, 1.442695
      %v1876 = vpow.pop %v1875
      %v1877 = vmul.f32 %v1868, 1.442695
      %v1878 = vpow.pop %v1877
      %v1879 = vmul.f32 %v1869, 1.442695
      %v1880 = vpow.pop %v1879
      %v1881 = vmul.f32 %v1870, 1.442695
      %v1882 = vpow.pop %v1881
      %v1883 = vmul.f32 %v1871, 1.442695
      %v1884 = vpow.pop %v1883
      %v1885 = vmul.f32 %v1872, 1.442695
      %v1886 = vpow.pop %v1885
      %v1887 = vmul.f32 %v1873, 1.442695
      %v1888 = vpow.pop %v1887
      %v1889 = vmul.f32 %v1874, 1.442695
      %v1890 = vpow.pop %v1889
      %1892 = vset.pattern.permute.xlu0 0
      %1893 = vperm.xlu0 %1892, %v1859
      %v1894 = vpop.permute.xlu0 %1893
      %1897 = vset.pattern.permute.xlu0 0
      %1898 = vperm.xlu0 %1897, %v1860
      %v1899 = vpop.permute.xlu0 %1898
      %1902 = vset.pattern.permute.xlu0 0
      %1903 = vperm.xlu0 %1902, %v1861
      %v1904 = vpop.permute.xlu0 %1903
      %1907 = vset.pattern.permute.xlu0 0
      %1908 = vperm.xlu0 %1907, %v1862
      %v1909 = vpop.permute.xlu0 %1908
      %1912 = vset.pattern.permute.xlu0 0
      %1913 = vperm.xlu0 %1912, %v1863
      %v1914 = vpop.permute.xlu0 %1913
      %1917 = vset.pattern.permute.xlu0 0
      %1918 = vperm.xlu0 %1917, %v1864
      %v1919 = vpop.permute.xlu0 %1918
      %1922 = vset.pattern.permute.xlu0 0
      %1923 = vperm.xlu0 %1922, %v1865
      %v1924 = vpop.permute.xlu0 %1923
      %1927 = vset.pattern.permute.xlu0 0
      %1928 = vperm.xlu0 %1927, %v1866
      %v1929 = vpop.permute.xlu0 %1928
      %v1931 = vsub.f32 %v1788, %v1894
      %v1932 = vsub.f32 %v1793, %v1899
      %v1933 = vsub.f32 %v1798, %v1904
      %v1934 = vsub.f32 %v1803, %v1909
      %v1935 = vsub.f32 %v1808, %v1914
      %v1936 = vsub.f32 %v1813, %v1919
      %v1937 = vsub.f32 %v1818, %v1924
      %v1938 = vsub.f32 %v1823, %v1929
      %v1939 = vmul.f32 %v1931, 1.442695
      %v1940 = vpow.pop %v1939
      %v1941 = vmul.f32 %v1932, 1.442695
      %v1942 = vpow.pop %v1941
      %v1943 = vmul.f32 %v1933, 1.442695
      %v1944 = vpow.pop %v1943
      %v1945 = vmul.f32 %v1934, 1.442695
      %v1946 = vpow.pop %v1945
      %v1947 = vmul.f32 %v1935, 1.442695
      %v1948 = vpow.pop %v1947
      %v1949 = vmul.f32 %v1936, 1.442695
      %v1950 = vpow.pop %v1949
      %v1951 = vmul.f32 %v1937, 1.442695
      %v1952 = vpow.pop %v1951
      %v1953 = vmul.f32 %v1938, 1.442695
      %v1954 = vpow.pop %v1953
      %s1955 = scalar_lea.vmem [#allocation3], 128
      %v1956 = vld [vmem:[%s1955] sm:$0xff]
      %v1957 = vld [vmem:[%s1955 + $0x8] sm:$0xff]
      %v1958 = vld [vmem:[%s1955 + $0x10] sm:$0xff]
      %v1959 = vld [vmem:[%s1955 + $0x18] sm:$0xff]
      %v1960 = vld [vmem:[%s1955 + $0x20] sm:$0xff]
      %v1961 = vld [vmem:[%s1955 + $0x28] sm:$0xff]
      %v1962 = vld [vmem:[%s1955 + $0x30] sm:$0xff]
      %v1963 = vld [vmem:[%s1955 + $0x38] sm:$0xff]
      %v1964 = vmul.f32 %v1876, %v1956
      %v1965 = vmul.f32 %v1878, %v1957
      %v1966 = vmul.f32 %v1880, %v1958
      %v1967 = vmul.f32 %v1882, %v1959
      %v1968 = vmul.f32 %v1884, %v1960
      %v1969 = vmul.f32 %v1886, %v1961
      %v1970 = vmul.f32 %v1888, %v1962
      %v1971 = vmul.f32 %v1890, %v1963
      %v1972 = vsel %vm673, %v1940, 0.0
      %1973 = vadd.xlane.f32.xlu0 %v1972
      %v1974 = vpop.xlane.xlu0 %1973
      %v1975 = vsel %vm673, %v1942, 0.0
      %1976 = vadd.xlane.f32.xlu0 %v1975
      %v1977 = vpop.xlane.xlu0 %1976
      %v1978 = vsel %vm673, %v1944, 0.0
      %1979 = vadd.xlane.f32.xlu0 %v1978
      %v1980 = vpop.xlane.xlu0 %1979
      %v1981 = vsel %vm673, %v1946, 0.0
      %1982 = vadd.xlane.f32.xlu0 %v1981
      %v1983 = vpop.xlane.xlu0 %1982
      %v1984 = vsel %vm673, %v1948, 0.0
      %1985 = vadd.xlane.f32.xlu0 %v1984
      %v1986 = vpop.xlane.xlu0 %1985
      %v1987 = vsel %vm673, %v1950, 0.0
      %1988 = vadd.xlane.f32.xlu0 %v1987
      %v1989 = vpop.xlane.xlu0 %1988
      %v1990 = vsel %vm673, %v1952, 0.0
      %1991 = vadd.xlane.f32.xlu0 %v1990
      %v1992 = vpop.xlane.xlu0 %1991
      %v1993 = vsel %vm673, %v1954, 0.0
      %1994 = vadd.xlane.f32.xlu0 %v1993
      %v1995 = vpop.xlane.xlu0 %1994
      %v1996 = vadd.f32 %v1964, %v1974
      %v1997 = vadd.f32 %v1965, %v1977
      %v1998 = vadd.f32 %v1966, %v1980
      %v1999 = vadd.f32 %v1967, %v1983
      %v2000 = vadd.f32 %v1968, %v1986
      %v2001 = vadd.f32 %v1969, %v1989
      %v2002 = vadd.f32 %v1970, %v1992
      %v2003 = vadd.f32 %v1971, %v1995
      %2004 = vst.msk [vmem:[%s1955] sm:$0xff] %vm842, %v1996
      %2005 = vst.msk [vmem:[%s1955 + $0x8] sm:$0xff] %vm842, %v1997
      %2006 = vst.msk [vmem:[%s1955 + $0x10] sm:$0xff] %vm842, %v1998
      %2007 = vst.msk [vmem:[%s1955 + $0x18] sm:$0xff] %vm842, %v1999
      %2008 = vst.msk [vmem:[%s1955 + $0x20] sm:$0xff] %vm842, %v2000
      %2009 = vst.msk [vmem:[%s1955 + $0x28] sm:$0xff] %vm842, %v2001
      %2010 = vst.msk [vmem:[%s1955 + $0x30] sm:$0xff] %vm842, %v2002
      %2011 = vst.msk [vmem:[%s1955 + $0x38] sm:$0xff] %vm842, %v2003
      %s2012 = scalar_lea.vmem [#allocation4], 128
      %v2013 = vld [vmem:[%s2012] sm:$0xff]
      %v2014 = vld [vmem:[%s2012 + $0x8] sm:$0xff]
      %v2015 = vld [vmem:[%s2012 + $0x10] sm:$0xff]
      %v2016 = vld [vmem:[%s2012 + $0x18] sm:$0xff]
      %v2017 = vld [vmem:[%s2012 + $0x20] sm:$0xff]
      %v2018 = vld [vmem:[%s2012 + $0x28] sm:$0xff]
      %v2019 = vld [vmem:[%s2012 + $0x30] sm:$0xff]
      %v2020 = vld [vmem:[%s2012 + $0x38] sm:$0xff]
      %2022 = vset.pattern.permute.xlu0 0
      %2023 = vperm.xlu0 %2022, %v1876
      %v2024 = vpop.permute.xlu0 %2023
      %2027 = vset.pattern.permute.xlu0 0
      %2028 = vperm.xlu0 %2027, %v1878
      %v2029 = vpop.permute.xlu0 %2028
      %2032 = vset.pattern.permute.xlu0 0
      %2033 = vperm.xlu0 %2032, %v1880
      %v2034 = vpop.permute.xlu0 %2033
      %2037 = vset.pattern.permute.xlu0 0
      %2038 = vperm.xlu0 %2037, %v1882
      %v2039 = vpop.permute.xlu0 %2038
      %2042 = vset.pattern.permute.xlu0 0
      %2043 = vperm.xlu0 %2042, %v1884
      %v2044 = vpop.permute.xlu0 %2043
      %2047 = vset.pattern.permute.xlu0 0
      %2048 = vperm.xlu0 %2047, %v1886
      %v2049 = vpop.permute.xlu0 %2048
      %2052 = vset.pattern.permute.xlu0 0
      %2053 = vperm.xlu0 %2052, %v1888
      %v2054 = vpop.permute.xlu0 %2053
      %2057 = vset.pattern.permute.xlu0 0
      %2058 = vperm.xlu0 %2057, %v1890
      %v2059 = vpop.permute.xlu0 %2058
      %v2061 = vmul.f32 %v2024, %v2013
      %v2062 = vmul.f32 %v2029, %v2014
      %v2063 = vmul.f32 %v2034, %v2015
      %v2064 = vmul.f32 %v2039, %v2016
      %v2065 = vmul.f32 %v2044, %v2017
      %v2066 = vmul.f32 %v2049, %v2018
      %v2067 = vmul.f32 %v2054, %v2019
      %v2068 = vmul.f32 %v2059, %v2020
      %2069 = vrot.lane.b32.xlu0 %v503, 96
      %v2070 = vpop.permute.xlu0 %2069
      %2071 = vrot.lane.b32.xlu0 %v504, 96
      %v2072 = vpop.permute.xlu0 %2071
      %2073 = vrot.lane.b32.xlu0 %v505, 96
      %v2074 = vpop.permute.xlu0 %2073
      %2075 = vrot.lane.b32.xlu0 %v506, 96
      %v2076 = vpop.permute.xlu0 %2075
      %2077 = vrot.lane.b32.xlu0 %v507, 96
      %v2078 = vpop.permute.xlu0 %2077
      %2079 = vrot.lane.b32.xlu0 %v508, 96
      %v2080 = vpop.permute.xlu0 %2079
      %2081 = vrot.lane.b32.xlu0 %v509, 96
      %v2082 = vpop.permute.xlu0 %2081
      %2083 = vrot.lane.b32.xlu0 %v510, 96
      %v2084 = vpop.permute.xlu0 %2083
      %v2094 = vsel %vm673, %v1940, 0
      %v2097 = vsel %vm673, %v1942, 0
      %v2100 = vsel %vm673, %v1944, 0
      %v2103 = vsel %vm673, %v1946, 0
      %v2106 = vsel %vm673, %v1948, 0
      %v2109 = vsel %vm673, %v1950, 0
      %v2112 = vsel %vm673, %v1952, 0
      %v2115 = vsel %vm673, %v1954, 0
      %2117 = vmatprep.subr.mxu0 0.0
      %2118 = vmatpush1.msra.mxu0 %v2070
      %2119 = vmatprep.subr.mxu0 0.0
      %2120 = vmatpush1.msra.mxu0 %v2072
      %2121 = vmatprep.subr.mxu0 0.0
      %2122 = vmatpush1.msra.mxu0 %v2074
      %2123 = vmatprep.subr.mxu0 0.0
      %2124 = vmatpush1.msra.mxu0 %v2076
      %2125 = vmatprep.subr.mxu0 0.0
      %2126 = vmatpush1.msra.mxu0 %v2078
      %2127 = vmatprep.subr.mxu0 0.0
      %2128 = vmatpush1.msra.mxu0 %v2080
      %2129 = vmatprep.subr.mxu0 0.0
      %2130 = vmatpush1.msra.mxu0 %v2082
      %2131 = vmatprep.subr.mxu0 0.0
      %2132 = vmatpush1.msra.mxu0 %v2084
      %2133 = vmatprep.subr.mxu0 0.0
      %2134 = vmatpush1.msra.mxu0 0.0
      %2135 = vmatprep.subr.mxu0 0.0
      %2136 = vmatpush1.msra.mxu0 0.0
      %2137 = vmatprep.subr.mxu0 0.0
      %2138 = vmatpush1.msra.mxu0 0.0
      %2139 = vmatprep.subr.mxu0 0.0
      %2140 = vmatpush1.msra.mxu0 0.0
      %2141 = vmatprep.subr.mxu0 0.0
      %2142 = vmatpush1.msra.mxu0 0.0
      %2143 = vmatprep.subr.mxu0 0.0
      %2144 = vmatpush1.msra.mxu0 0.0
      %2145 = vmatprep.subr.mxu0 0.0
      %2146 = vmatpush1.msra.mxu0 0.0
      %2147 = vmatprep.subr.mxu0 0.0
      %2148 = vmatpush1.msra.mxu0 0.0
      %2149 = vmatprep.subr.mxu0 0.0
      %2150 = vmatpush1.msra.mxu0 0.0
      %2151 = vmatprep.subr.mxu0 0.0
      %2152 = vmatpush1.msra.mxu0 0.0
      %2153 = vmatprep.subr.mxu0 0.0
      %2154 = vmatpush1.msra.mxu0 0.0
      %2155 = vmatprep.subr.mxu0 0.0
      %2156 = vmatpush1.msra.mxu0 0.0
      %2157 = vmatprep.subr.mxu0 0.0
      %2158 = vmatpush1.msra.mxu0 0.0
      %2159 = vmatprep.subr.mxu0 0.0
      %2160 = vmatpush1.msra.mxu0 0.0
      %2161 = vmatprep.subr.mxu0 0.0
      %2162 = vmatpush1.msra.mxu0 0.0
      %2163 = vmatprep.subr.mxu0 0.0
      %2164 = vmatpush1.msra.mxu0 0.0
      %2165 = vmatprep.subr.mxu0 0.0
      %2166 = vmatpush1.msra.mxu0 0.0
      %2167 = vmatprep.subr.mxu0 0.0
      %2168 = vmatpush1.msra.mxu0 0.0
      %2169 = vmatprep.subr.mxu0 0.0
      %2170 = vmatpush1.msra.mxu0 0.0
      %2171 = vmatprep.subr.mxu0 0.0
      %2172 = vmatpush1.msra.mxu0 0.0
      %2173 = vmatprep.subr.mxu0 0.0
      %2174 = vmatpush1.msra.mxu0 0.0
      %2175 = vmatprep.subr.mxu0 0.0
      %2176 = vmatpush1.msra.mxu0 0.0
      %2177 = vmatprep.subr.mxu0 0.0
      %2178 = vmatpush1.msra.mxu0 0.0
      %2179 = vmatprep.subr.mxu0 0.0
      %2180 = vmatpush1.msra.mxu0 0.0
      %2181 = vmatprep.mubr.f32.mxu0 0.0
      %2182 = vmatmul.mubr.f32.gmra.mrb[0].mxu0 %v2094
      %v2183 = vpop.f32.mrb[0].mxu0
      %v2184 = vadd.f32 0.0, %v2183
      %v2185 = vpop.f32.mrb[0].mxu0
      %2186 = vmatprep.mubr.f32.mxu0 0.0
      %2187 = vmatmul.mubr.f32.gmra.mrb[0].mxu0 %v2097
      %v2188 = vpop.f32.mrb[0].mxu0
      %v2189 = vadd.f32 0.0, %v2188
      %v2190 = vpop.f32.mrb[0].mxu0
      %2191 = vmatprep.mubr.f32.mxu0 0.0
      %2192 = vmatmul.mubr.f32.gmra.mrb[0].mxu0 %v2100
      %v2193 = vpop.f32.mrb[0].mxu0
      %v2194 = vadd.f32 0.0, %v2193
      %v2195 = vpop.f32.mrb[0].mxu0
      %2196 = vmatprep.mubr.f32.mxu0 0.0
      %2197 = vmatmul.mubr.f32.gmra.mrb[0].mxu0 %v2103
      %v2198 = vpop.f32.mrb[0].mxu0
      %v2199 = vadd.f32 0.0, %v2198
      %v2200 = vpop.f32.mrb[0].mxu0
      %2201 = vmatprep.mubr.f32.mxu0 0.0
      %2202 = vmatmul.mubr.f32.gmra.mrb[0].mxu0 %v2106
      %v2203 = vpop.f32.mrb[0].mxu0
      %v2204 = vadd.f32 0.0, %v2203
      %v2205 = vpop.f32.mrb[0].mxu0
      %2206 = vmatprep.mubr.f32.mxu0 0.0
      %2207 = vmatmul.mubr.f32.gmra.mrb[0].mxu0 %v2109
      %v2208 = vpop.f32.mrb[0].mxu0
      %v2209 = vadd.f32 0.0, %v2208
      %v2210 = vpop.f32.mrb[0].mxu0
      %2211 = vmatprep.mubr.f32.mxu0 0.0
      %2212 = vmatmul.mubr.f32.gmra.mrb[0].mxu0 %v2112
      %v2213 = vpop.f32.mrb[0].mxu0
      %v2214 = vadd.f32 0.0, %v2213
      %v2215 = vpop.f32.mrb[0].mxu0
      %2216 = vmatprep.mubr.f32.mxu0 0.0
      %2217 = vmatmul.mubr.f32.gmra.mrb[0].mxu0 %v2115
      %v2218 = vpop.f32.mrb[0].mxu0
      %v2219 = vadd.f32 0.0, %v2218
      %v2220 = vpop.f32.mrb[0].mxu0
      %2221 = vdwg.mxu0
      %v2222 = vadd.f32 %v2061, %v2184
      %v2223 = vadd.f32 %v2062, %v2189
      %v2224 = vadd.f32 %v2063, %v2194
      %v2225 = vadd.f32 %v2064, %v2199
      %v2226 = vadd.f32 %v2065, %v2204
      %v2227 = vadd.f32 %v2066, %v2209
      %v2228 = vadd.f32 %v2067, %v2214
      %v2229 = vadd.f32 %v2068, %v2219
      %2230 = vst.msk [vmem:[%s2012] sm:$0xff] %vm511, %v2222
      %2231 = vst.msk [vmem:[%s2012 + $0x8] sm:$0xff] %vm511, %v2223
      %2232 = vst.msk [vmem:[%s2012 + $0x10] sm:$0xff] %vm511, %v2224
      %2233 = vst.msk [vmem:[%s2012 + $0x18] sm:$0xff] %vm511, %v2225
      %2234 = vst.msk [vmem:[%s2012 + $0x20] sm:$0xff] %vm511, %v2226
      %2235 = vst.msk [vmem:[%s2012 + $0x28] sm:$0xff] %vm511, %v2227
      %2236 = vst.msk [vmem:[%s2012 + $0x30] sm:$0xff] %vm511, %v2228
      %2237 = vst.msk [vmem:[%s2012 + $0x38] sm:$0xff] %vm511, %v2229
      %2238 = vst.msk [vmem:[%s1826] sm:$0xff] %vm842, %v1859
      %2239 = vst.msk [vmem:[%s1826 + $0x8] sm:$0xff] %vm842, %v1860
      %2240 = vst.msk [vmem:[%s1826 + $0x10] sm:$0xff] %vm842, %v1861
      %2241 = vst.msk [vmem:[%s1826 + $0x18] sm:$0xff] %vm842, %v1862
      %2242 = vst.msk [vmem:[%s1826 + $0x20] sm:$0xff] %vm842, %v1863
      %2243 = vst.msk [vmem:[%s1826 + $0x28] sm:$0xff] %vm842, %v1864
      %2244 = vst.msk [vmem:[%s1826 + $0x30] sm:$0xff] %vm842, %v1865
      %2245 = vst.msk [vmem:[%s1826 + $0x38] sm:$0xff] %vm842, %v1866
      %2246 = vrot.lane.b32.xlu0 %v487, 80
      %v2247 = vpop.permute.xlu0 %2246
      %2248 = vrot.lane.b32.xlu0 %v488, 80
      %v2249 = vpop.permute.xlu0 %2248
      %2250 = vrot.lane.b32.xlu0 %v489, 80
      %v2251 = vpop.permute.xlu0 %2250
      %2252 = vrot.lane.b32.xlu0 %v490, 80
      %v2253 = vpop.permute.xlu0 %2252
      %2254 = vrot.lane.b32.xlu0 %v491, 80
      %v2255 = vpop.permute.xlu0 %2254
      %2256 = vrot.lane.b32.xlu0 %v492, 80
      %v2257 = vpop.permute.xlu0 %2256
      %2258 = vrot.lane.b32.xlu0 %v493, 80
      %v2259 = vpop.permute.xlu0 %2258
      %2260 = vrot.lane.b32.xlu0 %v494, 80
      %v2261 = vpop.permute.xlu0 %2260
      %2262 = vrot.lane.b32.xlu0 %v495, 80
      %v2263 = vpop.permute.xlu0 %2262
      %2264 = vrot.lane.b32.xlu0 %v496, 80
      %v2265 = vpop.permute.xlu0 %2264
      %2266 = vrot.lane.b32.xlu0 %v497, 80
      %v2267 = vpop.permute.xlu0 %2266
      %2268 = vrot.lane.b32.xlu0 %v498, 80
      %v2269 = vpop.permute.xlu0 %2268
      %2270 = vrot.lane.b32.xlu0 %v499, 80
      %v2271 = vpop.permute.xlu0 %2270
      %2272 = vrot.lane.b32.xlu0 %v500, 80
      %v2273 = vpop.permute.xlu0 %2272
      %2274 = vrot.lane.b32.xlu0 %v501, 80
      %v2275 = vpop.permute.xlu0 %2274
      %2276 = vrot.lane.b32.xlu0 %v502, 80
      %v2277 = vpop.permute.xlu0 %2276
      %v2278 = vsel %vm511, %v2247, 0
      %v2280 = vsel %vm511, %v2249, 0
      %v2282 = vsel %vm511, %v2251, 0
      %v2284 = vsel %vm511, %v2253, 0
      %v2286 = vsel %vm511, %v2255, 0
      %v2288 = vsel %vm511, %v2257, 0
      %v2290 = vsel %vm511, %v2259, 0
      %v2292 = vsel %vm511, %v2261, 0
      %v2294 = vsel %vm511, %v2263, 0
      %v2296 = vsel %vm511, %v2265, 0
      %v2298 = vsel %vm511, %v2267, 0
      %v2300 = vsel %vm511, %v2269, 0
      %v2302 = vsel %vm511, %v2271, 0
      %v2304 = vsel %vm511, %v2273, 0
      %v2306 = vsel %vm511, %v2275, 0
      %v2308 = vsel %vm511, %v2277, 0
      %2310 = vmatprep.subr.mxu0 0.0
      %2311 = vmatpush1.xpose.msra.mxu0 %v2294
      %2312 = vmatprep.subr.mxu0 0.0
      %2313 = vmatpush1.xpose.msra.mxu0 %v2296
      %2314 = vmatprep.subr.mxu0 0.0
      %2315 = vmatpush1.xpose.msra.mxu0 %v2298
      %2316 = vmatprep.subr.mxu0 0.0
      %2317 = vmatpush1.xpose.msra.mxu0 %v2300
      %2318 = vmatprep.subr.mxu0 0.0
      %2319 = vmatpush1.xpose.msra.mxu0 %v2302
      %2320 = vmatprep.subr.mxu0 0.0
      %2321 = vmatpush1.xpose.msra.mxu0 %v2304
      %2322 = vmatprep.subr.mxu0 0.0
      %2323 = vmatpush1.xpose.msra.mxu0 %v2306
      %2324 = vmatprep.subr.mxu0 0.0
      %2325 = vmatpush1.xpose.msra.mxu0 %v2308
      %2326 = vmatprep.subr.mxu0 0.0
      %2327 = vmatpush1.xpose.msra.mxu0 0.0
      %2328 = vmatprep.subr.mxu0 0.0
      %2329 = vmatpush1.xpose.msra.mxu0 0.0
      %2330 = vmatprep.subr.mxu0 0.0
      %2331 = vmatpush1.xpose.msra.mxu0 0.0
      %2332 = vmatprep.subr.mxu0 0.0
      %2333 = vmatpush1.xpose.msra.mxu0 0.0
      %2334 = vmatprep.subr.mxu0 0.0
      %2335 = vmatpush1.xpose.msra.mxu0 0.0
      %2336 = vmatprep.subr.mxu0 0.0
      %2337 = vmatpush1.xpose.msra.mxu0 0.0
      %2338 = vmatprep.subr.mxu0 0.0
      %2339 = vmatpush1.xpose.msra.mxu0 0.0
      %2340 = vmatprep.subr.mxu0 0.0
      %2341 = vmatpush1.xpose.msra.mxu0 0.0
      %2342 = vmatprep.subr.mxu0 0.0
      %2343 = vmatpush1.xpose.msra.mxu0 0.0
      %2344 = vmatprep.subr.mxu0 0.0
      %2345 = vmatpush1.xpose.msra.mxu0 0.0
      %2346 = vmatprep.subr.mxu0 0.0
      %2347 = vmatpush1.xpose.msra.mxu0 0.0
      %2348 = vmatprep.subr.mxu0 0.0
      %2349 = vmatpush1.xpose.msra.mxu0 0.0
      %2350 = vmatprep.subr.mxu0 0.0
      %2351 = vmatpush1.xpose.msra.mxu0 0.0
      %2352 = vmatprep.subr.mxu0 0.0
      %2353 = vmatpush1.xpose.msra.mxu0 0.0
      %2354 = vmatprep.subr.mxu0 0.0
      %2355 = vmatpush1.xpose.msra.mxu0 0.0
      %2356 = vmatprep.subr.mxu0 0.0
      %2357 = vmatpush1.xpose.msra.mxu0 0.0
      %2358 = vmatprep.subr.mxu0 0.0
      %2359 = vmatpush1.xpose.msra.mxu0 0.0
      %2360 = vmatprep.subr.mxu0 0.0
      %2361 = vmatpush1.xpose.msra.mxu0 0.0
      %2362 = vmatprep.subr.mxu0 0.0
      %2363 = vmatpush1.xpose.msra.mxu0 0.0
      %2364 = vmatprep.subr.mxu0 0.0
      %2365 = vmatpush1.xpose.msra.mxu0 0.0
      %2366 = vmatprep.subr.mxu0 0.0
      %2367 = vmatpush1.xpose.msra.mxu0 0.0
      %2368 = vmatprep.subr.mxu0 0.0
      %2369 = vmatpush1.xpose.msra.mxu0 0.0
      %2370 = vmatprep.subr.mxu0 0.0
      %2371 = vmatpush1.xpose.msra.mxu0 0.0
      %2372 = vmatprep.subr.mxu0 0.0
      %2373 = vmatpush1.xpose.msra.mxu0 0.0
      %2374 = vmatprep.mubr.f32.mxu0 0.0
      %2375 = vmatmul.mubr.f32.gmra.mrb[0].mxu0 %v2278
      %v2376 = vpop.f32.mrb[0].mxu0
      %v2377 = vadd.f32 0.0, %v2376
      %v2378 = vpop.f32.mrb[0].mxu0
      %2379 = vmatprep.mubr.f32.mxu0 0.0
      %2380 = vmatmul.mubr.f32.gmra.mrb[0].mxu0 %v2280
      %v2381 = vpop.f32.mrb[0].mxu0
      %v2382 = vadd.f32 0.0, %v2381
      %v2383 = vpop.f32.mrb[0].mxu0
      %2384 = vmatprep.mubr.f32.mxu0 0.0
      %2385 = vmatmul.mubr.f32.gmra.mrb[0].mxu0 %v2282
      %v2386 = vpop.f32.mrb[0].mxu0
      %v2387 = vadd.f32 0.0, %v2386
      %v2388 = vpop.f32.mrb[0].mxu0
      %2389 = vmatprep.mubr.f32.mxu0 0.0
      %2390 = vmatmul.mubr.f32.gmra.mrb[0].mxu0 %v2284
      %v2391 = vpop.f32.mrb[0].mxu0
      %v2392 = vadd.f32 0.0, %v2391
      %v2393 = vpop.f32.mrb[0].mxu0
      %2394 = vmatprep.mubr.f32.mxu0 0.0
      %2395 = vmatmul.mubr.f32.gmra.mrb[0].mxu0 %v2286
      %v2396 = vpop.f32.mrb[0].mxu0
      %v2397 = vadd.f32 0.0, %v2396
      %v2398 = vpop.f32.mrb[0].mxu0
      %2399 = vmatprep.mubr.f32.mxu0 0.0
      %2400 = vmatmul.mubr.f32.gmra.mrb[0].mxu0 %v2288
      %v2401 = vpop.f32.mrb[0].mxu0
      %v2402 = vadd.f32 0.0, %v2401
      %v2403 = vpop.f32.mrb[0].mxu0
      %2404 = vmatprep.mubr.f32.mxu0 0.0
      %2405 = vmatmul.mubr.f32.gmra.mrb[0].mxu0 %v2290
      %v2406 = vpop.f32.mrb[0].mxu0
      %v2407 = vadd.f32 0.0, %v2406
      %v2408 = vpop.f32.mrb[0].mxu0
      %2409 = vmatprep.mubr.f32.mxu0 0.0
      %2410 = vmatmul.mubr.f32.gmra.mrb[0].mxu0 %v2292
      %v2411 = vpop.f32.mrb[0].mxu0
      %v2412 = vadd.f32 0.0, %v2411
      %v2413 = vpop.f32.mrb[0].mxu0
      %2414 = vdwg.mxu0
      %s2415 = scalar_lea.vmem [#allocation2], 192
      %v2416 = vld [vmem:[%s2415] sm:$0xff]
      %v2417 = vld [vmem:[%s2415 + $0x8] sm:$0xff]
      %v2418 = vld [vmem:[%s2415 + $0x10] sm:$0xff]
      %v2419 = vld [vmem:[%s2415 + $0x18] sm:$0xff]
      %v2420 = vld [vmem:[%s2415 + $0x20] sm:$0xff]
      %v2421 = vld [vmem:[%s2415 + $0x28] sm:$0xff]
      %v2422 = vld [vmem:[%s2415 + $0x30] sm:$0xff]
      %v2423 = vld [vmem:[%s2415 + $0x38] sm:$0xff]
      %v2424 = vsel %vm673, %v2377, -inf
      %2425 = vmax.xlane.f32.xlu0 %v2424
      %v2426 = vpop.xlane.xlu0 %2425
      %v2427 = vsel %vm673, %v2382, -inf
      %2428 = vmax.xlane.f32.xlu0 %v2427
      %v2429 = vpop.xlane.xlu0 %2428
      %v2430 = vsel %vm673, %v2387, -inf
      %2431 = vmax.xlane.f32.xlu0 %v2430
      %v2432 = vpop.xlane.xlu0 %2431
      %v2433 = vsel %vm673, %v2392, -inf
      %2434 = vmax.xlane.f32.xlu0 %v2433
      %v2435 = vpop.xlane.xlu0 %2434
      %v2436 = vsel %vm673, %v2397, -inf
      %2437 = vmax.xlane.f32.xlu0 %v2436
      %v2438 = vpop.xlane.xlu0 %2437
      %v2439 = vsel %vm673, %v2402, -inf
      %2440 = vmax.xlane.f32.xlu0 %v2439
      %v2441 = vpop.xlane.xlu0 %2440
      %v2442 = vsel %vm673, %v2407, -inf
      %2443 = vmax.xlane.f32.xlu0 %v2442
      %v2444 = vpop.xlane.xlu0 %2443
      %v2445 = vsel %vm673, %v2412, -inf
      %2446 = vmax.xlane.f32.xlu0 %v2445
      %v2447 = vpop.xlane.xlu0 %2446
      %v2448 = vmax.f32 %v2416, %v2426
      %v2449 = vmax.f32 %v2417, %v2429
      %v2450 = vmax.f32 %v2418, %v2432
      %v2451 = vmax.f32 %v2419, %v2435
      %v2452 = vmax.f32 %v2420, %v2438
      %v2453 = vmax.f32 %v2421, %v2441
      %v2454 = vmax.f32 %v2422, %v2444
      %v2455 = vmax.f32 %v2423, %v2447
      %v2456 = vsub.f32 %v2416, %v2448
      %v2457 = vsub.f32 %v2417, %v2449
      %v2458 = vsub.f32 %v2418, %v2450
      %v2459 = vsub.f32 %v2419, %v2451
      %v2460 = vsub.f32 %v2420, %v2452
      %v2461 = vsub.f32 %v2421, %v2453
      %v2462 = vsub.f32 %v2422, %v2454
      %v2463 = vsub.f32 %v2423, %v2455
      %v2464 = vmul.f32 %v2456, 1.442695
      %v2465 = vpow.pop %v2464
      %v2466 = vmul.f32 %v2457, 1.442695
      %v2467 = vpow.pop %v2466
      %v2468 = vmul.f32 %v2458, 1.442695
      %v2469 = vpow.pop %v2468
      %v2470 = vmul.f32 %v2459, 1.442695
      %v2471 = vpow.pop %v2470
      %v2472 = vmul.f32 %v2460, 1.442695
      %v2473 = vpow.pop %v2472
      %v2474 = vmul.f32 %v2461, 1.442695
      %v2475 = vpow.pop %v2474
      %v2476 = vmul.f32 %v2462, 1.442695
      %v2477 = vpow.pop %v2476
      %v2478 = vmul.f32 %v2463, 1.442695
      %v2479 = vpow.pop %v2478
      %2481 = vset.pattern.permute.xlu0 0
      %2482 = vperm.xlu0 %2481, %v2448
      %v2483 = vpop.permute.xlu0 %2482
      %2486 = vset.pattern.permute.xlu0 0
      %2487 = vperm.xlu0 %2486, %v2449
      %v2488 = vpop.permute.xlu0 %2487
      %2491 = vset.pattern.permute.xlu0 0
      %2492 = vperm.xlu0 %2491, %v2450
      %v2493 = vpop.permute.xlu0 %2492
      %2496 = vset.pattern.permute.xlu0 0
      %2497 = vperm.xlu0 %2496, %v2451
      %v2498 = vpop.permute.xlu0 %2497
      %2501 = vset.pattern.permute.xlu0 0
      %2502 = vperm.xlu0 %2501, %v2452
      %v2503 = vpop.permute.xlu0 %2502
      %2506 = vset.pattern.permute.xlu0 0
      %2507 = vperm.xlu0 %2506, %v2453
      %v2508 = vpop.permute.xlu0 %2507
      %2511 = vset.pattern.permute.xlu0 0
      %2512 = vperm.xlu0 %2511, %v2454
      %v2513 = vpop.permute.xlu0 %2512
      %2516 = vset.pattern.permute.xlu0 0
      %2517 = vperm.xlu0 %2516, %v2455
      %v2518 = vpop.permute.xlu0 %2517
      %v2520 = vsub.f32 %v2377, %v2483
      %v2521 = vsub.f32 %v2382, %v2488
      %v2522 = vsub.f32 %v2387, %v2493
      %v2523 = vsub.f32 %v2392, %v2498
      %v2524 = vsub.f32 %v2397, %v2503
      %v2525 = vsub.f32 %v2402, %v2508
      %v2526 = vsub.f32 %v2407, %v2513
      %v2527 = vsub.f32 %v2412, %v2518
      %v2528 = vmul.f32 %v2520, 1.442695
      %v2529 = vpow.pop %v2528
      %v2530 = vmul.f32 %v2521, 1.442695
      %v2531 = vpow.pop %v2530
      %v2532 = vmul.f32 %v2522, 1.442695
      %v2533 = vpow.pop %v2532
      %v2534 = vmul.f32 %v2523, 1.442695
      %v2535 = vpow.pop %v2534
      %v2536 = vmul.f32 %v2524, 1.442695
      %v2537 = vpow.pop %v2536
      %v2538 = vmul.f32 %v2525, 1.442695
      %v2539 = vpow.pop %v2538
      %v2540 = vmul.f32 %v2526, 1.442695
      %v2541 = vpow.pop %v2540
      %v2542 = vmul.f32 %v2527, 1.442695
      %v2543 = vpow.pop %v2542
      %s2544 = scalar_lea.vmem [#allocation3], 192
      %v2545 = vld [vmem:[%s2544] sm:$0xff]
      %v2546 = vld [vmem:[%s2544 + $0x8] sm:$0xff]
      %v2547 = vld [vmem:[%s2544 + $0x10] sm:$0xff]
      %v2548 = vld [vmem:[%s2544 + $0x18] sm:$0xff]
      %v2549 = vld [vmem:[%s2544 + $0x20] sm:$0xff]
      %v2550 = vld [vmem:[%s2544 + $0x28] sm:$0xff]
      %v2551 = vld [vmem:[%s2544 + $0x30] sm:$0xff]
      %v2552 = vld [vmem:[%s2544 + $0x38] sm:$0xff]
      %v2553 = vmul.f32 %v2465, %v2545
      %v2554 = vmul.f32 %v2467, %v2546
      %v2555 = vmul.f32 %v2469, %v2547
      %v2556 = vmul.f32 %v2471, %v2548
      %v2557 = vmul.f32 %v2473, %v2549
      %v2558 = vmul.f32 %v2475, %v2550
      %v2559 = vmul.f32 %v2477, %v2551
      %v2560 = vmul.f32 %v2479, %v2552
      %v2561 = vsel %vm673, %v2529, 0.0
      %2562 = vadd.xlane.f32.xlu0 %v2561
      %v2563 = vpop.xlane.xlu0 %2562
      %v2564 = vsel %vm673, %v2531, 0.0
      %2565 = vadd.xlane.f32.xlu0 %v2564
      %v2566 = vpop.xlane.xlu0 %2565
      %v2567 = vsel %vm673, %v2533, 0.0
      %2568 = vadd.xlane.f32.xlu0 %v2567
      %v2569 = vpop.xlane.xlu0 %2568
      %v2570 = vsel %vm673, %v2535, 0.0
      %2571 = vadd.xlane.f32.xlu0 %v2570
      %v2572 = vpop.xlane.xlu0 %2571
      %v2573 = vsel %vm673, %v2537, 0.0
      %2574 = vadd.xlane.f32.xlu0 %v2573
      %v2575 = vpop.xlane.xlu0 %2574
      %v2576 = vsel %vm673, %v2539, 0.0
      %2577 = vadd.xlane.f32.xlu0 %v2576
      %v2578 = vpop.xlane.xlu0 %2577
      %v2579 = vsel %vm673, %v2541, 0.0
      %2580 = vadd.xlane.f32.xlu0 %v2579
      %v2581 = vpop.xlane.xlu0 %2580
      %v2582 = vsel %vm673, %v2543, 0.0
      %2583 = vadd.xlane.f32.xlu0 %v2582
      %v2584 = vpop.xlane.xlu0 %2583
      %v2585 = vadd.f32 %v2553, %v2563
      %v2586 = vadd.f32 %v2554, %v2566
      %v2587 = vadd.f32 %v2555, %v2569
      %v2588 = vadd.f32 %v2556, %v2572
      %v2589 = vadd.f32 %v2557, %v2575
      %v2590 = vadd.f32 %v2558, %v2578
      %v2591 = vadd.f32 %v2559, %v2581
      %v2592 = vadd.f32 %v2560, %v2584
      %2593 = vst.msk [vmem:[%s2544] sm:$0xff] %vm842, %v2585
      %2594 = vst.msk [vmem:[%s2544 + $0x8] sm:$0xff] %vm842, %v2586
      %2595 = vst.msk [vmem:[%s2544 + $0x10] sm:$0xff] %vm842, %v2587
      %2596 = vst.msk [vmem:[%s2544 + $0x18] sm:$0xff] %vm842, %v2588
      %2597 = vst.msk [vmem:[%s2544 + $0x20] sm:$0xff] %vm842, %v2589
      %2598 = vst.msk [vmem:[%s2544 + $0x28] sm:$0xff] %vm842, %v2590
      %2599 = vst.msk [vmem:[%s2544 + $0x30] sm:$0xff] %vm842, %v2591
      %2600 = vst.msk [vmem:[%s2544 + $0x38] sm:$0xff] %vm842, %v2592
      %s2601 = scalar_lea.vmem [#allocation4], 192
      %v2602 = vld [vmem:[%s2601] sm:$0xff]
      %v2603 = vld [vmem:[%s2601 + $0x8] sm:$0xff]
      %v2604 = vld [vmem:[%s2601 + $0x10] sm:$0xff]
      %v2605 = vld [vmem:[%s2601 + $0x18] sm:$0xff]
      %v2606 = vld [vmem:[%s2601 + $0x20] sm:$0xff]
      %v2607 = vld [vmem:[%s2601 + $0x28] sm:$0xff]
      %v2608 = vld [vmem:[%s2601 + $0x30] sm:$0xff]
      %v2609 = vld [vmem:[%s2601 + $0x38] sm:$0xff]
      %2611 = vset.pattern.permute.xlu0 0
      %2612 = vperm.xlu0 %2611, %v2465
      %v2613 = vpop.permute.xlu0 %2612
      %2616 = vset.pattern.permute.xlu0 0
      %2617 = vperm.xlu0 %2616, %v2467
      %v2618 = vpop.permute.xlu0 %2617
      %2621 = vset.pattern.permute.xlu0 0
      %2622 = vperm.xlu0 %2621, %v2469
      %v2623 = vpop.permute.xlu0 %2622
      %2626 = vset.pattern.permute.xlu0 0
      %2627 = vperm.xlu0 %2626, %v2471
      %v2628 = vpop.permute.xlu0 %2627
      %2631 = vset.pattern.permute.xlu0 0
      %2632 = vperm.xlu0 %2631, %v2473
      %v2633 = vpop.permute.xlu0 %2632
      %2636 = vset.pattern.permute.xlu0 0
      %2637 = vperm.xlu0 %2636, %v2475
      %v2638 = vpop.permute.xlu0 %2637
      %2641 = vset.pattern.permute.xlu0 0
      %2642 = vperm.xlu0 %2641, %v2477
      %v2643 = vpop.permute.xlu0 %2642
      %2646 = vset.pattern.permute.xlu0 0
      %2647 = vperm.xlu0 %2646, %v2479
      %v2648 = vpop.permute.xlu0 %2647
      %v2650 = vmul.f32 %v2613, %v2602
      %v2651 = vmul.f32 %v2618, %v2603
      %v2652 = vmul.f32 %v2623, %v2604
      %v2653 = vmul.f32 %v2628, %v2605
      %v2654 = vmul.f32 %v2633, %v2606
      %v2655 = vmul.f32 %v2638, %v2607
      %v2656 = vmul.f32 %v2643, %v2608
      %v2657 = vmul.f32 %v2648, %v2609
      %2658 = vrot.lane.b32.xlu0 %v503, 80
      %v2659 = vpop.permute.xlu0 %2658
      %2660 = vrot.lane.b32.xlu0 %v504, 80
      %v2661 = vpop.permute.xlu0 %2660
      %2662 = vrot.lane.b32.xlu0 %v505, 80
      %v2663 = vpop.permute.xlu0 %2662
      %2664 = vrot.lane.b32.xlu0 %v506, 80
      %v2665 = vpop.permute.xlu0 %2664
      %2666 = vrot.lane.b32.xlu0 %v507, 80
      %v2667 = vpop.permute.xlu0 %2666
      %2668 = vrot.lane.b32.xlu0 %v508, 80
      %v2669 = vpop.permute.xlu0 %2668
      %2670 = vrot.lane.b32.xlu0 %v509, 80
      %v2671 = vpop.permute.xlu0 %2670
      %2672 = vrot.lane.b32.xlu0 %v510, 80
      %v2673 = vpop.permute.xlu0 %2672
      %v2683 = vsel %vm673, %v2529, 0
      %v2686 = vsel %vm673, %v2531, 0
      %v2689 = vsel %vm673, %v2533, 0
      %v2692 = vsel %vm673, %v2535, 0
      %v2695 = vsel %vm673, %v2537, 0
      %v2698 = vsel %vm673, %v2539, 0
      %v2701 = vsel %vm673, %v2541, 0
      %v2704 = vsel %vm673, %v2543, 0
      %2706 = vmatprep.subr.mxu0 0.0
      %2707 = vmatpush1.msra.mxu0 %v2659
      %2708 = vmatprep.subr.mxu0 0.0
      %2709 = vmatpush1.msra.mxu0 %v2661
      %2710 = vmatprep.subr.mxu0 0.0
      %2711 = vmatpush1.msra.mxu0 %v2663
      %2712 = vmatprep.subr.mxu0 0.0
      %2713 = vmatpush1.msra.mxu0 %v2665
      %2714 = vmatprep.subr.mxu0 0.0
      %2715 = vmatpush1.msra.mxu0 %v2667
      %2716 = vmatprep.subr.mxu0 0.0
      %2717 = vmatpush1.msra.mxu0 %v2669
      %2718 = vmatprep.subr.mxu0 0.0
      %2719 = vmatpush1.msra.mxu0 %v2671
      %2720 = vmatprep.subr.mxu0 0.0
      %2721 = vmatpush1.msra.mxu0 %v2673
      %2722 = vmatprep.subr.mxu0 0.0
      %2723 = vmatpush1.msra.mxu0 0.0
      %2724 = vmatprep.subr.mxu0 0.0
      %2725 = vmatpush1.msra.mxu0 0.0
      %2726 = vmatprep.subr.mxu0 0.0
      %2727 = vmatpush1.msra.mxu0 0.0
      %2728 = vmatprep.subr.mxu0 0.0
      %2729 = vmatpush1.msra.mxu0 0.0
      %2730 = vmatprep.subr.mxu0 0.0
      %2731 = vmatpush1.msra.mxu0 0.0
      %2732 = vmatprep.subr.mxu0 0.0
      %2733 = vmatpush1.msra.mxu0 0.0
      %2734 = vmatprep.subr.mxu0 0.0
      %2735 = vmatpush1.msra.mxu0 0.0
      %2736 = vmatprep.subr.mxu0 0.0
      %2737 = vmatpush1.msra.mxu0 0.0
      %2738 = vmatprep.subr.mxu0 0.0
      %2739 = vmatpush1.msra.mxu0 0.0
      %2740 = vmatprep.subr.mxu0 0.0
      %2741 = vmatpush1.msra.mxu0 0.0
      %2742 = vmatprep.subr.mxu0 0.0
      %2743 = vmatpush1.msra.mxu0 0.0
      %2744 = vmatprep.subr.mxu0 0.0
      %2745 = vmatpush1.msra.mxu0 0.0
      %2746 = vmatprep.subr.mxu0 0.0
      %2747 = vmatpush1.msra.mxu0 0.0
      %2748 = vmatprep.subr.mxu0 0.0
      %2749 = vmatpush1.msra.mxu0 0.0
      %2750 = vmatprep.subr.mxu0 0.0
      %2751 = vmatpush1.msra.mxu0 0.0
      %2752 = vmatprep.subr.mxu0 0.0
      %2753 = vmatpush1.msra.mxu0 0.0
      %2754 = vmatprep.subr.mxu0 0.0
      %2755 = vmatpush1.msra.mxu0 0.0
      %2756 = vmatprep.subr.mxu0 0.0
      %2757 = vmatpush1.msra.mxu0 0.0
      %2758 = vmatprep.subr.mxu0 0.0
      %2759 = vmatpush1.msra.mxu0 0.0
      %2760 = vmatprep.subr.mxu0 0.0
      %2761 = vmatpush1.msra.mxu0 0.0
      %2762 = vmatprep.subr.mxu0 0.0
      %2763 = vmatpush1.msra.mxu0 0.0
      %2764 = vmatprep.subr.mxu0 0.0
      %2765 = vmatpush1.msra.mxu0 0.0
      %2766 = vmatprep.subr.mxu0 0.0
      %2767 = vmatpush1.msra.mxu0 0.0
      %2768 = vmatprep.subr.mxu0 0.0
      %2769 = vmatpush1.msra.mxu0 0.0
      %2770 = vmatprep.mubr.f32.mxu0 0.0
      %2771 = vmatmul.mubr.f32.gmra.mrb[0].mxu0 %v2683
      %v2772 = vpop.f32.mrb[0].mxu0
      %v2773 = vadd.f32 0.0, %v2772
      %v2774 = vpop.f32.mrb[0].mxu0
      %2775 = vmatprep.mubr.f32.mxu0 0.0
      %2776 = vmatmul.mubr.f32.gmra.mrb[0].mxu0 %v2686
      %v2777 = vpop.f32.mrb[0].mxu0
      %v2778 = vadd.f32 0.0, %v2777
      %v2779 = vpop.f32.mrb[0].mxu0
      %2780 = vmatprep.mubr.f32.mxu0 0.0
      %2781 = vmatmul.mubr.f32.gmra.mrb[0].mxu0 %v2689
      %v2782 = vpop.f32.mrb[0].mxu0
      %v2783 = vadd.f32 0.0, %v2782
      %v2784 = vpop.f32.mrb[0].mxu0
      %2785 = vmatprep.mubr.f32.mxu0 0.0
      %2786 = vmatmul.mubr.f32.gmra.mrb[0].mxu0 %v2692
      %v2787 = vpop.f32.mrb[0].mxu0
      %v2788 = vadd.f32 0.0, %v2787
      %v2789 = vpop.f32.mrb[0].mxu0
      %2790 = vmatprep.mubr.f32.mxu0 0.0
      %2791 = vmatmul.mubr.f32.gmra.mrb[0].mxu0 %v2695
      %v2792 = vpop.f32.mrb[0].mxu0
      %v2793 = vadd.f32 0.0, %v2792
      %v2794 = vpop.f32.mrb[0].mxu0
      %2795 = vmatprep.mubr.f32.mxu0 0.0
      %2796 = vmatmul.mubr.f32.gmra.mrb[0].mxu0 %v2698
      %v2797 = vpop.f32.mrb[0].mxu0
      %v2798 = vadd.f32 0.0, %v2797
      %v2799 = vpop.f32.mrb[0].mxu0
      %2800 = vmatprep.mubr.f32.mxu0 0.0
      %2801 = vmatmul.mubr.f32.gmra.mrb[0].mxu0 %v2701
      %v2802 = vpop.f32.mrb[0].mxu0
      %v2803 = vadd.f32 0.0, %v2802
      %v2804 = vpop.f32.mrb[0].mxu0
      %2805 = vmatprep.mubr.f32.mxu0 0.0
      %2806 = vmatmul.mubr.f32.gmra.mrb[0].mxu0 %v2704
      %v2807 = vpop.f32.mrb[0].mxu0
      %v2808 = vadd.f32 0.0, %v2807
      %v2809 = vpop.f32.mrb[0].mxu0
      %2810 = vdwg.mxu0
      %v2811 = vadd.f32 %v2650, %v2773
      %v2812 = vadd.f32 %v2651, %v2778
      %v2813 = vadd.f32 %v2652, %v2783
      %v2814 = vadd.f32 %v2653, %v2788
      %v2815 = vadd.f32 %v2654, %v2793
      %v2816 = vadd.f32 %v2655, %v2798
      %v2817 = vadd.f32 %v2656, %v2803
      %v2818 = vadd.f32 %v2657, %v2808
      %2819 = vst.msk [vmem:[%s2601] sm:$0xff] %vm511, %v2811
      %2820 = vst.msk [vmem:[%s2601 + $0x8] sm:$0xff] %vm511, %v2812
      %2821 = vst.msk [vmem:[%s2601 + $0x10] sm:$0xff] %vm511, %v2813
      %2822 = vst.msk [vmem:[%s2601 + $0x18] sm:$0xff] %vm511, %v2814
      %2823 = vst.msk [vmem:[%s2601 + $0x20] sm:$0xff] %vm511, %v2815
      %2824 = vst.msk [vmem:[%s2601 + $0x28] sm:$0xff] %vm511, %v2816
      %2825 = vst.msk [vmem:[%s2601 + $0x30] sm:$0xff] %vm511, %v2817
      %2826 = vst.msk [vmem:[%s2601 + $0x38] sm:$0xff] %vm511, %v2818
      %2827 = vst.msk [vmem:[%s2415] sm:$0xff] %vm842, %v2448
      %2828 = vst.msk [vmem:[%s2415 + $0x8] sm:$0xff] %vm842, %v2449
      %2829 = vst.msk [vmem:[%s2415 + $0x10] sm:$0xff] %vm842, %v2450
      %2830 = vst.msk [vmem:[%s2415 + $0x18] sm:$0xff] %vm842, %v2451
      %2831 = vst.msk [vmem:[%s2415 + $0x20] sm:$0xff] %vm842, %v2452
      %2832 = vst.msk [vmem:[%s2415 + $0x28] sm:$0xff] %vm842, %v2453
      %2833 = vst.msk [vmem:[%s2415 + $0x30] sm:$0xff] %vm842, %v2454
      %2834 = vst.msk [vmem:[%s2415 + $0x38] sm:$0xff] %vm842, %v2455
      %2835 = vrot.lane.b32.xlu0 %v487, 64
      %v2836 = vpop.permute.xlu0 %2835
      %2837 = vrot.lane.b32.xlu0 %v488, 64
      %v2838 = vpop.permute.xlu0 %2837
      %2839 = vrot.lane.b32.xlu0 %v489, 64
      %v2840 = vpop.permute.xlu0 %2839
      %2841 = vrot.lane.b32.xlu0 %v490, 64
      %v2842 = vpop.permute.xlu0 %2841
      %2843 = vrot.lane.b32.xlu0 %v491, 64
      %v2844 = vpop.permute.xlu0 %2843
      %2845 = vrot.lane.b32.xlu0 %v492, 64
      %v2846 = vpop.permute.xlu0 %2845
      %2847 = vrot.lane.b32.xlu0 %v493, 64
      %v2848 = vpop.permute.xlu0 %2847
      %2849 = vrot.lane.b32.xlu0 %v494, 64
      %v2850 = vpop.permute.xlu0 %2849
      %2851 = vrot.lane.b32.xlu0 %v495, 64
      %v2852 = vpop.permute.xlu0 %2851
      %2853 = vrot.lane.b32.xlu0 %v496, 64
      %v2854 = vpop.permute.xlu0 %2853
      %2855 = vrot.lane.b32.xlu0 %v497, 64
      %v2856 = vpop.permute.xlu0 %2855
      %2857 = vrot.lane.b32.xlu0 %v498, 64
      %v2858 = vpop.permute.xlu0 %2857
      %2859 = vrot.lane.b32.xlu0 %v499, 64
      %v2860 = vpop.permute.xlu0 %2859
      %2861 = vrot.lane.b32.xlu0 %v500, 64
      %v2862 = vpop.permute.xlu0 %2861
      %2863 = vrot.lane.b32.xlu0 %v501, 64
      %v2864 = vpop.permute.xlu0 %2863
      %2865 = vrot.lane.b32.xlu0 %v502, 64
      %v2866 = vpop.permute.xlu0 %2865
      %v2867 = vsel %vm511, %v2836, 0
      %v2869 = vsel %vm511, %v2838, 0
      %v2871 = vsel %vm511, %v2840, 0
      %v2873 = vsel %vm511, %v2842, 0
      %v2875 = vsel %vm511, %v2844, 0
      %v2877 = vsel %vm511, %v2846, 0
      %v2879 = vsel %vm511, %v2848, 0
      %v2881 = vsel %vm511, %v2850, 0
      %v2883 = vsel %vm511, %v2852, 0
      %v2885 = vsel %vm511, %v2854, 0
      %v2887 = vsel %vm511, %v2856, 0
      %v2889 = vsel %vm511, %v2858, 0
      %v2891 = vsel %vm511, %v2860, 0
      %v2893 = vsel %vm511, %v2862, 0
      %v2895 = vsel %vm511, %v2864, 0
      %v2897 = vsel %vm511, %v2866, 0
      %2899 = vmatprep.subr.mxu0 0.0
      %2900 = vmatpush1.xpose.msra.mxu0 %v2883
      %2901 = vmatprep.subr.mxu0 0.0
      %2902 = vmatpush1.xpose.msra.mxu0 %v2885
      %2903 = vmatprep.subr.mxu0 0.0
      %2904 = vmatpush1.xpose.msra.mxu0 %v2887
      %2905 = vmatprep.subr.mxu0 0.0
      %2906 = vmatpush1.xpose.msra.mxu0 %v2889
      %2907 = vmatprep.subr.mxu0 0.0
      %2908 = vmatpush1.xpose.msra.mxu0 %v2891
      %2909 = vmatprep.subr.mxu0 0.0
      %2910 = vmatpush1.xpose.msra.mxu0 %v2893
      %2911 = vmatprep.subr.mxu0 0.0
      %2912 = vmatpush1.xpose.msra.mxu0 %v2895
      %2913 = vmatprep.subr.mxu0 0.0
      %2914 = vmatpush1.xpose.msra.mxu0 %v2897
      %2915 = vmatprep.subr.mxu0 0.0
      %2916 = vmatpush1.xpose.msra.mxu0 0.0
      %2917 = vmatprep.subr.mxu0 0.0
      %2918 = vmatpush1.xpose.msra.mxu0 0.0
      %2919 = vmatprep.subr.mxu0 0.0
      %2920 = vmatpush1.xpose.msra.mxu0 0.0
      %2921 = vmatprep.subr.mxu0 0.0
      %2922 = vmatpush1.xpose.msra.mxu0 0.0
      %2923 = vmatprep.subr.mxu0 0.0
      %2924 = vmatpush1.xpose.msra.mxu0 0.0
      %2925 = vmatprep.subr.mxu0 0.0
      %2926 = vmatpush1.xpose.msra.mxu0 0.0
      %2927 = vmatprep.subr.mxu0 0.0
      %2928 = vmatpush1.xpose.msra.mxu0 0.0
      %2929 = vmatprep.subr.mxu0 0.0
      %2930 = vmatpush1.xpose.msra.mxu0 0.0
      %2931 = vmatprep.subr.mxu0 0.0
      %2932 = vmatpush1.xpose.msra.mxu0 0.0
      %2933 = vmatprep.subr.mxu0 0.0
      %2934 = vmatpush1.xpose.msra.mxu0 0.0
      %2935 = vmatprep.subr.mxu0 0.0
      %2936 = vmatpush1.xpose.msra.mxu0 0.0
      %2937 = vmatprep.subr.mxu0 0.0
      %2938 = vmatpush1.xpose.msra.mxu0 0.0
      %2939 = vmatprep.subr.mxu0 0.0
      %2940 = vmatpush1.xpose.msra.mxu0 0.0
      %2941 = vmatprep.subr.mxu0 0.0
      %2942 = vmatpush1.xpose.msra.mxu0 0.0
      %2943 = vmatprep.subr.mxu0 0.0
      %2944 = vmatpush1.xpose.msra.mxu0 0.0
      %2945 = vmatprep.subr.mxu0 0.0
      %2946 = vmatpush1.xpose.msra.mxu0 0.0
      %2947 = vmatprep.subr.mxu0 0.0
      %2948 = vmatpush1.xpose.msra.mxu0 0.0
      %2949 = vmatprep.subr.mxu0 0.0
      %2950 = vmatpush1.xpose.msra.mxu0 0.0
      %2951 = vmatprep.subr.mxu0 0.0
      %2952 = vmatpush1.xpose.msra.mxu0 0.0
      %2953 = vmatprep.subr.mxu0 0.0
      %2954 = vmatpush1.xpose.msra.mxu0 0.0
      %2955 = vmatprep.subr.mxu0 0.0
      %2956 = vmatpush1.xpose.msra.mxu0 0.0
      %2957 = vmatprep.subr.mxu0 0.0
      %2958 = vmatpush1.xpose.msra.mxu0 0.0
      %2959 = vmatprep.subr.mxu0 0.0
      %2960 = vmatpush1.xpose.msra.mxu0 0.0
      %2961 = vmatprep.subr.mxu0 0.0
      %2962 = vmatpush1.xpose.msra.mxu0 0.0
      %2963 = vmatprep.mubr.f32.mxu0 0.0
      %2964 = vmatmul.mubr.f32.gmra.mrb[0].mxu0 %v2867
      %v2965 = vpop.f32.mrb[0].mxu0
      %v2966 = vadd.f32 0.0, %v2965
      %v2967 = vpop.f32.mrb[0].mxu0
      %2968 = vmatprep.mubr.f32.mxu0 0.0
      %2969 = vmatmul.mubr.f32.gmra.mrb[0].mxu0 %v2869
      %v2970 = vpop.f32.mrb[0].mxu0
      %v2971 = vadd.f32 0.0, %v2970
      %v2972 = vpop.f32.mrb[0].mxu0
      %2973 = vmatprep.mubr.f32.mxu0 0.0
      %2974 = vmatmul.mubr.f32.gmra.mrb[0].mxu0 %v2871
      %v2975 = vpop.f32.mrb[0].mxu0
      %v2976 = vadd.f32 0.0, %v2975
      %v2977 = vpop.f32.mrb[0].mxu0
      %2978 = vmatprep.mubr.f32.mxu0 0.0
      %2979 = vmatmul.mubr.f32.gmra.mrb[0].mxu0 %v2873
      %v2980 = vpop.f32.mrb[0].mxu0
      %v2981 = vadd.f32 0.0, %v2980
      %v2982 = vpop.f32.mrb[0].mxu0
      %2983 = vmatprep.mubr.f32.mxu0 0.0
      %2984 = vmatmul.mubr.f32.gmra.mrb[0].mxu0 %v2875
      %v2985 = vpop.f32.mrb[0].mxu0
      %v2986 = vadd.f32 0.0, %v2985
      %v2987 = vpop.f32.mrb[0].mxu0
      %2988 = vmatprep.mubr.f32.mxu0 0.0
      %2989 = vmatmul.mubr.f32.gmra.mrb[0].mxu0 %v2877
      %v2990 = vpop.f32.mrb[0].mxu0
      %v2991 = vadd.f32 0.0, %v2990
      %v2992 = vpop.f32.mrb[0].mxu0
      %2993 = vmatprep.mubr.f32.mxu0 0.0
      %2994 = vmatmul.mubr.f32.gmra.mrb[0].mxu0 %v2879
      %v2995 = vpop.f32.mrb[0].mxu0
      %v2996 = vadd.f32 0.0, %v2995
      %v2997 = vpop.f32.mrb[0].mxu0
      %2998 = vmatprep.mubr.f32.mxu0 0.0
      %2999 = vmatmul.mubr.f32.gmra.mrb[0].mxu0 %v2881
      %v3000 = vpop.f32.mrb[0].mxu0
      %v3001 = vadd.f32 0.0, %v3000
      %v3002 = vpop.f32.mrb[0].mxu0
      %3003 = vdwg.mxu0
      %s3004 = scalar_lea.vmem [#allocation2], 256
      %v3005 = vld [vmem:[%s3004] sm:$0xff]
      %v3006 = vld [vmem:[%s3004 + $0x8] sm:$0xff]
      %v3007 = vld [vmem:[%s3004 + $0x10] sm:$0xff]
      %v3008 = vld [vmem:[%s3004 + $0x18] sm:$0xff]
      %v3009 = vld [vmem:[%s3004 + $0x20] sm:$0xff]
      %v3010 = vld [vmem:[%s3004 + $0x28] sm:$0xff]
      %v3011 = vld [vmem:[%s3004 + $0x30] sm:$0xff]
      %v3012 = vld [vmem:[%s3004 + $0x38] sm:$0xff]
      %v3013 = vsel %vm673, %v2966, -inf
      %3014 = vmax.xlane.f32.xlu0 %v3013
      %v3015 = vpop.xlane.xlu0 %3014
      %v3016 = vsel %vm673, %v2971, -inf
      %3017 = vmax.xlane.f32.xlu0 %v3016
      %v3018 = vpop.xlane.xlu0 %3017
      %v3019 = vsel %vm673, %v2976, -inf
      %3020 = vmax.xlane.f32.xlu0 %v3019
      %v3021 = vpop.xlane.xlu0 %3020
      %v3022 = vsel %vm673, %v2981, -inf
      %3023 = vmax.xlane.f32.xlu0 %v3022
      %v3024 = vpop.xlane.xlu0 %3023
      %v3025 = vsel %vm673, %v2986, -inf
      %3026 = vmax.xlane.f32.xlu0 %v3025
      %v3027 = vpop.xlane.xlu0 %3026
      %v3028 = vsel %vm673, %v2991, -inf
      %3029 = vmax.xlane.f32.xlu0 %v3028
      %v3030 = vpop.xlane.xlu0 %3029
      %v3031 = vsel %vm673, %v2996, -inf
      %3032 = vmax.xlane.f32.xlu0 %v3031
      %v3033 = vpop.xlane.xlu0 %3032
      %v3034 = vsel %vm673, %v3001, -inf
      %3035 = vmax.xlane.f32.xlu0 %v3034
      %v3036 = vpop.xlane.xlu0 %3035
      %v3037 = vmax.f32 %v3005, %v3015
      %v3038 = vmax.f32 %v3006, %v3018
      %v3039 = vmax.f32 %v3007, %v3021
      %v3040 = vmax.f32 %v3008, %v3024
      %v3041 = vmax.f32 %v3009, %v3027
      %v3042 = vmax.f32 %v3010, %v3030
      %v3043 = vmax.f32 %v3011, %v3033
      %v3044 = vmax.f32 %v3012, %v3036
      %v3045 = vsub.f32 %v3005, %v3037
      %v3046 = vsub.f32 %v3006, %v3038
      %v3047 = vsub.f32 %v3007, %v3039
      %v3048 = vsub.f32 %v3008, %v3040
      %v3049 = vsub.f32 %v3009, %v3041
      %v3050 = vsub.f32 %v3010, %v3042
      %v3051 = vsub.f32 %v3011, %v3043
      %v3052 = vsub.f32 %v3012, %v3044
      %v3053 = vmul.f32 %v3045, 1.442695
      %v3054 = vpow.pop %v3053
      %v3055 = vmul.f32 %v3046, 1.442695
      %v3056 = vpow.pop %v3055
      %v3057 = vmul.f32 %v3047, 1.442695
      %v3058 = vpow.pop %v3057
      %v3059 = vmul.f32 %v3048, 1.442695
      %v3060 = vpow.pop %v3059
      %v3061 = vmul.f32 %v3049, 1.442695
      %v3062 = vpow.pop %v3061
      %v3063 = vmul.f32 %v3050, 1.442695
      %v3064 = vpow.pop %v3063
      %v3065 = vmul.f32 %v3051, 1.442695
      %v3066 = vpow.pop %v3065
      %v3067 = vmul.f32 %v3052, 1.442695
      %v3068 = vpow.pop %v3067
      %3070 = vset.pattern.permute.xlu0 0
      %3071 = vperm.xlu0 %3070, %v3037
      %v3072 = vpop.permute.xlu0 %3071
      %3075 = vset.pattern.permute.xlu0 0
      %3076 = vperm.xlu0 %3075, %v3038
      %v3077 = vpop.permute.xlu0 %3076
      %3080 = vset.pattern.permute.xlu0 0
      %3081 = vperm.xlu0 %3080, %v3039
      %v3082 = vpop.permute.xlu0 %3081
      %3085 = vset.pattern.permute.xlu0 0
      %3086 = vperm.xlu0 %3085, %v3040
      %v3087 = vpop.permute.xlu0 %3086
      %3090 = vset.pattern.permute.xlu0 0
      %3091 = vperm.xlu0 %3090, %v3041
      %v3092 = vpop.permute.xlu0 %3091
      %3095 = vset.pattern.permute.xlu0 0
      %3096 = vperm.xlu0 %3095, %v3042
      %v3097 = vpop.permute.xlu0 %3096
      %3100 = vset.pattern.permute.xlu0 0
      %3101 = vperm.xlu0 %3100, %v3043
      %v3102 = vpop.permute.xlu0 %3101
      %3105 = vset.pattern.permute.xlu0 0
      %3106 = vperm.xlu0 %3105, %v3044
      %v3107 = vpop.permute.xlu0 %3106
      %v3109 = vsub.f32 %v2966, %v3072
      %v3110 = vsub.f32 %v2971, %v3077
      %v3111 = vsub.f32 %v2976, %v3082
      %v3112 = vsub.f32 %v2981, %v3087
      %v3113 = vsub.f32 %v2986, %v3092
      %v3114 = vsub.f32 %v2991, %v3097
      %v3115 = vsub.f32 %v2996, %v3102
      %v3116 = vsub.f32 %v3001, %v3107
      %v3117 = vmul.f32 %v3109, 1.442695
      %v3118 = vpow.pop %v3117
      %v3119 = vmul.f32 %v3110, 1.442695
      %v3120 = vpow.pop %v3119
      %v3121 = vmul.f32 %v3111, 1.442695
      %v3122 = vpow.pop %v3121
      %v3123 = vmul.f32 %v3112, 1.442695
      %v3124 = vpow.pop %v3123
      %v3125 = vmul.f32 %v3113, 1.442695
      %v3126 = vpow.pop %v3125
      %v3127 = vmul.f32 %v3114, 1.442695
      %v3128 = vpow.pop %v3127
      %v3129 = vmul.f32 %v3115, 1.442695
      %v3130 = vpow.pop %v3129
      %v3131 = vmul.f32 %v3116, 1.442695
      %v3132 = vpow.pop %v3131
      %s3133 = scalar_lea.vmem [#allocation3], 256
      %v3134 = vld [vmem:[%s3133] sm:$0xff]
      %v3135 = vld [vmem:[%s3133 + $0x8] sm:$0xff]
      %v3136 = vld [vmem:[%s3133 + $0x10] sm:$0xff]
      %v3137 = vld [vmem:[%s3133 + $0x18] sm:$0xff]
      %v3138 = vld [vmem:[%s3133 + $0x20] sm:$0xff]
      %v3139 = vld [vmem:[%s3133 + $0x28] sm:$0xff]
      %v3140 = vld [vmem:[%s3133 + $0x30] sm:$0xff]
      %v3141 = vld [vmem:[%s3133 + $0x38] sm:$0xff]
      %v3142 = vmul.f32 %v3054, %v3134
      %v3143 = vmul.f32 %v3056, %v3135
      %v3144 = vmul.f32 %v3058, %v3136
      %v3145 = vmul.f32 %v3060, %v3137
      %v3146 = vmul.f32 %v3062, %v3138
      %v3147 = vmul.f32 %v3064, %v3139
      %v3148 = vmul.f32 %v3066, %v3140
      %v3149 = vmul.f32 %v3068, %v3141
      %v3150 = vsel %vm673, %v3118, 0.0
      %3151 = vadd.xlane.f32.xlu0 %v3150
      %v3152 = vpop.xlane.xlu0 %3151
      %v3153 = vsel %vm673, %v3120, 0.0
      %3154 = vadd.xlane.f32.xlu0 %v3153
      %v3155 = vpop.xlane.xlu0 %3154
      %v3156 = vsel %vm673, %v3122, 0.0
      %3157 = vadd.xlane.f32.xlu0 %v3156
      %v3158 = vpop.xlane.xlu0 %3157
      %v3159 = vsel %vm673, %v3124, 0.0
      %3160 = vadd.xlane.f32.xlu0 %v3159
      %v3161 = vpop.xlane.xlu0 %3160
      %v3162 = vsel %vm673, %v3126, 0.0
      %3163 = vadd.xlane.f32.xlu0 %v3162
      %v3164 = vpop.xlane.xlu0 %3163
      %v3165 = vsel %vm673, %v3128, 0.0
      %3166 = vadd.xlane.f32.xlu0 %v3165
      %v3167 = vpop.xlane.xlu0 %3166
      %v3168 = vsel %vm673, %v3130, 0.0
      %3169 = vadd.xlane.f32.xlu0 %v3168
      %v3170 = vpop.xlane.xlu0 %3169
      %v3171 = vsel %vm673, %v3132, 0.0
      %3172 = vadd.xlane.f32.xlu0 %v3171
      %v3173 = vpop.xlane.xlu0 %3172
      %v3174 = vadd.f32 %v3142, %v3152
      %v3175 = vadd.f32 %v3143, %v3155
      %v3176 = vadd.f32 %v3144, %v3158
      %v3177 = vadd.f32 %v3145, %v3161
      %v3178 = vadd.f32 %v3146, %v3164
      %v3179 = vadd.f32 %v3147, %v3167
      %v3180 = vadd.f32 %v3148, %v3170
      %v3181 = vadd.f32 %v3149, %v3173
      %3182 = vst.msk [vmem:[%s3133] sm:$0xff] %vm842, %v3174
      %3183 = vst.msk [vmem:[%s3133 + $0x8] sm:$0xff] %vm842, %v3175
      %3184 = vst.msk [vmem:[%s3133 + $0x10] sm:$0xff] %vm842, %v3176
      %3185 = vst.msk [vmem:[%s3133 + $0x18] sm:$0xff] %vm842, %v3177
      %3186 = vst.msk [vmem:[%s3133 + $0x20] sm:$0xff] %vm842, %v3178
      %3187 = vst.msk [vmem:[%s3133 + $0x28] sm:$0xff] %vm842, %v3179
      %3188 = vst.msk [vmem:[%s3133 + $0x30] sm:$0xff] %vm842, %v3180
      %3189 = vst.msk [vmem:[%s3133 + $0x38] sm:$0xff] %vm842, %v3181
      %s3190 = scalar_lea.vmem [#allocation4], 256
      %v3191 = vld [vmem:[%s3190] sm:$0xff]
      %v3192 = vld [vmem:[%s3190 + $0x8] sm:$0xff]
      %v3193 = vld [vmem:[%s3190 + $0x10] sm:$0xff]
      %v3194 = vld [vmem:[%s3190 + $0x18] sm:$0xff]
      %v3195 = vld [vmem:[%s3190 + $0x20] sm:$0xff]
      %v3196 = vld [vmem:[%s3190 + $0x28] sm:$0xff]
      %v3197 = vld [vmem:[%s3190 + $0x30] sm:$0xff]
      %v3198 = vld [vmem:[%s3190 + $0x38] sm:$0xff]
      %3200 = vset.pattern.permute.xlu0 0
      %3201 = vperm.xlu0 %3200, %v3054
      %v3202 = vpop.permute.xlu0 %3201
      %3205 = vset.pattern.permute.xlu0 0
      %3206 = vperm.xlu0 %3205, %v3056
      %v3207 = vpop.permute.xlu0 %3206
      %3210 = vset.pattern.permute.xlu0 0
      %3211 = vperm.xlu0 %3210, %v3058
      %v3212 = vpop.permute.xlu0 %3211
      %3215 = vset.pattern.permute.xlu0 0
      %3216 = vperm.xlu0 %3215, %v3060
      %v3217 = vpop.permute.xlu0 %3216
      %3220 = vset.pattern.permute.xlu0 0
      %3221 = vperm.xlu0 %3220, %v3062
      %v3222 = vpop.permute.xlu0 %3221
      %3225 = vset.pattern.permute.xlu0 0
      %3226 = vperm.xlu0 %3225, %v3064
      %v3227 = vpop.permute.xlu0 %3226
      %3230 = vset.pattern.permute.xlu0 0
      %3231 = vperm.xlu0 %3230, %v3066
      %v3232 = vpop.permute.xlu0 %3231
      %3235 = vset.pattern.permute.xlu0 0
      %3236 = vperm.xlu0 %3235, %v3068
      %v3237 = vpop.permute.xlu0 %3236
      %v3239 = vmul.f32 %v3202, %v3191
      %v3240 = vmul.f32 %v3207, %v3192
      %v3241 = vmul.f32 %v3212, %v3193
      %v3242 = vmul.f32 %v3217, %v3194
      %v3243 = vmul.f32 %v3222, %v3195
      %v3244 = vmul.f32 %v3227, %v3196
      %v3245 = vmul.f32 %v3232, %v3197
      %v3246 = vmul.f32 %v3237, %v3198
      %3247 = vrot.lane.b32.xlu0 %v503, 64
      %v3248 = vpop.permute.xlu0 %3247
      %3249 = vrot.lane.b32.xlu0 %v504, 64
      %v3250 = vpop.permute.xlu0 %3249
      %3251 = vrot.lane.b32.xlu0 %v505, 64
      %v3252 = vpop.permute.xlu0 %3251
      %3253 = vrot.lane.b32.xlu0 %v506, 64
      %v3254 = vpop.permute.xlu0 %3253
      %3255 = vrot.lane.b32.xlu0 %v507, 64
      %v3256 = vpop.permute.xlu0 %3255
      %3257 = vrot.lane.b32.xlu0 %v508, 64
      %v3258 = vpop.permute.xlu0 %3257
      %3259 = vrot.lane.b32.xlu0 %v509, 64
      %v3260 = vpop.permute.xlu0 %3259
      %3261 = vrot.lane.b32.xlu0 %v510, 64
      %v3262 = vpop.permute.xlu0 %3261
      %v3272 = vsel %vm673, %v3118, 0
      %v3275 = vsel %vm673, %v3120, 0
      %v3278 = vsel %vm673, %v3122, 0
      %v3281 = vsel %vm673, %v3124, 0
      %v3284 = vsel %vm673, %v3126, 0
      %v3287 = vsel %vm673, %v3128, 0
      %v3290 = vsel %vm673, %v3130, 0
      %v3293 = vsel %vm673, %v3132, 0
      %3295 = vmatprep.subr.mxu0 0.0
      %3296 = vmatpush1.msra.mxu0 %v3248
      %3297 = vmatprep.subr.mxu0 0.0
      %3298 = vmatpush1.msra.mxu0 %v3250
      %3299 = vmatprep.subr.mxu0 0.0
      %3300 = vmatpush1.msra.mxu0 %v3252
      %3301 = vmatprep.subr.mxu0 0.0
      %3302 = vmatpush1.msra.mxu0 %v3254
      %3303 = vmatprep.subr.mxu0 0.0
      %3304 = vmatpush1.msra.mxu0 %v3256
      %3305 = vmatprep.subr.mxu0 0.0
      %3306 = vmatpush1.msra.mxu0 %v3258
      %3307 = vmatprep.subr.mxu0 0.0
      %3308 = vmatpush1.msra.mxu0 %v3260
      %3309 = vmatprep.subr.mxu0 0.0
      %3310 = vmatpush1.msra.mxu0 %v3262
      %3311 = vmatprep.subr.mxu0 0.0
      %3312 = vmatpush1.msra.mxu0 0.0
      %3313 = vmatprep.subr.mxu0 0.0
      %3314 = vmatpush1.msra.mxu0 0.0
      %3315 = vmatprep.subr.mxu0 0.0
      %3316 = vmatpush1.msra.mxu0 0.0
      %3317 = vmatprep.subr.mxu0 0.0
      %3318 = vmatpush1.msra.mxu0 0.0
      %3319 = vmatprep.subr.mxu0 0.0
      %3320 = vmatpush1.msra.mxu0 0.0
      %3321 = vmatprep.subr.mxu0 0.0
      %3322 = vmatpush1.msra.mxu0 0.0
      %3323 = vmatprep.subr.mxu0 0.0
      %3324 = vmatpush1.msra.mxu0 0.0
      %3325 = vmatprep.subr.mxu0 0.0
      %3326 = vmatpush1.msra.mxu0 0.0
      %3327 = vmatprep.subr.mxu0 0.0
      %3328 = vmatpush1.msra.mxu0 0.0
      %3329 = vmatprep.subr.mxu0 0.0
      %3330 = vmatpush1.msra.mxu0 0.0
      %3331 = vmatprep.subr.mxu0 0.0
      %3332 = vmatpush1.msra.mxu0 0.0
      %3333 = vmatprep.subr.mxu0 0.0
      %3334 = vmatpush1.msra.mxu0 0.0
      %3335 = vmatprep.subr.mxu0 0.0
      %3336 = vmatpush1.msra.mxu0 0.0
      %3337 = vmatprep.subr.mxu0 0.0
      %3338 = vmatpush1.msra.mxu0 0.0
      %3339 = vmatprep.subr.mxu0 0.0
      %3340 = vmatpush1.msra.mxu0 0.0
      %3341 = vmatprep.subr.mxu0 0.0
      %3342 = vmatpush1.msra.mxu0 0.0
      %3343 = vmatprep.subr.mxu0 0.0
      %3344 = vmatpush1.msra.mxu0 0.0
      %3345 = vmatprep.subr.mxu0 0.0
      %3346 = vmatpush1.msra.mxu0 0.0
      %3347 = vmatprep.subr.mxu0 0.0
      %3348 = vmatpush1.msra.mxu0 0.0
      %3349 = vmatprep.subr.mxu0 0.0
      %3350 = vmatpush1.msra.mxu0 0.0
      %3351 = vmatprep.subr.mxu0 0.0
      %3352 = vmatpush1.msra.mxu0 0.0
      %3353 = vmatprep.subr.mxu0 0.0
      %3354 = vmatpush1.msra.mxu0 0.0
      %3355 = vmatprep.subr.mxu0 0.0
      %3356 = vmatpush1.msra.mxu0 0.0
      %3357 = vmatprep.subr.mxu0 0.0
      %3358 = vmatpush1.msra.mxu0 0.0
      %3359 = vmatprep.mubr.f32.mxu0 0.0
      %3360 = vmatmul.mubr.f32.gmra.mrb[0].mxu0 %v3272
      %v3361 = vpop.f32.mrb[0].mxu0
      %v3362 = vadd.f32 0.0, %v3361
      %v3363 = vpop.f32.mrb[0].mxu0
      %3364 = vmatprep.mubr.f32.mxu0 0.0
      %3365 = vmatmul.mubr.f32.gmra.mrb[0].mxu0 %v3275
      %v3366 = vpop.f32.mrb[0].mxu0
      %v3367 = vadd.f32 0.0, %v3366
      %v3368 = vpop.f32.mrb[0].mxu0
      %3369 = vmatprep.mubr.f32.mxu0 0.0
      %3370 = vmatmul.mubr.f32.gmra.mrb[0].mxu0 %v3278
      %v3371 = vpop.f32.mrb[0].mxu0
      %v3372 = vadd.f32 0.0, %v3371
      %v3373 = vpop.f32.mrb[0].mxu0
      %3374 = vmatprep.mubr.f32.mxu0 0.0
      %3375 = vmatmul.mubr.f32.gmra.mrb[0].mxu0 %v3281
      %v3376 = vpop.f32.mrb[0].mxu0
      %v3377 = vadd.f32 0.0, %v3376
      %v3378 = vpop.f32.mrb[0].mxu0
      %3379 = vmatprep.mubr.f32.mxu0 0.0
      %3380 = vmatmul.mubr.f32.gmra.mrb[0].mxu0 %v3284
      %v3381 = vpop.f32.mrb[0].mxu0
      %v3382 = vadd.f32 0.0, %v3381
      %v3383 = vpop.f32.mrb[0].mxu0
      %3384 = vmatprep.mubr.f32.mxu0 0.0
      %3385 = vmatmul.mubr.f32.gmra.mrb[0].mxu0 %v3287
      %v3386 = vpop.f32.mrb[0].mxu0
      %v3387 = vadd.f32 0.0, %v3386
      %v3388 = vpop.f32.mrb[0].mxu0
      %3389 = vmatprep.mubr.f32.mxu0 0.0
      %3390 = vmatmul.mubr.f32.gmra.mrb[0].mxu0 %v3290
      %v3391 = vpop.f32.mrb[0].mxu0
      %v3392 = vadd.f32 0.0, %v3391
      %v3393 = vpop.f32.mrb[0].mxu0
      %3394 = vmatprep.mubr.f32.mxu0 0.0
      %3395 = vmatmul.mubr.f32.gmra.mrb[0].mxu0 %v3293
      %v3396 = vpop.f32.mrb[0].mxu0
      %v3397 = vadd.f32 0.0, %v3396
      %v3398 = vpop.f32.mrb[0].mxu0
      %3399 = vdwg.mxu0
      %v3400 = vadd.f32 %v3239, %v3362
      %v3401 = vadd.f32 %v3240, %v3367
      %v3402 = vadd.f32 %v3241, %v3372
      %v3403 = vadd.f32 %v3242, %v3377
      %v3404 = vadd.f32 %v3243, %v3382
      %v3405 = vadd.f32 %v3244, %v3387
      %v3406 = vadd.f32 %v3245, %v3392
      %v3407 = vadd.f32 %v3246, %v3397
      %3408 = vst.msk [vmem:[%s3190] sm:$0xff] %vm511, %v3400
      %3409 = vst.msk [vmem:[%s3190 + $0x8] sm:$0xff] %vm511, %v3401
      %3410 = vst.msk [vmem:[%s3190 + $0x10] sm:$0xff] %vm511, %v3402
      %3411 = vst.msk [vmem:[%s3190 + $0x18] sm:$0xff] %vm511, %v3403
      %3412 = vst.msk [vmem:[%s3190 + $0x20] sm:$0xff] %vm511, %v3404
      %3413 = vst.msk [vmem:[%s3190 + $0x28] sm:$0xff] %vm511, %v3405
      %3414 = vst.msk [vmem:[%s3190 + $0x30] sm:$0xff] %vm511, %v3406
      %3415 = vst.msk [vmem:[%s3190 + $0x38] sm:$0xff] %vm511, %v3407
      %3416 = vst.msk [vmem:[%s3004] sm:$0xff] %vm842, %v3037
      %3417 = vst.msk [vmem:[%s3004 + $0x8] sm:$0xff] %vm842, %v3038
      %3418 = vst.msk [vmem:[%s3004 + $0x10] sm:$0xff] %vm842, %v3039
      %3419 = vst.msk [vmem:[%s3004 + $0x18] sm:$0xff] %vm842, %v3040
      %3420 = vst.msk [vmem:[%s3004 + $0x20] sm:$0xff] %vm842, %v3041
      %3421 = vst.msk [vmem:[%s3004 + $0x28] sm:$0xff] %vm842, %v3042
      %3422 = vst.msk [vmem:[%s3004 + $0x30] sm:$0xff] %vm842, %v3043
      %3423 = vst.msk [vmem:[%s3004 + $0x38] sm:$0xff] %vm842, %v3044
      %3424 = vrot.lane.b32.xlu0 %v487, 48
      %v3425 = vpop.permute.xlu0 %3424
      %3426 = vrot.lane.b32.xlu0 %v488, 48
      %v3427 = vpop.permute.xlu0 %3426
      %3428 = vrot.lane.b32.xlu0 %v489, 48
      %v3429 = vpop.permute.xlu0 %3428
      %3430 = vrot.lane.b32.xlu0 %v490, 48
      %v3431 = vpop.permute.xlu0 %3430
      %3432 = vrot.lane.b32.xlu0 %v491, 48
      %v3433 = vpop.permute.xlu0 %3432
      %3434 = vrot.lane.b32.xlu0 %v492, 48
      %v3435 = vpop.permute.xlu0 %3434
      %3436 = vrot.lane.b32.xlu0 %v493, 48
      %v3437 = vpop.permute.xlu0 %3436
      %3438 = vrot.lane.b32.xlu0 %v494, 48
      %v3439 = vpop.permute.xlu0 %3438
      %3440 = vrot.lane.b32.xlu0 %v495, 48
      %v3441 = vpop.permute.xlu0 %3440
      %3442 = vrot.lane.b32.xlu0 %v496, 48
      %v3443 = vpop.permute.xlu0 %3442
      %3444 = vrot.lane.b32.xlu0 %v497, 48
      %v3445 = vpop.permute.xlu0 %3444
      %3446 = vrot.lane.b32.xlu0 %v498, 48
      %v3447 = vpop.permute.xlu0 %3446
      %3448 = vrot.lane.b32.xlu0 %v499, 48
      %v3449 = vpop.permute.xlu0 %3448
      %3450 = vrot.lane.b32.xlu0 %v500, 48
      %v3451 = vpop.permute.xlu0 %3450
      %3452 = vrot.lane.b32.xlu0 %v501, 48
      %v3453 = vpop.permute.xlu0 %3452
      %3454 = vrot.lane.b32.xlu0 %v502, 48
      %v3455 = vpop.permute.xlu0 %3454
      %v3456 = vsel %vm511, %v3425, 0
      %v3458 = vsel %vm511, %v3427, 0
      %v3460 = vsel %vm511, %v3429, 0
      %v3462 = vsel %vm511, %v3431, 0
      %v3464 = vsel %vm511, %v3433, 0
      %v3466 = vsel %vm511, %v3435, 0
      %v3468 = vsel %vm511, %v3437, 0
      %v3470 = vsel %vm511, %v3439, 0
      %v3472 = vsel %vm511, %v3441, 0
      %v3474 = vsel %vm511, %v3443, 0
      %v3476 = vsel %vm511, %v3445, 0
      %v3478 = vsel %vm511, %v3447, 0
      %v3480 = vsel %vm511, %v3449, 0
      %v3482 = vsel %vm511, %v3451, 0
      %v3484 = vsel %vm511, %v3453, 0
      %v3486 = vsel %vm511, %v3455, 0
      %3488 = vmatprep.subr.mxu0 0.0
      %3489 = vmatpush1.xpose.msra.mxu0 %v3472
      %3490 = vmatprep.subr.mxu0 0.0
      %3491 = vmatpush1.xpose.msra.mxu0 %v3474
      %3492 = vmatprep.subr.mxu0 0.0
      %3493 = vmatpush1.xpose.msra.mxu0 %v3476
      %3494 = vmatprep.subr.mxu0 0.0
      %3495 = vmatpush1.xpose.msra.mxu0 %v3478
      %3496 = vmatprep.subr.mxu0 0.0
      %3497 = vmatpush1.xpose.msra.mxu0 %v3480
      %3498 = vmatprep.subr.mxu0 0.0
      %3499 = vmatpush1.xpose.msra.mxu0 %v3482
      %3500 = vmatprep.subr.mxu0 0.0
      %3501 = vmatpush1.xpose.msra.mxu0 %v3484
      %3502 = vmatprep.subr.mxu0 0.0
      %3503 = vmatpush1.xpose.msra.mxu0 %v3486
      %3504 = vmatprep.subr.mxu0 0.0
      %3505 = vmatpush1.xpose.msra.mxu0 0.0
      %3506 = vmatprep.subr.mxu0 0.0
      %3507 = vmatpush1.xpose.msra.mxu0 0.0
      %3508 = vmatprep.subr.mxu0 0.0
      %3509 = vmatpush1.xpose.msra.mxu0 0.0
      %3510 = vmatprep.subr.mxu0 0.0
      %3511 = vmatpush1.xpose.msra.mxu0 0.0
      %3512 = vmatprep.subr.mxu0 0.0
      %3513 = vmatpush1.xpose.msra.mxu0 0.0
      %3514 = vmatprep.subr.mxu0 0.0
      %3515 = vmatpush1.xpose.msra.mxu0 0.0
      %3516 = vmatprep.subr.mxu0 0.0
      %3517 = vmatpush1.xpose.msra.mxu0 0.0
      %3518 = vmatprep.subr.mxu0 0.0
      %3519 = vmatpush1.xpose.msra.mxu0 0.0
      %3520 = vmatprep.subr.mxu0 0.0
      %3521 = vmatpush1.xpose.msra.mxu0 0.0
      %3522 = vmatprep.subr.mxu0 0.0
      %3523 = vmatpush1.xpose.msra.mxu0 0.0
      %3524 = vmatprep.subr.mxu0 0.0
      %3525 = vmatpush1.xpose.msra.mxu0 0.0
      %3526 = vmatprep.subr.mxu0 0.0
      %3527 = vmatpush1.xpose.msra.mxu0 0.0
      %3528 = vmatprep.subr.mxu0 0.0
      %3529 = vmatpush1.xpose.msra.mxu0 0.0
      %3530 = vmatprep.subr.mxu0 0.0
      %3531 = vmatpush1.xpose.msra.mxu0 0.0
      %3532 = vmatprep.subr.mxu0 0.0
      %3533 = vmatpush1.xpose.msra.mxu0 0.0
      %3534 = vmatprep.subr.mxu0 0.0
      %3535 = vmatpush1.xpose.msra.mxu0 0.0
      %3536 = vmatprep.subr.mxu0 0.0
      %3537 = vmatpush1.xpose.msra.mxu0 0.0
      %3538 = vmatprep.subr.mxu0 0.0
      %3539 = vmatpush1.xpose.msra.mxu0 0.0
      %3540 = vmatprep.subr.mxu0 0.0
      %3541 = vmatpush1.xpose.msra.mxu0 0.0
      %3542 = vmatprep.subr.mxu0 0.0
      %3543 = vmatpush1.xpose.msra.mxu0 0.0
      %3544 = vmatprep.subr.mxu0 0.0
      %3545 = vmatpush1.xpose.msra.mxu0 0.0
      %3546 = vmatprep.subr.mxu0 0.0
      %3547 = vmatpush1.xpose.msra.mxu0 0.0
      %3548 = vmatprep.subr.mxu0 0.0
      %3549 = vmatpush1.xpose.msra.mxu0 0.0
      %3550 = vmatprep.subr.mxu0 0.0
      %3551 = vmatpush1.xpose.msra.mxu0 0.0
      %3552 = vmatprep.mubr.f32.mxu0 0.0
      %3553 = vmatmul.mubr.f32.gmra.mrb[0].mxu0 %v3456
      %v3554 = vpop.f32.mrb[0].mxu0
      %v3555 = vadd.f32 0.0, %v3554
      %v3556 = vpop.f32.mrb[0].mxu0
      %3557 = vmatprep.mubr.f32.mxu0 0.0
      %3558 = vmatmul.mubr.f32.gmra.mrb[0].mxu0 %v3458
      %v3559 = vpop.f32.mrb[0].mxu0
      %v3560 = vadd.f32 0.0, %v3559
      %v3561 = vpop.f32.mrb[0].mxu0
      %3562 = vmatprep.mubr.f32.mxu0 0.0
      %3563 = vmatmul.mubr.f32.gmra.mrb[0].mxu0 %v3460
      %v3564 = vpop.f32.mrb[0].mxu0
      %v3565 = vadd.f32 0.0, %v3564
      %v3566 = vpop.f32.mrb[0].mxu0
      %3567 = vmatprep.mubr.f32.mxu0 0.0
      %3568 = vmatmul.mubr.f32.gmra.mrb[0].mxu0 %v3462
      %v3569 = vpop.f32.mrb[0].mxu0
      %v3570 = vadd.f32 0.0, %v3569
      %v3571 = vpop.f32.mrb[0].mxu0
      %3572 = vmatprep.mubr.f32.mxu0 0.0
      %3573 = vmatmul.mubr.f32.gmra.mrb[0].mxu0 %v3464
      %v3574 = vpop.f32.mrb[0].mxu0
      %v3575 = vadd.f32 0.0, %v3574
      %v3576 = vpop.f32.mrb[0].mxu0
      %3577 = vmatprep.mubr.f32.mxu0 0.0
      %3578 = vmatmul.mubr.f32.gmra.mrb[0].mxu0 %v3466
      %v3579 = vpop.f32.mrb[0].mxu0
      %v3580 = vadd.f32 0.0, %v3579
      %v3581 = vpop.f32.mrb[0].mxu0
      %3582 = vmatprep.mubr.f32.mxu0 0.0
      %3583 = vmatmul.mubr.f32.gmra.mrb[0].mxu0 %v3468
      %v3584 = vpop.f32.mrb[0].mxu0
      %v3585 = vadd.f32 0.0, %v3584
      %v3586 = vpop.f32.mrb[0].mxu0
      %3587 = vmatprep.mubr.f32.mxu0 0.0
      %3588 = vmatmul.mubr.f32.gmra.mrb[0].mxu0 %v3470
      %v3589 = vpop.f32.mrb[0].mxu0
      %v3590 = vadd.f32 0.0, %v3589
      %v3591 = vpop.f32.mrb[0].mxu0
      %3592 = vdwg.mxu0
      %s3593 = scalar_lea.vmem [#allocation2], 320
      %v3594 = vld [vmem:[%s3593] sm:$0xff]
      %v3595 = vld [vmem:[%s3593 + $0x8] sm:$0xff]
      %v3596 = vld [vmem:[%s3593 + $0x10] sm:$0xff]
      %v3597 = vld [vmem:[%s3593 + $0x18] sm:$0xff]
      %v3598 = vld [vmem:[%s3593 + $0x20] sm:$0xff]
      %v3599 = vld [vmem:[%s3593 + $0x28] sm:$0xff]
      %v3600 = vld [vmem:[%s3593 + $0x30] sm:$0xff]
      %v3601 = vld [vmem:[%s3593 + $0x38] sm:$0xff]
      %v3602 = vsel %vm673, %v3555, -inf
      %3603 = vmax.xlane.f32.xlu0 %v3602
      %v3604 = vpop.xlane.xlu0 %3603
      %v3605 = vsel %vm673, %v3560, -inf
      %3606 = vmax.xlane.f32.xlu0 %v3605
      %v3607 = vpop.xlane.xlu0 %3606
      %v3608 = vsel %vm673, %v3565, -inf
      %3609 = vmax.xlane.f32.xlu0 %v3608
      %v3610 = vpop.xlane.xlu0 %3609
      %v3611 = vsel %vm673, %v3570, -inf
      %3612 = vmax.xlane.f32.xlu0 %v3611
      %v3613 = vpop.xlane.xlu0 %3612
      %v3614 = vsel %vm673, %v3575, -inf
      %3615 = vmax.xlane.f32.xlu0 %v3614
      %v3616 = vpop.xlane.xlu0 %3615
      %v3617 = vsel %vm673, %v3580, -inf
      %3618 = vmax.xlane.f32.xlu0 %v3617
      %v3619 = vpop.xlane.xlu0 %3618
      %v3620 = vsel %vm673, %v3585, -inf
      %3621 = vmax.xlane.f32.xlu0 %v3620
      %v3622 = vpop.xlane.xlu0 %3621
      %v3623 = vsel %vm673, %v3590, -inf
      %3624 = vmax.xlane.f32.xlu0 %v3623
      %v3625 = vpop.xlane.xlu0 %3624
      %v3626 = vmax.f32 %v3594, %v3604
      %v3627 = vmax.f32 %v3595, %v3607
      %v3628 = vmax.f32 %v3596, %v3610
      %v3629 = vmax.f32 %v3597, %v3613
      %v3630 = vmax.f32 %v3598, %v3616
      %v3631 = vmax.f32 %v3599, %v3619
      %v3632 = vmax.f32 %v3600, %v3622
      %v3633 = vmax.f32 %v3601, %v3625
      %v3634 = vsub.f32 %v3594, %v3626
      %v3635 = vsub.f32 %v3595, %v3627
      %v3636 = vsub.f32 %v3596, %v3628
      %v3637 = vsub.f32 %v3597, %v3629
      %v3638 = vsub.f32 %v3598, %v3630
      %v3639 = vsub.f32 %v3599, %v3631
      %v3640 = vsub.f32 %v3600, %v3632
      %v3641 = vsub.f32 %v3601, %v3633
      %v3642 = vmul.f32 %v3634, 1.442695
      %v3643 = vpow.pop %v3642
      %v3644 = vmul.f32 %v3635, 1.442695
      %v3645 = vpow.pop %v3644
      %v3646 = vmul.f32 %v3636, 1.442695
      %v3647 = vpow.pop %v3646
      %v3648 = vmul.f32 %v3637, 1.442695
      %v3649 = vpow.pop %v3648
      %v3650 = vmul.f32 %v3638, 1.442695
      %v3651 = vpow.pop %v3650
      %v3652 = vmul.f32 %v3639, 1.442695
      %v3653 = vpow.pop %v3652
      %v3654 = vmul.f32 %v3640, 1.442695
      %v3655 = vpow.pop %v3654
      %v3656 = vmul.f32 %v3641, 1.442695
      %v3657 = vpow.pop %v3656
      %3659 = vset.pattern.permute.xlu0 0
      %3660 = vperm.xlu0 %3659, %v3626
      %v3661 = vpop.permute.xlu0 %3660
      %3664 = vset.pattern.permute.xlu0 0
      %3665 = vperm.xlu0 %3664, %v3627
      %v3666 = vpop.permute.xlu0 %3665
      %3669 = vset.pattern.permute.xlu0 0
      %3670 = vperm.xlu0 %3669, %v3628
      %v3671 = vpop.permute.xlu0 %3670
      %3674 = vset.pattern.permute.xlu0 0
      %3675 = vperm.xlu0 %3674, %v3629
      %v3676 = vpop.permute.xlu0 %3675
      %3679 = vset.pattern.permute.xlu0 0
      %3680 = vperm.xlu0 %3679, %v3630
      %v3681 = vpop.permute.xlu0 %3680
      %3684 = vset.pattern.permute.xlu0 0
      %3685 = vperm.xlu0 %3684, %v3631
      %v3686 = vpop.permute.xlu0 %3685
      %3689 = vset.pattern.permute.xlu0 0
      %3690 = vperm.xlu0 %3689, %v3632
      %v3691 = vpop.permute.xlu0 %3690
      %3694 = vset.pattern.permute.xlu0 0
      %3695 = vperm.xlu0 %3694, %v3633
      %v3696 = vpop.permute.xlu0 %3695
      %v3698 = vsub.f32 %v3555, %v3661
      %v3699 = vsub.f32 %v3560, %v3666
      %v3700 = vsub.f32 %v3565, %v3671
      %v3701 = vsub.f32 %v3570, %v3676
      %v3702 = vsub.f32 %v3575, %v3681
      %v3703 = vsub.f32 %v3580, %v3686
      %v3704 = vsub.f32 %v3585, %v3691
      %v3705 = vsub.f32 %v3590, %v3696
      %v3706 = vmul.f32 %v3698, 1.442695
      %v3707 = vpow.pop %v3706
      %v3708 = vmul.f32 %v3699, 1.442695
      %v3709 = vpow.pop %v3708
      %v3710 = vmul.f32 %v3700, 1.442695
      %v3711 = vpow.pop %v3710
      %v3712 = vmul.f32 %v3701, 1.442695
      %v3713 = vpow.pop %v3712
      %v3714 = vmul.f32 %v3702, 1.442695
      %v3715 = vpow.pop %v3714
      %v3716 = vmul.f32 %v3703, 1.442695
      %v3717 = vpow.pop %v3716
      %v3718 = vmul.f32 %v3704, 1.442695
      %v3719 = vpow.pop %v3718
      %v3720 = vmul.f32 %v3705, 1.442695
      %v3721 = vpow.pop %v3720
      %s3722 = scalar_lea.vmem [#allocation3], 320
      %v3723 = vld [vmem:[%s3722] sm:$0xff]
      %v3724 = vld [vmem:[%s3722 + $0x8] sm:$0xff]
      %v3725 = vld [vmem:[%s3722 + $0x10] sm:$0xff]
      %v3726 = vld [vmem:[%s3722 + $0x18] sm:$0xff]
      %v3727 = vld [vmem:[%s3722 + $0x20] sm:$0xff]
      %v3728 = vld [vmem:[%s3722 + $0x28] sm:$0xff]
      %v3729 = vld [vmem:[%s3722 + $0x30] sm:$0xff]
      %v3730 = vld [vmem:[%s3722 + $0x38] sm:$0xff]
      %v3731 = vmul.f32 %v3643, %v3723
      %v3732 = vmul.f32 %v3645, %v3724
      %v3733 = vmul.f32 %v3647, %v3725
      %v3734 = vmul.f32 %v3649, %v3726
      %v3735 = vmul.f32 %v3651, %v3727
      %v3736 = vmul.f32 %v3653, %v3728
      %v3737 = vmul.f32 %v3655, %v3729
      %v3738 = vmul.f32 %v3657, %v3730
      %v3739 = vsel %vm673, %v3707, 0.0
      %3740 = vadd.xlane.f32.xlu0 %v3739
      %v3741 = vpop.xlane.xlu0 %3740
      %v3742 = vsel %vm673, %v3709, 0.0
      %3743 = vadd.xlane.f32.xlu0 %v3742
      %v3744 = vpop.xlane.xlu0 %3743
      %v3745 = vsel %vm673, %v3711, 0.0
      %3746 = vadd.xlane.f32.xlu0 %v3745
      %v3747 = vpop.xlane.xlu0 %3746
      %v3748 = vsel %vm673, %v3713, 0.0
      %3749 = vadd.xlane.f32.xlu0 %v3748
      %v3750 = vpop.xlane.xlu0 %3749
      %v3751 = vsel %vm673, %v3715, 0.0
      %3752 = vadd.xlane.f32.xlu0 %v3751
      %v3753 = vpop.xlane.xlu0 %3752
      %v3754 = vsel %vm673, %v3717, 0.0
      %3755 = vadd.xlane.f32.xlu0 %v3754
      %v3756 = vpop.xlane.xlu0 %3755
      %v3757 = vsel %vm673, %v3719, 0.0
      %3758 = vadd.xlane.f32.xlu0 %v3757
      %v3759 = vpop.xlane.xlu0 %3758
      %v3760 = vsel %vm673, %v3721, 0.0
      %3761 = vadd.xlane.f32.xlu0 %v3760
      %v3762 = vpop.xlane.xlu0 %3761
      %v3763 = vadd.f32 %v3731, %v3741
      %v3764 = vadd.f32 %v3732, %v3744
      %v3765 = vadd.f32 %v3733, %v3747
      %v3766 = vadd.f32 %v3734, %v3750
      %v3767 = vadd.f32 %v3735, %v3753
      %v3768 = vadd.f32 %v3736, %v3756
      %v3769 = vadd.f32 %v3737, %v3759
      %v3770 = vadd.f32 %v3738, %v3762
      %3771 = vst.msk [vmem:[%s3722] sm:$0xff] %vm842, %v3763
      %3772 = vst.msk [vmem:[%s3722 + $0x8] sm:$0xff] %vm842, %v3764
      %3773 = vst.msk [vmem:[%s3722 + $0x10] sm:$0xff] %vm842, %v3765
      %3774 = vst.msk [vmem:[%s3722 + $0x18] sm:$0xff] %vm842, %v3766
      %3775 = vst.msk [vmem:[%s3722 + $0x20] sm:$0xff] %vm842, %v3767
      %3776 = vst.msk [vmem:[%s3722 + $0x28] sm:$0xff] %vm842, %v3768
      %3777 = vst.msk [vmem:[%s3722 + $0x30] sm:$0xff] %vm842, %v3769
      %3778 = vst.msk [vmem:[%s3722 + $0x38] sm:$0xff] %vm842, %v3770
      %s3779 = scalar_lea.vmem [#allocation4], 320
      %v3780 = vld [vmem:[%s3779] sm:$0xff]
      %v3781 = vld [vmem:[%s3779 + $0x8] sm:$0xff]
      %v3782 = vld [vmem:[%s3779 + $0x10] sm:$0xff]
      %v3783 = vld [vmem:[%s3779 + $0x18] sm:$0xff]
      %v3784 = vld [vmem:[%s3779 + $0x20] sm:$0xff]
      %v3785 = vld [vmem:[%s3779 + $0x28] sm:$0xff]
      %v3786 = vld [vmem:[%s3779 + $0x30] sm:$0xff]
      %v3787 = vld [vmem:[%s3779 + $0x38] sm:$0xff]
      %3789 = vset.pattern.permute.xlu0 0
      %3790 = vperm.xlu0 %3789, %v3643
      %v3791 = vpop.permute.xlu0 %3790
      %3794 = vset.pattern.permute.xlu0 0
      %3795 = vperm.xlu0 %3794, %v3645
      %v3796 = vpop.permute.xlu0 %3795
      %3799 = vset.pattern.permute.xlu0 0
      %3800 = vperm.xlu0 %3799, %v3647
      %v3801 = vpop.permute.xlu0 %3800
      %3804 = vset.pattern.permute.xlu0 0
      %3805 = vperm.xlu0 %3804, %v3649
      %v3806 = vpop.permute.xlu0 %3805
      %3809 = vset.pattern.permute.xlu0 0
      %3810 = vperm.xlu0 %3809, %v3651
      %v3811 = vpop.permute.xlu0 %3810
      %3814 = vset.pattern.permute.xlu0 0
      %3815 = vperm.xlu0 %3814, %v3653
      %v3816 = vpop.permute.xlu0 %3815
      %3819 = vset.pattern.permute.xlu0 0
      %3820 = vperm.xlu0 %3819, %v3655
      %v3821 = vpop.permute.xlu0 %3820
      %3824 = vset.pattern.permute.xlu0 0
      %3825 = vperm.xlu0 %3824, %v3657
      %v3826 = vpop.permute.xlu0 %3825
      %v3828 = vmul.f32 %v3791, %v3780
      %v3829 = vmul.f32 %v3796, %v3781
      %v3830 = vmul.f32 %v3801, %v3782
      %v3831 = vmul.f32 %v3806, %v3783
      %v3832 = vmul.f32 %v3811, %v3784
      %v3833 = vmul.f32 %v3816, %v3785
      %v3834 = vmul.f32 %v3821, %v3786
      %v3835 = vmul.f32 %v3826, %v3787
      %3836 = vrot.lane.b32.xlu0 %v503, 48
      %v3837 = vpop.permute.xlu0 %3836
      %3838 = vrot.lane.b32.xlu0 %v504, 48
      %v3839 = vpop.permute.xlu0 %3838
      %3840 = vrot.lane.b32.xlu0 %v505, 48
      %v3841 = vpop.permute.xlu0 %3840
      %3842 = vrot.lane.b32.xlu0 %v506, 48
      %v3843 = vpop.permute.xlu0 %3842
      %3844 = vrot.lane.b32.xlu0 %v507, 48
      %v3845 = vpop.permute.xlu0 %3844
      %3846 = vrot.lane.b32.xlu0 %v508, 48
      %v3847 = vpop.permute.xlu0 %3846
      %3848 = vrot.lane.b32.xlu0 %v509, 48
      %v3849 = vpop.permute.xlu0 %3848
      %3850 = vrot.lane.b32.xlu0 %v510, 48
      %v3851 = vpop.permute.xlu0 %3850
      %v3861 = vsel %vm673, %v3707, 0
      %v3864 = vsel %vm673, %v3709, 0
      %v3867 = vsel %vm673, %v3711, 0
      %v3870 = vsel %vm673, %v3713, 0
      %v3873 = vsel %vm673, %v3715, 0
      %v3876 = vsel %vm673, %v3717, 0
      %v3879 = vsel %vm673, %v3719, 0
      %v3882 = vsel %vm673, %v3721, 0
      %3884 = vmatprep.subr.mxu0 0.0
      %3885 = vmatpush1.msra.mxu0 %v3837
      %3886 = vmatprep.subr.mxu0 0.0
      %3887 = vmatpush1.msra.mxu0 %v3839
      %3888 = vmatprep.subr.mxu0 0.0
      %3889 = vmatpush1.msra.mxu0 %v3841
      %3890 = vmatprep.subr.mxu0 0.0
      %3891 = vmatpush1.msra.mxu0 %v3843
      %3892 = vmatprep.subr.mxu0 0.0
      %3893 = vmatpush1.msra.mxu0 %v3845
      %3894 = vmatprep.subr.mxu0 0.0
      %3895 = vmatpush1.msra.mxu0 %v3847
      %3896 = vmatprep.subr.mxu0 0.0
      %3897 = vmatpush1.msra.mxu0 %v3849
      %3898 = vmatprep.subr.mxu0 0.0
      %3899 = vmatpush1.msra.mxu0 %v3851
      %3900 = vmatprep.subr.mxu0 0.0
      %3901 = vmatpush1.msra.mxu0 0.0
      %3902 = vmatprep.subr.mxu0 0.0
      %3903 = vmatpush1.msra.mxu0 0.0
      %3904 = vmatprep.subr.mxu0 0.0
      %3905 = vmatpush1.msra.mxu0 0.0
      %3906 = vmatprep.subr.mxu0 0.0
      %3907 = vmatpush1.msra.mxu0 0.0
      %3908 = vmatprep.subr.mxu0 0.0
      %3909 = vmatpush1.msra.mxu0 0.0
      %3910 = vmatprep.subr.mxu0 0.0
      %3911 = vmatpush1.msra.mxu0 0.0
      %3912 = vmatprep.subr.mxu0 0.0
      %3913 = vmatpush1.msra.mxu0 0.0
      %3914 = vmatprep.subr.mxu0 0.0
      %3915 = vmatpush1.msra.mxu0 0.0
      %3916 = vmatprep.subr.mxu0 0.0
      %3917 = vmatpush1.msra.mxu0 0.0
      %3918 = vmatprep.subr.mxu0 0.0
      %3919 = vmatpush1.msra.mxu0 0.0
      %3920 = vmatprep.subr.mxu0 0.0
      %3921 = vmatpush1.msra.mxu0 0.0
      %3922 = vmatprep.subr.mxu0 0.0
      %3923 = vmatpush1.msra.mxu0 0.0
      %3924 = vmatprep.subr.mxu0 0.0
      %3925 = vmatpush1.msra.mxu0 0.0
      %3926 = vmatprep.subr.mxu0 0.0
      %3927 = vmatpush1.msra.mxu0 0.0
      %3928 = vmatprep.subr.mxu0 0.0
      %3929 = vmatpush1.msra.mxu0 0.0
      %3930 = vmatprep.subr.mxu0 0.0
      %3931 = vmatpush1.msra.mxu0 0.0
      %3932 = vmatprep.subr.mxu0 0.0
      %3933 = vmatpush1.msra.mxu0 0.0
      %3934 = vmatprep.subr.mxu0 0.0
      %3935 = vmatpush1.msra.mxu0 0.0
      %3936 = vmatprep.subr.mxu0 0.0
      %3937 = vmatpush1.msra.mxu0 0.0
      %3938 = vmatprep.subr.mxu0 0.0
      %3939 = vmatpush1.msra.mxu0 0.0
      %3940 = vmatprep.subr.mxu0 0.0
      %3941 = vmatpush1.msra.mxu0 0.0
      %3942 = vmatprep.subr.mxu0 0.0
      %3943 = vmatpush1.msra.mxu0 0.0
      %3944 = vmatprep.subr.mxu0 0.0
      %3945 = vmatpush1.msra.mxu0 0.0
      %3946 = vmatprep.subr.mxu0 0.0
      %3947 = vmatpush1.msra.mxu0 0.0
      %3948 = vmatprep.mubr.f32.mxu0 0.0
      %3949 = vmatmul.mubr.f32.gmra.mrb[0].mxu0 %v3861
      %v3950 = vpop.f32.mrb[0].mxu0
      %v3951 = vadd.f32 0.0, %v3950
      %v3952 = vpop.f32.mrb[0].mxu0
      %3953 = vmatprep.mubr.f32.mxu0 0.0
      %3954 = vmatmul.mubr.f32.gmra.mrb[0].mxu0 %v3864
      %v3955 = vpop.f32.mrb[0].mxu0
      %v3956 = vadd.f32 0.0, %v3955
      %v3957 = vpop.f32.mrb[0].mxu0
      %3958 = vmatprep.mubr.f32.mxu0 0.0
      %3959 = vmatmul.mubr.f32.gmra.mrb[0].mxu0 %v3867
      %v3960 = vpop.f32.mrb[0].mxu0
      %v3961 = vadd.f32 0.0, %v3960
      %v3962 = vpop.f32.mrb[0].mxu0
      %3963 = vmatprep.mubr.f32.mxu0 0.0
      %3964 = vmatmul.mubr.f32.gmra.mrb[0].mxu0 %v3870
      %v3965 = vpop.f32.mrb[0].mxu0
      %v3966 = vadd.f32 0.0, %v3965
      %v3967 = vpop.f32.mrb[0].mxu0
      %3968 = vmatprep.mubr.f32.mxu0 0.0
      %3969 = vmatmul.mubr.f32.gmra.mrb[0].mxu0 %v3873
      %v3970 = vpop.f32.mrb[0].mxu0
      %v3971 = vadd.f32 0.0, %v3970
      %v3972 = vpop.f32.mrb[0].mxu0
      %3973 = vmatprep.mubr.f32.mxu0 0.0
      %3974 = vmatmul.mubr.f32.gmra.mrb[0].mxu0 %v3876
      %v3975 = vpop.f32.mrb[0].mxu0
      %v3976 = vadd.f32 0.0, %v3975
      %v3977 = vpop.f32.mrb[0].mxu0
      %3978 = vmatprep.mubr.f32.mxu0 0.0
      %3979 = vmatmul.mubr.f32.gmra.mrb[0].mxu0 %v3879
      %v3980 = vpop.f32.mrb[0].mxu0
      %v3981 = vadd.f32 0.0, %v3980
      %v3982 = vpop.f32.mrb[0].mxu0
      %3983 = vmatprep.mubr.f32.mxu0 0.0
      %3984 = vmatmul.mubr.f32.gmra.mrb[0].mxu0 %v3882
      %v3985 = vpop.f32.mrb[0].mxu0
      %v3986 = vadd.f32 0.0, %v3985
      %v3987 = vpop.f32.mrb[0].mxu0
      %3988 = vdwg.mxu0
      %v3989 = vadd.f32 %v3828, %v3951
      %v3990 = vadd.f32 %v3829, %v3956
      %v3991 = vadd.f32 %v3830, %v3961
      %v3992 = vadd.f32 %v3831, %v3966
      %v3993 = vadd.f32 %v3832, %v3971
      %v3994 = vadd.f32 %v3833, %v3976
      %v3995 = vadd.f32 %v3834, %v3981
      %v3996 = vadd.f32 %v3835, %v3986
      %3997 = vst.msk [vmem:[%s3779] sm:$0xff] %vm511, %v3989
      %3998 = vst.msk [vmem:[%s3779 + $0x8] sm:$0xff] %vm511, %v3990
      %3999 = vst.msk [vmem:[%s3779 + $0x10] sm:$0xff] %vm511, %v3991
      %4000 = vst.msk [vmem:[%s3779 + $0x18] sm:$0xff] %vm511, %v3992
      %4001 = vst.msk [vmem:[%s3779 + $0x20] sm:$0xff] %vm511, %v3993
      %4002 = vst.msk [vmem:[%s3779 + $0x28] sm:$0xff] %vm511, %v3994
      %4003 = vst.msk [vmem:[%s3779 + $0x30] sm:$0xff] %vm511, %v3995
      %4004 = vst.msk [vmem:[%s3779 + $0x38] sm:$0xff] %vm511, %v3996
      %4005 = vst.msk [vmem:[%s3593] sm:$0xff] %vm842, %v3626
      %4006 = vst.msk [vmem:[%s3593 + $0x8] sm:$0xff] %vm842, %v3627
      %4007 = vst.msk [vmem:[%s3593 + $0x10] sm:$0xff] %vm842, %v3628
      %4008 = vst.msk [vmem:[%s3593 + $0x18] sm:$0xff] %vm842, %v3629
      %4009 = vst.msk [vmem:[%s3593 + $0x20] sm:$0xff] %vm842, %v3630
      %4010 = vst.msk [vmem:[%s3593 + $0x28] sm:$0xff] %vm842, %v3631
      %4011 = vst.msk [vmem:[%s3593 + $0x30] sm:$0xff] %vm842, %v3632
      %4012 = vst.msk [vmem:[%s3593 + $0x38] sm:$0xff] %vm842, %v3633
      %4013 = vrot.lane.b32.xlu0 %v487, 32
      %v4014 = vpop.permute.xlu0 %4013
      %4015 = vrot.lane.b32.xlu0 %v488, 32
      %v4016 = vpop.permute.xlu0 %4015
      %4017 = vrot.lane.b32.xlu0 %v489, 32
      %v4018 = vpop.permute.xlu0 %4017
      %4019 = vrot.lane.b32.xlu0 %v490, 32
      %v4020 = vpop.permute.xlu0 %4019
      %4021 = vrot.lane.b32.xlu0 %v491, 32
      %v4022 = vpop.permute.xlu0 %4021
      %4023 = vrot.lane.b32.xlu0 %v492, 32
      %v4024 = vpop.permute.xlu0 %4023
      %4025 = vrot.lane.b32.xlu0 %v493, 32
      %v4026 = vpop.permute.xlu0 %4025
      %4027 = vrot.lane.b32.xlu0 %v494, 32
      %v4028 = vpop.permute.xlu0 %4027
      %4029 = vrot.lane.b32.xlu0 %v495, 32
      %v4030 = vpop.permute.xlu0 %4029
      %4031 = vrot.lane.b32.xlu0 %v496, 32
      %v4032 = vpop.permute.xlu0 %4031
      %4033 = vrot.lane.b32.xlu0 %v497, 32
      %v4034 = vpop.permute.xlu0 %4033
      %4035 = vrot.lane.b32.xlu0 %v498, 32
      %v4036 = vpop.permute.xlu0 %4035
      %4037 = vrot.lane.b32.xlu0 %v499, 32
      %v4038 = vpop.permute.xlu0 %4037
      %4039 = vrot.lane.b32.xlu0 %v500, 32
      %v4040 = vpop.permute.xlu0 %4039
      %4041 = vrot.lane.b32.xlu0 %v501, 32
      %v4042 = vpop.permute.xlu0 %4041
      %4043 = vrot.lane.b32.xlu0 %v502, 32
      %v4044 = vpop.permute.xlu0 %4043
      %v4045 = vsel %vm511, %v4014, 0
      %v4047 = vsel %vm511, %v4016, 0
      %v4049 = vsel %vm511, %v4018, 0
      %v4051 = vsel %vm511, %v4020, 0
      %v4053 = vsel %vm511, %v4022, 0
      %v4055 = vsel %vm511, %v4024, 0
      %v4057 = vsel %vm511, %v4026, 0
      %v4059 = vsel %vm511, %v4028, 0
      %v4061 = vsel %vm511, %v4030, 0
      %v4063 = vsel %vm511, %v4032, 0
      %v4065 = vsel %vm511, %v4034, 0
      %v4067 = vsel %vm511, %v4036, 0
      %v4069 = vsel %vm511, %v4038, 0
      %v4071 = vsel %vm511, %v4040, 0
      %v4073 = vsel %vm511, %v4042, 0
      %v4075 = vsel %vm511, %v4044, 0
      %4077 = vmatprep.subr.mxu0 0.0
      %4078 = vmatpush1.xpose.msra.mxu0 %v4061
      %4079 = vmatprep.subr.mxu0 0.0
      %4080 = vmatpush1.xpose.msra.mxu0 %v4063
      %4081 = vmatprep.subr.mxu0 0.0
      %4082 = vmatpush1.xpose.msra.mxu0 %v4065
      %4083 = vmatprep.subr.mxu0 0.0
      %4084 = vmatpush1.xpose.msra.mxu0 %v4067
      %4085 = vmatprep.subr.mxu0 0.0
      %4086 = vmatpush1.xpose.msra.mxu0 %v4069
      %4087 = vmatprep.subr.mxu0 0.0
      %4088 = vmatpush1.xpose.msra.mxu0 %v4071
      %4089 = vmatprep.subr.mxu0 0.0
      %4090 = vmatpush1.xpose.msra.mxu0 %v4073
      %4091 = vmatprep.subr.mxu0 0.0
      %4092 = vmatpush1.xpose.msra.mxu0 %v4075
      %4093 = vmatprep.subr.mxu0 0.0
      %4094 = vmatpush1.xpose.msra.mxu0 0.0
      %4095 = vmatprep.subr.mxu0 0.0
      %4096 = vmatpush1.xpose.msra.mxu0 0.0
      %4097 = vmatprep.subr.mxu0 0.0
      %4098 = vmatpush1.xpose.msra.mxu0 0.0
      %4099 = vmatprep.subr.mxu0 0.0
      %4100 = vmatpush1.xpose.msra.mxu0 0.0
      %4101 = vmatprep.subr.mxu0 0.0
      %4102 = vmatpush1.xpose.msra.mxu0 0.0
      %4103 = vmatprep.subr.mxu0 0.0
      %4104 = vmatpush1.xpose.msra.mxu0 0.0
      %4105 = vmatprep.subr.mxu0 0.0
      %4106 = vmatpush1.xpose.msra.mxu0 0.0
      %4107 = vmatprep.subr.mxu0 0.0
      %4108 = vmatpush1.xpose.msra.mxu0 0.0
      %4109 = vmatprep.subr.mxu0 0.0
      %4110 = vmatpush1.xpose.msra.mxu0 0.0
      %4111 = vmatprep.subr.mxu0 0.0
      %4112 = vmatpush1.xpose.msra.mxu0 0.0
      %4113 = vmatprep.subr.mxu0 0.0
      %4114 = vmatpush1.xpose.msra.mxu0 0.0
      %4115 = vmatprep.subr.mxu0 0.0
      %4116 = vmatpush1.xpose.msra.mxu0 0.0
      %4117 = vmatprep.subr.mxu0 0.0
      %4118 = vmatpush1.xpose.msra.mxu0 0.0
      %4119 = vmatprep.subr.mxu0 0.0
      %4120 = vmatpush1.xpose.msra.mxu0 0.0
      %4121 = vmatprep.subr.mxu0 0.0
      %4122 = vmatpush1.xpose.msra.mxu0 0.0
      %4123 = vmatprep.subr.mxu0 0.0
      %4124 = vmatpush1.xpose.msra.mxu0 0.0
      %4125 = vmatprep.subr.mxu0 0.0
      %4126 = vmatpush1.xpose.msra.mxu0 0.0
      %4127 = vmatprep.subr.mxu0 0.0
      %4128 = vmatpush1.xpose.msra.mxu0 0.0
      %4129 = vmatprep.subr.mxu0 0.0
      %4130 = vmatpush1.xpose.msra.mxu0 0.0
      %4131 = vmatprep.subr.mxu0 0.0
      %4132 = vmatpush1.xpose.msra.mxu0 0.0
      %4133 = vmatprep.subr.mxu0 0.0
      %4134 = vmatpush1.xpose.msra.mxu0 0.0
      %4135 = vmatprep.subr.mxu0 0.0
      %4136 = vmatpush1.xpose.msra.mxu0 0.0
      %4137 = vmatprep.subr.mxu0 0.0
      %4138 = vmatpush1.xpose.msra.mxu0 0.0
      %4139 = vmatprep.subr.mxu0 0.0
      %4140 = vmatpush1.xpose.msra.mxu0 0.0
      %4141 = vmatprep.mubr.f32.mxu0 0.0
      %4142 = vmatmul.mubr.f32.gmra.mrb[0].mxu0 %v4045
      %v4143 = vpop.f32.mrb[0].mxu0
      %v4144 = vadd.f32 0.0, %v4143
      %v4145 = vpop.f32.mrb[0].mxu0
      %4146 = vmatprep.mubr.f32.mxu0 0.0
      %4147 = vmatmul.mubr.f32.gmra.mrb[0].mxu0 %v4047
      %v4148 = vpop.f32.mrb[0].mxu0
      %v4149 = vadd.f32 0.0, %v4148
      %v4150 = vpop.f32.mrb[0].mxu0
      %4151 = vmatprep.mubr.f32.mxu0 0.0
      %4152 = vmatmul.mubr.f32.gmra.mrb[0].mxu0 %v4049
      %v4153 = vpop.f32.mrb[0].mxu0
      %v4154 = vadd.f32 0.0, %v4153
      %v4155 = vpop.f32.mrb[0].mxu0
      %4156 = vmatprep.mubr.f32.mxu0 0.0
      %4157 = vmatmul.mubr.f32.gmra.mrb[0].mxu0 %v4051
      %v4158 = vpop.f32.mrb[0].mxu0
      %v4159 = vadd.f32 0.0, %v4158
      %v4160 = vpop.f32.mrb[0].mxu0
      %4161 = vmatprep.mubr.f32.mxu0 0.0
      %4162 = vmatmul.mubr.f32.gmra.mrb[0].mxu0 %v4053
      %v4163 = vpop.f32.mrb[0].mxu0
      %v4164 = vadd.f32 0.0, %v4163
      %v4165 = vpop.f32.mrb[0].mxu0
      %4166 = vmatprep.mubr.f32.mxu0 0.0
      %4167 = vmatmul.mubr.f32.gmra.mrb[0].mxu0 %v4055
      %v4168 = vpop.f32.mrb[0].mxu0
      %v4169 = vadd.f32 0.0, %v4168
      %v4170 = vpop.f32.mrb[0].mxu0
      %4171 = vmatprep.mubr.f32.mxu0 0.0
      %4172 = vmatmul.mubr.f32.gmra.mrb[0].mxu0 %v4057
      %v4173 = vpop.f32.mrb[0].mxu0
      %v4174 = vadd.f32 0.0, %v4173
      %v4175 = vpop.f32.mrb[0].mxu0
      %4176 = vmatprep.mubr.f32.mxu0 0.0
      %4177 = vmatmul.mubr.f32.gmra.mrb[0].mxu0 %v4059
      %v4178 = vpop.f32.mrb[0].mxu0
      %v4179 = vadd.f32 0.0, %v4178
      %v4180 = vpop.f32.mrb[0].mxu0
      %4181 = vdwg.mxu0
      %s4182 = scalar_lea.vmem [#allocation2], 384
      %v4183 = vld [vmem:[%s4182] sm:$0xff]
      %v4184 = vld [vmem:[%s4182 + $0x8] sm:$0xff]
      %v4185 = vld [vmem:[%s4182 + $0x10] sm:$0xff]
      %v4186 = vld [vmem:[%s4182 + $0x18] sm:$0xff]
      %v4187 = vld [vmem:[%s4182 + $0x20] sm:$0xff]
      %v4188 = vld [vmem:[%s4182 + $0x28] sm:$0xff]
      %v4189 = vld [vmem:[%s4182 + $0x30] sm:$0xff]
      %v4190 = vld [vmem:[%s4182 + $0x38] sm:$0xff]
      %v4191 = vsel %vm673, %v4144, -inf
      %4192 = vmax.xlane.f32.xlu0 %v4191
      %v4193 = vpop.xlane.xlu0 %4192
      %v4194 = vsel %vm673, %v4149, -inf
      %4195 = vmax.xlane.f32.xlu0 %v4194
      %v4196 = vpop.xlane.xlu0 %4195
      %v4197 = vsel %vm673, %v4154, -inf
      %4198 = vmax.xlane.f32.xlu0 %v4197
      %v4199 = vpop.xlane.xlu0 %4198
      %v4200 = vsel %vm673, %v4159, -inf
      %4201 = vmax.xlane.f32.xlu0 %v4200
      %v4202 = vpop.xlane.xlu0 %4201
      %v4203 = vsel %vm673, %v4164, -inf
      %4204 = vmax.xlane.f32.xlu0 %v4203
      %v4205 = vpop.xlane.xlu0 %4204
      %v4206 = vsel %vm673, %v4169, -inf
      %4207 = vmax.xlane.f32.xlu0 %v4206
      %v4208 = vpop.xlane.xlu0 %4207
      %v4209 = vsel %vm673, %v4174, -inf
      %4210 = vmax.xlane.f32.xlu0 %v4209
      %v4211 = vpop.xlane.xlu0 %4210
      %v4212 = vsel %vm673, %v4179, -inf
      %4213 = vmax.xlane.f32.xlu0 %v4212
      %v4214 = vpop.xlane.xlu0 %4213
      %v4215 = vmax.f32 %v4183, %v4193
      %v4216 = vmax.f32 %v4184, %v4196
      %v4217 = vmax.f32 %v4185, %v4199
      %v4218 = vmax.f32 %v4186, %v4202
      %v4219 = vmax.f32 %v4187, %v4205
      %v4220 = vmax.f32 %v4188, %v4208
      %v4221 = vmax.f32 %v4189, %v4211
      %v4222 = vmax.f32 %v4190, %v4214
      %v4223 = vsub.f32 %v4183, %v4215
      %v4224 = vsub.f32 %v4184, %v4216
      %v4225 = vsub.f32 %v4185, %v4217
      %v4226 = vsub.f32 %v4186, %v4218
      %v4227 = vsub.f32 %v4187, %v4219
      %v4228 = vsub.f32 %v4188, %v4220
      %v4229 = vsub.f32 %v4189, %v4221
      %v4230 = vsub.f32 %v4190, %v4222
      %v4231 = vmul.f32 %v4223, 1.442695
      %v4232 = vpow.pop %v4231
      %v4233 = vmul.f32 %v4224, 1.442695
      %v4234 = vpow.pop %v4233
      %v4235 = vmul.f32 %v4225, 1.442695
      %v4236 = vpow.pop %v4235
      %v4237 = vmul.f32 %v4226, 1.442695
      %v4238 = vpow.pop %v4237
      %v4239 = vmul.f32 %v4227, 1.442695
      %v4240 = vpow.pop %v4239
      %v4241 = vmul.f32 %v4228, 1.442695
      %v4242 = vpow.pop %v4241
      %v4243 = vmul.f32 %v4229, 1.442695
      %v4244 = vpow.pop %v4243
      %v4245 = vmul.f32 %v4230, 1.442695
      %v4246 = vpow.pop %v4245
      %4248 = vset.pattern.permute.xlu0 0
      %4249 = vperm.xlu0 %4248, %v4215
      %v4250 = vpop.permute.xlu0 %4249
      %4253 = vset.pattern.permute.xlu0 0
      %4254 = vperm.xlu0 %4253, %v4216
      %v4255 = vpop.permute.xlu0 %4254
      %4258 = vset.pattern.permute.xlu0 0
      %4259 = vperm.xlu0 %4258, %v4217
      %v4260 = vpop.permute.xlu0 %4259
      %4263 = vset.pattern.permute.xlu0 0
      %4264 = vperm.xlu0 %4263, %v4218
      %v4265 = vpop.permute.xlu0 %4264
      %4268 = vset.pattern.permute.xlu0 0
      %4269 = vperm.xlu0 %4268, %v4219
      %v4270 = vpop.permute.xlu0 %4269
      %4273 = vset.pattern.permute.xlu0 0
      %4274 = vperm.xlu0 %4273, %v4220
      %v4275 = vpop.permute.xlu0 %4274
      %4278 = vset.pattern.permute.xlu0 0
      %4279 = vperm.xlu0 %4278, %v4221
      %v4280 = vpop.permute.xlu0 %4279
      %4283 = vset.pattern.permute.xlu0 0
      %4284 = vperm.xlu0 %4283, %v4222
      %v4285 = vpop.permute.xlu0 %4284
      %v4287 = vsub.f32 %v4144, %v4250
      %v4288 = vsub.f32 %v4149, %v4255
      %v4289 = vsub.f32 %v4154, %v4260
      %v4290 = vsub.f32 %v4159, %v4265
      %v4291 = vsub.f32 %v4164, %v4270
      %v4292 = vsub.f32 %v4169, %v4275
      %v4293 = vsub.f32 %v4174, %v4280
      %v4294 = vsub.f32 %v4179, %v4285
      %v4295 = vmul.f32 %v4287, 1.442695
      %v4296 = vpow.pop %v4295
      %v4297 = vmul.f32 %v4288, 1.442695
      %v4298 = vpow.pop %v4297
      %v4299 = vmul.f32 %v4289, 1.442695
      %v4300 = vpow.pop %v4299
      %v4301 = vmul.f32 %v4290, 1.442695
      %v4302 = vpow.pop %v4301
      %v4303 = vmul.f32 %v4291, 1.442695
      %v4304 = vpow.pop %v4303
      %v4305 = vmul.f32 %v4292, 1.442695
      %v4306 = vpow.pop %v4305
      %v4307 = vmul.f32 %v4293, 1.442695
      %v4308 = vpow.pop %v4307
      %v4309 = vmul.f32 %v4294, 1.442695
      %v4310 = vpow.pop %v4309
      %s4311 = scalar_lea.vmem [#allocation3], 384
      %v4312 = vld [vmem:[%s4311] sm:$0xff]
      %v4313 = vld [vmem:[%s4311 + $0x8] sm:$0xff]
      %v4314 = vld [vmem:[%s4311 + $0x10] sm:$0xff]
      %v4315 = vld [vmem:[%s4311 + $0x18] sm:$0xff]
      %v4316 = vld [vmem:[%s4311 + $0x20] sm:$0xff]
      %v4317 = vld [vmem:[%s4311 + $0x28] sm:$0xff]
      %v4318 = vld [vmem:[%s4311 + $0x30] sm:$0xff]
      %v4319 = vld [vmem:[%s4311 + $0x38] sm:$0xff]
      %v4320 = vmul.f32 %v4232, %v4312
      %v4321 = vmul.f32 %v4234, %v4313
      %v4322 = vmul.f32 %v4236, %v4314
      %v4323 = vmul.f32 %v4238, %v4315
      %v4324 = vmul.f32 %v4240, %v4316
      %v4325 = vmul.f32 %v4242, %v4317
      %v4326 = vmul.f32 %v4244, %v4318
      %v4327 = vmul.f32 %v4246, %v4319
      %v4328 = vsel %vm673, %v4296, 0.0
      %4329 = vadd.xlane.f32.xlu0 %v4328
      %v4330 = vpop.xlane.xlu0 %4329
      %v4331 = vsel %vm673, %v4298, 0.0
      %4332 = vadd.xlane.f32.xlu0 %v4331
      %v4333 = vpop.xlane.xlu0 %4332
      %v4334 = vsel %vm673, %v4300, 0.0
      %4335 = vadd.xlane.f32.xlu0 %v4334
      %v4336 = vpop.xlane.xlu0 %4335
      %v4337 = vsel %vm673, %v4302, 0.0
      %4338 = vadd.xlane.f32.xlu0 %v4337
      %v4339 = vpop.xlane.xlu0 %4338
      %v4340 = vsel %vm673, %v4304, 0.0
      %4341 = vadd.xlane.f32.xlu0 %v4340
      %v4342 = vpop.xlane.xlu0 %4341
      %v4343 = vsel %vm673, %v4306, 0.0
      %4344 = vadd.xlane.f32.xlu0 %v4343
      %v4345 = vpop.xlane.xlu0 %4344
      %v4346 = vsel %vm673, %v4308, 0.0
      %4347 = vadd.xlane.f32.xlu0 %v4346
      %v4348 = vpop.xlane.xlu0 %4347
      %v4349 = vsel %vm673, %v4310, 0.0
      %4350 = vadd.xlane.f32.xlu0 %v4349
      %v4351 = vpop.xlane.xlu0 %4350
      %v4352 = vadd.f32 %v4320, %v4330
      %v4353 = vadd.f32 %v4321, %v4333
      %v4354 = vadd.f32 %v4322, %v4336
      %v4355 = vadd.f32 %v4323, %v4339
      %v4356 = vadd.f32 %v4324, %v4342
      %v4357 = vadd.f32 %v4325, %v4345
      %v4358 = vadd.f32 %v4326, %v4348
      %v4359 = vadd.f32 %v4327, %v4351
      %4360 = vst.msk [vmem:[%s4311] sm:$0xff] %vm842, %v4352
      %4361 = vst.msk [vmem:[%s4311 + $0x8] sm:$0xff] %vm842, %v4353
      %4362 = vst.msk [vmem:[%s4311 + $0x10] sm:$0xff] %vm842, %v4354
      %4363 = vst.msk [vmem:[%s4311 + $0x18] sm:$0xff] %vm842, %v4355
      %4364 = vst.msk [vmem:[%s4311 + $0x20] sm:$0xff] %vm842, %v4356
      %4365 = vst.msk [vmem:[%s4311 + $0x28] sm:$0xff] %vm842, %v4357
      %4366 = vst.msk [vmem:[%s4311 + $0x30] sm:$0xff] %vm842, %v4358
      %4367 = vst.msk [vmem:[%s4311 + $0x38] sm:$0xff] %vm842, %v4359
      %s4368 = scalar_lea.vmem [#allocation4], 384
      %v4369 = vld [vmem:[%s4368] sm:$0xff]
      %v4370 = vld [vmem:[%s4368 + $0x8] sm:$0xff]
      %v4371 = vld [vmem:[%s4368 + $0x10] sm:$0xff]
      %v4372 = vld [vmem:[%s4368 + $0x18] sm:$0xff]
      %v4373 = vld [vmem:[%s4368 + $0x20] sm:$0xff]
      %v4374 = vld [vmem:[%s4368 + $0x28] sm:$0xff]
      %v4375 = vld [vmem:[%s4368 + $0x30] sm:$0xff]
      %v4376 = vld [vmem:[%s4368 + $0x38] sm:$0xff]
      %4378 = vset.pattern.permute.xlu0 0
      %4379 = vperm.xlu0 %4378, %v4232
      %v4380 = vpop.permute.xlu0 %4379
      %4383 = vset.pattern.permute.xlu0 0
      %4384 = vperm.xlu0 %4383, %v4234
      %v4385 = vpop.permute.xlu0 %4384
      %4388 = vset.pattern.permute.xlu0 0
      %4389 = vperm.xlu0 %4388, %v4236
      %v4390 = vpop.permute.xlu0 %4389
      %4393 = vset.pattern.permute.xlu0 0
      %4394 = vperm.xlu0 %4393, %v4238
      %v4395 = vpop.permute.xlu0 %4394
      %4398 = vset.pattern.permute.xlu0 0
      %4399 = vperm.xlu0 %4398, %v4240
      %v4400 = vpop.permute.xlu0 %4399
      %4403 = vset.pattern.permute.xlu0 0
      %4404 = vperm.xlu0 %4403, %v4242
      %v4405 = vpop.permute.xlu0 %4404
      %4408 = vset.pattern.permute.xlu0 0
      %4409 = vperm.xlu0 %4408, %v4244
      %v4410 = vpop.permute.xlu0 %4409
      %4413 = vset.pattern.permute.xlu0 0
      %4414 = vperm.xlu0 %4413, %v4246
      %v4415 = vpop.permute.xlu0 %4414
      %v4417 = vmul.f32 %v4380, %v4369
      %v4418 = vmul.f32 %v4385, %v4370
      %v4419 = vmul.f32 %v4390, %v4371
      %v4420 = vmul.f32 %v4395, %v4372
      %v4421 = vmul.f32 %v4400, %v4373
      %v4422 = vmul.f32 %v4405, %v4374
      %v4423 = vmul.f32 %v4410, %v4375
      %v4424 = vmul.f32 %v4415, %v4376
      %4425 = vrot.lane.b32.xlu0 %v503, 32
      %v4426 = vpop.permute.xlu0 %4425
      %4427 = vrot.lane.b32.xlu0 %v504, 32
      %v4428 = vpop.permute.xlu0 %4427
      %4429 = vrot.lane.b32.xlu0 %v505, 32
      %v4430 = vpop.permute.xlu0 %4429
      %4431 = vrot.lane.b32.xlu0 %v506, 32
      %v4432 = vpop.permute.xlu0 %4431
      %4433 = vrot.lane.b32.xlu0 %v507, 32
      %v4434 = vpop.permute.xlu0 %4433
      %4435 = vrot.lane.b32.xlu0 %v508, 32
      %v4436 = vpop.permute.xlu0 %4435
      %4437 = vrot.lane.b32.xlu0 %v509, 32
      %v4438 = vpop.permute.xlu0 %4437
      %4439 = vrot.lane.b32.xlu0 %v510, 32
      %v4440 = vpop.permute.xlu0 %4439
      %v4450 = vsel %vm673, %v4296, 0
      %v4453 = vsel %vm673, %v4298, 0
      %v4456 = vsel %vm673, %v4300, 0
      %v4459 = vsel %vm673, %v4302, 0
      %v4462 = vsel %vm673, %v4304, 0
      %v4465 = vsel %vm673, %v4306, 0
      %v4468 = vsel %vm673, %v4308, 0
      %v4471 = vsel %vm673, %v4310, 0
      %4473 = vmatprep.subr.mxu0 0.0
      %4474 = vmatpush1.msra.mxu0 %v4426
      %4475 = vmatprep.subr.mxu0 0.0
      %4476 = vmatpush1.msra.mxu0 %v4428
      %4477 = vmatprep.subr.mxu0 0.0
      %4478 = vmatpush1.msra.mxu0 %v4430
      %4479 = vmatprep.subr.mxu0 0.0
      %4480 = vmatpush1.msra.mxu0 %v4432
      %4481 = vmatprep.subr.mxu0 0.0
      %4482 = vmatpush1.msra.mxu0 %v4434
      %4483 = vmatprep.subr.mxu0 0.0
      %4484 = vmatpush1.msra.mxu0 %v4436
      %4485 = vmatprep.subr.mxu0 0.0
      %4486 = vmatpush1.msra.mxu0 %v4438
      %4487 = vmatprep.subr.mxu0 0.0
      %4488 = vmatpush1.msra.mxu0 %v4440
      %4489 = vmatprep.subr.mxu0 0.0
      %4490 = vmatpush1.msra.mxu0 0.0
      %4491 = vmatprep.subr.mxu0 0.0
      %4492 = vmatpush1.msra.mxu0 0.0
      %4493 = vmatprep.subr.mxu0 0.0
      %4494 = vmatpush1.msra.mxu0 0.0
      %4495 = vmatprep.subr.mxu0 0.0
      %4496 = vmatpush1.msra.mxu0 0.0
      %4497 = vmatprep.subr.mxu0 0.0
      %4498 = vmatpush1.msra.mxu0 0.0
      %4499 = vmatprep.subr.mxu0 0.0
      %4500 = vmatpush1.msra.mxu0 0.0
      %4501 = vmatprep.subr.mxu0 0.0
      %4502 = vmatpush1.msra.mxu0 0.0
      %4503 = vmatprep.subr.mxu0 0.0
      %4504 = vmatpush1.msra.mxu0 0.0
      %4505 = vmatprep.subr.mxu0 0.0
      %4506 = vmatpush1.msra.mxu0 0.0
      %4507 = vmatprep.subr.mxu0 0.0
      %4508 = vmatpush1.msra.mxu0 0.0
      %4509 = vmatprep.subr.mxu0 0.0
      %4510 = vmatpush1.msra.mxu0 0.0
      %4511 = vmatprep.subr.mxu0 0.0
      %4512 = vmatpush1.msra.mxu0 0.0
      %4513 = vmatprep.subr.mxu0 0.0
      %4514 = vmatpush1.msra.mxu0 0.0
      %4515 = vmatprep.subr.mxu0 0.0
      %4516 = vmatpush1.msra.mxu0 0.0
      %4517 = vmatprep.subr.mxu0 0.0
      %4518 = vmatpush1.msra.mxu0 0.0
      %4519 = vmatprep.subr.mxu0 0.0
      %4520 = vmatpush1.msra.mxu0 0.0
      %4521 = vmatprep.subr.mxu0 0.0
      %4522 = vmatpush1.msra.mxu0 0.0
      %4523 = vmatprep.subr.mxu0 0.0
      %4524 = vmatpush1.msra.mxu0 0.0
      %4525 = vmatprep.subr.mxu0 0.0
      %4526 = vmatpush1.msra.mxu0 0.0
      %4527 = vmatprep.subr.mxu0 0.0
      %4528 = vmatpush1.msra.mxu0 0.0
      %4529 = vmatprep.subr.mxu0 0.0
      %4530 = vmatpush1.msra.mxu0 0.0
      %4531 = vmatprep.subr.mxu0 0.0
      %4532 = vmatpush1.msra.mxu0 0.0
      %4533 = vmatprep.subr.mxu0 0.0
      %4534 = vmatpush1.msra.mxu0 0.0
      %4535 = vmatprep.subr.mxu0 0.0
      %4536 = vmatpush1.msra.mxu0 0.0
      %4537 = vmatprep.mubr.f32.mxu0 0.0
      %4538 = vmatmul.mubr.f32.gmra.mrb[0].mxu0 %v4450
      %v4539 = vpop.f32.mrb[0].mxu0
      %v4540 = vadd.f32 0.0, %v4539
      %v4541 = vpop.f32.mrb[0].mxu0
      %4542 = vmatprep.mubr.f32.mxu0 0.0
      %4543 = vmatmul.mubr.f32.gmra.mrb[0].mxu0 %v4453
      %v4544 = vpop.f32.mrb[0].mxu0
      %v4545 = vadd.f32 0.0, %v4544
      %v4546 = vpop.f32.mrb[0].mxu0
      %4547 = vmatprep.mubr.f32.mxu0 0.0
      %4548 = vmatmul.mubr.f32.gmra.mrb[0].mxu0 %v4456
      %v4549 = vpop.f32.mrb[0].mxu0
      %v4550 = vadd.f32 0.0, %v4549
      %v4551 = vpop.f32.mrb[0].mxu0
      %4552 = vmatprep.mubr.f32.mxu0 0.0
      %4553 = vmatmul.mubr.f32.gmra.mrb[0].mxu0 %v4459
      %v4554 = vpop.f32.mrb[0].mxu0
      %v4555 = vadd.f32 0.0, %v4554
      %v4556 = vpop.f32.mrb[0].mxu0
      %4557 = vmatprep.mubr.f32.mxu0 0.0
      %4558 = vmatmul.mubr.f32.gmra.mrb[0].mxu0 %v4462
      %v4559 = vpop.f32.mrb[0].mxu0
      %v4560 = vadd.f32 0.0, %v4559
      %v4561 = vpop.f32.mrb[0].mxu0
      %4562 = vmatprep.mubr.f32.mxu0 0.0
      %4563 = vmatmul.mubr.f32.gmra.mrb[0].mxu0 %v4465
      %v4564 = vpop.f32.mrb[0].mxu0
      %v4565 = vadd.f32 0.0, %v4564
      %v4566 = vpop.f32.mrb[0].mxu0
      %4567 = vmatprep.mubr.f32.mxu0 0.0
      %4568 = vmatmul.mubr.f32.gmra.mrb[0].mxu0 %v4468
      %v4569 = vpop.f32.mrb[0].mxu0
      %v4570 = vadd.f32 0.0, %v4569
      %v4571 = vpop.f32.mrb[0].mxu0
      %4572 = vmatprep.mubr.f32.mxu0 0.0
      %4573 = vmatmul.mubr.f32.gmra.mrb[0].mxu0 %v4471
      %v4574 = vpop.f32.mrb[0].mxu0
      %v4575 = vadd.f32 0.0, %v4574
      %v4576 = vpop.f32.mrb[0].mxu0
      %4577 = vdwg.mxu0
      %v4578 = vadd.f32 %v4417, %v4540
      %v4579 = vadd.f32 %v4418, %v4545
      %v4580 = vadd.f32 %v4419, %v4550
      %v4581 = vadd.f32 %v4420, %v4555
      %v4582 = vadd.f32 %v4421, %v4560
      %v4583 = vadd.f32 %v4422, %v4565
      %v4584 = vadd.f32 %v4423, %v4570
      %v4585 = vadd.f32 %v4424, %v4575
      %4586 = vst.msk [vmem:[%s4368] sm:$0xff] %vm511, %v4578
      %4587 = vst.msk [vmem:[%s4368 + $0x8] sm:$0xff] %vm511, %v4579
      %4588 = vst.msk [vmem:[%s4368 + $0x10] sm:$0xff] %vm511, %v4580
      %4589 = vst.msk [vmem:[%s4368 + $0x18] sm:$0xff] %vm511, %v4581
      %4590 = vst.msk [vmem:[%s4368 + $0x20] sm:$0xff] %vm511, %v4582
      %4591 = vst.msk [vmem:[%s4368 + $0x28] sm:$0xff] %vm511, %v4583
      %4592 = vst.msk [vmem:[%s4368 + $0x30] sm:$0xff] %vm511, %v4584
      %4593 = vst.msk [vmem:[%s4368 + $0x38] sm:$0xff] %vm511, %v4585
      %4594 = vst.msk [vmem:[%s4182] sm:$0xff] %vm842, %v4215
      %4595 = vst.msk [vmem:[%s4182 + $0x8] sm:$0xff] %vm842, %v4216
      %4596 = vst.msk [vmem:[%s4182 + $0x10] sm:$0xff] %vm842, %v4217
      %4597 = vst.msk [vmem:[%s4182 + $0x18] sm:$0xff] %vm842, %v4218
      %4598 = vst.msk [vmem:[%s4182 + $0x20] sm:$0xff] %vm842, %v4219
      %4599 = vst.msk [vmem:[%s4182 + $0x28] sm:$0xff] %vm842, %v4220
      %4600 = vst.msk [vmem:[%s4182 + $0x30] sm:$0xff] %vm842, %v4221
      %4601 = vst.msk [vmem:[%s4182 + $0x38] sm:$0xff] %vm842, %v4222
      %4602 = vrot.lane.b32.xlu0 %v487, 16
      %v4603 = vpop.permute.xlu0 %4602
      %4604 = vrot.lane.b32.xlu0 %v488, 16
      %v4605 = vpop.permute.xlu0 %4604
      %4606 = vrot.lane.b32.xlu0 %v489, 16
      %v4607 = vpop.permute.xlu0 %4606
      %4608 = vrot.lane.b32.xlu0 %v490, 16
      %v4609 = vpop.permute.xlu0 %4608
      %4610 = vrot.lane.b32.xlu0 %v491, 16
      %v4611 = vpop.permute.xlu0 %4610
      %4612 = vrot.lane.b32.xlu0 %v492, 16
      %v4613 = vpop.permute.xlu0 %4612
      %4614 = vrot.lane.b32.xlu0 %v493, 16
      %v4615 = vpop.permute.xlu0 %4614
      %4616 = vrot.lane.b32.xlu0 %v494, 16
      %v4617 = vpop.permute.xlu0 %4616
      %4618 = vrot.lane.b32.xlu0 %v495, 16
      %v4619 = vpop.permute.xlu0 %4618
      %4620 = vrot.lane.b32.xlu0 %v496, 16
      %v4621 = vpop.permute.xlu0 %4620
      %4622 = vrot.lane.b32.xlu0 %v497, 16
      %v4623 = vpop.permute.xlu0 %4622
      %4624 = vrot.lane.b32.xlu0 %v498, 16
      %v4625 = vpop.permute.xlu0 %4624
      %4626 = vrot.lane.b32.xlu0 %v499, 16
      %v4627 = vpop.permute.xlu0 %4626
      %4628 = vrot.lane.b32.xlu0 %v500, 16
      %v4629 = vpop.permute.xlu0 %4628
      %4630 = vrot.lane.b32.xlu0 %v501, 16
      %v4631 = vpop.permute.xlu0 %4630
      %4632 = vrot.lane.b32.xlu0 %v502, 16
      %v4633 = vpop.permute.xlu0 %4632
      %v4634 = vsel %vm511, %v4603, 0
      %v4636 = vsel %vm511, %v4605, 0
      %v4638 = vsel %vm511, %v4607, 0
      %v4640 = vsel %vm511, %v4609, 0
      %v4642 = vsel %vm511, %v4611, 0
      %v4644 = vsel %vm511, %v4613, 0
      %v4646 = vsel %vm511, %v4615, 0
      %v4648 = vsel %vm511, %v4617, 0
      %v4650 = vsel %vm511, %v4619, 0
      %v4652 = vsel %vm511, %v4621, 0
      %v4654 = vsel %vm511, %v4623, 0
      %v4656 = vsel %vm511, %v4625, 0
      %v4658 = vsel %vm511, %v4627, 0
      %v4660 = vsel %vm511, %v4629, 0
      %v4662 = vsel %vm511, %v4631, 0
      %v4664 = vsel %vm511, %v4633, 0
      %4666 = vmatprep.subr.mxu0 0.0
      %4667 = vmatpush1.xpose.msra.mxu0 %v4650
      %4668 = vmatprep.subr.mxu0 0.0
      %4669 = vmatpush1.xpose.msra.mxu0 %v4652
      %4670 = vmatprep.subr.mxu0 0.0
      %4671 = vmatpush1.xpose.msra.mxu0 %v4654
      %4672 = vmatprep.subr.mxu0 0.0
      %4673 = vmatpush1.xpose.msra.mxu0 %v4656
      %4674 = vmatprep.subr.mxu0 0.0
      %4675 = vmatpush1.xpose.msra.mxu0 %v4658
      %4676 = vmatprep.subr.mxu0 0.0
      %4677 = vmatpush1.xpose.msra.mxu0 %v4660
      %4678 = vmatprep.subr.mxu0 0.0
      %4679 = vmatpush1.xpose.msra.mxu0 %v4662
      %4680 = vmatprep.subr.mxu0 0.0
      %4681 = vmatpush1.xpose.msra.mxu0 %v4664
      %4682 = vmatprep.subr.mxu0 0.0
      %4683 = vmatpush1.xpose.msra.mxu0 0.0
      %4684 = vmatprep.subr.mxu0 0.0
      %4685 = vmatpush1.xpose.msra.mxu0 0.0
      %4686 = vmatprep.subr.mxu0 0.0
      %4687 = vmatpush1.xpose.msra.mxu0 0.0
      %4688 = vmatprep.subr.mxu0 0.0
      %4689 = vmatpush1.xpose.msra.mxu0 0.0
      %4690 = vmatprep.subr.mxu0 0.0
      %4691 = vmatpush1.xpose.msra.mxu0 0.0
      %4692 = vmatprep.subr.mxu0 0.0
      %4693 = vmatpush1.xpose.msra.mxu0 0.0
      %4694 = vmatprep.subr.mxu0 0.0
      %4695 = vmatpush1.xpose.msra.mxu0 0.0
      %4696 = vmatprep.subr.mxu0 0.0
      %4697 = vmatpush1.xpose.msra.mxu0 0.0
      %4698 = vmatprep.subr.mxu0 0.0
      %4699 = vmatpush1.xpose.msra.mxu0 0.0
      %4700 = vmatprep.subr.mxu0 0.0
      %4701 = vmatpush1.xpose.msra.mxu0 0.0
      %4702 = vmatprep.subr.mxu0 0.0
      %4703 = vmatpush1.xpose.msra.mxu0 0.0
      %4704 = vmatprep.subr.mxu0 0.0
      %4705 = vmatpush1.xpose.msra.mxu0 0.0
      %4706 = vmatprep.subr.mxu0 0.0
      %4707 = vmatpush1.xpose.msra.mxu0 0.0
      %4708 = vmatprep.subr.mxu0 0.0
      %4709 = vmatpush1.xpose.msra.mxu0 0.0
      %4710 = vmatprep.subr.mxu0 0.0
      %4711 = vmatpush1.xpose.msra.mxu0 0.0
      %4712 = vmatprep.subr.mxu0 0.0
      %4713 = vmatpush1.xpose.msra.mxu0 0.0
      %4714 = vmatprep.subr.mxu0 0.0
      %4715 = vmatpush1.xpose.msra.mxu0 0.0
      %4716 = vmatprep.subr.mxu0 0.0
      %4717 = vmatpush1.xpose.msra.mxu0 0.0
      %4718 = vmatprep.subr.mxu0 0.0
      %4719 = vmatpush1.xpose.msra.mxu0 0.0
      %4720 = vmatprep.subr.mxu0 0.0
      %4721 = vmatpush1.xpose.msra.mxu0 0.0
      %4722 = vmatprep.subr.mxu0 0.0
      %4723 = vmatpush1.xpose.msra.mxu0 0.0
      %4724 = vmatprep.subr.mxu0 0.0
      %4725 = vmatpush1.xpose.msra.mxu0 0.0
      %4726 = vmatprep.subr.mxu0 0.0
      %4727 = vmatpush1.xpose.msra.mxu0 0.0
      %4728 = vmatprep.subr.mxu0 0.0
      %4729 = vmatpush1.xpose.msra.mxu0 0.0
      %4730 = vmatprep.mubr.f32.mxu0 0.0
      %4731 = vmatmul.mubr.f32.gmra.mrb[0].mxu0 %v4634
      %v4732 = vpop.f32.mrb[0].mxu0
      %v4733 = vadd.f32 0.0, %v4732
      %v4734 = vpop.f32.mrb[0].mxu0
      %4735 = vmatprep.mubr.f32.mxu0 0.0
      %4736 = vmatmul.mubr.f32.gmra.mrb[0].mxu0 %v4636
      %v4737 = vpop.f32.mrb[0].mxu0
      %v4738 = vadd.f32 0.0, %v4737
      %v4739 = vpop.f32.mrb[0].mxu0
      %4740 = vmatprep.mubr.f32.mxu0 0.0
      %4741 = vmatmul.mubr.f32.gmra.mrb[0].mxu0 %v4638
      %v4742 = vpop.f32.mrb[0].mxu0
      %v4743 = vadd.f32 0.0, %v4742
      %v4744 = vpop.f32.mrb[0].mxu0
      %4745 = vmatprep.mubr.f32.mxu0 0.0
      %4746 = vmatmul.mubr.f32.gmra.mrb[0].mxu0 %v4640
      %v4747 = vpop.f32.mrb[0].mxu0
      %v4748 = vadd.f32 0.0, %v4747
      %v4749 = vpop.f32.mrb[0].mxu0
      %4750 = vmatprep.mubr.f32.mxu0 0.0
      %4751 = vmatmul.mubr.f32.gmra.mrb[0].mxu0 %v4642
      %v4752 = vpop.f32.mrb[0].mxu0
      %v4753 = vadd.f32 0.0, %v4752
      %v4754 = vpop.f32.mrb[0].mxu0
      %4755 = vmatprep.mubr.f32.mxu0 0.0
      %4756 = vmatmul.mubr.f32.gmra.mrb[0].mxu0 %v4644
      %v4757 = vpop.f32.mrb[0].mxu0
      %v4758 = vadd.f32 0.0, %v4757
      %v4759 = vpop.f32.mrb[0].mxu0
      %4760 = vmatprep.mubr.f32.mxu0 0.0
      %4761 = vmatmul.mubr.f32.gmra.mrb[0].mxu0 %v4646
      %v4762 = vpop.f32.mrb[0].mxu0
      %v4763 = vadd.f32 0.0, %v4762
      %v4764 = vpop.f32.mrb[0].mxu0
      %4765 = vmatprep.mubr.f32.mxu0 0.0
      %4766 = vmatmul.mubr.f32.gmra.mrb[0].mxu0 %v4648
      %v4767 = vpop.f32.mrb[0].mxu0
      %v4768 = vadd.f32 0.0, %v4767
      %v4769 = vpop.f32.mrb[0].mxu0
      %4770 = vdwg.mxu0
      %s4771 = scalar_lea.vmem [#allocation2], 448
      %v4772 = vld [vmem:[%s4771] sm:$0xff]
      %v4773 = vld [vmem:[%s4771 + $0x8] sm:$0xff]
      %v4774 = vld [vmem:[%s4771 + $0x10] sm:$0xff]
      %v4775 = vld [vmem:[%s4771 + $0x18] sm:$0xff]
      %v4776 = vld [vmem:[%s4771 + $0x20] sm:$0xff]
      %v4777 = vld [vmem:[%s4771 + $0x28] sm:$0xff]
      %v4778 = vld [vmem:[%s4771 + $0x30] sm:$0xff]
      %v4779 = vld [vmem:[%s4771 + $0x38] sm:$0xff]
      %v4780 = vsel %vm673, %v4733, -inf
      %4781 = vmax.xlane.f32.xlu0 %v4780
      %v4782 = vpop.xlane.xlu0 %4781
      %v4783 = vsel %vm673, %v4738, -inf
      %4784 = vmax.xlane.f32.xlu0 %v4783
      %v4785 = vpop.xlane.xlu0 %4784
      %v4786 = vsel %vm673, %v4743, -inf
      %4787 = vmax.xlane.f32.xlu0 %v4786
      %v4788 = vpop.xlane.xlu0 %4787
      %v4789 = vsel %vm673, %v4748, -inf
      %4790 = vmax.xlane.f32.xlu0 %v4789
      %v4791 = vpop.xlane.xlu0 %4790
      %v4792 = vsel %vm673, %v4753, -inf
      %4793 = vmax.xlane.f32.xlu0 %v4792
      %v4794 = vpop.xlane.xlu0 %4793
      %v4795 = vsel %vm673, %v4758, -inf
      %4796 = vmax.xlane.f32.xlu0 %v4795
      %v4797 = vpop.xlane.xlu0 %4796
      %v4798 = vsel %vm673, %v4763, -inf
      %4799 = vmax.xlane.f32.xlu0 %v4798
      %v4800 = vpop.xlane.xlu0 %4799
      %v4801 = vsel %vm673, %v4768, -inf
      %4802 = vmax.xlane.f32.xlu0 %v4801
      %v4803 = vpop.xlane.xlu0 %4802
      %v4804 = vmax.f32 %v4772, %v4782
      %v4805 = vmax.f32 %v4773, %v4785
      %v4806 = vmax.f32 %v4774, %v4788
      %v4807 = vmax.f32 %v4775, %v4791
      %v4808 = vmax.f32 %v4776, %v4794
      %v4809 = vmax.f32 %v4777, %v4797
      %v4810 = vmax.f32 %v4778, %v4800
      %v4811 = vmax.f32 %v4779, %v4803
      %v4812 = vsub.f32 %v4772, %v4804
      %v4813 = vsub.f32 %v4773, %v4805
      %v4814 = vsub.f32 %v4774, %v4806
      %v4815 = vsub.f32 %v4775, %v4807
      %v4816 = vsub.f32 %v4776, %v4808
      %v4817 = vsub.f32 %v4777, %v4809
      %v4818 = vsub.f32 %v4778, %v4810
      %v4819 = vsub.f32 %v4779, %v4811
      %v4820 = vmul.f32 %v4812, 1.442695
      %v4821 = vpow.pop %v4820
      %v4822 = vmul.f32 %v4813, 1.442695
      %v4823 = vpow.pop %v4822
      %v4824 = vmul.f32 %v4814, 1.442695
      %v4825 = vpow.pop %v4824
      %v4826 = vmul.f32 %v4815, 1.442695
      %v4827 = vpow.pop %v4826
      %v4828 = vmul.f32 %v4816, 1.442695
      %v4829 = vpow.pop %v4828
      %v4830 = vmul.f32 %v4817, 1.442695
      %v4831 = vpow.pop %v4830
      %v4832 = vmul.f32 %v4818, 1.442695
      %v4833 = vpow.pop %v4832
      %v4834 = vmul.f32 %v4819, 1.442695
      %v4835 = vpow.pop %v4834
      %4837 = vset.pattern.permute.xlu0 0
      %4838 = vperm.xlu0 %4837, %v4804
      %v4839 = vpop.permute.xlu0 %4838
      %4842 = vset.pattern.permute.xlu0 0
      %4843 = vperm.xlu0 %4842, %v4805
      %v4844 = vpop.permute.xlu0 %4843
      %4847 = vset.pattern.permute.xlu0 0
      %4848 = vperm.xlu0 %4847, %v4806
      %v4849 = vpop.permute.xlu0 %4848
      %4852 = vset.pattern.permute.xlu0 0
      %4853 = vperm.xlu0 %4852, %v4807
      %v4854 = vpop.permute.xlu0 %4853
      %4857 = vset.pattern.permute.xlu0 0
      %4858 = vperm.xlu0 %4857, %v4808
      %v4859 = vpop.permute.xlu0 %4858
      %4862 = vset.pattern.permute.xlu0 0
      %4863 = vperm.xlu0 %4862, %v4809
      %v4864 = vpop.permute.xlu0 %4863
      %4867 = vset.pattern.permute.xlu0 0
      %4868 = vperm.xlu0 %4867, %v4810
      %v4869 = vpop.permute.xlu0 %4868
      %4872 = vset.pattern.permute.xlu0 0
      %4873 = vperm.xlu0 %4872, %v4811
      %v4874 = vpop.permute.xlu0 %4873
      %v4876 = vsub.f32 %v4733, %v4839
      %v4877 = vsub.f32 %v4738, %v4844
      %v4878 = vsub.f32 %v4743, %v4849
      %v4879 = vsub.f32 %v4748, %v4854
      %v4880 = vsub.f32 %v4753, %v4859
      %v4881 = vsub.f32 %v4758, %v4864
      %v4882 = vsub.f32 %v4763, %v4869
      %v4883 = vsub.f32 %v4768, %v4874
      %v4884 = vmul.f32 %v4876, 1.442695
      %v4885 = vpow.pop %v4884
      %v4886 = vmul.f32 %v4877, 1.442695
      %v4887 = vpow.pop %v4886
      %v4888 = vmul.f32 %v4878, 1.442695
      %v4889 = vpow.pop %v4888
      %v4890 = vmul.f32 %v4879, 1.442695
      %v4891 = vpow.pop %v4890
      %v4892 = vmul.f32 %v4880, 1.442695
      %v4893 = vpow.pop %v4892
      %v4894 = vmul.f32 %v4881, 1.442695
      %v4895 = vpow.pop %v4894
      %v4896 = vmul.f32 %v4882, 1.442695
      %v4897 = vpow.pop %v4896
      %v4898 = vmul.f32 %v4883, 1.442695
      %v4899 = vpow.pop %v4898
      %s4900 = scalar_lea.vmem [#allocation3], 448
      %v4901 = vld [vmem:[%s4900] sm:$0xff]
      %v4902 = vld [vmem:[%s4900 + $0x8] sm:$0xff]
      %v4903 = vld [vmem:[%s4900 + $0x10] sm:$0xff]
      %v4904 = vld [vmem:[%s4900 + $0x18] sm:$0xff]
      %v4905 = vld [vmem:[%s4900 + $0x20] sm:$0xff]
      %v4906 = vld [vmem:[%s4900 + $0x28] sm:$0xff]
      %v4907 = vld [vmem:[%s4900 + $0x30] sm:$0xff]
      %v4908 = vld [vmem:[%s4900 + $0x38] sm:$0xff]
      %v4909 = vmul.f32 %v4821, %v4901
      %v4910 = vmul.f32 %v4823, %v4902
      %v4911 = vmul.f32 %v4825, %v4903
      %v4912 = vmul.f32 %v4827, %v4904
      %v4913 = vmul.f32 %v4829, %v4905
      %v4914 = vmul.f32 %v4831, %v4906
      %v4915 = vmul.f32 %v4833, %v4907
      %v4916 = vmul.f32 %v4835, %v4908
      %v4917 = vsel %vm673, %v4885, 0.0
      %4918 = vadd.xlane.f32.xlu0 %v4917
      %v4919 = vpop.xlane.xlu0 %4918
      %v4920 = vsel %vm673, %v4887, 0.0
      %4921 = vadd.xlane.f32.xlu0 %v4920
      %v4922 = vpop.xlane.xlu0 %4921
      %v4923 = vsel %vm673, %v4889, 0.0
      %4924 = vadd.xlane.f32.xlu0 %v4923
      %v4925 = vpop.xlane.xlu0 %4924
      %v4926 = vsel %vm673, %v4891, 0.0
      %4927 = vadd.xlane.f32.xlu0 %v4926
      %v4928 = vpop.xlane.xlu0 %4927
      %v4929 = vsel %vm673, %v4893, 0.0
      %4930 = vadd.xlane.f32.xlu0 %v4929
      %v4931 = vpop.xlane.xlu0 %4930
      %v4932 = vsel %vm673, %v4895, 0.0
      %4933 = vadd.xlane.f32.xlu0 %v4932
      %v4934 = vpop.xlane.xlu0 %4933
      %v4935 = vsel %vm673, %v4897, 0.0
      %4936 = vadd.xlane.f32.xlu0 %v4935
      %v4937 = vpop.xlane.xlu0 %4936
      %v4938 = vsel %vm673, %v4899, 0.0
      %4939 = vadd.xlane.f32.xlu0 %v4938
      %v4940 = vpop.xlane.xlu0 %4939
      %v4941 = vadd.f32 %v4909, %v4919
      %v4942 = vadd.f32 %v4910, %v4922
      %v4943 = vadd.f32 %v4911, %v4925
      %v4944 = vadd.f32 %v4912, %v4928
      %v4945 = vadd.f32 %v4913, %v4931
      %v4946 = vadd.f32 %v4914, %v4934
      %v4947 = vadd.f32 %v4915, %v4937
      %v4948 = vadd.f32 %v4916, %v4940
      %4949 = vst.msk [vmem:[%s4900] sm:$0xff] %vm842, %v4941
      %4950 = vst.msk [vmem:[%s4900 + $0x8] sm:$0xff] %vm842, %v4942
      %4951 = vst.msk [vmem:[%s4900 + $0x10] sm:$0xff] %vm842, %v4943
      %4952 = vst.msk [vmem:[%s4900 + $0x18] sm:$0xff] %vm842, %v4944
      %4953 = vst.msk [vmem:[%s4900 + $0x20] sm:$0xff] %vm842, %v4945
      %4954 = vst.msk [vmem:[%s4900 + $0x28] sm:$0xff] %vm842, %v4946
      %4955 = vst.msk [vmem:[%s4900 + $0x30] sm:$0xff] %vm842, %v4947
      %4956 = vst.msk [vmem:[%s4900 + $0x38] sm:$0xff] %vm842, %v4948
      %s4957 = scalar_lea.vmem [#allocation4], 448
      %v4958 = vld [vmem:[%s4957] sm:$0xff]
      %v4959 = vld [vmem:[%s4957 + $0x8] sm:$0xff]
      %v4960 = vld [vmem:[%s4957 + $0x10] sm:$0xff]
      %v4961 = vld [vmem:[%s4957 + $0x18] sm:$0xff]
      %v4962 = vld [vmem:[%s4957 + $0x20] sm:$0xff]
      %v4963 = vld [vmem:[%s4957 + $0x28] sm:$0xff]
      %v4964 = vld [vmem:[%s4957 + $0x30] sm:$0xff]
      %v4965 = vld [vmem:[%s4957 + $0x38] sm:$0xff]
      %4967 = vset.pattern.permute.xlu0 0
      %4968 = vperm.xlu0 %4967, %v4821
      %v4969 = vpop.permute.xlu0 %4968
      %4972 = vset.pattern.permute.xlu0 0
      %4973 = vperm.xlu0 %4972, %v4823
      %v4974 = vpop.permute.xlu0 %4973
      %4977 = vset.pattern.permute.xlu0 0
      %4978 = vperm.xlu0 %4977, %v4825
      %v4979 = vpop.permute.xlu0 %4978
      %4982 = vset.pattern.permute.xlu0 0
      %4983 = vperm.xlu0 %4982, %v4827
      %v4984 = vpop.permute.xlu0 %4983
      %4987 = vset.pattern.permute.xlu0 0
      %4988 = vperm.xlu0 %4987, %v4829
      %v4989 = vpop.permute.xlu0 %4988
      %4992 = vset.pattern.permute.xlu0 0
      %4993 = vperm.xlu0 %4992, %v4831
      %v4994 = vpop.permute.xlu0 %4993
      %4997 = vset.pattern.permute.xlu0 0
      %4998 = vperm.xlu0 %4997, %v4833
      %v4999 = vpop.permute.xlu0 %4998
      %5002 = vset.pattern.permute.xlu0 0
      %5003 = vperm.xlu0 %5002, %v4835
      %v5004 = vpop.permute.xlu0 %5003
      %v5006 = vmul.f32 %v4969, %v4958
      %v5007 = vmul.f32 %v4974, %v4959
      %v5008 = vmul.f32 %v4979, %v4960
      %v5009 = vmul.f32 %v4984, %v4961
      %v5010 = vmul.f32 %v4989, %v4962
      %v5011 = vmul.f32 %v4994, %v4963
      %v5012 = vmul.f32 %v4999, %v4964
      %v5013 = vmul.f32 %v5004, %v4965
      %5014 = vrot.lane.b32.xlu0 %v503, 16
      %v5015 = vpop.permute.xlu0 %5014
      %5016 = vrot.lane.b32.xlu0 %v504, 16
      %v5017 = vpop.permute.xlu0 %5016
      %5018 = vrot.lane.b32.xlu0 %v505, 16
      %v5019 = vpop.permute.xlu0 %5018
      %5020 = vrot.lane.b32.xlu0 %v506, 16
      %v5021 = vpop.permute.xlu0 %5020
      %5022 = vrot.lane.b32.xlu0 %v507, 16
      %v5023 = vpop.permute.xlu0 %5022
      %5024 = vrot.lane.b32.xlu0 %v508, 16
      %v5025 = vpop.permute.xlu0 %5024
      %5026 = vrot.lane.b32.xlu0 %v509, 16
      %v5027 = vpop.permute.xlu0 %5026
      %5028 = vrot.lane.b32.xlu0 %v510, 16
      %v5029 = vpop.permute.xlu0 %5028
      %v5039 = vsel %vm673, %v4885, 0
      %v5042 = vsel %vm673, %v4887, 0
      %v5045 = vsel %vm673, %v4889, 0
      %v5048 = vsel %vm673, %v4891, 0
      %v5051 = vsel %vm673, %v4893, 0
      %v5054 = vsel %vm673, %v4895, 0
      %v5057 = vsel %vm673, %v4897, 0
      %v5060 = vsel %vm673, %v4899, 0
      %5062 = vmatprep.subr.mxu0 0.0
      %5063 = vmatpush1.msra.mxu0 %v5015
      %5064 = vmatprep.subr.mxu0 0.0
      %5065 = vmatpush1.msra.mxu0 %v5017
      %5066 = vmatprep.subr.mxu0 0.0
      %5067 = vmatpush1.msra.mxu0 %v5019
      %5068 = vmatprep.subr.mxu0 0.0
      %5069 = vmatpush1.msra.mxu0 %v5021
      %5070 = vmatprep.subr.mxu0 0.0
      %5071 = vmatpush1.msra.mxu0 %v5023
      %5072 = vmatprep.subr.mxu0 0.0
      %5073 = vmatpush1.msra.mxu0 %v5025
      %5074 = vmatprep.subr.mxu0 0.0
      %5075 = vmatpush1.msra.mxu0 %v5027
      %5076 = vmatprep.subr.mxu0 0.0
      %5077 = vmatpush1.msra.mxu0 %v5029
      %5078 = vmatprep.subr.mxu0 0.0
      %5079 = vmatpush1.msra.mxu0 0.0
      %5080 = vmatprep.subr.mxu0 0.0
      %5081 = vmatpush1.msra.mxu0 0.0
      %5082 = vmatprep.subr.mxu0 0.0
      %5083 = vmatpush1.msra.mxu0 0.0
      %5084 = vmatprep.subr.mxu0 0.0
      %5085 = vmatpush1.msra.mxu0 0.0
      %5086 = vmatprep.subr.mxu0 0.0
      %5087 = vmatpush1.msra.mxu0 0.0
      %5088 = vmatprep.subr.mxu0 0.0
      %5089 = vmatpush1.msra.mxu0 0.0
      %5090 = vmatprep.subr.mxu0 0.0
      %5091 = vmatpush1.msra.mxu0 0.0
      %5092 = vmatprep.subr.mxu0 0.0
      %5093 = vmatpush1.msra.mxu0 0.0
      %5094 = vmatprep.subr.mxu0 0.0
      %5095 = vmatpush1.msra.mxu0 0.0
      %5096 = vmatprep.subr.mxu0 0.0
      %5097 = vmatpush1.msra.mxu0 0.0
      %5098 = vmatprep.subr.mxu0 0.0
      %5099 = vmatpush1.msra.mxu0 0.0
      %5100 = vmatprep.subr.mxu0 0.0
      %5101 = vmatpush1.msra.mxu0 0.0
      %5102 = vmatprep.subr.mxu0 0.0
      %5103 = vmatpush1.msra.mxu0 0.0
      %5104 = vmatprep.subr.mxu0 0.0
      %5105 = vmatpush1.msra.mxu0 0.0
      %5106 = vmatprep.subr.mxu0 0.0
      %5107 = vmatpush1.msra.mxu0 0.0
      %5108 = vmatprep.subr.mxu0 0.0
      %5109 = vmatpush1.msra.mxu0 0.0
      %5110 = vmatprep.subr.mxu0 0.0
      %5111 = vmatpush1.msra.mxu0 0.0
      %5112 = vmatprep.subr.mxu0 0.0
      %5113 = vmatpush1.msra.mxu0 0.0
      %5114 = vmatprep.subr.mxu0 0.0
      %5115 = vmatpush1.msra.mxu0 0.0
      %5116 = vmatprep.subr.mxu0 0.0
      %5117 = vmatpush1.msra.mxu0 0.0
      %5118 = vmatprep.subr.mxu0 0.0
      %5119 = vmatpush1.msra.mxu0 0.0
      %5120 = vmatprep.subr.mxu0 0.0
      %5121 = vmatpush1.msra.mxu0 0.0
      %5122 = vmatprep.subr.mxu0 0.0
      %5123 = vmatpush1.msra.mxu0 0.0
      %5124 = vmatprep.subr.mxu0 0.0
      %5125 = vmatpush1.msra.mxu0 0.0
      %5126 = vmatprep.mubr.f32.mxu0 0.0
      %5127 = vmatmul.mubr.f32.gmra.mrb[0].mxu0 %v5039
      %v5128 = vpop.f32.mrb[0].mxu0
      %v5129 = vadd.f32 0.0, %v5128
      %v5130 = vpop.f32.mrb[0].mxu0
      %5131 = vmatprep.mubr.f32.mxu0 0.0
      %5132 = vmatmul.mubr.f32.gmra.mrb[0].mxu0 %v5042
      %v5133 = vpop.f32.mrb[0].mxu0
      %v5134 = vadd.f32 0.0, %v5133
      %v5135 = vpop.f32.mrb[0].mxu0
      %5136 = vmatprep.mubr.f32.mxu0 0.0
      %5137 = vmatmul.mubr.f32.gmra.mrb[0].mxu0 %v5045
      %v5138 = vpop.f32.mrb[0].mxu0
      %v5139 = vadd.f32 0.0, %v5138
      %v5140 = vpop.f32.mrb[0].mxu0
      %5141 = vmatprep.mubr.f32.mxu0 0.0
      %5142 = vmatmul.mubr.f32.gmra.mrb[0].mxu0 %v5048
      %v5143 = vpop.f32.mrb[0].mxu0
      %v5144 = vadd.f32 0.0, %v5143
      %v5145 = vpop.f32.mrb[0].mxu0
      %5146 = vmatprep.mubr.f32.mxu0 0.0
      %5147 = vmatmul.mubr.f32.gmra.mrb[0].mxu0 %v5051
      %v5148 = vpop.f32.mrb[0].mxu0
      %v5149 = vadd.f32 0.0, %v5148
      %v5150 = vpop.f32.mrb[0].mxu0
      %5151 = vmatprep.mubr.f32.mxu0 0.0
      %5152 = vmatmul.mubr.f32.gmra.mrb[0].mxu0 %v5054
      %v5153 = vpop.f32.mrb[0].mxu0
      %v5154 = vadd.f32 0.0, %v5153
      %v5155 = vpop.f32.mrb[0].mxu0
      %5156 = vmatprep.mubr.f32.mxu0 0.0
      %5157 = vmatmul.mubr.f32.gmra.mrb[0].mxu0 %v5057
      %v5158 = vpop.f32.mrb[0].mxu0
      %v5159 = vadd.f32 0.0, %v5158
      %v5160 = vpop.f32.mrb[0].mxu0
      %5161 = vmatprep.mubr.f32.mxu0 0.0
      %5162 = vmatmul.mubr.f32.gmra.mrb[0].mxu0 %v5060
      %v5163 = vpop.f32.mrb[0].mxu0
      %v5164 = vadd.f32 0.0, %v5163
      %v5165 = vpop.f32.mrb[0].mxu0
      %5166 = vdwg.mxu0
      %v5167 = vadd.f32 %v5006, %v5129
      %v5168 = vadd.f32 %v5007, %v5134
      %v5169 = vadd.f32 %v5008, %v5139
      %v5170 = vadd.f32 %v5009, %v5144
      %v5171 = vadd.f32 %v5010, %v5149
      %v5172 = vadd.f32 %v5011, %v5154
      %v5173 = vadd.f32 %v5012, %v5159
      %v5174 = vadd.f32 %v5013, %v5164
      %5175 = vst.msk [vmem:[%s4957] sm:$0xff] %vm511, %v5167
      %5176 = vst.msk [vmem:[%s4957 + $0x8] sm:$0xff] %vm511, %v5168
      %5177 = vst.msk [vmem:[%s4957 + $0x10] sm:$0xff] %vm511, %v5169
      %5178 = vst.msk [vmem:[%s4957 + $0x18] sm:$0xff] %vm511, %v5170
      %5179 = vst.msk [vmem:[%s4957 + $0x20] sm:$0xff] %vm511, %v5171
      %5180 = vst.msk [vmem:[%s4957 + $0x28] sm:$0xff] %vm511, %v5172
      %5181 = vst.msk [vmem:[%s4957 + $0x30] sm:$0xff] %vm511, %v5173
      %5182 = vst.msk [vmem:[%s4957 + $0x38] sm:$0xff] %vm511, %v5174
      %5183 = vst.msk [vmem:[%s4771] sm:$0xff] %vm842, %v4804
      %5184 = vst.msk [vmem:[%s4771 + $0x8] sm:$0xff] %vm842, %v4805
      %5185 = vst.msk [vmem:[%s4771 + $0x10] sm:$0xff] %vm842, %v4806
      %5186 = vst.msk [vmem:[%s4771 + $0x18] sm:$0xff] %vm842, %v4807
      %5187 = vst.msk [vmem:[%s4771 + $0x20] sm:$0xff] %vm842, %v4808
      %5188 = vst.msk [vmem:[%s4771 + $0x28] sm:$0xff] %vm842, %v4809
      %5189 = vst.msk [vmem:[%s4771 + $0x30] sm:$0xff] %vm842, %v4810
      %5190 = vst.msk [vmem:[%s4771 + $0x38] sm:$0xff] %vm842, %v4811
      %p5191 = scmp.eq.s32.totalorder %s21, 1
      // Predicated region
      $region37: #{self_attn_block.4} parent=31 // pred_check
        %p5192 = pneg %p5191
      $region38: #{self_attn_block.4} parent=31 // pred_check_branch
        %5194 = sbr.rel (%p5192) target = $region40
      $region39: #{self_attn_block.4} parent=31 // pred_region
        %v5195 = vld [vmem:[#allocation3] sm:$0xff]
        %v5196 = vld [vmem:[#allocation3 + $0x8] sm:$0xff]
        %v5197 = vld [vmem:[#allocation3 + $0x10] sm:$0xff]
        %v5198 = vld [vmem:[#allocation3 + $0x18] sm:$0xff]
        %v5199 = vld [vmem:[#allocation3 + $0x20] sm:$0xff]
        %v5200 = vld [vmem:[#allocation3 + $0x28] sm:$0xff]
        %v5201 = vld [vmem:[#allocation3 + $0x30] sm:$0xff]
        %v5202 = vld [vmem:[#allocation3 + $0x38] sm:$0xff]
        %v5203 = vld [vmem:[#allocation3 + $0x40] sm:$0xff]
        %v5204 = vld [vmem:[#allocation3 + $0x48] sm:$0xff]
        %v5205 = vld [vmem:[#allocation3 + $0x50] sm:$0xff]
        %v5206 = vld [vmem:[#allocation3 + $0x58] sm:$0xff]
        %v5207 = vld [vmem:[#allocation3 + $0x60] sm:$0xff]
        %v5208 = vld [vmem:[#allocation3 + $0x68] sm:$0xff]
        %v5209 = vld [vmem:[#allocation3 + $0x70] sm:$0xff]
        %v5210 = vld [vmem:[#allocation3 + $0x78] sm:$0xff]
        %v5211 = vld [vmem:[#allocation3 + $0x80] sm:$0xff]
        %v5212 = vld [vmem:[#allocation3 + $0x88] sm:$0xff]
        %v5213 = vld [vmem:[#allocation3 + $0x90] sm:$0xff]
        %v5214 = vld [vmem:[#allocation3 + $0x98] sm:$0xff]
        %v5215 = vld [vmem:[#allocation3 + $0xa0] sm:$0xff]
        %v5216 = vld [vmem:[#allocation3 + $0xa8] sm:$0xff]
        %v5217 = vld [vmem:[#allocation3 + $0xb0] sm:$0xff]
        %v5218 = vld [vmem:[#allocation3 + $0xb8] sm:$0xff]
        %v5219 = vld [vmem:[#allocation3 + $0xc0] sm:$0xff]
        %v5220 = vld [vmem:[#allocation3 + $0xc8] sm:$0xff]
        %v5221 = vld [vmem:[#allocation3 + $0xd0] sm:$0xff]
        %v5222 = vld [vmem:[#allocation3 + $0xd8] sm:$0xff]
        %v5223 = vld [vmem:[#allocation3 + $0xe0] sm:$0xff]
        %v5224 = vld [vmem:[#allocation3 + $0xe8] sm:$0xff]
        %v5225 = vld [vmem:[#allocation3 + $0xf0] sm:$0xff]
        %v5226 = vld [vmem:[#allocation3 + $0xf8] sm:$0xff]
        %v5227 = vld [vmem:[#allocation3 + $0x100] sm:$0xff]
        %v5228 = vld [vmem:[#allocation3 + $0x108] sm:$0xff]
        %v5229 = vld [vmem:[#allocation3 + $0x110] sm:$0xff]
        %v5230 = vld [vmem:[#allocation3 + $0x118] sm:$0xff]
        %v5231 = vld [vmem:[#allocation3 + $0x120] sm:$0xff]
        %v5232 = vld [vmem:[#allocation3 + $0x128] sm:$0xff]
        %v5233 = vld [vmem:[#allocation3 + $0x130] sm:$0xff]
        %v5234 = vld [vmem:[#allocation3 + $0x138] sm:$0xff]
        %v5235 = vld [vmem:[#allocation3 + $0x140] sm:$0xff]
        %v5236 = vld [vmem:[#allocation3 + $0x148] sm:$0xff]
        %v5237 = vld [vmem:[#allocation3 + $0x150] sm:$0xff]
        %v5238 = vld [vmem:[#allocation3 + $0x158] sm:$0xff]
        %v5239 = vld [vmem:[#allocation3 + $0x160] sm:$0xff]
        %v5240 = vld [vmem:[#allocation3 + $0x168] sm:$0xff]
        %v5241 = vld [vmem:[#allocation3 + $0x170] sm:$0xff]
        %v5242 = vld [vmem:[#allocation3 + $0x178] sm:$0xff]
        %v5243 = vld [vmem:[#allocation3 + $0x180] sm:$0xff]
        %v5244 = vld [vmem:[#allocation3 + $0x188] sm:$0xff]
        %v5245 = vld [vmem:[#allocation3 + $0x190] sm:$0xff]
        %v5246 = vld [vmem:[#allocation3 + $0x198] sm:$0xff]
        %v5247 = vld [vmem:[#allocation3 + $0x1a0] sm:$0xff]
        %v5248 = vld [vmem:[#allocation3 + $0x1a8] sm:$0xff]
        %v5249 = vld [vmem:[#allocation3 + $0x1b0] sm:$0xff]
        %v5250 = vld [vmem:[#allocation3 + $0x1b8] sm:$0xff]
        %v5251 = vld [vmem:[#allocation3 + $0x1c0] sm:$0xff]
        %v5252 = vld [vmem:[#allocation3 + $0x1c8] sm:$0xff]
        %v5253 = vld [vmem:[#allocation3 + $0x1d0] sm:$0xff]
        %v5254 = vld [vmem:[#allocation3 + $0x1d8] sm:$0xff]
        %v5255 = vld [vmem:[#allocation3 + $0x1e0] sm:$0xff]
        %v5256 = vld [vmem:[#allocation3 + $0x1e8] sm:$0xff]
        %v5257 = vld [vmem:[#allocation3 + $0x1f0] sm:$0xff]
        %v5258 = vld [vmem:[#allocation3 + $0x1f8] sm:$0xff]
        %v5259 = vrcp.pop %v5195
        %v5260 = vrcp.pop %v5196
        %v5261 = vrcp.pop %v5197
        %v5262 = vrcp.pop %v5198
        %v5263 = vrcp.pop %v5199
        %v5264 = vrcp.pop %v5200
        %v5265 = vrcp.pop %v5201
        %v5266 = vrcp.pop %v5202
        %v5267 = vrcp.pop %v5203
        %v5268 = vrcp.pop %v5204
        %v5269 = vrcp.pop %v5205
        %v5270 = vrcp.pop %v5206
        %v5271 = vrcp.pop %v5207
        %v5272 = vrcp.pop %v5208
        %v5273 = vrcp.pop %v5209
        %v5274 = vrcp.pop %v5210
        %v5275 = vrcp.pop %v5211
        %v5276 = vrcp.pop %v5212
        %v5277 = vrcp.pop %v5213
        %v5278 = vrcp.pop %v5214
        %v5279 = vrcp.pop %v5215
        %v5280 = vrcp.pop %v5216
        %v5281 = vrcp.pop %v5217
        %v5282 = vrcp.pop %v5218
        %v5283 = vrcp.pop %v5219
        %v5284 = vrcp.pop %v5220
        %v5285 = vrcp.pop %v5221
        %v5286 = vrcp.pop %v5222
        %v5287 = vrcp.pop %v5223
        %v5288 = vrcp.pop %v5224
        %v5289 = vrcp.pop %v5225
        %v5290 = vrcp.pop %v5226
        %v5291 = vrcp.pop %v5227
        %v5292 = vrcp.pop %v5228
        %v5293 = vrcp.pop %v5229
        %v5294 = vrcp.pop %v5230
        %v5295 = vrcp.pop %v5231
        %v5296 = vrcp.pop %v5232
        %v5297 = vrcp.pop %v5233
        %v5298 = vrcp.pop %v5234
        %v5299 = vrcp.pop %v5235
        %v5300 = vrcp.pop %v5236
        %v5301 = vrcp.pop %v5237
        %v5302 = vrcp.pop %v5238
        %v5303 = vrcp.pop %v5239
        %v5304 = vrcp.pop %v5240
        %v5305 = vrcp.pop %v5241
        %v5306 = vrcp.pop %v5242
        %v5307 = vrcp.pop %v5243
        %v5308 = vrcp.pop %v5244
        %v5309 = vrcp.pop %v5245
        %v5310 = vrcp.pop %v5246
        %v5311 = vrcp.pop %v5247
        %v5312 = vrcp.pop %v5248
        %v5313 = vrcp.pop %v5249
        %v5314 = vrcp.pop %v5250
        %v5315 = vrcp.pop %v5251
        %v5316 = vrcp.pop %v5252
        %v5317 = vrcp.pop %v5253
        %v5318 = vrcp.pop %v5254
        %v5319 = vrcp.pop %v5255
        %v5320 = vrcp.pop %v5256
        %v5321 = vrcp.pop %v5257
        %v5322 = vrcp.pop %v5258
        %v5323 = vld [vmem:[#allocation4] sm:$0xff]
        %v5324 = vld [vmem:[#allocation4 + $0x8] sm:$0xff]
        %v5325 = vld [vmem:[#allocation4 + $0x10] sm:$0xff]
        %v5326 = vld [vmem:[#allocation4 + $0x18] sm:$0xff]
        %v5327 = vld [vmem:[#allocation4 + $0x20] sm:$0xff]
        %v5328 = vld [vmem:[#allocation4 + $0x28] sm:$0xff]
        %v5329 = vld [vmem:[#allocation4 + $0x30] sm:$0xff]
        %v5330 = vld [vmem:[#allocation4 + $0x38] sm:$0xff]
        %v5331 = vld [vmem:[#allocation4 + $0x40] sm:$0xff]
        %v5332 = vld [vmem:[#allocation4 + $0x48] sm:$0xff]
        %v5333 = vld [vmem:[#allocation4 + $0x50] sm:$0xff]
        %v5334 = vld [vmem:[#allocation4 + $0x58] sm:$0xff]
        %v5335 = vld [vmem:[#allocation4 + $0x60] sm:$0xff]
        %v5336 = vld [vmem:[#allocation4 + $0x68] sm:$0xff]
        %v5337 = vld [vmem:[#allocation4 + $0x70] sm:$0xff]
        %v5338 = vld [vmem:[#allocation4 + $0x78] sm:$0xff]
        %v5339 = vld [vmem:[#allocation4 + $0x80] sm:$0xff]
        %v5340 = vld [vmem:[#allocation4 + $0x88] sm:$0xff]
        %v5341 = vld [vmem:[#allocation4 + $0x90] sm:$0xff]
        %v5342 = vld [vmem:[#allocation4 + $0x98] sm:$0xff]
        %v5343 = vld [vmem:[#allocation4 + $0xa0] sm:$0xff]
        %v5344 = vld [vmem:[#allocation4 + $0xa8] sm:$0xff]
        %v5345 = vld [vmem:[#allocation4 + $0xb0] sm:$0xff]
        %v5346 = vld [vmem:[#allocation4 + $0xb8] sm:$0xff]
        %v5347 = vld [vmem:[#allocation4 + $0xc0] sm:$0xff]
        %v5348 = vld [vmem:[#allocation4 + $0xc8] sm:$0xff]
        %v5349 = vld [vmem:[#allocation4 + $0xd0] sm:$0xff]
        %v5350 = vld [vmem:[#allocation4 + $0xd8] sm:$0xff]
        %v5351 = vld [vmem:[#allocation4 + $0xe0] sm:$0xff]
        %v5352 = vld [vmem:[#allocation4 + $0xe8] sm:$0xff]
        %v5353 = vld [vmem:[#allocation4 + $0xf0] sm:$0xff]
        %v5354 = vld [vmem:[#allocation4 + $0xf8] sm:$0xff]
        %v5355 = vld [vmem:[#allocation4 + $0x100] sm:$0xff]
        %v5356 = vld [vmem:[#allocation4 + $0x108] sm:$0xff]
        %v5357 = vld [vmem:[#allocation4 + $0x110] sm:$0xff]
        %v5358 = vld [vmem:[#allocation4 + $0x118] sm:$0xff]
        %v5359 = vld [vmem:[#allocation4 + $0x120] sm:$0xff]
        %v5360 = vld [vmem:[#allocation4 + $0x128] sm:$0xff]
        %v5361 = vld [vmem:[#allocation4 + $0x130] sm:$0xff]
        %v5362 = vld [vmem:[#allocation4 + $0x138] sm:$0xff]
        %v5363 = vld [vmem:[#allocation4 + $0x140] sm:$0xff]
        %v5364 = vld [vmem:[#allocation4 + $0x148] sm:$0xff]
        %v5365 = vld [vmem:[#allocation4 + $0x150] sm:$0xff]
        %v5366 = vld [vmem:[#allocation4 + $0x158] sm:$0xff]
        %v5367 = vld [vmem:[#allocation4 + $0x160] sm:$0xff]
        %v5368 = vld [vmem:[#allocation4 + $0x168] sm:$0xff]
        %v5369 = vld [vmem:[#allocation4 + $0x170] sm:$0xff]
        %v5370 = vld [vmem:[#allocation4 + $0x178] sm:$0xff]
        %v5371 = vld [vmem:[#allocation4 + $0x180] sm:$0xff]
        %v5372 = vld [vmem:[#allocation4 + $0x188] sm:$0xff]
        %v5373 = vld [vmem:[#allocation4 + $0x190] sm:$0xff]
        %v5374 = vld [vmem:[#allocation4 + $0x198] sm:$0xff]
        %v5375 = vld [vmem:[#allocation4 + $0x1a0] sm:$0xff]
        %v5376 = vld [vmem:[#allocation4 + $0x1a8] sm:$0xff]
        %v5377 = vld [vmem:[#allocation4 + $0x1b0] sm:$0xff]
        %v5378 = vld [vmem:[#allocation4 + $0x1b8] sm:$0xff]
        %v5379 = vld [vmem:[#allocation4 + $0x1c0] sm:$0xff]
        %v5380 = vld [vmem:[#allocation4 + $0x1c8] sm:$0xff]
        %v5381 = vld [vmem:[#allocation4 + $0x1d0] sm:$0xff]
        %v5382 = vld [vmem:[#allocation4 + $0x1d8] sm:$0xff]
        %v5383 = vld [vmem:[#allocation4 + $0x1e0] sm:$0xff]
        %v5384 = vld [vmem:[#allocation4 + $0x1e8] sm:$0xff]
        %v5385 = vld [vmem:[#allocation4 + $0x1f0] sm:$0xff]
        %v5386 = vld [vmem:[#allocation4 + $0x1f8] sm:$0xff]
        %5388 = vset.pattern.permute.xlu0 0
        %5389 = vperm.xlu0 %5388, %v5259
        %v5390 = vpop.permute.xlu0 %5389
        %5393 = vset.pattern.permute.xlu0 0
        %5394 = vperm.xlu0 %5393, %v5260
        %v5395 = vpop.permute.xlu0 %5394
        %5398 = vset.pattern.permute.xlu0 0
        %5399 = vperm.xlu0 %5398, %v5261
        %v5400 = vpop.permute.xlu0 %5399
        %5403 = vset.pattern.permute.xlu0 0
        %5404 = vperm.xlu0 %5403, %v5262
        %v5405 = vpop.permute.xlu0 %5404
        %5408 = vset.pattern.permute.xlu0 0
        %5409 = vperm.xlu0 %5408, %v5263
        %v5410 = vpop.permute.xlu0 %5409
        %5413 = vset.pattern.permute.xlu0 0
        %5414 = vperm.xlu0 %5413, %v5264
        %v5415 = vpop.permute.xlu0 %5414
        %5418 = vset.pattern.permute.xlu0 0
        %5419 = vperm.xlu0 %5418, %v5265
        %v5420 = vpop.permute.xlu0 %5419
        %5423 = vset.pattern.permute.xlu0 0
        %5424 = vperm.xlu0 %5423, %v5266
        %v5425 = vpop.permute.xlu0 %5424
        %5428 = vset.pattern.permute.xlu0 0
        %5429 = vperm.xlu0 %5428, %v5267
        %v5430 = vpop.permute.xlu0 %5429
        %5433 = vset.pattern.permute.xlu0 0
        %5434 = vperm.xlu0 %5433, %v5268
        %v5435 = vpop.permute.xlu0 %5434
        %5438 = vset.pattern.permute.xlu0 0
        %5439 = vperm.xlu0 %5438, %v5269
        %v5440 = vpop.permute.xlu0 %5439
        %5443 = vset.pattern.permute.xlu0 0
        %5444 = vperm.xlu0 %5443, %v5270
        %v5445 = vpop.permute.xlu0 %5444
        %5448 = vset.pattern.permute.xlu0 0
        %5449 = vperm.xlu0 %5448, %v5271
        %v5450 = vpop.permute.xlu0 %5449
        %5453 = vset.pattern.permute.xlu0 0
        %5454 = vperm.xlu0 %5453, %v5272
        %v5455 = vpop.permute.xlu0 %5454
        %5458 = vset.pattern.permute.xlu0 0
        %5459 = vperm.xlu0 %5458, %v5273
        %v5460 = vpop.permute.xlu0 %5459
        %5463 = vset.pattern.permute.xlu0 0
        %5464 = vperm.xlu0 %5463, %v5274
        %v5465 = vpop.permute.xlu0 %5464
        %5468 = vset.pattern.permute.xlu0 0
        %5469 = vperm.xlu0 %5468, %v5275
        %v5470 = vpop.permute.xlu0 %5469
        %5473 = vset.pattern.permute.xlu0 0
        %5474 = vperm.xlu0 %5473, %v5276
        %v5475 = vpop.permute.xlu0 %5474
        %5478 = vset.pattern.permute.xlu0 0
        %5479 = vperm.xlu0 %5478, %v5277
        %v5480 = vpop.permute.xlu0 %5479
        %5483 = vset.pattern.permute.xlu0 0
        %5484 = vperm.xlu0 %5483, %v5278
        %v5485 = vpop.permute.xlu0 %5484
        %5488 = vset.pattern.permute.xlu0 0
        %5489 = vperm.xlu0 %5488, %v5279
        %v5490 = vpop.permute.xlu0 %5489
        %5493 = vset.pattern.permute.xlu0 0
        %5494 = vperm.xlu0 %5493, %v5280
        %v5495 = vpop.permute.xlu0 %5494
        %5498 = vset.pattern.permute.xlu0 0
        %5499 = vperm.xlu0 %5498, %v5281
        %v5500 = vpop.permute.xlu0 %5499
        %5503 = vset.pattern.permute.xlu0 0
        %5504 = vperm.xlu0 %5503, %v5282
        %v5505 = vpop.permute.xlu0 %5504
        %5508 = vset.pattern.permute.xlu0 0
        %5509 = vperm.xlu0 %5508, %v5283
        %v5510 = vpop.permute.xlu0 %5509
        %5513 = vset.pattern.permute.xlu0 0
        %5514 = vperm.xlu0 %5513, %v5284
        %v5515 = vpop.permute.xlu0 %5514
        %5518 = vset.pattern.permute.xlu0 0
        %5519 = vperm.xlu0 %5518, %v5285
        %v5520 = vpop.permute.xlu0 %5519
        %5523 = vset.pattern.permute.xlu0 0
        %5524 = vperm.xlu0 %5523, %v5286
        %v5525 = vpop.permute.xlu0 %5524
        %5528 = vset.pattern.permute.xlu0 0
        %5529 = vperm.xlu0 %5528, %v5287
        %v5530 = vpop.permute.xlu0 %5529
        %5533 = vset.pattern.permute.xlu0 0
        %5534 = vperm.xlu0 %5533, %v5288
        %v5535 = vpop.permute.xlu0 %5534
        %5538 = vset.pattern.permute.xlu0 0
        %5539 = vperm.xlu0 %5538, %v5289
        %v5540 = vpop.permute.xlu0 %5539
        %5543 = vset.pattern.permute.xlu0 0
        %5544 = vperm.xlu0 %5543, %v5290
        %v5545 = vpop.permute.xlu0 %5544
        %5548 = vset.pattern.permute.xlu0 0
        %5549 = vperm.xlu0 %5548, %v5291
        %v5550 = vpop.permute.xlu0 %5549
        %5553 = vset.pattern.permute.xlu0 0
        %5554 = vperm.xlu0 %5553, %v5292
        %v5555 = vpop.permute.xlu0 %5554
        %5558 = vset.pattern.permute.xlu0 0
        %5559 = vperm.xlu0 %5558, %v5293
        %v5560 = vpop.permute.xlu0 %5559
        %5563 = vset.pattern.permute.xlu0 0
        %5564 = vperm.xlu0 %5563, %v5294
        %v5565 = vpop.permute.xlu0 %5564
        %5568 = vset.pattern.permute.xlu0 0
        %5569 = vperm.xlu0 %5568, %v5295
        %v5570 = vpop.permute.xlu0 %5569
        %5573 = vset.pattern.permute.xlu0 0
        %5574 = vperm.xlu0 %5573, %v5296
        %v5575 = vpop.permute.xlu0 %5574
        %5578 = vset.pattern.permute.xlu0 0
        %5579 = vperm.xlu0 %5578, %v5297
        %v5580 = vpop.permute.xlu0 %5579
        %5583 = vset.pattern.permute.xlu0 0
        %5584 = vperm.xlu0 %5583, %v5298
        %v5585 = vpop.permute.xlu0 %5584
        %5588 = vset.pattern.permute.xlu0 0
        %5589 = vperm.xlu0 %5588, %v5299
        %v5590 = vpop.permute.xlu0 %5589
        %5593 = vset.pattern.permute.xlu0 0
        %5594 = vperm.xlu0 %5593, %v5300
        %v5595 = vpop.permute.xlu0 %5594
        %5598 = vset.pattern.permute.xlu0 0
        %5599 = vperm.xlu0 %5598, %v5301
        %v5600 = vpop.permute.xlu0 %5599
        %5603 = vset.pattern.permute.xlu0 0
        %5604 = vperm.xlu0 %5603, %v5302
        %v5605 = vpop.permute.xlu0 %5604
        %5608 = vset.pattern.permute.xlu0 0
        %5609 = vperm.xlu0 %5608, %v5303
        %v5610 = vpop.permute.xlu0 %5609
        %5613 = vset.pattern.permute.xlu0 0
        %5614 = vperm.xlu0 %5613, %v5304
        %v5615 = vpop.permute.xlu0 %5614
        %5618 = vset.pattern.permute.xlu0 0
        %5619 = vperm.xlu0 %5618, %v5305
        %v5620 = vpop.permute.xlu0 %5619
        %5623 = vset.pattern.permute.xlu0 0
        %5624 = vperm.xlu0 %5623, %v5306
        %v5625 = vpop.permute.xlu0 %5624
        %5628 = vset.pattern.permute.xlu0 0
        %5629 = vperm.xlu0 %5628, %v5307
        %v5630 = vpop.permute.xlu0 %5629
        %5633 = vset.pattern.permute.xlu0 0
        %5634 = vperm.xlu0 %5633, %v5308
        %v5635 = vpop.permute.xlu0 %5634
        %5638 = vset.pattern.permute.xlu0 0
        %5639 = vperm.xlu0 %5638, %v5309
        %v5640 = vpop.permute.xlu0 %5639
        %5643 = vset.pattern.permute.xlu0 0
        %5644 = vperm.xlu0 %5643, %v5310
        %v5645 = vpop.permute.xlu0 %5644
        %5648 = vset.pattern.permute.xlu0 0
        %5649 = vperm.xlu0 %5648, %v5311
        %v5650 = vpop.permute.xlu0 %5649
        %5653 = vset.pattern.permute.xlu0 0
        %5654 = vperm.xlu0 %5653, %v5312
        %v5655 = vpop.permute.xlu0 %5654
        %5658 = vset.pattern.permute.xlu0 0
        %5659 = vperm.xlu0 %5658, %v5313
        %v5660 = vpop.permute.xlu0 %5659
        %5663 = vset.pattern.permute.xlu0 0
        %5664 = vperm.xlu0 %5663, %v5314
        %v5665 = vpop.permute.xlu0 %5664
        %5668 = vset.pattern.permute.xlu0 0
        %5669 = vperm.xlu0 %5668, %v5315
        %v5670 = vpop.permute.xlu0 %5669
        %5673 = vset.pattern.permute.xlu0 0
        %5674 = vperm.xlu0 %5673, %v5316
        %v5675 = vpop.permute.xlu0 %5674
        %5678 = vset.pattern.permute.xlu0 0
        %5679 = vperm.xlu0 %5678, %v5317
        %v5680 = vpop.permute.xlu0 %5679
        %5683 = vset.pattern.permute.xlu0 0
        %5684 = vperm.xlu0 %5683, %v5318
        %v5685 = vpop.permute.xlu0 %5684
        %5688 = vset.pattern.permute.xlu0 0
        %5689 = vperm.xlu0 %5688, %v5319
        %v5690 = vpop.permute.xlu0 %5689
        %5693 = vset.pattern.permute.xlu0 0
        %5694 = vperm.xlu0 %5693, %v5320
        %v5695 = vpop.permute.xlu0 %5694
        %5698 = vset.pattern.permute.xlu0 0
        %5699 = vperm.xlu0 %5698, %v5321
        %v5700 = vpop.permute.xlu0 %5699
        %5703 = vset.pattern.permute.xlu0 0
        %5704 = vperm.xlu0 %5703, %v5322
        %v5705 = vpop.permute.xlu0 %5704
        %v5707 = vmul.f32 %v5323, %v5390
        %v5708 = vmul.f32 %v5324, %v5395
        %v5709 = vmul.f32 %v5325, %v5400
        %v5710 = vmul.f32 %v5326, %v5405
        %v5711 = vmul.f32 %v5327, %v5410
        %v5712 = vmul.f32 %v5328, %v5415
        %v5713 = vmul.f32 %v5329, %v5420
        %v5714 = vmul.f32 %v5330, %v5425
        %v5715 = vmul.f32 %v5331, %v5430
        %v5716 = vmul.f32 %v5332, %v5435
        %v5717 = vmul.f32 %v5333, %v5440
        %v5718 = vmul.f32 %v5334, %v5445
        %v5719 = vmul.f32 %v5335, %v5450
        %v5720 = vmul.f32 %v5336, %v5455
        %v5721 = vmul.f32 %v5337, %v5460
        %v5722 = vmul.f32 %v5338, %v5465
        %v5723 = vmul.f32 %v5339, %v5470
        %v5724 = vmul.f32 %v5340, %v5475
        %v5725 = vmul.f32 %v5341, %v5480
        %v5726 = vmul.f32 %v5342, %v5485
        %v5727 = vmul.f32 %v5343, %v5490
        %v5728 = vmul.f32 %v5344, %v5495
        %v5729 = vmul.f32 %v5345, %v5500
        %v5730 = vmul.f32 %v5346, %v5505
        %v5731 = vmul.f32 %v5347, %v5510
        %v5732 = vmul.f32 %v5348, %v5515
        %v5733 = vmul.f32 %v5349, %v5520
        %v5734 = vmul.f32 %v5350, %v5525
        %v5735 = vmul.f32 %v5351, %v5530
        %v5736 = vmul.f32 %v5352, %v5535
        %v5737 = vmul.f32 %v5353, %v5540
        %v5738 = vmul.f32 %v5354, %v5545
        %v5739 = vmul.f32 %v5355, %v5550
        %v5740 = vmul.f32 %v5356, %v5555
        %v5741 = vmul.f32 %v5357, %v5560
        %v5742 = vmul.f32 %v5358, %v5565
        %v5743 = vmul.f32 %v5359, %v5570
        %v5744 = vmul.f32 %v5360, %v5575
        %v5745 = vmul.f32 %v5361, %v5580
        %v5746 = vmul.f32 %v5362, %v5585
        %v5747 = vmul.f32 %v5363, %v5590
        %v5748 = vmul.f32 %v5364, %v5595
        %v5749 = vmul.f32 %v5365, %v5600
        %v5750 = vmul.f32 %v5366, %v5605
        %v5751 = vmul.f32 %v5367, %v5610
        %v5752 = vmul.f32 %v5368, %v5615
        %v5753 = vmul.f32 %v5369, %v5620
        %v5754 = vmul.f32 %v5370, %v5625
        %v5755 = vmul.f32 %v5371, %v5630
        %v5756 = vmul.f32 %v5372, %v5635
        %v5757 = vmul.f32 %v5373, %v5640
        %v5758 = vmul.f32 %v5374, %v5645
        %v5759 = vmul.f32 %v5375, %v5650
        %v5760 = vmul.f32 %v5376, %v5655
        %v5761 = vmul.f32 %v5377, %v5660
        %v5762 = vmul.f32 %v5378, %v5665
        %v5763 = vmul.f32 %v5379, %v5670
        %v5764 = vmul.f32 %v5380, %v5675
        %v5765 = vmul.f32 %v5381, %v5680
        %v5766 = vmul.f32 %v5382, %v5685
        %v5767 = vmul.f32 %v5383, %v5690
        %v5768 = vmul.f32 %v5384, %v5695
        %v5769 = vmul.f32 %v5385, %v5700
        %v5770 = vmul.f32 %v5386, %v5705
        %5779 = vrot.lane.b32.xlu0 %v5715, 16
        %v5780 = vpop.permute.xlu0 %5779
        %5781 = vrot.lane.b32.xlu0 %v5716, 16
        %v5782 = vpop.permute.xlu0 %5781
        %5783 = vrot.lane.b32.xlu0 %v5717, 16
        %v5784 = vpop.permute.xlu0 %5783
        %5785 = vrot.lane.b32.xlu0 %v5718, 16
        %v5786 = vpop.permute.xlu0 %5785
        %5787 = vrot.lane.b32.xlu0 %v5719, 16
        %v5788 = vpop.permute.xlu0 %5787
        %5789 = vrot.lane.b32.xlu0 %v5720, 16
        %v5790 = vpop.permute.xlu0 %5789
        %5791 = vrot.lane.b32.xlu0 %v5721, 16
        %v5792 = vpop.permute.xlu0 %5791
        %5793 = vrot.lane.b32.xlu0 %v5722, 16
        %v5794 = vpop.permute.xlu0 %5793
        %5811 = vrot.lane.b32.xlu0 %v5723, 32
        %v5812 = vpop.permute.xlu0 %5811
        %5813 = vrot.lane.b32.xlu0 %v5724, 32
        %v5814 = vpop.permute.xlu0 %5813
        %5815 = vrot.lane.b32.xlu0 %v5725, 32
        %v5816 = vpop.permute.xlu0 %5815
        %5817 = vrot.lane.b32.xlu0 %v5726, 32
        %v5818 = vpop.permute.xlu0 %5817
        %5819 = vrot.lane.b32.xlu0 %v5727, 32
        %v5820 = vpop.permute.xlu0 %5819
        %5821 = vrot.lane.b32.xlu0 %v5728, 32
        %v5822 = vpop.permute.xlu0 %5821
        %5823 = vrot.lane.b32.xlu0 %v5729, 32
        %v5824 = vpop.permute.xlu0 %5823
        %5825 = vrot.lane.b32.xlu0 %v5730, 32
        %v5826 = vpop.permute.xlu0 %5825
        %5843 = vrot.lane.b32.xlu0 %v5731, 48
        %v5844 = vpop.permute.xlu0 %5843
        %5845 = vrot.lane.b32.xlu0 %v5732, 48
        %v5846 = vpop.permute.xlu0 %5845
        %5847 = vrot.lane.b32.xlu0 %v5733, 48
        %v5848 = vpop.permute.xlu0 %5847
        %5849 = vrot.lane.b32.xlu0 %v5734, 48
        %v5850 = vpop.permute.xlu0 %5849
        %5851 = vrot.lane.b32.xlu0 %v5735, 48
        %v5852 = vpop.permute.xlu0 %5851
        %5853 = vrot.lane.b32.xlu0 %v5736, 48
        %v5854 = vpop.permute.xlu0 %5853
        %5855 = vrot.lane.b32.xlu0 %v5737, 48
        %v5856 = vpop.permute.xlu0 %5855
        %5857 = vrot.lane.b32.xlu0 %v5738, 48
        %v5858 = vpop.permute.xlu0 %5857
        %5875 = vrot.lane.b32.xlu0 %v5739, 64
        %v5876 = vpop.permute.xlu0 %5875
        %5877 = vrot.lane.b32.xlu0 %v5740, 64
        %v5878 = vpop.permute.xlu0 %5877
        %5879 = vrot.lane.b32.xlu0 %v5741, 64
        %v5880 = vpop.permute.xlu0 %5879
        %5881 = vrot.lane.b32.xlu0 %v5742, 64
        %v5882 = vpop.permute.xlu0 %5881
        %5883 = vrot.lane.b32.xlu0 %v5743, 64
        %v5884 = vpop.permute.xlu0 %5883
        %5885 = vrot.lane.b32.xlu0 %v5744, 64
        %v5886 = vpop.permute.xlu0 %5885
        %5887 = vrot.lane.b32.xlu0 %v5745, 64
        %v5888 = vpop.permute.xlu0 %5887
        %5889 = vrot.lane.b32.xlu0 %v5746, 64
        %v5890 = vpop.permute.xlu0 %5889
        %5907 = vrot.lane.b32.xlu0 %v5747, 80
        %v5908 = vpop.permute.xlu0 %5907
        %5909 = vrot.lane.b32.xlu0 %v5748, 80
        %v5910 = vpop.permute.xlu0 %5909
        %5911 = vrot.lane.b32.xlu0 %v5749, 80
        %v5912 = vpop.permute.xlu0 %5911
        %5913 = vrot.lane.b32.xlu0 %v5750, 80
        %v5914 = vpop.permute.xlu0 %5913
        %5915 = vrot.lane.b32.xlu0 %v5751, 80
        %v5916 = vpop.permute.xlu0 %5915
        %5917 = vrot.lane.b32.xlu0 %v5752, 80
        %v5918 = vpop.permute.xlu0 %5917
        %5919 = vrot.lane.b32.xlu0 %v5753, 80
        %v5920 = vpop.permute.xlu0 %5919
        %5921 = vrot.lane.b32.xlu0 %v5754, 80
        %v5922 = vpop.permute.xlu0 %5921
        %5939 = vrot.lane.b32.xlu0 %v5755, 96
        %v5940 = vpop.permute.xlu0 %5939
        %5941 = vrot.lane.b32.xlu0 %v5756, 96
        %v5942 = vpop.permute.xlu0 %5941
        %5943 = vrot.lane.b32.xlu0 %v5757, 96
        %v5944 = vpop.permute.xlu0 %5943
        %5945 = vrot.lane.b32.xlu0 %v5758, 96
        %v5946 = vpop.permute.xlu0 %5945
        %5947 = vrot.lane.b32.xlu0 %v5759, 96
        %v5948 = vpop.permute.xlu0 %5947
        %5949 = vrot.lane.b32.xlu0 %v5760, 96
        %v5950 = vpop.permute.xlu0 %5949
        %5951 = vrot.lane.b32.xlu0 %v5761, 96
        %v5952 = vpop.permute.xlu0 %5951
        %5953 = vrot.lane.b32.xlu0 %v5762, 96
        %v5954 = vpop.permute.xlu0 %5953
        %5971 = vrot.lane.b32.xlu0 %v5763, 112
        %v5972 = vpop.permute.xlu0 %5971
        %5973 = vrot.lane.b32.xlu0 %v5764, 112
        %v5974 = vpop.permute.xlu0 %5973
        %5975 = vrot.lane.b32.xlu0 %v5765, 112
        %v5976 = vpop.permute.xlu0 %5975
        %5977 = vrot.lane.b32.xlu0 %v5766, 112
        %v5978 = vpop.permute.xlu0 %5977
        %5979 = vrot.lane.b32.xlu0 %v5767, 112
        %v5980 = vpop.permute.xlu0 %5979
        %5981 = vrot.lane.b32.xlu0 %v5768, 112
        %v5982 = vpop.permute.xlu0 %5981
        %5983 = vrot.lane.b32.xlu0 %v5769, 112
        %v5984 = vpop.permute.xlu0 %5983
        %5985 = vrot.lane.b32.xlu0 %v5770, 112
        %v5986 = vpop.permute.xlu0 %5985
        %v5995 = vsel %vm511, %v5707, %v5780
        %v5996 = vsel %vm511, %v5708, %v5782
        %v5997 = vsel %vm511, %v5709, %v5784
        %v5998 = vsel %vm511, %v5710, %v5786
        %v5999 = vsel %vm511, %v5711, %v5788
        %v6000 = vsel %vm511, %v5712, %v5790
        %v6001 = vsel %vm511, %v5713, %v5792
        %v6002 = vsel %vm511, %v5714, %v5794
        %vm6003 = vcmask 261120
        %v6004 = vsel %vm6003, %v5995, %v5812
        %v6005 = vsel %vm6003, %v5996, %v5814
        %v6006 = vsel %vm6003, %v5997, %v5816
        %v6007 = vsel %vm6003, %v5998, %v5818
        %v6008 = vsel %vm6003, %v5999, %v5820
        %v6009 = vsel %vm6003, %v6000, %v5822
        %v6010 = vsel %vm6003, %v6001, %v5824
        %v6011 = vsel %vm6003, %v6002, %v5826
        %vm6012 = vcmask 392192
        %v6013 = vsel %vm6012, %v6004, %v5844
        %v6014 = vsel %vm6012, %v6005, %v5846
        %v6015 = vsel %vm6012, %v6006, %v5848
        %v6016 = vsel %vm6012, %v6007, %v5850
        %v6017 = vsel %vm6012, %v6008, %v5852
        %v6018 = vsel %vm6012, %v6009, %v5854
        %v6019 = vsel %vm6012, %v6010, %v5856
        %v6020 = vsel %vm6012, %v6011, %v5858
        %v6021 = vsel %vm673, %v6013, %v5876
        %v6022 = vsel %vm673, %v6014, %v5878
        %v6023 = vsel %vm673, %v6015, %v5880
        %v6024 = vsel %vm673, %v6016, %v5882
        %v6025 = vsel %vm673, %v6017, %v5884
        %v6026 = vsel %vm673, %v6018, %v5886
        %v6027 = vsel %vm673, %v6019, %v5888
        %v6028 = vsel %vm673, %v6020, %v5890
        %vm6029 = vcmask 654336
        %v6030 = vsel %vm6029, %v6021, %v5908
        %v6031 = vsel %vm6029, %v6022, %v5910
        %v6032 = vsel %vm6029, %v6023, %v5912
        %v6033 = vsel %vm6029, %v6024, %v5914
        %v6034 = vsel %vm6029, %v6025, %v5916
        %v6035 = vsel %vm6029, %v6026, %v5918
        %v6036 = vsel %vm6029, %v6027, %v5920
        %v6037 = vsel %vm6029, %v6028, %v5922
        %vm6038 = vcmask 785408
        %v6039 = vsel %vm6038, %v6030, %v5940
        %v6040 = vsel %vm6038, %v6031, %v5942
        %v6041 = vsel %vm6038, %v6032, %v5944
        %v6042 = vsel %vm6038, %v6033, %v5946
        %v6043 = vsel %vm6038, %v6034, %v5948
        %v6044 = vsel %vm6038, %v6035, %v5950
        %v6045 = vsel %vm6038, %v6036, %v5952
        %v6046 = vsel %vm6038, %v6037, %v5954
        %vm6047 = vcmask 916480
        %v6048 = vsel %vm6047, %v6039, %v5972
        %v6049 = vsel %vm6047, %v6040, %v5974
        %v6050 = vsel %vm6047, %v6041, %v5976
        %v6051 = vsel %vm6047, %v6042, %v5978
        %v6052 = vsel %vm6047, %v6043, %v5980
        %v6053 = vsel %vm6047, %v6044, %v5982
        %v6054 = vsel %vm6047, %v6045, %v5984
        %v6055 = vsel %vm6047, %v6046, %v5986
        %6056 = vst [vmem:[%s287] sm:$0xff] %v6048
        %6057 = vst [vmem:[%s287 + $0x8] sm:$0xff] %v6049
        %6058 = vst [vmem:[%s287 + $0x10] sm:$0xff] %v6050
        %6059 = vst [vmem:[%s287 + $0x18] sm:$0xff] %v6051
        %6060 = vst [vmem:[%s287 + $0x20] sm:$0xff] %v6052
        %6061 = vst [vmem:[%s287 + $0x28] sm:$0xff] %v6053
        %6062 = vst [vmem:[%s287 + $0x30] sm:$0xff] %v6054
        %6063 = vst [vmem:[%s287 + $0x38] sm:$0xff] %v6055
      $region40: #{self_attn_block.4} parent=31 // pred_fallthru
        _
      %s6064 = smul.u32 8, %s20
      %p6065 = scmp.lt.s32.totalorder %s19, 1
      %s6066 = scalar_select %p6065, %s19, 1
      %p6067 = scmp.lt.s32.totalorder %s6064, 15
      %s6068 = scalar_select %p6067, %s6064, 15
      %s6069 = smul.addr %s6066, 16
      %s6070 = sadd.s32 %s6068, %s6069
      %s6071 = smul.addr %s6070, 8
      %s6072 = scalar_lea.vmem %s3, %s6071
      // Predicated region
      $region41: #{self_attn_block.4} parent=31 // pred_check
        %p6073 = pneg %p137
      $region42: #{self_attn_block.4} parent=31 // pred_check_branch
        %6075 = sbr.rel (%p6073) target = $region44
      $region43: #{self_attn_block.4} parent=31 // pred_region
        %s6076 = smul.u32 8, %s20
      $region44: #{self_attn_block.4} parent=31 // pred_fallthru
        _
    $region32: #{self_attn_block.4} parent=5 // pred_fallthru
      _
    %p6077 = scmp.le.s32.totalorder 2, %s9
    // Predicated region
    $region45: #{self_attn_block.4} parent=5 // pred_check
      %p6078 = pneg %p6077
    $region46: #{self_attn_block.4} parent=5 // pred_check_branch
      %6080 = sbr.rel (%p6078) target = $region48
    $region47: #{self_attn_block.4} parent=5 // pred_region
      %s6081 = ssub.s32 %s9, 2
      // Predicated region
      $region49: #{self_attn_block.4} parent=47 // pred_check
        %p6082 = pneg %p143
      $region50: #{self_attn_block.4} parent=47 // pred_check_branch
        %6084 = sbr.rel (%p6082) target = $region52
      $region51: #{self_attn_block.4} parent=47 // pred_region
        %s6085 = smul.u32 8, %s23
        %p6086 = scmp.lt.s32.totalorder %s22, 1
        %s6087 = scalar_select %p6086, %s22, 1
        %p6088 = scmp.lt.s32.totalorder %s6085, 15
        %s6089 = scalar_select %p6088, %s6085, 15
        %s6090 = smul.addr %s6087, 16
        %s6091 = sadd.s32 %s6089, %s6090
        %s6092 = smul.addr %s6091, 8
        %s6093 = scalar_lea.vmem %s3, %s6092
      $region52: #{self_attn_block.4} parent=47 // pred_fallthru
        _
    $region48: #{self_attn_block.4} parent=5 // pred_fallthru
      _
  $region6: #{self_attn_block.4} parent=0 // loop_footer
    %s13 = sadd.s32 1, %s9
  $region7: #{self_attn_block.4} parent=0 // loop_footer_branch
    %8 = sbr.rel target = $region3
  $region8: #{self_attn_block.4} parent=0 // loop_exit
    _

</llo_original>
